<compile_context>
chip_gen: v7x
topology: tpu7x:2x2x1
jax: 0.10.0
libtpu: 0.0.40
codegen_flags: <defaults>
</compile_context>

<pallas_src>
import jax
import jax.numpy as jnp
from jax import lax
from jax.experimental import pallas as pl
from jax.experimental.pallas import tpu as pltpu

EPS = 1e-5
# Safe on every generation (v5e/v6e: 128 MiB physical, v7x: 64 MiB); tune per gen.
_VMEM_LIMIT_BYTES = 32 * 1024 * 1024


# ----------------------------- small helpers --------------------------------
def _round_up(x, m):
    return (x + m - 1) // m * m


def _pick_row_tile(total_rows, width, target_m, align=8):
    """Largest divisor TBH of total_rows with TBH*width <= target_m and
    TBH*width % align == 0 (alignment waived when a single tile covers the axis)."""
    target = max(1, target_m // width)
    for t in range(min(total_rows, target), 0, -1):
        if total_rows % t == 0 and ((t * width) % align == 0 or t == total_rows):
            return t
    return total_rows


def _pick_m_tile(m, target_m, align=8):
    for t in range(min(m, target_m), 0, -1):
        if m % t == 0 and (t % align == 0 or t == m):
            return t
    return m


# ------------------------------- kernels -------------------------------------
def _conv_stats_kernel(top_ref, mid_ref, bot_ref, w_ref, y_ref, stats_ref):
    """Pass 1: 3x3 conv for one block of image rows + BN partial sums.

    top/mid/bot : (TBH, W+2, Cin) row blocks of the zero-padded input, pre-shifted
                  by dh = 0/1/2 image rows (no im2col, no halo DMA needed).
    w_ref       : (9, Cin, Coutp) per-tap weight slabs, Coutp lane-dense (mult. of 128).
    y_ref       : (TBH*W, Coutp) f32 conv output block.
    stats_ref   : (1, 2, Coutp) f32 per-block [sum(y), sum(y*y)].
    """
    tbh, wp2, cin = top_ref.shape
    w = wp2 - 2
    coutp = w_ref.shape[-1]
    m = tbh * w

    acc = jnp.zeros((m, coutp), jnp.float32)
    taps = (top_ref, mid_ref, bot_ref)
    for dh in range(3):
        for dw in range(3):
            # dw-shifted window of this row block, flattened to the matmul LHS.
            lhs = taps[dh][:, dw:dw + w, :].reshape(m, cin)
            acc = acc + jnp.dot(lhs, w_ref[3 * dh + dw],
                                preferred_element_type=jnp.float32)

    y_ref[...] = acc
    # BN batch statistics as sum / sum-of-squares partials; reduced across blocks
    # (and across TensorCores on v7x) by a tiny JAX epilogue in the wrapper.
    stats_ref[:, 0:1, :] = jnp.sum(acc, axis=0, keepdims=True)[None]
    stats_ref[:, 1:2, :] = jnp.sum(acc * acc, axis=0, keepdims=True)[None]


def _bn_relu_kernel(y_ref, scale_ref, shift_ref, o_ref):
    """Pass 2: folded BatchNorm affine + ReLU: out = max(y*scale + shift, 0)."""
    o_ref[...] = jnp.maximum(y_ref[...] * scale_ref[...] + shift_ref[...], 0.0)


# --------------------------- one conv->BN->ReLU stage -------------------------
def conv_bn_relu(x_nhwc, w_oihw, gamma, beta, *,
                 matmul_dtype=jnp.bfloat16, block_m=1024):
    """One (conv3x3 pad=1 -> BatchNorm2d(batch stats, eps=1e-5) -> ReLU) stage.

    The conv bias is intentionally NOT applied: under train-mode BN,
    (y+b) - mean(y+b) == y - mean(y), so the bias is algebraically dead.
    """
    B, H, W, Cin = x_nhwc.shape
    Cout = w_oihw.shape[0]
    Coutp = _round_up(Cout, 128)          # lane-dense channel dimension
    M = B * H * W

    # --- glue: pad + 3 row-shifted views (3x input bytes, not 9x im2col) -----
    xp = jnp.pad(x_nhwc, ((0, 0), (1, 1), (1, 1), (0, 0))).astype(matmul_dtype)
    top = xp[:, 0:H].reshape(B * H, W + 2, Cin)       # dh = 0 tap rows
    mid = xp[:, 1:H + 1].reshape(B * H, W + 2, Cin)   # dh = 1
    bot = xp[:, 2:H + 2].reshape(B * H, W + 2, Cin)   # dh = 2

    # Weights -> (9, Cin, Coutp), tap order (dh, dw), zero-padded channels.
    w9 = jnp.transpose(w_oihw, (2, 3, 1, 0)).reshape(9, Cin, Cout)
    w9 = jnp.pad(w9, ((0, 0), (0, 0), (0, Coutp - Cout))).astype(matmul_dtype)

    # --- pass 1: conv + BN partial sums, tiled over image rows ---------------
    TBH = _pick_row_tile(B * H, W, block_m)           # image rows per tile
    nR = (B * H) // TBH
    Mtile = TBH * W

    y, stats = pl.pallas_call(
        _conv_stats_kernel,
        out_shape=(jax.ShapeDtypeStruct((M, Coutp), jnp.float32),
                   jax.ShapeDtypeStruct((nR, 2, Coutp), jnp.float32)),
        grid=(nR,),
        in_specs=[
            pl.BlockSpec((TBH, W + 2, Cin), lambda r: (r, 0, 0)),
            pl.BlockSpec((TBH, W + 2, Cin), lambda r: (r, 0, 0)),
            pl.BlockSpec((TBH, W + 2, Cin), lambda r: (r, 0, 0)),
            pl.BlockSpec((9, Cin, Coutp), lambda r: (0, 0, 0)),
        ],
        out_specs=(
            pl.BlockSpec((Mtile, Coutp), lambda r: (r, 0)),
            pl.BlockSpec((1, 2, Coutp), lambda r: (r, 0, 0)),
        ),
        compiler_params=pltpu.CompilerParams(
            dimension_semantics=("parallel",),
            vmem_limit_bytes=_VMEM_LIMIT_BYTES),
    )(top, mid, bot, w9)

    # --- tiny epilogue: global BN stats + folded affine (f32) ----------------
    tot = jnp.sum(stats, axis=0)                      # (2, Coutp)
    mean = tot[0] / M
    var = jnp.maximum(tot[1] / M - mean * mean, 0.0)  # biased variance (train mode)
    inv = lax.rsqrt(var + EPS)
    gamma_p = jnp.pad(gamma.astype(jnp.float32), (0, Coutp - Cout))
    beta_p = jnp.pad(beta.astype(jnp.float32), (0, Coutp - Cout))
    scale = (gamma_p * inv).reshape(1, Coutp).astype(jnp.float32)
    shift = (beta_p - mean * gamma_p * inv).reshape(1, Coutp).astype(jnp.float32)

    # --- pass 2: normalize + ReLU, tiled over M -------------------------------
    TM2 = _pick_m_tile(M, block_m)
    out = pl.pallas_call(
        _bn_relu_kernel,
        out_shape=jax.ShapeDtypeStruct((M, Coutp), jnp.float32),
        grid=(M // TM2,),
        in_specs=[
            pl.BlockSpec((TM2, Coutp), lambda r: (r, 0)),
            pl.BlockSpec((1, Coutp), lambda r: (0, 0)),
            pl.BlockSpec((1, Coutp), lambda r: (0, 0)),
        ],
        out_specs=pl.BlockSpec((TM2, Coutp), lambda r: (r, 0)),
        compiler_params=pltpu.CompilerParams(
            dimension_semantics=("parallel",),
            vmem_limit_bytes=_VMEM_LIMIT_BYTES),
    )(y, scale, shift)

    return out[:, :Cout].reshape(B, H, W, Cout)


def double_conv(x_nchw, params, *, matmul_dtype=jnp.bfloat16, block_m=1024):
    """Pallas-backed equivalent of the PyTorch double_conv.forward (training-mode BN).

    Conv biases b1/b2 are accepted in `params` for parity with the nn.Module but are
    not used: they cancel exactly under the batch-stat mean subtraction.
    """
    x = jnp.transpose(x_nchw, (0, 2, 3, 1))           # NCHW -> NHWC
    x = conv_bn_relu(x, params["w1"], params["g1"], params["beta1"],
                     matmul_dtype=matmul_dtype, block_m=block_m)
    x = conv_bn_relu(x, params["w2"], params["g2"], params["beta2"],
                     matmul_dtype=matmul_dtype, block_m=block_m)
    return jnp.transpose(x, (0, 3, 1, 2))             # NHWC -> NCHW


# ----------------------------- pure-JAX reference ---------------------------
def _ref_stage(x_nhwc, w_oihw, bias, gamma, beta):
    w_hwio = jnp.transpose(w_oihw, (2, 3, 1, 0))
    y = lax.conv_general_dilated(
        x_nhwc, w_hwio, window_strides=(1, 1), padding="SAME",
        dimension_numbers=("NHWC", "HWIO", "NHWC"))
    y = y + bias
    mean = jnp.mean(y, axis=(0, 1, 2), keepdims=True)
    var = jnp.mean((y - mean) ** 2, axis=(0, 1, 2), keepdims=True)
    y = gamma * (y - mean) * lax.rsqrt(var + EPS) + beta
    return jnp.maximum(y, 0.0)


def double_conv_ref(x_nchw, params):
    x = jnp.transpose(x_nchw, (0, 2, 3, 1))
    x = _ref_stage(x, params["w1"], params["b1"], params["g1"], params["beta1"])
    x = _ref_stage(x, params["w2"], params["b2"], params["g2"], params["beta2"])
    return jnp.transpose(x, (0, 3, 1, 2))


if __name__ == "__main__":
    B, in_ch, out_ch, HW = 2, 4, 8, 16
    key = jax.random.PRNGKey(0)
    ks = jax.random.split(key, 9)

    params = {
        # Conv2d(in_ch, out_ch, 3): weight (out_ch, in_ch, 3, 3), bias (out_ch,)
        "w1": 0.1 * jax.random.normal(ks[0], (out_ch, in_ch, 3, 3), jnp.float32),
        "b1": 0.05 * jax.random.normal(ks[1], (out_ch,), jnp.float32),
        # BatchNorm2d(out_ch): gamma, beta
        "g1": 1.0 + 0.1 * jax.random.normal(ks[2], (out_ch,), jnp.float32),
        "beta1": 0.1 * jax.random.normal(ks[3], (out_ch,), jnp.float32),
        # Conv2d(out_ch, out_ch, 3)
        "w2": 0.1 * jax.random.normal(ks[4], (out_ch, out_ch, 3, 3), jnp.float32),
        "b2": 0.05 * jax.random.normal(ks[5], (out_ch,), jnp.float32),
        "g2": 1.0 + 0.1 * jax.random.normal(ks[6], (out_ch,), jnp.float32),
        "beta2": 0.1 * jax.random.normal(ks[7], (out_ch,), jnp.float32),
    }

    x = jax.random.normal(ks[8], (B, in_ch, HW, HW), jnp.float32)

    ref = jax.block_until_ready(double_conv_ref(x, params))

    run = jax.jit(double_conv, static_argnames=("matmul_dtype", "block_m"))

    # 1) Exact-math check: f32 matmul operands (small block_m so the demo exercises
    #    multi-tile grids and the cross-tile BN partial-sum reduction).
    out_f32 = jax.block_until_ready(
        run(x, params, matmul_dtype=jnp.float32, block_m=256))
    assert out_f32.shape == (B, out_ch, HW, HW), out_f32.shape
    assert jnp.allclose(out_f32, ref, rtol=1e-3, atol=1e-3), \
        float(jnp.max(jnp.abs(out_f32 - ref)))

    # 2) Default fast path: bf16 matmul operands, f32 accumulation + f32 BN math.
    #    Tolerance sized for bf16 operand rounding (exact math verified above).
    out_bf16 = jax.block_until_ready(run(x, params, block_m=256))
    assert out_bf16.shape == (B, out_ch, HW, HW), out_bf16.shape
    assert jnp.allclose(out_bf16, ref, rtol=5e-2, atol=5e-2), \
        float(jnp.max(jnp.abs(out_bf16 - ref)))

    print("KERNEL_OK")
</pallas_src>

<mosaic_0001>
module attributes {stable_mosaic.version = 11 : i64} {
  func.func @_conv_stats_kernel(%arg0: i32, %arg1: memref<16x18x4xf32, #tpu.memory_space<vmem>>, %arg2: memref<16x18x4xf32, #tpu.memory_space<vmem>>, %arg3: memref<16x18x4xf32, #tpu.memory_space<vmem>>, %arg4: memref<9x4x128xf32, #tpu.memory_space<vmem>>, %arg5: memref<256x128xf32, #tpu.memory_space<vmem>>, %arg6: memref<1x2x128xf32, #tpu.memory_space<vmem>>) attributes {dimension_semantics = [#tpu.dimension_semantics<parallel>], iteration_bounds = array<i64: 2>, scalar_prefetch = 0 : i64, scratch_operands = 0 : i64, tpu.core_type = #tpu.core_type<tc>, window_params = [{transform_indices = @transform_0, window_bounds = array<i64: 16, 18, 4>}, {transform_indices = @transform_1, window_bounds = array<i64: 16, 18, 4>}, {transform_indices = @transform_2, window_bounds = array<i64: 16, 18, 4>}, {pipeline_mode = #tpu.pipeline_mode<synchronous>, transform_indices = @transform_3, window_bounds = array<i64: 9, 4, 128>}, {transform_indices = @transform_4, window_bounds = array<i64: 256, 128>}, {transform_indices = @transform_5, window_bounds = array<i64: 1, 2, 128>}]} {
    %cst = arith.constant 0.000000e+00 : f32
    %0 = vector.broadcast %cst : f32 to vector<256x128xf32>
    %c0 = arith.constant 0 : index
    %c0_0 = arith.constant 0 : index
    %c0_1 = arith.constant 0 : index
    %1 = vector.load %arg1[%c0, %c0_0, %c0_1] : memref<16x18x4xf32, #tpu.memory_space<vmem>>, vector<16x16x4xf32>
    %2 = vector.shape_cast %1 : vector<16x16x4xf32> to vector<256x4xf32>
    %c0_2 = arith.constant 0 : index
    %c0_3 = arith.constant 0 : index
    %c0_4 = arith.constant 0 : index
    %3 = vector.load %arg4[%c0_2, %c0_3, %c0_4] : memref<9x4x128xf32, #tpu.memory_space<vmem>>, vector<1x4x128xf32>
    %4 = vector.shape_cast %3 : vector<1x4x128xf32> to vector<4x128xf32>
    %cst_5 = arith.constant dense<0.000000e+00> : vector<256x128xf32>
    %5 = tpu.matmul %2, %4, %cst_5 {dimension_numbers = #tpu.dot_dimension_numbers<[1], [0], [0], [1], [0, 0, 1, 1], [], []>} : vector<256x4xf32>, vector<4x128xf32>, vector<256x128xf32> -> vector<256x128xf32>
    %6 = arith.addf %0, %5 : vector<256x128xf32>
    %c0_6 = arith.constant 0 : index
    %c1 = arith.constant 1 : index
    %c0_7 = arith.constant 0 : index
    %7 = vector.load %arg1[%c0_6, %c1, %c0_7] : memref<16x18x4xf32, #tpu.memory_space<vmem>>, vector<16x16x4xf32>
    %8 = vector.shape_cast %7 : vector<16x16x4xf32> to vector<256x4xf32>
    %c1_8 = arith.constant 1 : index
    %c0_9 = arith.constant 0 : index
    %c0_10 = arith.constant 0 : index
    %9 = vector.load %arg4[%c1_8, %c0_9, %c0_10] : memref<9x4x128xf32, #tpu.memory_space<vmem>>, vector<1x4x128xf32>
    %10 = vector.shape_cast %9 : vector<1x4x128xf32> to vector<4x128xf32>
    %cst_11 = arith.constant dense<0.000000e+00> : vector<256x128xf32>
    %11 = tpu.matmul %8, %10, %cst_11 {dimension_numbers = #tpu.dot_dimension_numbers<[1], [0], [0], [1], [0, 0, 1, 1], [], []>} : vector<256x4xf32>, vector<4x128xf32>, vector<256x128xf32> -> vector<256x128xf32>
    %12 = arith.addf %6, %11 : vector<256x128xf32>
    %c0_12 = arith.constant 0 : index
    %c2 = arith.constant 2 : index
    %c0_13 = arith.constant 0 : index
    %13 = vector.load %arg1[%c0_12, %c2, %c0_13] : memref<16x18x4xf32, #tpu.memory_space<vmem>>, vector<16x16x4xf32>
    %14 = vector.shape_cast %13 : vector<16x16x4xf32> to vector<256x4xf32>
    %c2_14 = arith.constant 2 : index
    %c0_15 = arith.constant 0 : index
    %c0_16 = arith.constant 0 : index
    %15 = vector.load %arg4[%c2_14, %c0_15, %c0_16] : memref<9x4x128xf32, #tpu.memory_space<vmem>>, vector<1x4x128xf32>
    %16 = vector.shape_cast %15 : vector<1x4x128xf32> to vector<4x128xf32>
    %cst_17 = arith.constant dense<0.000000e+00> : vector<256x128xf32>
    %17 = tpu.matmul %14, %16, %cst_17 {dimension_numbers = #tpu.dot_dimension_numbers<[1], [0], [0], [1], [0, 0, 1, 1], [], []>} : vector<256x4xf32>, vector<4x128xf32>, vector<256x128xf32> -> vector<256x128xf32>
    %18 = arith.addf %12, %17 : vector<256x128xf32>
    %c0_18 = arith.constant 0 : index
    %c0_19 = arith.constant 0 : index
    %c0_20 = arith.constant 0 : index
    %19 = vector.load %arg2[%c0_18, %c0_19, %c0_20] : memref<16x18x4xf32, #tpu.memory_space<vmem>>, vector<16x16x4xf32>
    %20 = vector.shape_cast %19 : vector<16x16x4xf32> to vector<256x4xf32>
    %c3 = arith.constant 3 : index
    %c0_21 = arith.constant 0 : index
    %c0_22 = arith.constant 0 : index
    %21 = vector.load %arg4[%c3, %c0_21, %c0_22] : memref<9x4x128xf32, #tpu.memory_space<vmem>>, vector<1x4x128xf32>
    %22 = vector.shape_cast %21 : vector<1x4x128xf32> to vector<4x128xf32>
    %cst_23 = arith.constant dense<0.000000e+00> : vector<256x128xf32>
    %23 = tpu.matmul %20, %22, %cst_23 {dimension_numbers = #tpu.dot_dimension_numbers<[1], [0], [0], [1], [0, 0, 1, 1], [], []>} : vector<256x4xf32>, vector<4x128xf32>, vector<256x128xf32> -> vector<256x128xf32>
    %24 = arith.addf %18, %23 : vector<256x128xf32>
    %c0_24 = arith.constant 0 : index
    %c1_25 = arith.constant 1 : index
    %c0_26 = arith.constant 0 : index
    %25 = vector.load %arg2[%c0_24, %c1_25, %c0_26] : memref<16x18x4xf32, #tpu.memory_space<vmem>>, vector<16x16x4xf32>
    %26 = vector.shape_cast %25 : vector<16x16x4xf32> to vector<256x4xf32>
    %c4 = arith.constant 4 : index
    %c0_27 = arith.constant 0 : index
    %c0_28 = arith.constant 0 : index
    %27 = vector.load %arg4[%c4, %c0_27, %c0_28] : memref<9x4x128xf32, #tpu.memory_space<vmem>>, vector<1x4x128xf32>
    %28 = vector.shape_cast %27 : vector<1x4x128xf32> to vector<4x128xf32>
    %cst_29 = arith.constant dense<0.000000e+00> : vector<256x128xf32>
    %29 = tpu.matmul %26, %28, %cst_29 {dimension_numbers = #tpu.dot_dimension_numbers<[1], [0], [0], [1], [0, 0, 1, 1], [], []>} : vector<256x4xf32>, vector<4x128xf32>, vector<256x128xf32> -> vector<256x128xf32>
    %30 = arith.addf %24, %29 : vector<256x128xf32>
    %c0_30 = arith.constant 0 : index
    %c2_31 = arith.constant 2 : index
    %c0_32 = arith.constant 0 : index
    %31 = vector.load %arg2[%c0_30, %c2_31, %c0_32] : memref<16x18x4xf32, #tpu.memory_space<vmem>>, vector<16x16x4xf32>
    %32 = vector.shape_cast %31 : vector<16x16x4xf32> to vector<256x4xf32>
    %c5 = arith.constant 5 : index
    %c0_33 = arith.constant 0 : index
    %c0_34 = arith.constant 0 : index
    %33 = vector.load %arg4[%c5, %c0_33, %c0_34] : memref<9x4x128xf32, #tpu.memory_space<vmem>>, vector<1x4x128xf32>
    %34 = vector.shape_cast %33 : vector<1x4x128xf32> to vector<4x128xf32>
    %cst_35 = arith.constant dense<0.000000e+00> : vector<256x128xf32>
    %35 = tpu.matmul %32, %34, %cst_35 {dimension_numbers = #tpu.dot_dimension_numbers<[1], [0], [0], [1], [0, 0, 1, 1], [], []>} : vector<256x4xf32>, vector<4x128xf32>, vector<256x128xf32> -> vector<256x128xf32>
    %36 = arith.addf %30, %35 : vector<256x128xf32>
    %c0_36 = arith.constant 0 : index
    %c0_37 = arith.constant 0 : index
    %c0_38 = arith.constant 0 : index
    %37 = vector.load %arg3[%c0_36, %c0_37, %c0_38] : memref<16x18x4xf32, #tpu.memory_space<vmem>>, vector<16x16x4xf32>
    %38 = vector.shape_cast %37 : vector<16x16x4xf32> to vector<256x4xf32>
    %c6 = arith.constant 6 : index
    %c0_39 = arith.constant 0 : index
    %c0_40 = arith.constant 0 : index
    %39 = vector.load %arg4[%c6, %c0_39, %c0_40] : memref<9x4x128xf32, #tpu.memory_space<vmem>>, vector<1x4x128xf32>
    %40 = vector.shape_cast %39 : vector<1x4x128xf32> to vector<4x128xf32>
    %cst_41 = arith.constant dense<0.000000e+00> : vector<256x128xf32>
    %41 = tpu.matmul %38, %40, %cst_41 {dimension_numbers = #tpu.dot_dimension_numbers<[1], [0], [0], [1], [0, 0, 1, 1], [], []>} : vector<256x4xf32>, vector<4x128xf32>, vector<256x128xf32> -> vector<256x128xf32>
    %42 = arith.addf %36, %41 : vector<256x128xf32>
    %c0_42 = arith.constant 0 : index
    %c1_43 = arith.constant 1 : index
    %c0_44 = arith.constant 0 : index
    %43 = vector.load %arg3[%c0_42, %c1_43, %c0_44] : memref<16x18x4xf32, #tpu.memory_space<vmem>>, vector<16x16x4xf32>
    %44 = vector.shape_cast %43 : vector<16x16x4xf32> to vector<256x4xf32>
    %c7 = arith.constant 7 : index
    %c0_45 = arith.constant 0 : index
    %c0_46 = arith.constant 0 : index
    %45 = vector.load %arg4[%c7, %c0_45, %c0_46] : memref<9x4x128xf32, #tpu.memory_space<vmem>>, vector<1x4x128xf32>
    %46 = vector.shape_cast %45 : vector<1x4x128xf32> to vector<4x128xf32>
    %cst_47 = arith.constant dense<0.000000e+00> : vector<256x128xf32>
    %47 = tpu.matmul %44, %46, %cst_47 {dimension_numbers = #tpu.dot_dimension_numbers<[1], [0], [0], [1], [0, 0, 1, 1], [], []>} : vector<256x4xf32>, vector<4x128xf32>, vector<256x128xf32> -> vector<256x128xf32>
    %48 = arith.addf %42, %47 : vector<256x128xf32>
    %c0_48 = arith.constant 0 : index
    %c2_49 = arith.constant 2 : index
    %c0_50 = arith.constant 0 : index
    %49 = vector.load %arg3[%c0_48, %c2_49, %c0_50] : memref<16x18x4xf32, #tpu.memory_space<vmem>>, vector<16x16x4xf32>
    %50 = vector.shape_cast %49 : vector<16x16x4xf32> to vector<256x4xf32>
    %c8 = arith.constant 8 : index
    %c0_51 = arith.constant 0 : index
    %c0_52 = arith.constant 0 : index
    %51 = vector.load %arg4[%c8, %c0_51, %c0_52] : memref<9x4x128xf32, #tpu.memory_space<vmem>>, vector<1x4x128xf32>
    %52 = vector.shape_cast %51 : vector<1x4x128xf32> to vector<4x128xf32>
    %cst_53 = arith.constant dense<0.000000e+00> : vector<256x128xf32>
    %53 = tpu.matmul %50, %52, %cst_53 {dimension_numbers = #tpu.dot_dimension_numbers<[1], [0], [0], [1], [0, 0, 1, 1], [], []>} : vector<256x4xf32>, vector<4x128xf32>, vector<256x128xf32> -> vector<256x128xf32>
    %54 = arith.addf %48, %53 : vector<256x128xf32>
    %c0_54 = arith.constant 0 : index
    %c0_55 = arith.constant 0 : index
    %55 = vector.load %arg5[%c0_54, %c0_55] : memref<256x128xf32, #tpu.memory_space<vmem>>, vector<256x128xf32>
    tpu.vector_store %arg5[%c0_54, %c0_55], %54 {strides = array<i32>} : memref<256x128xf32, #tpu.memory_space<vmem>>, vector<256x128xf32>,
    %cst_56 = arith.constant dense<0.000000e+00> : vector<128xf32>
    %56 = vector.multi_reduction <add>, %54, %cst_56 [0] : vector<256x128xf32> to vector<128xf32>
    %57 = vector.shape_cast %56 : vector<128xf32> to vector<1x128xf32>
    %58 = vector.shape_cast %57 : vector<1x128xf32> to vector<1x1x128xf32>
    %c0_57 = arith.constant 0 : index
    %c0_58 = arith.constant 0 : index
    %c0_59 = arith.constant 0 : index
    %59 = vector.load %arg6[%c0_57, %c0_58, %c0_59] : memref<1x2x128xf32, #tpu.memory_space<vmem>>, vector<1x1x128xf32>
    tpu.vector_store %arg6[%c0_57, %c0_58, %c0_59], %58 {strides = array<i32>} : memref<1x2x128xf32, #tpu.memory_space<vmem>>, vector<1x1x128xf32>,
    %60 = arith.mulf %54, %54 : vector<256x128xf32>
    %cst_60 = arith.constant dense<0.000000e+00> : vector<128xf32>
    %61 = vector.multi_reduction <add>, %60, %cst_60 [0] : vector<256x128xf32> to vector<128xf32>
    %62 = vector.shape_cast %61 : vector<128xf32> to vector<1x128xf32>
    %63 = vector.shape_cast %62 : vector<1x128xf32> to vector<1x1x128xf32>
    %c0_61 = arith.constant 0 : index
    %c1_62 = arith.constant 1 : index
    %c0_63 = arith.constant 0 : index
    %64 = vector.load %arg6[%c0_61, %c1_62, %c0_63] : memref<1x2x128xf32, #tpu.memory_space<vmem>>, vector<1x1x128xf32>
    tpu.vector_store %arg6[%c0_61, %c1_62, %c0_63], %63 {strides = array<i32>} : memref<1x2x128xf32, #tpu.memory_space<vmem>>, vector<1x1x128xf32>,
    return
  }
  func.func @transform_0(%arg0: i32) -> (i32, i32, i32) {
    %c0_i32 = arith.constant 0 : i32
    %c0_i32_0 = arith.constant 0 : i32
    %c0_i32_1 = arith.constant 0 : i32
    return %arg0, %c0_i32, %c0_i32_0 : i32, i32, i32
  }
  func.func @transform_1(%arg0: i32) -> (i32, i32, i32) {
    %c0_i32 = arith.constant 0 : i32
    %c0_i32_0 = arith.constant 0 : i32
    %c0_i32_1 = arith.constant 0 : i32
    return %arg0, %c0_i32, %c0_i32_0 : i32, i32, i32
  }
  func.func @transform_2(%arg0: i32) -> (i32, i32, i32) {
    %c0_i32 = arith.constant 0 : i32
    %c0_i32_0 = arith.constant 0 : i32
    %c0_i32_1 = arith.constant 0 : i32
    return %arg0, %c0_i32, %c0_i32_0 : i32, i32, i32
  }
  func.func @transform_3(%arg0: i32) -> (i32, i32, i32) {
    %c0_i32 = arith.constant 0 : i32
    %c0_i32_0 = arith.constant 0 : i32
    %c0_i32_1 = arith.constant 0 : i32
    %c0_i32_2 = arith.constant 0 : i32
    return %c0_i32, %c0_i32_0, %c0_i32_1 : i32, i32, i32
  }
  func.func @transform_4(%arg0: i32) -> (i32, i32) {
    %c0_i32 = arith.constant 0 : i32
    %c0_i32_0 = arith.constant 0 : i32
    return %arg0, %c0_i32 : i32, i32
  }
  func.func @transform_5(%arg0: i32) -> (i32, i32, i32) {
    %c0_i32 = arith.constant 0 : i32
    %c0_i32_0 = arith.constant 0 : i32
    %c0_i32_1 = arith.constant 0 : i32
    return %arg0, %c0_i32, %c0_i32_0 : i32, i32, i32
  }
}

module attributes {stable_mosaic.version = 11 : i64} {
  func.func @_bn_relu_kernel(%arg0: i32, %arg1: memref<256x128xf32, #tpu.memory_space<vmem>>, %arg2: memref<1x128xf32, #tpu.memory_space<vmem>>, %arg3: memref<1x128xf32, #tpu.memory_space<vmem>>, %arg4: memref<256x128xf32, #tpu.memory_space<vmem>>) attributes {dimension_semantics = [#tpu.dimension_semantics<parallel>], iteration_bounds = array<i64: 2>, scalar_prefetch = 0 : i64, scratch_operands = 0 : i64, tpu.core_type = #tpu.core_type<tc>, window_params = [{transform_indices = @transform_0, window_bounds = array<i64: 256, 128>}, {pipeline_mode = #tpu.pipeline_mode<synchronous>, transform_indices = @transform_1, window_bounds = array<i64: 1, 128>}, {pipeline_mode = #tpu.pipeline_mode<synchronous>, transform_indices = @transform_2, window_bounds = array<i64: 1, 128>}, {transform_indices = @transform_3, window_bounds = array<i64: 256, 128>}]} {
    %c0 = arith.constant 0 : index
    %c0_0 = arith.constant 0 : index
    %0 = vector.load %arg1[%c0, %c0_0] : memref<256x128xf32, #tpu.memory_space<vmem>>, vector<256x128xf32>
    %c0_1 = arith.constant 0 : index
    %c0_2 = arith.constant 0 : index
    %1 = vector.load %arg2[%c0_1, %c0_2] : memref<1x128xf32, #tpu.memory_space<vmem>>, vector<1x128xf32>
    %2 = vector.broadcast %1 : vector<1x128xf32> to vector<256x128xf32>
    %3 = arith.mulf %0, %2 : vector<256x128xf32>
    %c0_3 = arith.constant 0 : index
    %c0_4 = arith.constant 0 : index
    %4 = vector.load %arg3[%c0_3, %c0_4] : memref<1x128xf32, #tpu.memory_space<vmem>>, vector<1x128xf32>
    %5 = vector.broadcast %4 : vector<1x128xf32> to vector<256x128xf32>
    %6 = arith.addf %3, %5 : vector<256x128xf32>
    %cst = arith.constant 0.000000e+00 : f32
    %7 = vector.broadcast %cst : f32 to vector<256x128xf32>
    %8 = arith.maximumf %6, %7 : vector<256x128xf32>
    %c0_5 = arith.constant 0 : index
    %c0_6 = arith.constant 0 : index
    %9 = vector.load %arg4[%c0_5, %c0_6] : memref<256x128xf32, #tpu.memory_space<vmem>>, vector<256x128xf32>
    tpu.vector_store %arg4[%c0_5, %c0_6], %8 {strides = array<i32>} : memref<256x128xf32, #tpu.memory_space<vmem>>, vector<256x128xf32>,
    return
  }
  func.func @transform_0(%arg0: i32) -> (i32, i32) {
    %c0_i32 = arith.constant 0 : i32
    %c0_i32_0 = arith.constant 0 : i32
    return %arg0, %c0_i32 : i32, i32
  }
  func.func @transform_1(%arg0: i32) -> (i32, i32) {
    %c0_i32 = arith.constant 0 : i32
    %c0_i32_0 = arith.constant 0 : i32
    %c0_i32_1 = arith.constant 0 : i32
    return %c0_i32, %c0_i32_0 : i32, i32
  }
  func.func @transform_2(%arg0: i32) -> (i32, i32) {
    %c0_i32 = arith.constant 0 : i32
    %c0_i32_0 = arith.constant 0 : i32
    %c0_i32_1 = arith.constant 0 : i32
    return %c0_i32, %c0_i32_0 : i32, i32
  }
  func.func @transform_3(%arg0: i32) -> (i32, i32) {
    %c0_i32 = arith.constant 0 : i32
    %c0_i32_0 = arith.constant 0 : i32
    return %arg0, %c0_i32 : i32, i32
  }
}

module attributes {stable_mosaic.version = 11 : i64} {
  func.func @_conv_stats_kernel(%arg0: i32, %arg1: memref<16x18x8xf32, #tpu.memory_space<vmem>>, %arg2: memref<16x18x8xf32, #tpu.memory_space<vmem>>, %arg3: memref<16x18x8xf32, #tpu.memory_space<vmem>>, %arg4: memref<9x8x128xf32, #tpu.memory_space<vmem>>, %arg5: memref<256x128xf32, #tpu.memory_space<vmem>>, %arg6: memref<1x2x128xf32, #tpu.memory_space<vmem>>) attributes {dimension_semantics = [#tpu.dimension_semantics<parallel>], iteration_bounds = array<i64: 2>, scalar_prefetch = 0 : i64, scratch_operands = 0 : i64, tpu.core_type = #tpu.core_type<tc>, window_params = [{transform_indices = @transform_0, window_bounds = array<i64: 16, 18, 8>}, {transform_indices = @transform_1, window_bounds = array<i64: 16, 18, 8>}, {transform_indices = @transform_2, window_bounds = array<i64: 16, 18, 8>}, {pipeline_mode = #tpu.pipeline_mode<synchronous>, transform_indices = @transform_3, window_bounds = array<i64: 9, 8, 128>}, {transform_indices = @transform_4, window_bounds = array<i64: 256, 128>}, {transform_indices = @transform_5, window_bounds = array<i64: 1, 2, 128>}]} {
    %cst = arith.constant 0.000000e+00 : f32
    %0 = vector.broadcast %cst : f32 to vector<256x128xf32>
    %c0 = arith.constant 0 : index
    %c0_0 = arith.constant 0 : index
    %c0_1 = arith.constant 0 : index
    %1 = vector.load %arg1[%c0, %c0_0, %c0_1] : memref<16x18x8xf32, #tpu.memory_space<vmem>>, vector<16x16x8xf32>
    %2 = vector.shape_cast %1 : vector<16x16x8xf32> to vector<256x8xf32>
    %c0_2 = arith.constant 0 : index
    %c0_3 = arith.constant 0 : index
    %c0_4 = arith.constant 0 : index
    %3 = vector.load %arg4[%c0_2, %c0_3, %c0_4] : memref<9x8x128xf32, #tpu.memory_space<vmem>>, vector<1x8x128xf32>
    %4 = vector.shape_cast %3 : vector<1x8x128xf32> to vector<8x128xf32>
    %cst_5 = arith.constant dense<0.000000e+00> : vector<256x128xf32>
    %5 = tpu.matmul %2, %4, %cst_5 {dimension_numbers = #tpu.dot_dimension_numbers<[1], [0], [0], [1], [0, 0, 1, 1], [], []>} : vector<256x8xf32>, vector<8x128xf32>, vector<256x128xf32> -> vector<256x128xf32>
    %6 = arith.addf %0, %5 : vector<256x128xf32>
    %c0_6 = arith.constant 0 : index
    %c1 = arith.constant 1 : index
    %c0_7 = arith.constant 0 : index
    %7 = vector.load %arg1[%c0_6, %c1, %c0_7] : memref<16x18x8xf32, #tpu.memory_space<vmem>>, vector<16x16x8xf32>
    %8 = vector.shape_cast %7 : vector<16x16x8xf32> to vector<256x8xf32>
    %c1_8 = arith.constant 1 : index
    %c0_9 = arith.constant 0 : index
    %c0_10 = arith.constant 0 : index
    %9 = vector.load %arg4[%c1_8, %c0_9, %c0_10] : memref<9x8x128xf32, #tpu.memory_space<vmem>>, vector<1x8x128xf32>
    %10 = vector.shape_cast %9 : vector<1x8x128xf32> to vector<8x128xf32>
    %cst_11 = arith.constant dense<0.000000e+00> : vector<256x128xf32>
    %11 = tpu.matmul %8, %10, %cst_11 {dimension_numbers = #tpu.dot_dimension_numbers<[1], [0], [0], [1], [0, 0, 1, 1], [], []>} : vector<256x8xf32>, vector<8x128xf32>, vector<256x128xf32> -> vector<256x128xf32>
    %12 = arith.addf %6, %11 : vector<256x128xf32>
    %c0_12 = arith.constant 0 : index
    %c2 = arith.constant 2 : index
    %c0_13 = arith.constant 0 : index
    %13 = vector.load %arg1[%c0_12, %c2, %c0_13] : memref<16x18x8xf32, #tpu.memory_space<vmem>>, vector<16x16x8xf32>
    %14 = vector.shape_cast %13 : vector<16x16x8xf32> to vector<256x8xf32>
    %c2_14 = arith.constant 2 : index
    %c0_15 = arith.constant 0 : index
    %c0_16 = arith.constant 0 : index
    %15 = vector.load %arg4[%c2_14, %c0_15, %c0_16] : memref<9x8x128xf32, #tpu.memory_space<vmem>>, vector<1x8x128xf32>
    %16 = vector.shape_cast %15 : vector<1x8x128xf32> to vector<8x128xf32>
    %cst_17 = arith.constant dense<0.000000e+00> : vector<256x128xf32>
    %17 = tpu.matmul %14, %16, %cst_17 {dimension_numbers = #tpu.dot_dimension_numbers<[1], [0], [0], [1], [0, 0, 1, 1], [], []>} : vector<256x8xf32>, vector<8x128xf32>, vector<256x128xf32> -> vector<256x128xf32>
    %18 = arith.addf %12, %17 : vector<256x128xf32>
    %c0_18 = arith.constant 0 : index
    %c0_19 = arith.constant 0 : index
    %c0_20 = arith.constant 0 : index
    %19 = vector.load %arg2[%c0_18, %c0_19, %c0_20] : memref<16x18x8xf32, #tpu.memory_space<vmem>>, vector<16x16x8xf32>
    %20 = vector.shape_cast %19 : vector<16x16x8xf32> to vector<256x8xf32>
    %c3 = arith.constant 3 : index
    %c0_21 = arith.constant 0 : index
    %c0_22 = arith.constant 0 : index
    %21 = vector.load %arg4[%c3, %c0_21, %c0_22] : memref<9x8x128xf32, #tpu.memory_space<vmem>>, vector<1x8x128xf32>
    %22 = vector.shape_cast %21 : vector<1x8x128xf32> to vector<8x128xf32>
    %cst_23 = arith.constant dense<0.000000e+00> : vector<256x128xf32>
    %23 = tpu.matmul %20, %22, %cst_23 {dimension_numbers = #tpu.dot_dimension_numbers<[1], [0], [0], [1], [0, 0, 1, 1], [], []>} : vector<256x8xf32>, vector<8x128xf32>, vector<256x128xf32> -> vector<256x128xf32>
    %24 = arith.addf %18, %23 : vector<256x128xf32>
    %c0_24 = arith.constant 0 : index
    %c1_25 = arith.constant 1 : index
    %c0_26 = arith.constant 0 : index
    %25 = vector.load %arg2[%c0_24, %c1_25, %c0_26] : memref<16x18x8xf32, #tpu.memory_space<vmem>>, vector<16x16x8xf32>
    %26 = vector.shape_cast %25 : vector<16x16x8xf32> to vector<256x8xf32>
    %c4 = arith.constant 4 : index
    %c0_27 = arith.constant 0 : index
    %c0_28 = arith.constant 0 : index
    %27 = vector.load %arg4[%c4, %c0_27, %c0_28] : memref<9x8x128xf32, #tpu.memory_space<vmem>>, vector<1x8x128xf32>
    %28 = vector.shape_cast %27 : vector<1x8x128xf32> to vector<8x128xf32>
    %cst_29 = arith.constant dense<0.000000e+00> : vector<256x128xf32>
    %29 = tpu.matmul %26, %28, %cst_29 {dimension_numbers = #tpu.dot_dimension_numbers<[1], [0], [0], [1], [0, 0, 1, 1], [], []>} : vector<256x8xf32>, vector<8x128xf32>, vector<256x128xf32> -> vector<256x128xf32>
    %30 = arith.addf %24, %29 : vector<256x128xf32>
    %c0_30 = arith.constant 0 : index
    %c2_31 = arith.constant 2 : index
    %c0_32 = arith.constant 0 : index
    %31 = vector.load %arg2[%c0_30, %c2_31, %c0_32] : memref<16x18x8xf32, #tpu.memory_space<vmem>>, vector<16x16x8xf32>
    %32 = vector.shape_cast %31 : vector<16x16x8xf32> to vector<256x8xf32>
    %c5 = arith.constant 5 : index
    %c0_33 = arith.constant 0 : index
    %c0_34 = arith.constant 0 : index
    %33 = vector.load %arg4[%c5, %c0_33, %c0_34] : memref<9x8x128xf32, #tpu.memory_space<vmem>>, vector<1x8x128xf32>
    %34 = vector.shape_cast %33 : vector<1x8x128xf32> to vector<8x128xf32>
    %cst_35 = arith.constant dense<0.000000e+00> : vector<256x128xf32>
    %35 = tpu.matmul %32, %34, %cst_35 {dimension_numbers = #tpu.dot_dimension_numbers<[1], [0], [0], [1], [0, 0, 1, 1], [], []>} : vector<256x8xf32>, vector<8x128xf32>, vector<256x128xf32> -> vector<256x128xf32>
    %36 = arith.addf %30, %35 : vector<256x128xf32>
    %c0_36 = arith.constant 0 : index
    %c0_37 = arith.constant 0 : index
    %c0_38 = arith.constant 0 : index
    %37 = vector.load %arg3[%c0_36, %c0_37, %c0_38] : memref<16x18x8xf32, #tpu.memory_space<vmem>>, vector<16x16x8xf32>
    %38 = vector.shape_cast %37 : vector<16x16x8xf32> to vector<256x8xf32>
    %c6 = arith.constant 6 : index
    %c0_39 = arith.constant 0 : index
    %c0_40 = arith.constant 0 : index
    %39 = vector.load %arg4[%c6, %c0_39, %c0_40] : memref<9x8x128xf32, #tpu.memory_space<vmem>>, vector<1x8x128xf32>
    %40 = vector.shape_cast %39 : vector<1x8x128xf32> to vector<8x128xf32>
    %cst_41 = arith.constant dense<0.000000e+00> : vector<256x128xf32>
    %41 = tpu.matmul %38, %40, %cst_41 {dimension_numbers = #tpu.dot_dimension_numbers<[1], [0], [0], [1], [0, 0, 1, 1], [], []>} : vector<256x8xf32>, vector<8x128xf32>, vector<256x128xf32> -> vector<256x128xf32>
    %42 = arith.addf %36, %41 : vector<256x128xf32>
    %c0_42 = arith.constant 0 : index
    %c1_43 = arith.constant 1 : index
    %c0_44 = arith.constant 0 : index
    %43 = vector.load %arg3[%c0_42, %c1_43, %c0_44] : memref<16x18x8xf32, #tpu.memory_space<vmem>>, vector<16x16x8xf32>
    %44 = vector.shape_cast %43 : vector<16x16x8xf32> to vector<256x8xf32>
    %c7 = arith.constant 7 : index
    %c0_45 = arith.constant 0 : index
    %c0_46 = arith.constant 0 : index
    %45 = vector.load %arg4[%c7, %c0_45, %c0_46] : memref<9x8x128xf32, #tpu.memory_space<vmem>>, vector<1x8x128xf32>
    %46 = vector.shape_cast %45 : vector<1x8x128xf32> to vector<8x128xf32>
    %cst_47 = arith.constant dense<0.000000e+00> : vector<256x128xf32>
    %47 = tpu.matmul %44, %46, %cst_47 {dimension_numbers = #tpu.dot_dimension_numbers<[1], [0], [0], [1], [0, 0, 1, 1], [], []>} : vector<256x8xf32>, vector<8x128xf32>, vector<256x128xf32> -> vector<256x128xf32>
    %48 = arith.addf %42, %47 : vector<256x128xf32>
    %c0_48 = arith.constant 0 : index
    %c2_49 = arith.constant 2 : index
    %c0_50 = arith.constant 0 : index
    %49 = vector.load %arg3[%c0_48, %c2_49, %c0_50] : memref<16x18x8xf32, #tpu.memory_space<vmem>>, vector<16x16x8xf32>
    %50 = vector.shape_cast %49 : vector<16x16x8xf32> to vector<256x8xf32>
    %c8 = arith.constant 8 : index
    %c0_51 = arith.constant 0 : index
    %c0_52 = arith.constant 0 : index
    %51 = vector.load %arg4[%c8, %c0_51, %c0_52] : memref<9x8x128xf32, #tpu.memory_space<vmem>>, vector<1x8x128xf32>
    %52 = vector.shape_cast %51 : vector<1x8x128xf32> to vector<8x128xf32>
    %cst_53 = arith.constant dense<0.000000e+00> : vector<256x128xf32>
    %53 = tpu.matmul %50, %52, %cst_53 {dimension_numbers = #tpu.dot_dimension_numbers<[1], [0], [0], [1], [0, 0, 1, 1], [], []>} : vector<256x8xf32>, vector<8x128xf32>, vector<256x128xf32> -> vector<256x128xf32>
    %54 = arith.addf %48, %53 : vector<256x128xf32>
    %c0_54 = arith.constant 0 : index
    %c0_55 = arith.constant 0 : index
    %55 = vector.load %arg5[%c0_54, %c0_55] : memref<256x128xf32, #tpu.memory_space<vmem>>, vector<256x128xf32>
    tpu.vector_store %arg5[%c0_54, %c0_55], %54 {strides = array<i32>} : memref<256x128xf32, #tpu.memory_space<vmem>>, vector<256x128xf32>,
    %cst_56 = arith.constant dense<0.000000e+00> : vector<128xf32>
    %56 = vector.multi_reduction <add>, %54, %cst_56 [0] : vector<256x128xf32> to vector<128xf32>
    %57 = vector.shape_cast %56 : vector<128xf32> to vector<1x128xf32>
    %58 = vector.shape_cast %57 : vector<1x128xf32> to vector<1x1x128xf32>
    %c0_57 = arith.constant 0 : index
    %c0_58 = arith.constant 0 : index
    %c0_59 = arith.constant 0 : index
    %59 = vector.load %arg6[%c0_57, %c0_58, %c0_59] : memref<1x2x128xf32, #tpu.memory_space<vmem>>, vector<1x1x128xf32>
    tpu.vector_store %arg6[%c0_57, %c0_58, %c0_59], %58 {strides = array<i32>} : memref<1x2x128xf32, #tpu.memory_space<vmem>>, vector<1x1x128xf32>,
    %60 = arith.mulf %54, %54 : vector<256x128xf32>
    %cst_60 = arith.constant dense<0.000000e+00> : vector<128xf32>
    %61 = vector.multi_reduction <add>, %60, %cst_60 [0] : vector<256x128xf32> to vector<128xf32>
    %62 = vector.shape_cast %61 : vector<128xf32> to vector<1x128xf32>
    %63 = vector.shape_cast %62 : vector<1x128xf32> to vector<1x1x128xf32>
    %c0_61 = arith.constant 0 : index
    %c1_62 = arith.constant 1 : index
    %c0_63 = arith.constant 0 : index
    %64 = vector.load %arg6[%c0_61, %c1_62, %c0_63] : memref<1x2x128xf32, #tpu.memory_space<vmem>>, vector<1x1x128xf32>
    tpu.vector_store %arg6[%c0_61, %c1_62, %c0_63], %63 {strides = array<i32>} : memref<1x2x128xf32, #tpu.memory_space<vmem>>, vector<1x1x128xf32>,
    return
  }
  func.func @transform_0(%arg0: i32) -> (i32, i32, i32) {
    %c0_i32 = arith.constant 0 : i32
    %c0_i32_0 = arith.constant 0 : i32
    %c0_i32_1 = arith.constant 0 : i32
    return %arg0, %c0_i32, %c0_i32_0 : i32, i32, i32
  }
  func.func @transform_1(%arg0: i32) -> (i32, i32, i32) {
    %c0_i32 = arith.constant 0 : i32
    %c0_i32_0 = arith.constant 0 : i32
    %c0_i32_1 = arith.constant 0 : i32
    return %arg0, %c0_i32, %c0_i32_0 : i32, i32, i32
  }
  func.func @transform_2(%arg0: i32) -> (i32, i32, i32) {
    %c0_i32 = arith.constant 0 : i32
    %c0_i32_0 = arith.constant 0 : i32
    %c0_i32_1 = arith.constant 0 : i32
    return %arg0, %c0_i32, %c0_i32_0 : i32, i32, i32
  }
  func.func @transform_3(%arg0: i32) -> (i32, i32, i32) {
    %c0_i32 = arith.constant 0 : i32
    %c0_i32_0 = arith.constant 0 : i32
    %c0_i32_1 = arith.constant 0 : i32
    %c0_i32_2 = arith.constant 0 : i32
    return %c0_i32, %c0_i32_0, %c0_i32_1 : i32, i32, i32
  }
  func.func @transform_4(%arg0: i32) -> (i32, i32) {
    %c0_i32 = arith.constant 0 : i32
    %c0_i32_0 = arith.constant 0 : i32
    return %arg0, %c0_i32 : i32, i32
  }
  func.func @transform_5(%arg0: i32) -> (i32, i32, i32) {
    %c0_i32 = arith.constant 0 : i32
    %c0_i32_0 = arith.constant 0 : i32
    %c0_i32_1 = arith.constant 0 : i32
    return %arg0, %c0_i32, %c0_i32_0 : i32, i32, i32
  }
}

</mosaic_0001>

<llo_original>
// kernel: double_conv.5
$region0: #{double_conv.5}
  #allocation0 [shape = 'u32[]', space=smem, size = 0x4, offset = 0x4, fixed_abs, tag = 'smem constant byte address 0x4 - core index']
  #allocation1 [shape = 'u32[144,128]{1,0:T(1,128)}', space=vmem, size = 0x12000, scoped, tag = 'internal scratch']
  %s0 = inlined_call_operand.vmem [shape: f32[512,128], index: 0, kind: input, shape index: {}]
  %s1 = inlined_call_operand.vmem [shape: f32[1,128], index: 1, kind: input, shape index: {}]
  %s2 = inlined_call_operand.vmem [shape: f32[1,128], index: 2, kind: input, shape index: {}]
  %s3 = inlined_call_operand.vmem [shape: f32[512,128], index: 3, kind: output, shape index: {}]
  %s4 = sld [smem:[#allocation0]]
  $region45: #{double_conv.5} parent=0
    _
  %s6 = ssub.s32 1, %s4
  %s7 = scalar_select 0, %s6, %s4
  loop: start=0, step=1, limit=4
  $region2: #{double_conv.5} parent=0 // loop_pre_header
    _
  $region3: #{double_conv.5} parent=0 // loop_header
    %s9 = sphi 0, %s13
    %p10 = scmp.ge.s32.totalorder %s9, 4
    %s19 = sphi 0, %s21
    %s22 = sphi 0, %s19
    %s23 = sphi 0, %s22
    %s39 = sphi 0, %s23
    %s43 = sphi 0, %s43
    %s45 = sphi 0, %s43
    %s46 = sphi 0, %s45
    %s60 = sphi 0, %s46
    %s64 = sphi 0, %s64
    %s66 = sphi 0, %s64
    %s67 = sphi 0, %s66
    %s81 = sphi 0, %s67
    %s87 = sphi 0, %s89
    %s90 = sphi 0, %s87
    %s91 = sphi 0, %s90
    %s107 = sphi 0, %s91
  $region4: #{double_conv.5} parent=0 // loop_header_branch
    %12 = sbr.rel (%p10) target = $region8
  $region5: #{double_conv.5} parent=0 // loop_body
    %s14 = ssub.s32 %s9, 1
    %s15 = ssub.s32 %s9, 2
    %s16 = sadd.s32 %s9, 1
    %s17 = ssub.s32 %s9, %s16
    %p18 = scmp.eq.s32.totalorder %s17, 0
    %s20 = sadd.s32 %s19, 1
    %s21 = scalar_select %p18, %s19, %s20
    %p24 = pneg %p18
    %p25 = scmp.eq.s32.totalorder %s9, 1
    %p26 = por %p24, %p25
    %p27 = scmp.ne.s32.totalorder %s19, %s22
    %p28 = scmp.eq.s32.totalorder %s9, 0
    %p29 = por %p27, %p28
    %p30 = scmp.ne.s32.totalorder %s19, %s22
    %p31 = scmp.eq.s32.totalorder %s14, 1
    %p32 = por %p30, %p31
    %p33 = scmp.ne.s32.totalorder %s22, %s23
    %p34 = scmp.eq.s32.totalorder %s14, 0
    %p35 = por %p33, %p34
    %p36 = scmp.ne.s32.totalorder %s22, %s23
    %p37 = scmp.eq.s32.totalorder %s15, 1
    %p38 = por %p36, %p37
    %p40 = scmp.ne.s32.totalorder %s23, %s39
    %p41 = scmp.eq.s32.totalorder %s15, 0
    %p42 = por %p40, %p41
    %s44 = sadd.s32 %s43, 1
    %p47 = scmp.eq.s32.totalorder %s9, 1
    %p48 = scmp.ne.s32.totalorder %s43, %s45
    %p49 = scmp.eq.s32.totalorder %s9, 0
    %p50 = por %p48, %p49
    %p51 = scmp.ne.s32.totalorder %s43, %s45
    %p52 = scmp.eq.s32.totalorder %s14, 1
    %p53 = por %p51, %p52
    %p54 = scmp.ne.s32.totalorder %s45, %s46
    %p55 = scmp.eq.s32.totalorder %s14, 0
    %p56 = por %p54, %p55
    %p57 = scmp.ne.s32.totalorder %s45, %s46
    %p58 = scmp.eq.s32.totalorder %s15, 1
    %p59 = por %p57, %p58
    %p61 = scmp.ne.s32.totalorder %s46, %s60
    %p62 = scmp.eq.s32.totalorder %s15, 0
    %p63 = por %p61, %p62
    %s65 = sadd.s32 %s64, 1
    %p68 = scmp.eq.s32.totalorder %s9, 1
    %p69 = scmp.ne.s32.totalorder %s64, %s66
    %p70 = scmp.eq.s32.totalorder %s9, 0
    %p71 = por %p69, %p70
    %p72 = scmp.ne.s32.totalorder %s64, %s66
    %p73 = scmp.eq.s32.totalorder %s14, 1
    %p74 = por %p72, %p73
    %p75 = scmp.ne.s32.totalorder %s66, %s67
    %p76 = scmp.eq.s32.totalorder %s14, 0
    %p77 = por %p75, %p76
    %p78 = scmp.ne.s32.totalorder %s66, %s67
    %p79 = scmp.eq.s32.totalorder %s15, 1
    %p80 = por %p78, %p79
    %p82 = scmp.ne.s32.totalorder %s67, %s81
    %p83 = scmp.eq.s32.totalorder %s15, 0
    %p84 = por %p82, %p83
    %s85 = ssub.s32 %s9, %s16
    %p86 = scmp.eq.s32.totalorder %s85, 0
    %s88 = sadd.s32 %s87, 1
    %s89 = scalar_select %p86, %s87, %s88
    %p92 = pneg %p86
    %p93 = scmp.eq.s32.totalorder %s9, 1
    %p94 = por %p92, %p93
    %p95 = scmp.ne.s32.totalorder %s87, %s90
    %p96 = scmp.eq.s32.totalorder %s9, 0
    %p97 = por %p95, %p96
    %p98 = scmp.ne.s32.totalorder %s87, %s90
    %p99 = scmp.eq.s32.totalorder %s14, 1
    %p100 = por %p98, %p99
    %p101 = scmp.ne.s32.totalorder %s90, %s91
    %p102 = scmp.eq.s32.totalorder %s14, 0
    %p103 = por %p101, %p102
    %p104 = scmp.ne.s32.totalorder %s90, %s91
    %p105 = scmp.eq.s32.totalorder %s15, 1
    %p106 = por %p104, %p105
    %p108 = scmp.ne.s32.totalorder %s91, %s107
    %p109 = scmp.eq.s32.totalorder %s15, 0
    %p110 = por %p108, %p109
    %p111 = scmp.le.s32.totalorder 1, %s9
    %p112 = scmp.lt.s32.totalorder %s9, 3
    %p113 = pnand %p111, %p112
    %p114 = pneg %p113
    // Predicated region
    $region9: #{double_conv.5} parent=5 // pred_check
      _
    $region10: #{double_conv.5} parent=5 // pred_check_branch
      %116 = sbr.rel (%p113) target = $region12
    $region11: #{double_conv.5} parent=5 // pred_region
      %s117 = ssub.s32 %s9, 1
      // Predicated region
      $region13: #{double_conv.5} parent=11 // pred_check
        %p118 = pneg %p56
      $region14: #{double_conv.5} parent=11 // pred_check_branch
        %120 = sbr.rel (%p118) target = $region16
      $region15: #{double_conv.5} parent=11 // pred_region
        _
      $region16: #{double_conv.5} parent=11 // pred_fallthru
        _
      // Predicated region
      $region17: #{double_conv.5} parent=11 // pred_check
        %p121 = pneg %p77
      $region18: #{double_conv.5} parent=11 // pred_check_branch
        %123 = sbr.rel (%p121) target = $region20
      $region19: #{double_conv.5} parent=11 // pred_region
        _
      $region20: #{double_conv.5} parent=11 // pred_fallthru
        _
    $region12: #{double_conv.5} parent=5 // pred_fallthru
      _
    %p124 = scmp.lt.s32.totalorder %s9, 2
    // Predicated region
    $region21: #{double_conv.5} parent=5 // pred_check
      %p125 = pneg %p124
    $region22: #{double_conv.5} parent=5 // pred_check_branch
      %127 = sbr.rel (%p125) target = $region24
    $region23: #{double_conv.5} parent=5 // pred_region
      // Predicated region
      $region25: #{double_conv.5} parent=23 // pred_check
        %p128 = pneg %p29
      $region26: #{double_conv.5} parent=23 // pred_check_branch
        %130 = sbr.rel (%p128) target = $region28
      $region27: #{double_conv.5} parent=23 // pred_region
        %s131 = smul.u32 32, %s9
        %p132 = scmp.lt.s32.totalorder %s131, 63
        %s133 = scalar_select %p132, %s131, 63
        %s134 = smul.addr %s133, 8
        %s135 = scalar_lea.vmem %s0, %s134
        %s136 = smul.u32 32, %s9
      $region28: #{double_conv.5} parent=23 // pred_fallthru
        _
    $region24: #{double_conv.5} parent=5 // pred_fallthru
      _
    %p137 = scmp.le.s32.totalorder 1, %s9
    %p138 = scmp.lt.s32.totalorder %s9, 3
    %p139 = pnand %p137, %p138
    %p140 = pneg %p139
    // Predicated region
    $region29: #{double_conv.5} parent=5 // pred_check
      _
    $region30: #{double_conv.5} parent=5 // pred_check_branch
      %142 = sbr.rel (%p139) target = $region32
    $region31: #{double_conv.5} parent=5 // pred_region
      %s143 = ssub.s32 %s9, 1
      %s144 = smul.u32 32, %s14
      %p145 = scmp.lt.s32.totalorder %s144, 63
      %s146 = scalar_select %p145, %s144, 63
      %s147 = smul.addr %s146, 8
      %s148 = scalar_lea.vmem %s0, %s147
      %p149 = pneg %p35
      %p150 = pneg %p32
      %p151 = pneg %p56
      %p152 = pneg %p53
      %p153 = pneg %p77
      %p154 = pneg %p74
      %p155 = pneg %p103
      %p156 = pneg %p100
      %s157 = smul.u32 32, %s14
      %p158 = scmp.lt.s32.totalorder %s157, 63
      %s159 = scalar_select %p158, %s157, 63
      %s160 = smul.addr %s159, 8
      %s161 = scalar_lea.vmem %s3, %s160
      %s162 = smul.u32 32, %s14
      %p163 = scmp.lt.s32.totalorder %s162, 63
      %s164 = scalar_select %p163, %s162, 63
      %s165 = smul.addr %s164, 8
      %s166 = scalar_lea.vmem %s0, %s165
      %s167 = smul.u32 32, %s14
      %s168 = smul.u32 32, %s14
      %p169 = scmp.lt.s32.totalorder %s168, 63
      %s170 = scalar_select %p169, %s168, 63
      %s171 = smul.addr %s170, 8
      %s172 = scalar_lea.vmem %s3, %s171
      %s173 = smul.u32 32, %s14
      %v174 = vld [vmem:[%s166] sm:$0xff]
      %v175 = vld [vmem:[%s166 + $0x8] sm:$0xff]
      %v176 = vld [vmem:[%s166 + $0x10] sm:$0xff]
      %v177 = vld [vmem:[%s166 + $0x18] sm:$0xff]
      %v178 = vld [vmem:[%s166 + $0x20] sm:$0xff]
      %v179 = vld [vmem:[%s166 + $0x28] sm:$0xff]
      %v180 = vld [vmem:[%s166 + $0x30] sm:$0xff]
      %v181 = vld [vmem:[%s166 + $0x38] sm:$0xff]
      %v182 = vld [vmem:[%s166 + $0x40] sm:$0xff]
      %v183 = vld [vmem:[%s166 + $0x48] sm:$0xff]
      %v184 = vld [vmem:[%s166 + $0x50] sm:$0xff]
      %v185 = vld [vmem:[%s166 + $0x58] sm:$0xff]
      %v186 = vld [vmem:[%s166 + $0x60] sm:$0xff]
      %v187 = vld [vmem:[%s166 + $0x68] sm:$0xff]
      %v188 = vld [vmem:[%s166 + $0x70] sm:$0xff]
      %v189 = vld [vmem:[%s166 + $0x78] sm:$0xff]
      %v190 = vld [vmem:[%s166 + $0x80] sm:$0xff]
      %v191 = vld [vmem:[%s166 + $0x88] sm:$0xff]
      %v192 = vld [vmem:[%s166 + $0x90] sm:$0xff]
      %v193 = vld [vmem:[%s166 + $0x98] sm:$0xff]
      %v194 = vld [vmem:[%s166 + $0xa0] sm:$0xff]
      %v195 = vld [vmem:[%s166 + $0xa8] sm:$0xff]
      %v196 = vld [vmem:[%s166 + $0xb0] sm:$0xff]
      %v197 = vld [vmem:[%s166 + $0xb8] sm:$0xff]
      %v198 = vld [vmem:[%s166 + $0xc0] sm:$0xff]
      %v199 = vld [vmem:[%s166 + $0xc8] sm:$0xff]
      %v200 = vld [vmem:[%s166 + $0xd0] sm:$0xff]
      %v201 = vld [vmem:[%s166 + $0xd8] sm:$0xff]
      %v202 = vld [vmem:[%s166 + $0xe0] sm:$0xff]
      %v203 = vld [vmem:[%s166 + $0xe8] sm:$0xff]
      %v204 = vld [vmem:[%s166 + $0xf0] sm:$0xff]
      %v205 = vld [vmem:[%s166 + $0xf8] sm:$0xff]
      %v206 = vld [vmem:[%s1] sm:$0x1]
      %v208 = vlaneseq
      %v209 = vshrl.u32 %v208, 7
      %v210 = vsub.s32 0, %v209
      %v211 = vrot.slane %v206, %v210
      %v213 = vmul.f32 %v174, %v211
      %v214 = vmul.f32 %v175, %v211
      %v215 = vmul.f32 %v176, %v211
      %v216 = vmul.f32 %v177, %v211
      %v217 = vmul.f32 %v178, %v211
      %v218 = vmul.f32 %v179, %v211
      %v219 = vmul.f32 %v180, %v211
      %v220 = vmul.f32 %v181, %v211
      %v221 = vmul.f32 %v182, %v211
      %v222 = vmul.f32 %v183, %v211
      %v223 = vmul.f32 %v184, %v211
      %v224 = vmul.f32 %v185, %v211
      %v225 = vmul.f32 %v186, %v211
      %v226 = vmul.f32 %v187, %v211
      %v227 = vmul.f32 %v188, %v211
      %v228 = vmul.f32 %v189, %v211
      %v229 = vmul.f32 %v190, %v211
      %v230 = vmul.f32 %v191, %v211
      %v231 = vmul.f32 %v192, %v211
      %v232 = vmul.f32 %v193, %v211
      %v233 = vmul.f32 %v194, %v211
      %v234 = vmul.f32 %v195, %v211
      %v235 = vmul.f32 %v196, %v211
      %v236 = vmul.f32 %v197, %v211
      %v237 = vmul.f32 %v198, %v211
      %v238 = vmul.f32 %v199, %v211
      %v239 = vmul.f32 %v200, %v211
      %v240 = vmul.f32 %v201, %v211
      %v241 = vmul.f32 %v202, %v211
      %v242 = vmul.f32 %v203, %v211
      %v243 = vmul.f32 %v204, %v211
      %v244 = vmul.f32 %v205, %v211
      %v245 = vld [vmem:[%s2] sm:$0x1]
      %v247 = vlaneseq
      %v248 = vshrl.u32 %v247, 7
      %v249 = vsub.s32 0, %v248
      %v250 = vrot.slane %v245, %v249
      %v252 = vadd.f32 %v213, %v250
      %v253 = vadd.f32 %v214, %v250
      %v254 = vadd.f32 %v215, %v250
      %v255 = vadd.f32 %v216, %v250
      %v256 = vadd.f32 %v217, %v250
      %v257 = vadd.f32 %v218, %v250
      %v258 = vadd.f32 %v219, %v250
      %v259 = vadd.f32 %v220, %v250
      %v260 = vadd.f32 %v221, %v250
      %v261 = vadd.f32 %v222, %v250
      %v262 = vadd.f32 %v223, %v250
      %v263 = vadd.f32 %v224, %v250
      %v264 = vadd.f32 %v225, %v250
      %v265 = vadd.f32 %v226, %v250
      %v266 = vadd.f32 %v227, %v250
      %v267 = vadd.f32 %v228, %v250
      %v268 = vadd.f32 %v229, %v250
      %v269 = vadd.f32 %v230, %v250
      %v270 = vadd.f32 %v231, %v250
      %v271 = vadd.f32 %v232, %v250
      %v272 = vadd.f32 %v233, %v250
      %v273 = vadd.f32 %v234, %v250
      %v274 = vadd.f32 %v235, %v250
      %v275 = vadd.f32 %v236, %v250
      %v276 = vadd.f32 %v237, %v250
      %v277 = vadd.f32 %v238, %v250
      %v278 = vadd.f32 %v239, %v250
      %v279 = vadd.f32 %v240, %v250
      %v280 = vadd.f32 %v241, %v250
      %v281 = vadd.f32 %v242, %v250
      %v282 = vadd.f32 %v243, %v250
      %v283 = vadd.f32 %v244, %v250
      %v284 = vmax.f32 %v252, 0.0
      %v285 = vmax.f32 %v253, 0.0
      %v286 = vmax.f32 %v254, 0.0
      %v287 = vmax.f32 %v255, 0.0
      %v288 = vmax.f32 %v256, 0.0
      %v289 = vmax.f32 %v257, 0.0
      %v290 = vmax.f32 %v258, 0.0
      %v291 = vmax.f32 %v259, 0.0
      %v292 = vmax.f32 %v260, 0.0
      %v293 = vmax.f32 %v261, 0.0
      %v294 = vmax.f32 %v262, 0.0
      %v295 = vmax.f32 %v263, 0.0
      %v296 = vmax.f32 %v264, 0.0
      %v297 = vmax.f32 %v265, 0.0
      %v298 = vmax.f32 %v266, 0.0
      %v299 = vmax.f32 %v267, 0.0
      %v300 = vmax.f32 %v268, 0.0
      %v301 = vmax.f32 %v269, 0.0
      %v302 = vmax.f32 %v270, 0.0
      %v303 = vmax.f32 %v271, 0.0
      %v304 = vmax.f32 %v272, 0.0
      %v305 = vmax.f32 %v273, 0.0
      %v306 = vmax.f32 %v274, 0.0
      %v307 = vmax.f32 %v275, 0.0
      %v308 = vmax.f32 %v276, 0.0
      %v309 = vmax.f32 %v277, 0.0
      %v310 = vmax.f32 %v278, 0.0
      %v311 = vmax.f32 %v279, 0.0
      %v312 = vmax.f32 %v280, 0.0
      %v313 = vmax.f32 %v281, 0.0
      %v314 = vmax.f32 %v282, 0.0
      %v315 = vmax.f32 %v283, 0.0
      %316 = vst [vmem:[%s172] sm:$0xff] %v284
      %317 = vst [vmem:[%s172 + $0x8] sm:$0xff] %v285
      %318 = vst [vmem:[%s172 + $0x10] sm:$0xff] %v286
      %319 = vst [vmem:[%s172 + $0x18] sm:$0xff] %v287
      %320 = vst [vmem:[%s172 + $0x20] sm:$0xff] %v288
      %321 = vst [vmem:[%s172 + $0x28] sm:$0xff] %v289
      %322 = vst [vmem:[%s172 + $0x30] sm:$0xff] %v290
      %323 = vst [vmem:[%s172 + $0x38] sm:$0xff] %v291
      %324 = vst [vmem:[%s172 + $0x40] sm:$0xff] %v292
      %325 = vst [vmem:[%s172 + $0x48] sm:$0xff] %v293
      %326 = vst [vmem:[%s172 + $0x50] sm:$0xff] %v294
      %327 = vst [vmem:[%s172 + $0x58] sm:$0xff] %v295
      %328 = vst [vmem:[%s172 + $0x60] sm:$0xff] %v296
      %329 = vst [vmem:[%s172 + $0x68] sm:$0xff] %v297
      %330 = vst [vmem:[%s172 + $0x70] sm:$0xff] %v298
      %331 = vst [vmem:[%s172 + $0x78] sm:$0xff] %v299
      %332 = vst [vmem:[%s172 + $0x80] sm:$0xff] %v300
      %333 = vst [vmem:[%s172 + $0x88] sm:$0xff] %v301
      %334 = vst [vmem:[%s172 + $0x90] sm:$0xff] %v302
      %335 = vst [vmem:[%s172 + $0x98] sm:$0xff] %v303
      %336 = vst [vmem:[%s172 + $0xa0] sm:$0xff] %v304
      %337 = vst [vmem:[%s172 + $0xa8] sm:$0xff] %v305
      %338 = vst [vmem:[%s172 + $0xb0] sm:$0xff] %v306
      %339 = vst [vmem:[%s172 + $0xb8] sm:$0xff] %v307
      %340 = vst [vmem:[%s172 + $0xc0] sm:$0xff] %v308
      %341 = vst [vmem:[%s172 + $0xc8] sm:$0xff] %v309
      %342 = vst [vmem:[%s172 + $0xd0] sm:$0xff] %v310
      %343 = vst [vmem:[%s172 + $0xd8] sm:$0xff] %v311
      %344 = vst [vmem:[%s172 + $0xe0] sm:$0xff] %v312
      %345 = vst [vmem:[%s172 + $0xe8] sm:$0xff] %v313
      %346 = vst [vmem:[%s172 + $0xf0] sm:$0xff] %v314
      %347 = vst [vmem:[%s172 + $0xf8] sm:$0xff] %v315
      %s348 = smul.u32 32, %s14
      %p349 = scmp.lt.s32.totalorder %s348, 63
      %s350 = scalar_select %p349, %s348, 63
      %s351 = smul.addr %s350, 8
      %s352 = scalar_lea.vmem %s3, %s351
      // Predicated region
      $region33: #{double_conv.5} parent=31 // pred_check
        %p353 = pneg %p100
      $region34: #{double_conv.5} parent=31 // pred_check_branch
        %355 = sbr.rel (%p353) target = $region36
      $region35: #{double_conv.5} parent=31 // pred_region
        %s356 = smul.u32 32, %s14
      $region36: #{double_conv.5} parent=31 // pred_fallthru
        _
    $region32: #{double_conv.5} parent=5 // pred_fallthru
      _
    %p357 = scmp.le.s32.totalorder 2, %s9
    // Predicated region
    $region37: #{double_conv.5} parent=5 // pred_check
      %p358 = pneg %p357
    $region38: #{double_conv.5} parent=5 // pred_check_branch
      %360 = sbr.rel (%p358) target = $region40
    $region39: #{double_conv.5} parent=5 // pred_region
      %s361 = ssub.s32 %s9, 2
      // Predicated region
      $region41: #{double_conv.5} parent=39 // pred_check
        %p362 = pneg %p106
      $region42: #{double_conv.5} parent=39 // pred_check_branch
        %364 = sbr.rel (%p362) target = $region44
      $region43: #{double_conv.5} parent=39 // pred_region
        %s365 = smul.u32 32, %s15
        %p366 = scmp.lt.s32.totalorder %s365, 63
        %s367 = scalar_select %p366, %s365, 63
        %s368 = smul.addr %s367, 8
        %s369 = scalar_lea.vmem %s3, %s368
      $region44: #{double_conv.5} parent=39 // pred_fallthru
        _
    $region40: #{double_conv.5} parent=5 // pred_fallthru
      _
  $region6: #{double_conv.5} parent=0 // loop_footer
    %s13 = sadd.s32 1, %s9
  $region7: #{double_conv.5} parent=0 // loop_footer_branch
    %8 = sbr.rel target = $region3
  $region8: #{double_conv.5} parent=0 // loop_exit
    _

// kernel: double_conv.4
$region0: #{double_conv.4}
  #allocation0 [shape = 'u32[]', space=smem, size = 0x4, offset = 0x4, fixed_abs, tag = 'smem constant byte address 0x4 - core index']
  #allocation1 [shape = 'u32[144,128]{1,0:T(1,128)}', space=vmem, size = 0x12000, scoped, tag = 'internal scratch']
  %s0 = inlined_call_operand.vmem [shape: f32[32,18,4], index: 0, kind: input, shape index: {}]
  %s1 = inlined_call_operand.vmem [shape: f32[32,18,4], index: 1, kind: input, shape index: {}]
  %s2 = inlined_call_operand.vmem [shape: f32[32,18,4], index: 2, kind: input, shape index: {}]
  %s3 = inlined_call_operand.vmem [shape: f32[9,4,128], index: 3, kind: input, shape index: {}]
  %s4 = inlined_call_operand.vmem [shape: f32[512,128], index: 4, kind: output, shape index: {0}]
  %s5 = inlined_call_operand.vmem [shape: f32[2,2,128], index: 5, kind: output, shape index: {1}]
  %6 = xla_tuple %s4, %s5
  %s7 = sld [smem:[#allocation0]]
  $region57: #{double_conv.4} parent=0
    _
  %s9 = ssub.s32 1, %s7
  %s10 = scalar_select 0, %s9, %s7
  loop: start=0, step=1, limit=4
  $region2: #{double_conv.4} parent=0 // loop_pre_header
    _
  $region3: #{double_conv.4} parent=0 // loop_header
    %s12 = sphi 0, %s16
    %p13 = scmp.ge.s32.totalorder %s12, 4
    %s22 = sphi 0, %s24
    %s25 = sphi 0, %s22
    %s26 = sphi 0, %s25
    %s42 = sphi 0, %s26
    %s48 = sphi 0, %s50
    %s51 = sphi 0, %s48
    %s52 = sphi 0, %s51
    %s68 = sphi 0, %s52
    %s74 = sphi 0, %s76
    %s77 = sphi 0, %s74
    %s78 = sphi 0, %s77
    %s94 = sphi 0, %s78
    %s98 = sphi 0, %s98
    %s100 = sphi 0, %s98
    %s101 = sphi 0, %s100
    %s115 = sphi 0, %s101
    %s121 = sphi 0, %s123
    %s124 = sphi 0, %s121
    %s125 = sphi 0, %s124
    %s141 = sphi 0, %s125
    %s147 = sphi 0, %s149
    %s150 = sphi 0, %s147
    %s151 = sphi 0, %s150
    %s167 = sphi 0, %s151
  $region4: #{double_conv.4} parent=0 // loop_header_branch
    %15 = sbr.rel (%p13) target = $region8
  $region5: #{double_conv.4} parent=0 // loop_body
    %s17 = ssub.s32 %s12, 1
    %s18 = ssub.s32 %s12, 2
    %s19 = sadd.s32 %s12, 1
    %s20 = ssub.s32 %s12, %s19
    %p21 = scmp.eq.s32.totalorder %s20, 0
    %s23 = sadd.s32 %s22, 1
    %s24 = scalar_select %p21, %s22, %s23
    %p27 = pneg %p21
    %p28 = scmp.eq.s32.totalorder %s12, 1
    %p29 = por %p27, %p28
    %p30 = scmp.ne.s32.totalorder %s22, %s25
    %p31 = scmp.eq.s32.totalorder %s12, 0
    %p32 = por %p30, %p31
    %p33 = scmp.ne.s32.totalorder %s22, %s25
    %p34 = scmp.eq.s32.totalorder %s17, 1
    %p35 = por %p33, %p34
    %p36 = scmp.ne.s32.totalorder %s25, %s26
    %p37 = scmp.eq.s32.totalorder %s17, 0
    %p38 = por %p36, %p37
    %p39 = scmp.ne.s32.totalorder %s25, %s26
    %p40 = scmp.eq.s32.totalorder %s18, 1
    %p41 = por %p39, %p40
    %p43 = scmp.ne.s32.totalorder %s26, %s42
    %p44 = scmp.eq.s32.totalorder %s18, 0
    %p45 = por %p43, %p44
    %s46 = ssub.s32 %s12, %s19
    %p47 = scmp.eq.s32.totalorder %s46, 0
    %s49 = sadd.s32 %s48, 1
    %s50 = scalar_select %p47, %s48, %s49
    %p53 = pneg %p47
    %p54 = scmp.eq.s32.totalorder %s12, 1
    %p55 = por %p53, %p54
    %p56 = scmp.ne.s32.totalorder %s48, %s51
    %p57 = scmp.eq.s32.totalorder %s12, 0
    %p58 = por %p56, %p57
    %p59 = scmp.ne.s32.totalorder %s48, %s51
    %p60 = scmp.eq.s32.totalorder %s17, 1
    %p61 = por %p59, %p60
    %p62 = scmp.ne.s32.totalorder %s51, %s52
    %p63 = scmp.eq.s32.totalorder %s17, 0
    %p64 = por %p62, %p63
    %p65 = scmp.ne.s32.totalorder %s51, %s52
    %p66 = scmp.eq.s32.totalorder %s18, 1
    %p67 = por %p65, %p66
    %p69 = scmp.ne.s32.totalorder %s52, %s68
    %p70 = scmp.eq.s32.totalorder %s18, 0
    %p71 = por %p69, %p70
    %s72 = ssub.s32 %s12, %s19
    %p73 = scmp.eq.s32.totalorder %s72, 0
    %s75 = sadd.s32 %s74, 1
    %s76 = scalar_select %p73, %s74, %s75
    %p79 = pneg %p73
    %p80 = scmp.eq.s32.totalorder %s12, 1
    %p81 = por %p79, %p80
    %p82 = scmp.ne.s32.totalorder %s74, %s77
    %p83 = scmp.eq.s32.totalorder %s12, 0
    %p84 = por %p82, %p83
    %p85 = scmp.ne.s32.totalorder %s74, %s77
    %p86 = scmp.eq.s32.totalorder %s17, 1
    %p87 = por %p85, %p86
    %p88 = scmp.ne.s32.totalorder %s77, %s78
    %p89 = scmp.eq.s32.totalorder %s17, 0
    %p90 = por %p88, %p89
    %p91 = scmp.ne.s32.totalorder %s77, %s78
    %p92 = scmp.eq.s32.totalorder %s18, 1
    %p93 = por %p91, %p92
    %p95 = scmp.ne.s32.totalorder %s78, %s94
    %p96 = scmp.eq.s32.totalorder %s18, 0
    %p97 = por %p95, %p96
    %s99 = sadd.s32 %s98, 1
    %p102 = scmp.eq.s32.totalorder %s12, 1
    %p103 = scmp.ne.s32.totalorder %s98, %s100
    %p104 = scmp.eq.s32.totalorder %s12, 0
    %p105 = por %p103, %p104
    %p106 = scmp.ne.s32.totalorder %s98, %s100
    %p107 = scmp.eq.s32.totalorder %s17, 1
    %p108 = por %p106, %p107
    %p109 = scmp.ne.s32.totalorder %s100, %s101
    %p110 = scmp.eq.s32.totalorder %s17, 0
    %p111 = por %p109, %p110
    %p112 = scmp.ne.s32.totalorder %s100, %s101
    %p113 = scmp.eq.s32.totalorder %s18, 1
    %p114 = por %p112, %p113
    %p116 = scmp.ne.s32.totalorder %s101, %s115
    %p117 = scmp.eq.s32.totalorder %s18, 0
    %p118 = por %p116, %p117
    %s119 = ssub.s32 %s12, %s19
    %p120 = scmp.eq.s32.totalorder %s119, 0
    %s122 = sadd.s32 %s121, 1
    %s123 = scalar_select %p120, %s121, %s122
    %p126 = pneg %p120
    %p127 = scmp.eq.s32.totalorder %s12, 1
    %p128 = por %p126, %p127
    %p129 = scmp.ne.s32.totalorder %s121, %s124
    %p130 = scmp.eq.s32.totalorder %s12, 0
    %p131 = por %p129, %p130
    %p132 = scmp.ne.s32.totalorder %s121, %s124
    %p133 = scmp.eq.s32.totalorder %s17, 1
    %p134 = por %p132, %p133
    %p135 = scmp.ne.s32.totalorder %s124, %s125
    %p136 = scmp.eq.s32.totalorder %s17, 0
    %p137 = por %p135, %p136
    %p138 = scmp.ne.s32.totalorder %s124, %s125
    %p139 = scmp.eq.s32.totalorder %s18, 1
    %p140 = por %p138, %p139
    %p142 = scmp.ne.s32.totalorder %s125, %s141
    %p143 = scmp.eq.s32.totalorder %s18, 0
    %p144 = por %p142, %p143
    %s145 = ssub.s32 %s12, %s19
    %p146 = scmp.eq.s32.totalorder %s145, 0
    %s148 = sadd.s32 %s147, 1
    %s149 = scalar_select %p146, %s147, %s148
    %p152 = pneg %p146
    %p153 = scmp.eq.s32.totalorder %s12, 1
    %p154 = por %p152, %p153
    %p155 = scmp.ne.s32.totalorder %s147, %s150
    %p156 = scmp.eq.s32.totalorder %s12, 0
    %p157 = por %p155, %p156
    %p158 = scmp.ne.s32.totalorder %s147, %s150
    %p159 = scmp.eq.s32.totalorder %s17, 1
    %p160 = por %p158, %p159
    %p161 = scmp.ne.s32.totalorder %s150, %s151
    %p162 = scmp.eq.s32.totalorder %s17, 0
    %p163 = por %p161, %p162
    %p164 = scmp.ne.s32.totalorder %s150, %s151
    %p165 = scmp.eq.s32.totalorder %s18, 1
    %p166 = por %p164, %p165
    %p168 = scmp.ne.s32.totalorder %s151, %s167
    %p169 = scmp.eq.s32.totalorder %s18, 0
    %p170 = por %p168, %p169
    %p171 = scmp.le.s32.totalorder 1, %s12
    %p172 = scmp.lt.s32.totalorder %s12, 3
    %p173 = pnand %p171, %p172
    %p174 = pneg %p173
    // Predicated region
    $region9: #{double_conv.4} parent=5 // pred_check
      _
    $region10: #{double_conv.4} parent=5 // pred_check_branch
      %176 = sbr.rel (%p173) target = $region12
    $region11: #{double_conv.4} parent=5 // pred_region
      %s177 = ssub.s32 %s12, 1
      // Predicated region
      $region13: #{double_conv.4} parent=11 // pred_check
        %p178 = pneg %p111
      $region14: #{double_conv.4} parent=11 // pred_check_branch
        %180 = sbr.rel (%p178) target = $region16
      $region15: #{double_conv.4} parent=11 // pred_region
        _
      $region16: #{double_conv.4} parent=11 // pred_fallthru
        _
    $region12: #{double_conv.4} parent=5 // pred_fallthru
      _
    %p181 = scmp.lt.s32.totalorder %s12, 2
    // Predicated region
    $region17: #{double_conv.4} parent=5 // pred_check
      %p182 = pneg %p181
    $region18: #{double_conv.4} parent=5 // pred_check_branch
      %184 = sbr.rel (%p182) target = $region20
    $region19: #{double_conv.4} parent=5 // pred_region
      // Predicated region
      $region21: #{double_conv.4} parent=19 // pred_check
        %p185 = pneg %p32
      $region22: #{double_conv.4} parent=19 // pred_check_branch
        %187 = sbr.rel (%p185) target = $region24
      $region23: #{double_conv.4} parent=19 // pred_region
        %s188 = smul.u32 16, %s12
        %p189 = scmp.lt.s32.totalorder %s188, 31
        %s190 = scalar_select %p189, %s188, 31
        %s191 = smul.addr %s190, 3
        %s192 = smul.addr %s191, 8
        %s193 = scalar_lea.vmem %s0, %s192
        %s194 = smul.u32 16, %s12
      $region24: #{double_conv.4} parent=19 // pred_fallthru
        _
      // Predicated region
      $region25: #{double_conv.4} parent=19 // pred_check
        %p195 = pneg %p58
      $region26: #{double_conv.4} parent=19 // pred_check_branch
        %197 = sbr.rel (%p195) target = $region28
      $region27: #{double_conv.4} parent=19 // pred_region
        %s198 = smul.u32 16, %s12
        %p199 = scmp.lt.s32.totalorder %s198, 31
        %s200 = scalar_select %p199, %s198, 31
        %s201 = smul.addr %s200, 3
        %s202 = smul.addr %s201, 8
        %s203 = scalar_lea.vmem %s1, %s202
        %s204 = smul.u32 16, %s12
      $region28: #{double_conv.4} parent=19 // pred_fallthru
        _
      // Predicated region
      $region29: #{double_conv.4} parent=19 // pred_check
        %p205 = pneg %p84
      $region30: #{double_conv.4} parent=19 // pred_check_branch
        %207 = sbr.rel (%p205) target = $region32
      $region31: #{double_conv.4} parent=19 // pred_region
        %s208 = smul.u32 16, %s12
        %p209 = scmp.lt.s32.totalorder %s208, 31
        %s210 = scalar_select %p209, %s208, 31
        %s211 = smul.addr %s210, 3
        %s212 = smul.addr %s211, 8
        %s213 = scalar_lea.vmem %s2, %s212
        %s214 = smul.u32 16, %s12
      $region32: #{double_conv.4} parent=19 // pred_fallthru
        _
    $region20: #{double_conv.4} parent=5 // pred_fallthru
      _
    %p215 = scmp.le.s32.totalorder 1, %s12
    %p216 = scmp.lt.s32.totalorder %s12, 3
    %p217 = pnand %p215, %p216
    %p218 = pneg %p217
    // Predicated region
    $region33: #{double_conv.4} parent=5 // pred_check
      _
    $region34: #{double_conv.4} parent=5 // pred_check_branch
      %220 = sbr.rel (%p217) target = $region36
    $region35: #{double_conv.4} parent=5 // pred_region
      %s221 = ssub.s32 %s12, 1
      %s222 = smul.u32 16, %s17
      %p223 = scmp.lt.s32.totalorder %s222, 31
      %s224 = scalar_select %p223, %s222, 31
      %s225 = smul.addr %s224, 3
      %s226 = smul.addr %s225, 8
      %s227 = scalar_lea.vmem %s0, %s226
      %p228 = pneg %p38
      %p229 = pneg %p35
      %s230 = smul.u32 16, %s17
      %p231 = scmp.lt.s32.totalorder %s230, 31
      %s232 = scalar_select %p231, %s230, 31
      %s233 = smul.addr %s232, 3
      %s234 = smul.addr %s233, 8
      %s235 = scalar_lea.vmem %s1, %s234
      %p236 = pneg %p64
      %p237 = pneg %p61
      %s238 = smul.u32 16, %s17
      %p239 = scmp.lt.s32.totalorder %s238, 31
      %s240 = scalar_select %p239, %s238, 31
      %s241 = smul.addr %s240, 3
      %s242 = smul.addr %s241, 8
      %s243 = scalar_lea.vmem %s2, %s242
      %p244 = pneg %p90
      %p245 = pneg %p87
      %p246 = pneg %p111
      %p247 = pneg %p108
      %p248 = pneg %p137
      %p249 = pneg %p134
      %s250 = smul.u32 32, %s17
      %p251 = scmp.lt.s32.totalorder %s250, 63
      %s252 = scalar_select %p251, %s250, 63
      %s253 = smul.addr %s252, 8
      %s254 = scalar_lea.vmem %s4, %s253
      %p255 = pneg %p163
      %p256 = pneg %p160
      %p257 = scmp.lt.s32.totalorder %s17, 1
      %s258 = scalar_select %p257, %s17, 1
      %s259 = smul.addr %s258, 2
      %s260 = scalar_lea.vmem %s5, %s259
      %s261 = smul.u32 16, %s17
      %p262 = scmp.lt.s32.totalorder %s261, 31
      %s263 = scalar_select %p262, %s261, 31
      %s264 = smul.addr %s263, 3
      %s265 = smul.addr %s264, 8
      %s266 = scalar_lea.vmem %s0, %s265
      %s267 = smul.u32 16, %s17
      %s268 = smul.u32 16, %s17
      %p269 = scmp.lt.s32.totalorder %s268, 31
      %s270 = scalar_select %p269, %s268, 31
      %s271 = smul.addr %s270, 3
      %s272 = smul.addr %s271, 8
      %s273 = scalar_lea.vmem %s1, %s272
      %s274 = smul.u32 16, %s17
      %s275 = smul.u32 16, %s17
      %p276 = scmp.lt.s32.totalorder %s275, 31
      %s277 = scalar_select %p276, %s275, 31
      %s278 = smul.addr %s277, 3
      %s279 = smul.addr %s278, 8
      %s280 = scalar_lea.vmem %s2, %s279
      %s281 = smul.u32 16, %s17
      %s282 = smul.u32 32, %s17
      %p283 = scmp.lt.s32.totalorder %s282, 63
      %s284 = scalar_select %p283, %s282, 63
      %s285 = smul.addr %s284, 8
      %s286 = scalar_lea.vmem %s4, %s285
      %s287 = smul.u32 32, %s17
      %p288 = scmp.lt.s32.totalorder %s17, 1
      %s289 = scalar_select %p288, %s17, 1
      %s290 = smul.addr %s289, 2
      %s291 = scalar_lea.vmem %s5, %s290
      %v292 = vld [vmem:[%s266] sm:$0xff]
      %v293 = vld [vmem:[%s266 + $0x8] sm:$0xff]
      %v294 = vld [vmem:[%s266 + $0x18] sm:$0xff]
      %v295 = vld [vmem:[%s266 + $0x20] sm:$0xff]
      %v296 = vld [vmem:[%s266 + $0x30] sm:$0xff]
      %v297 = vld [vmem:[%s266 + $0x38] sm:$0xff]
      %v298 = vld [vmem:[%s266 + $0x48] sm:$0xff]
      %v299 = vld [vmem:[%s266 + $0x50] sm:$0xff]
      %v300 = vld [vmem:[%s266 + $0x60] sm:$0xff]
      %v301 = vld [vmem:[%s266 + $0x68] sm:$0xff]
      %v302 = vld [vmem:[%s266 + $0x78] sm:$0xff]
      %v303 = vld [vmem:[%s266 + $0x80] sm:$0xff]
      %v304 = vld [vmem:[%s266 + $0x90] sm:$0xff]
      %v305 = vld [vmem:[%s266 + $0x98] sm:$0xff]
      %v306 = vld [vmem:[%s266 + $0xa8] sm:$0xff]
      %v307 = vld [vmem:[%s266 + $0xb0] sm:$0xff]
      %v308 = vld [vmem:[%s266 + $0xc0] sm:$0xff]
      %v309 = vld [vmem:[%s266 + $0xc8] sm:$0xff]
      %v310 = vld [vmem:[%s266 + $0xd8] sm:$0xff]
      %v311 = vld [vmem:[%s266 + $0xe0] sm:$0xff]
      %v312 = vld [vmem:[%s266 + $0xf0] sm:$0xff]
      %v313 = vld [vmem:[%s266 + $0xf8] sm:$0xff]
      %v314 = vld [vmem:[%s266 + $0x108] sm:$0xff]
      %v315 = vld [vmem:[%s266 + $0x110] sm:$0xff]
      %v316 = vld [vmem:[%s266 + $0x120] sm:$0xff]
      %v317 = vld [vmem:[%s266 + $0x128] sm:$0xff]
      %v318 = vld [vmem:[%s266 + $0x138] sm:$0xff]
      %v319 = vld [vmem:[%s266 + $0x140] sm:$0xff]
      %v320 = vld [vmem:[%s266 + $0x150] sm:$0xff]
      %v321 = vld [vmem:[%s266 + $0x158] sm:$0xff]
      %v322 = vld [vmem:[%s266 + $0x168] sm:$0xff]
      %v323 = vld [vmem:[%s266 + $0x170] sm:$0xff]
      %v324 = vld [vmem:[%s3] sm:$0xf]
      %v325 = vld [vmem:[%s266 + $0x1] sm:$0xff]
      %v326 = vld [vmem:[%s266 + $0x9] sm:$0xff]
      %v327 = vld [vmem:[%s266 + $0x19] sm:$0xff]
      %v328 = vld [vmem:[%s266 + $0x21] sm:$0xff]
      %v329 = vld [vmem:[%s266 + $0x31] sm:$0xff]
      %v330 = vld [vmem:[%s266 + $0x39] sm:$0xff]
      %v331 = vld [vmem:[%s266 + $0x49] sm:$0xff]
      %v332 = vld [vmem:[%s266 + $0x51] sm:$0xff]
      %v333 = vld [vmem:[%s266 + $0x61] sm:$0xff]
      %v334 = vld [vmem:[%s266 + $0x69] sm:$0xff]
      %v335 = vld [vmem:[%s266 + $0x79] sm:$0xff]
      %v336 = vld [vmem:[%s266 + $0x81] sm:$0xff]
      %v337 = vld [vmem:[%s266 + $0x91] sm:$0xff]
      %v338 = vld [vmem:[%s266 + $0x99] sm:$0xff]
      %v339 = vld [vmem:[%s266 + $0xa9] sm:$0xff]
      %v340 = vld [vmem:[%s266 + $0xb1] sm:$0xff]
      %v341 = vld [vmem:[%s266 + $0xc1] sm:$0xff]
      %v342 = vld [vmem:[%s266 + $0xc9] sm:$0xff]
      %v343 = vld [vmem:[%s266 + $0xd9] sm:$0xff]
      %v344 = vld [vmem:[%s266 + $0xe1] sm:$0xff]
      %v345 = vld [vmem:[%s266 + $0xf1] sm:$0xff]
      %v346 = vld [vmem:[%s266 + $0xf9] sm:$0xff]
      %v347 = vld [vmem:[%s266 + $0x109] sm:$0xff]
      %v348 = vld [vmem:[%s266 + $0x111] sm:$0xff]
      %v349 = vld [vmem:[%s266 + $0x121] sm:$0xff]
      %v350 = vld [vmem:[%s266 + $0x129] sm:$0xff]
      %v351 = vld [vmem:[%s266 + $0x139] sm:$0xff]
      %v352 = vld [vmem:[%s266 + $0x141] sm:$0xff]
      %v353 = vld [vmem:[%s266 + $0x151] sm:$0xff]
      %v354 = vld [vmem:[%s266 + $0x159] sm:$0xff]
      %v355 = vld [vmem:[%s266 + $0x169] sm:$0xff]
      %v356 = vld [vmem:[%s266 + $0x171] sm:$0xff]
      %s357 = scalar_lea.vmem %s3, 4
      %v358 = vld [vmem:[%s357] sm:$0xf]
      %vm359 = vcmask 31744
      %v361 = vsel %vm359, %v325, 0
      %v364 = vsel %vm359, %v326, 0
      %v367 = vsel %vm359, %v327, 0
      %v370 = vsel %vm359, %v328, 0
      %v373 = vsel %vm359, %v329, 0
      %v376 = vsel %vm359, %v330, 0
      %v379 = vsel %vm359, %v331, 0
      %v382 = vsel %vm359, %v332, 0
      %v385 = vsel %vm359, %v333, 0
      %v388 = vsel %vm359, %v334, 0
      %v391 = vsel %vm359, %v335, 0
      %v394 = vsel %vm359, %v336, 0
      %v397 = vsel %vm359, %v337, 0
      %v400 = vsel %vm359, %v338, 0
      %v403 = vsel %vm359, %v339, 0
      %v406 = vsel %vm359, %v340, 0
      %v409 = vsel %vm359, %v341, 0
      %v412 = vsel %vm359, %v342, 0
      %v415 = vsel %vm359, %v343, 0
      %v418 = vsel %vm359, %v344, 0
      %v421 = vsel %vm359, %v345, 0
      %v424 = vsel %vm359, %v346, 0
      %v427 = vsel %vm359, %v347, 0
      %v430 = vsel %vm359, %v348, 0
      %v433 = vsel %vm359, %v349, 0
      %v436 = vsel %vm359, %v350, 0
      %v439 = vsel %vm359, %v351, 0
      %v442 = vsel %vm359, %v352, 0
      %v445 = vsel %vm359, %v353, 0
      %v448 = vsel %vm359, %v354, 0
      %v451 = vsel %vm359, %v355, 0
      %v454 = vsel %vm359, %v356, 0
      %vm456 = vcmask 1043456
      %v458 = vsel %vm456, %v358, 0
      %460 = vmatprep.subr.mxu0 0.0
      %461 = vmatpush1.msra.mxu0 %v458
      %462 = vmatprep.subr.mxu0 0.0
      %463 = vmatpush1.msra.mxu0 0.0
      %464 = vmatprep.subr.mxu0 0.0
      %465 = vmatpush1.msra.mxu0 0.0
      %466 = vmatprep.subr.mxu0 0.0
      %467 = vmatpush1.msra.mxu0 0.0
      %468 = vmatprep.subr.mxu0 0.0
      %469 = vmatpush1.msra.mxu0 0.0
      %470 = vmatprep.subr.mxu0 0.0
      %471 = vmatpush1.msra.mxu0 0.0
      %472 = vmatprep.subr.mxu0 0.0
      %473 = vmatpush1.msra.mxu0 0.0
      %474 = vmatprep.subr.mxu0 0.0
      %475 = vmatpush1.msra.mxu0 0.0
      %476 = vmatprep.subr.mxu0 0.0
      %477 = vmatpush1.msra.mxu0 0.0
      %478 = vmatprep.subr.mxu0 0.0
      %479 = vmatpush1.msra.mxu0 0.0
      %480 = vmatprep.subr.mxu0 0.0
      %481 = vmatpush1.msra.mxu0 0.0
      %482 = vmatprep.subr.mxu0 0.0
      %483 = vmatpush1.msra.mxu0 0.0
      %484 = vmatprep.subr.mxu0 0.0
      %485 = vmatpush1.msra.mxu0 0.0
      %486 = vmatprep.subr.mxu0 0.0
      %487 = vmatpush1.msra.mxu0 0.0
      %488 = vmatprep.subr.mxu0 0.0
      %489 = vmatpush1.msra.mxu0 0.0
      %490 = vmatprep.subr.mxu0 0.0
      %491 = vmatpush1.msra.mxu0 0.0
      %492 = vmatprep.subr.mxu0 0.0
      %493 = vmatpush1.msra.mxu0 0.0
      %494 = vmatprep.subr.mxu0 0.0
      %495 = vmatpush1.msra.mxu0 0.0
      %496 = vmatprep.subr.mxu0 0.0
      %497 = vmatpush1.msra.mxu0 0.0
      %498 = vmatprep.subr.mxu0 0.0
      %499 = vmatpush1.msra.mxu0 0.0
      %500 = vmatprep.subr.mxu0 0.0
      %501 = vmatpush1.msra.mxu0 0.0
      %502 = vmatprep.subr.mxu0 0.0
      %503 = vmatpush1.msra.mxu0 0.0
      %504 = vmatprep.subr.mxu0 0.0
      %505 = vmatpush1.msra.mxu0 0.0
      %506 = vmatprep.subr.mxu0 0.0
      %507 = vmatpush1.msra.mxu0 0.0
      %508 = vmatprep.subr.mxu0 0.0
      %509 = vmatpush1.msra.mxu0 0.0
      %510 = vmatprep.subr.mxu0 0.0
      %511 = vmatpush1.msra.mxu0 0.0
      %512 = vmatprep.subr.mxu0 0.0
      %513 = vmatpush1.msra.mxu0 0.0
      %514 = vmatprep.subr.mxu0 0.0
      %515 = vmatpush1.msra.mxu0 0.0
      %516 = vmatprep.subr.mxu0 0.0
      %517 = vmatpush1.msra.mxu0 0.0
      %518 = vmatprep.subr.mxu0 0.0
      %519 = vmatpush1.msra.mxu0 0.0
      %520 = vmatprep.subr.mxu0 0.0
      %521 = vmatpush1.msra.mxu0 0.0
      %522 = vmatprep.subr.mxu0 0.0
      %523 = vmatpush1.msra.mxu0 0.0
      %524 = vmatprep.mubr.f32.mxu0 0.0
      %525 = vmatmul.mubr.f32.gmra.mrb[0].mxu0 %v361
      %v526 = vpop.f32.mrb[0].mxu0
      %v527 = vadd.f32 0.0, %v526
      %v528 = vpop.f32.mrb[0].mxu0
      %529 = vmatprep.mubr.f32.mxu0 0.0
      %530 = vmatmul.mubr.f32.gmra.mrb[0].mxu0 %v364
      %v531 = vpop.f32.mrb[0].mxu0
      %v532 = vadd.f32 0.0, %v531
      %v533 = vpop.f32.mrb[0].mxu0
      %534 = vmatprep.mubr.f32.mxu0 0.0
      %535 = vmatmul.mubr.f32.gmra.mrb[0].mxu0 %v367
      %v536 = vpop.f32.mrb[0].mxu0
      %v537 = vadd.f32 0.0, %v536
      %v538 = vpop.f32.mrb[0].mxu0
      %539 = vmatprep.mubr.f32.mxu0 0.0
      %540 = vmatmul.mubr.f32.gmra.mrb[0].mxu0 %v370
      %v541 = vpop.f32.mrb[0].mxu0
      %v542 = vadd.f32 0.0, %v541
      %v543 = vpop.f32.mrb[0].mxu0
      %544 = vmatprep.mubr.f32.mxu0 0.0
      %545 = vmatmul.mubr.f32.gmra.mrb[0].mxu0 %v373
      %v546 = vpop.f32.mrb[0].mxu0
      %v547 = vadd.f32 0.0, %v546
      %v548 = vpop.f32.mrb[0].mxu0
      %549 = vmatprep.mubr.f32.mxu0 0.0
      %550 = vmatmul.mubr.f32.gmra.mrb[0].mxu0 %v376
      %v551 = vpop.f32.mrb[0].mxu0
      %v552 = vadd.f32 0.0, %v551
      %v553 = vpop.f32.mrb[0].mxu0
      %554 = vmatprep.mubr.f32.mxu0 0.0
      %555 = vmatmul.mubr.f32.gmra.mrb[0].mxu0 %v379
      %v556 = vpop.f32.mrb[0].mxu0
      %v557 = vadd.f32 0.0, %v556
      %v558 = vpop.f32.mrb[0].mxu0
      %559 = vmatprep.mubr.f32.mxu0 0.0
      %560 = vmatmul.mubr.f32.gmra.mrb[0].mxu0 %v382
      %v561 = vpop.f32.mrb[0].mxu0
      %v562 = vadd.f32 0.0, %v561
      %v563 = vpop.f32.mrb[0].mxu0
      %564 = vmatprep.mubr.f32.mxu0 0.0
      %565 = vmatmul.mubr.f32.gmra.mrb[0].mxu0 %v385
      %v566 = vpop.f32.mrb[0].mxu0
      %v567 = vadd.f32 0.0, %v566
      %v568 = vpop.f32.mrb[0].mxu0
      %569 = vmatprep.mubr.f32.mxu0 0.0
      %570 = vmatmul.mubr.f32.gmra.mrb[0].mxu0 %v388
      %v571 = vpop.f32.mrb[0].mxu0
      %v572 = vadd.f32 0.0, %v571
      %v573 = vpop.f32.mrb[0].mxu0
      %574 = vmatprep.mubr.f32.mxu0 0.0
      %575 = vmatmul.mubr.f32.gmra.mrb[0].mxu0 %v391
      %v576 = vpop.f32.mrb[0].mxu0
      %v577 = vadd.f32 0.0, %v576
      %v578 = vpop.f32.mrb[0].mxu0
      %579 = vmatprep.mubr.f32.mxu0 0.0
      %580 = vmatmul.mubr.f32.gmra.mrb[0].mxu0 %v394
      %v581 = vpop.f32.mrb[0].mxu0
      %v582 = vadd.f32 0.0, %v581
      %v583 = vpop.f32.mrb[0].mxu0
      %584 = vmatprep.mubr.f32.mxu0 0.0
      %585 = vmatmul.mubr.f32.gmra.mrb[0].mxu0 %v397
      %v586 = vpop.f32.mrb[0].mxu0
      %v587 = vadd.f32 0.0, %v586
      %v588 = vpop.f32.mrb[0].mxu0
      %589 = vmatprep.mubr.f32.mxu0 0.0
      %590 = vmatmul.mubr.f32.gmra.mrb[0].mxu0 %v400
      %v591 = vpop.f32.mrb[0].mxu0
      %v592 = vadd.f32 0.0, %v591
      %v593 = vpop.f32.mrb[0].mxu0
      %594 = vmatprep.mubr.f32.mxu0 0.0
      %595 = vmatmul.mubr.f32.gmra.mrb[0].mxu0 %v403
      %v596 = vpop.f32.mrb[0].mxu0
      %v597 = vadd.f32 0.0, %v596
      %v598 = vpop.f32.mrb[0].mxu0
      %599 = vmatprep.mubr.f32.mxu0 0.0
      %600 = vmatmul.mubr.f32.gmra.mrb[0].mxu0 %v406
      %v601 = vpop.f32.mrb[0].mxu0
      %v602 = vadd.f32 0.0, %v601
      %v603 = vpop.f32.mrb[0].mxu0
      %604 = vmatprep.mubr.f32.mxu0 0.0
      %605 = vmatmul.mubr.f32.gmra.mrb[0].mxu0 %v409
      %v606 = vpop.f32.mrb[0].mxu0
      %v607 = vadd.f32 0.0, %v606
      %v608 = vpop.f32.mrb[0].mxu0
      %609 = vmatprep.mubr.f32.mxu0 0.0
      %610 = vmatmul.mubr.f32.gmra.mrb[0].mxu0 %v412
      %v611 = vpop.f32.mrb[0].mxu0
      %v612 = vadd.f32 0.0, %v611
      %v613 = vpop.f32.mrb[0].mxu0
      %614 = vmatprep.mubr.f32.mxu0 0.0
      %615 = vmatmul.mubr.f32.gmra.mrb[0].mxu0 %v415
      %v616 = vpop.f32.mrb[0].mxu0
      %v617 = vadd.f32 0.0, %v616
      %v618 = vpop.f32.mrb[0].mxu0
      %619 = vmatprep.mubr.f32.mxu0 0.0
      %620 = vmatmul.mubr.f32.gmra.mrb[0].mxu0 %v418
      %v621 = vpop.f32.mrb[0].mxu0
      %v622 = vadd.f32 0.0, %v621
      %v623 = vpop.f32.mrb[0].mxu0
      %624 = vmatprep.mubr.f32.mxu0 0.0
      %625 = vmatmul.mubr.f32.gmra.mrb[0].mxu0 %v421
      %v626 = vpop.f32.mrb[0].mxu0
      %v627 = vadd.f32 0.0, %v626
      %v628 = vpop.f32.mrb[0].mxu0
      %629 = vmatprep.mubr.f32.mxu0 0.0
      %630 = vmatmul.mubr.f32.gmra.mrb[0].mxu0 %v424
      %v631 = vpop.f32.mrb[0].mxu0
      %v632 = vadd.f32 0.0, %v631
      %v633 = vpop.f32.mrb[0].mxu0
      %634 = vmatprep.mubr.f32.mxu0 0.0
      %635 = vmatmul.mubr.f32.gmra.mrb[0].mxu0 %v427
      %v636 = vpop.f32.mrb[0].mxu0
      %v637 = vadd.f32 0.0, %v636
      %v638 = vpop.f32.mrb[0].mxu0
      %639 = vmatprep.mubr.f32.mxu0 0.0
      %640 = vmatmul.mubr.f32.gmra.mrb[0].mxu0 %v430
      %v641 = vpop.f32.mrb[0].mxu0
      %v642 = vadd.f32 0.0, %v641
      %v643 = vpop.f32.mrb[0].mxu0
      %644 = vmatprep.mubr.f32.mxu0 0.0
      %645 = vmatmul.mubr.f32.gmra.mrb[0].mxu0 %v433
      %v646 = vpop.f32.mrb[0].mxu0
      %v647 = vadd.f32 0.0, %v646
      %v648 = vpop.f32.mrb[0].mxu0
      %649 = vmatprep.mubr.f32.mxu0 0.0
      %650 = vmatmul.mubr.f32.gmra.mrb[0].mxu0 %v436
      %v651 = vpop.f32.mrb[0].mxu0
      %v652 = vadd.f32 0.0, %v651
      %v653 = vpop.f32.mrb[0].mxu0
      %654 = vmatprep.mubr.f32.mxu0 0.0
      %655 = vmatmul.mubr.f32.gmra.mrb[0].mxu0 %v439
      %v656 = vpop.f32.mrb[0].mxu0
      %v657 = vadd.f32 0.0, %v656
      %v658 = vpop.f32.mrb[0].mxu0
      %659 = vmatprep.mubr.f32.mxu0 0.0
      %660 = vmatmul.mubr.f32.gmra.mrb[0].mxu0 %v442
      %v661 = vpop.f32.mrb[0].mxu0
      %v662 = vadd.f32 0.0, %v661
      %v663 = vpop.f32.mrb[0].mxu0
      %664 = vmatprep.mubr.f32.mxu0 0.0
      %665 = vmatmul.mubr.f32.gmra.mrb[0].mxu0 %v445
      %v666 = vpop.f32.mrb[0].mxu0
      %v667 = vadd.f32 0.0, %v666
      %v668 = vpop.f32.mrb[0].mxu0
      %669 = vmatprep.mubr.f32.mxu0 0.0
      %670 = vmatmul.mubr.f32.gmra.mrb[0].mxu0 %v448
      %v671 = vpop.f32.mrb[0].mxu0
      %v672 = vadd.f32 0.0, %v671
      %v673 = vpop.f32.mrb[0].mxu0
      %674 = vmatprep.mubr.f32.mxu0 0.0
      %675 = vmatmul.mubr.f32.gmra.mrb[0].mxu0 %v451
      %v676 = vpop.f32.mrb[0].mxu0
      %v677 = vadd.f32 0.0, %v676
      %v678 = vpop.f32.mrb[0].mxu0
      %679 = vmatprep.mubr.f32.mxu0 0.0
      %680 = vmatmul.mubr.f32.gmra.mrb[0].mxu0 %v454
      %v681 = vpop.f32.mrb[0].mxu0
      %v682 = vadd.f32 0.0, %v681
      %v683 = vpop.f32.mrb[0].mxu0
      %684 = vdwg.mxu0
      %v686 = vsel %vm359, %v292, 0
      %v689 = vsel %vm359, %v293, 0
      %v692 = vsel %vm359, %v294, 0
      %v695 = vsel %vm359, %v295, 0
      %v698 = vsel %vm359, %v296, 0
      %v701 = vsel %vm359, %v297, 0
      %v704 = vsel %vm359, %v298, 0
      %v707 = vsel %vm359, %v299, 0
      %v710 = vsel %vm359, %v300, 0
      %v713 = vsel %vm359, %v301, 0
      %v716 = vsel %vm359, %v302, 0
      %v719 = vsel %vm359, %v303, 0
      %v722 = vsel %vm359, %v304, 0
      %v725 = vsel %vm359, %v305, 0
      %v728 = vsel %vm359, %v306, 0
      %v731 = vsel %vm359, %v307, 0
      %v734 = vsel %vm359, %v308, 0
      %v737 = vsel %vm359, %v309, 0
      %v740 = vsel %vm359, %v310, 0
      %v743 = vsel %vm359, %v311, 0
      %v746 = vsel %vm359, %v312, 0
      %v749 = vsel %vm359, %v313, 0
      %v752 = vsel %vm359, %v314, 0
      %v755 = vsel %vm359, %v315, 0
      %v758 = vsel %vm359, %v316, 0
      %v761 = vsel %vm359, %v317, 0
      %v764 = vsel %vm359, %v318, 0
      %v767 = vsel %vm359, %v319, 0
      %v770 = vsel %vm359, %v320, 0
      %v773 = vsel %vm359, %v321, 0
      %v776 = vsel %vm359, %v322, 0
      %v779 = vsel %vm359, %v323, 0
      %v782 = vsel %vm456, %v324, 0
      %784 = vmatprep.subr.mxu0 0.0
      %785 = vmatpush1.msra.mxu0 %v782
      %786 = vmatprep.subr.mxu0 0.0
      %787 = vmatpush1.msra.mxu0 0.0
      %788 = vmatprep.subr.mxu0 0.0
      %789 = vmatpush1.msra.mxu0 0.0
      %790 = vmatprep.subr.mxu0 0.0
      %791 = vmatpush1.msra.mxu0 0.0
      %792 = vmatprep.subr.mxu0 0.0
      %793 = vmatpush1.msra.mxu0 0.0
      %794 = vmatprep.subr.mxu0 0.0
      %795 = vmatpush1.msra.mxu0 0.0
      %796 = vmatprep.subr.mxu0 0.0
      %797 = vmatpush1.msra.mxu0 0.0
      %798 = vmatprep.subr.mxu0 0.0
      %799 = vmatpush1.msra.mxu0 0.0
      %800 = vmatprep.subr.mxu0 0.0
      %801 = vmatpush1.msra.mxu0 0.0
      %802 = vmatprep.subr.mxu0 0.0
      %803 = vmatpush1.msra.mxu0 0.0
      %804 = vmatprep.subr.mxu0 0.0
      %805 = vmatpush1.msra.mxu0 0.0
      %806 = vmatprep.subr.mxu0 0.0
      %807 = vmatpush1.msra.mxu0 0.0
      %808 = vmatprep.subr.mxu0 0.0
      %809 = vmatpush1.msra.mxu0 0.0
      %810 = vmatprep.subr.mxu0 0.0
      %811 = vmatpush1.msra.mxu0 0.0
      %812 = vmatprep.subr.mxu0 0.0
      %813 = vmatpush1.msra.mxu0 0.0
      %814 = vmatprep.subr.mxu0 0.0
      %815 = vmatpush1.msra.mxu0 0.0
      %816 = vmatprep.subr.mxu0 0.0
      %817 = vmatpush1.msra.mxu0 0.0
      %818 = vmatprep.subr.mxu0 0.0
      %819 = vmatpush1.msra.mxu0 0.0
      %820 = vmatprep.subr.mxu0 0.0
      %821 = vmatpush1.msra.mxu0 0.0
      %822 = vmatprep.subr.mxu0 0.0
      %823 = vmatpush1.msra.mxu0 0.0
      %824 = vmatprep.subr.mxu0 0.0
      %825 = vmatpush1.msra.mxu0 0.0
      %826 = vmatprep.subr.mxu0 0.0
      %827 = vmatpush1.msra.mxu0 0.0
      %828 = vmatprep.subr.mxu0 0.0
      %829 = vmatpush1.msra.mxu0 0.0
      %830 = vmatprep.subr.mxu0 0.0
      %831 = vmatpush1.msra.mxu0 0.0
      %832 = vmatprep.subr.mxu0 0.0
      %833 = vmatpush1.msra.mxu0 0.0
      %834 = vmatprep.subr.mxu0 0.0
      %835 = vmatpush1.msra.mxu0 0.0
      %836 = vmatprep.subr.mxu0 0.0
      %837 = vmatpush1.msra.mxu0 0.0
      %838 = vmatprep.subr.mxu0 0.0
      %839 = vmatpush1.msra.mxu0 0.0
      %840 = vmatprep.subr.mxu0 0.0
      %841 = vmatpush1.msra.mxu0 0.0
      %842 = vmatprep.subr.mxu0 0.0
      %843 = vmatpush1.msra.mxu0 0.0
      %844 = vmatprep.subr.mxu0 0.0
      %845 = vmatpush1.msra.mxu0 0.0
      %846 = vmatprep.subr.mxu0 0.0
      %847 = vmatpush1.msra.mxu0 0.0
      %848 = vmatprep.mubr.f32.mxu0 0.0
      %849 = vmatmul.mubr.f32.gmra.mrb[0].mxu0 %v686
      %v850 = vpop.f32.mrb[0].mxu0
      %v851 = vadd.f32 %v527, %v850
      %v852 = vpop.f32.mrb[0].mxu0
      %853 = vmatprep.mubr.f32.mxu0 0.0
      %854 = vmatmul.mubr.f32.gmra.mrb[0].mxu0 %v689
      %v855 = vpop.f32.mrb[0].mxu0
      %v856 = vadd.f32 %v532, %v855
      %v857 = vpop.f32.mrb[0].mxu0
      %858 = vmatprep.mubr.f32.mxu0 0.0
      %859 = vmatmul.mubr.f32.gmra.mrb[0].mxu0 %v692
      %v860 = vpop.f32.mrb[0].mxu0
      %v861 = vadd.f32 %v537, %v860
      %v862 = vpop.f32.mrb[0].mxu0
      %863 = vmatprep.mubr.f32.mxu0 0.0
      %864 = vmatmul.mubr.f32.gmra.mrb[0].mxu0 %v695
      %v865 = vpop.f32.mrb[0].mxu0
      %v866 = vadd.f32 %v542, %v865
      %v867 = vpop.f32.mrb[0].mxu0
      %868 = vmatprep.mubr.f32.mxu0 0.0
      %869 = vmatmul.mubr.f32.gmra.mrb[0].mxu0 %v698
      %v870 = vpop.f32.mrb[0].mxu0
      %v871 = vadd.f32 %v547, %v870
      %v872 = vpop.f32.mrb[0].mxu0
      %873 = vmatprep.mubr.f32.mxu0 0.0
      %874 = vmatmul.mubr.f32.gmra.mrb[0].mxu0 %v701
      %v875 = vpop.f32.mrb[0].mxu0
      %v876 = vadd.f32 %v552, %v875
      %v877 = vpop.f32.mrb[0].mxu0
      %878 = vmatprep.mubr.f32.mxu0 0.0
      %879 = vmatmul.mubr.f32.gmra.mrb[0].mxu0 %v704
      %v880 = vpop.f32.mrb[0].mxu0
      %v881 = vadd.f32 %v557, %v880
      %v882 = vpop.f32.mrb[0].mxu0
      %883 = vmatprep.mubr.f32.mxu0 0.0
      %884 = vmatmul.mubr.f32.gmra.mrb[0].mxu0 %v707
      %v885 = vpop.f32.mrb[0].mxu0
      %v886 = vadd.f32 %v562, %v885
      %v887 = vpop.f32.mrb[0].mxu0
      %888 = vmatprep.mubr.f32.mxu0 0.0
      %889 = vmatmul.mubr.f32.gmra.mrb[0].mxu0 %v710
      %v890 = vpop.f32.mrb[0].mxu0
      %v891 = vadd.f32 %v567, %v890
      %v892 = vpop.f32.mrb[0].mxu0
      %893 = vmatprep.mubr.f32.mxu0 0.0
      %894 = vmatmul.mubr.f32.gmra.mrb[0].mxu0 %v713
      %v895 = vpop.f32.mrb[0].mxu0
      %v896 = vadd.f32 %v572, %v895
      %v897 = vpop.f32.mrb[0].mxu0
      %898 = vmatprep.mubr.f32.mxu0 0.0
      %899 = vmatmul.mubr.f32.gmra.mrb[0].mxu0 %v716
      %v900 = vpop.f32.mrb[0].mxu0
      %v901 = vadd.f32 %v577, %v900
      %v902 = vpop.f32.mrb[0].mxu0
      %903 = vmatprep.mubr.f32.mxu0 0.0
      %904 = vmatmul.mubr.f32.gmra.mrb[0].mxu0 %v719
      %v905 = vpop.f32.mrb[0].mxu0
      %v906 = vadd.f32 %v582, %v905
      %v907 = vpop.f32.mrb[0].mxu0
      %908 = vmatprep.mubr.f32.mxu0 0.0
      %909 = vmatmul.mubr.f32.gmra.mrb[0].mxu0 %v722
      %v910 = vpop.f32.mrb[0].mxu0
      %v911 = vadd.f32 %v587, %v910
      %v912 = vpop.f32.mrb[0].mxu0
      %913 = vmatprep.mubr.f32.mxu0 0.0
      %914 = vmatmul.mubr.f32.gmra.mrb[0].mxu0 %v725
      %v915 = vpop.f32.mrb[0].mxu0
      %v916 = vadd.f32 %v592, %v915
      %v917 = vpop.f32.mrb[0].mxu0
      %918 = vmatprep.mubr.f32.mxu0 0.0
      %919 = vmatmul.mubr.f32.gmra.mrb[0].mxu0 %v728
      %v920 = vpop.f32.mrb[0].mxu0
      %v921 = vadd.f32 %v597, %v920
      %v922 = vpop.f32.mrb[0].mxu0
      %923 = vmatprep.mubr.f32.mxu0 0.0
      %924 = vmatmul.mubr.f32.gmra.mrb[0].mxu0 %v731
      %v925 = vpop.f32.mrb[0].mxu0
      %v926 = vadd.f32 %v602, %v925
      %v927 = vpop.f32.mrb[0].mxu0
      %928 = vmatprep.mubr.f32.mxu0 0.0
      %929 = vmatmul.mubr.f32.gmra.mrb[0].mxu0 %v734
      %v930 = vpop.f32.mrb[0].mxu0
      %v931 = vadd.f32 %v607, %v930
      %v932 = vpop.f32.mrb[0].mxu0
      %933 = vmatprep.mubr.f32.mxu0 0.0
      %934 = vmatmul.mubr.f32.gmra.mrb[0].mxu0 %v737
      %v935 = vpop.f32.mrb[0].mxu0
      %v936 = vadd.f32 %v612, %v935
      %v937 = vpop.f32.mrb[0].mxu0
      %938 = vmatprep.mubr.f32.mxu0 0.0
      %939 = vmatmul.mubr.f32.gmra.mrb[0].mxu0 %v740
      %v940 = vpop.f32.mrb[0].mxu0
      %v941 = vadd.f32 %v617, %v940
      %v942 = vpop.f32.mrb[0].mxu0
      %943 = vmatprep.mubr.f32.mxu0 0.0
      %944 = vmatmul.mubr.f32.gmra.mrb[0].mxu0 %v743
      %v945 = vpop.f32.mrb[0].mxu0
      %v946 = vadd.f32 %v622, %v945
      %v947 = vpop.f32.mrb[0].mxu0
      %948 = vmatprep.mubr.f32.mxu0 0.0
      %949 = vmatmul.mubr.f32.gmra.mrb[0].mxu0 %v746
      %v950 = vpop.f32.mrb[0].mxu0
      %v951 = vadd.f32 %v627, %v950
      %v952 = vpop.f32.mrb[0].mxu0
      %953 = vmatprep.mubr.f32.mxu0 0.0
      %954 = vmatmul.mubr.f32.gmra.mrb[0].mxu0 %v749
      %v955 = vpop.f32.mrb[0].mxu0
      %v956 = vadd.f32 %v632, %v955
      %v957 = vpop.f32.mrb[0].mxu0
      %958 = vmatprep.mubr.f32.mxu0 0.0
      %959 = vmatmul.mubr.f32.gmra.mrb[0].mxu0 %v752
      %v960 = vpop.f32.mrb[0].mxu0
      %v961 = vadd.f32 %v637, %v960
      %v962 = vpop.f32.mrb[0].mxu0
      %963 = vmatprep.mubr.f32.mxu0 0.0
      %964 = vmatmul.mubr.f32.gmra.mrb[0].mxu0 %v755
      %v965 = vpop.f32.mrb[0].mxu0
      %v966 = vadd.f32 %v642, %v965
      %v967 = vpop.f32.mrb[0].mxu0
      %968 = vmatprep.mubr.f32.mxu0 0.0
      %969 = vmatmul.mubr.f32.gmra.mrb[0].mxu0 %v758
      %v970 = vpop.f32.mrb[0].mxu0
      %v971 = vadd.f32 %v647, %v970
      %v972 = vpop.f32.mrb[0].mxu0
      %973 = vmatprep.mubr.f32.mxu0 0.0
      %974 = vmatmul.mubr.f32.gmra.mrb[0].mxu0 %v761
      %v975 = vpop.f32.mrb[0].mxu0
      %v976 = vadd.f32 %v652, %v975
      %v977 = vpop.f32.mrb[0].mxu0
      %978 = vmatprep.mubr.f32.mxu0 0.0
      %979 = vmatmul.mubr.f32.gmra.mrb[0].mxu0 %v764
      %v980 = vpop.f32.mrb[0].mxu0
      %v981 = vadd.f32 %v657, %v980
      %v982 = vpop.f32.mrb[0].mxu0
      %983 = vmatprep.mubr.f32.mxu0 0.0
      %984 = vmatmul.mubr.f32.gmra.mrb[0].mxu0 %v767
      %v985 = vpop.f32.mrb[0].mxu0
      %v986 = vadd.f32 %v662, %v985
      %v987 = vpop.f32.mrb[0].mxu0
      %988 = vmatprep.mubr.f32.mxu0 0.0
      %989 = vmatmul.mubr.f32.gmra.mrb[0].mxu0 %v770
      %v990 = vpop.f32.mrb[0].mxu0
      %v991 = vadd.f32 %v667, %v990
      %v992 = vpop.f32.mrb[0].mxu0
      %993 = vmatprep.mubr.f32.mxu0 0.0
      %994 = vmatmul.mubr.f32.gmra.mrb[0].mxu0 %v773
      %v995 = vpop.f32.mrb[0].mxu0
      %v996 = vadd.f32 %v672, %v995
      %v997 = vpop.f32.mrb[0].mxu0
      %998 = vmatprep.mubr.f32.mxu0 0.0
      %999 = vmatmul.mubr.f32.gmra.mrb[0].mxu0 %v776
      %v1000 = vpop.f32.mrb[0].mxu0
      %v1001 = vadd.f32 %v677, %v1000
      %v1002 = vpop.f32.mrb[0].mxu0
      %1003 = vmatprep.mubr.f32.mxu0 0.0
      %1004 = vmatmul.mubr.f32.gmra.mrb[0].mxu0 %v779
      %v1005 = vpop.f32.mrb[0].mxu0
      %v1006 = vadd.f32 %v682, %v1005
      %v1007 = vpop.f32.mrb[0].mxu0
      %1008 = vdwg.mxu0
      %v1009 = vld [vmem:[%s266 + $0x2] sm:$0xff]
      %v1010 = vld [vmem:[%s266 + $0xa] sm:$0xff]
      %v1011 = vld [vmem:[%s266 + $0x1a] sm:$0xff]
      %v1012 = vld [vmem:[%s266 + $0x22] sm:$0xff]
      %v1013 = vld [vmem:[%s266 + $0x32] sm:$0xff]
      %v1014 = vld [vmem:[%s266 + $0x3a] sm:$0xff]
      %v1015 = vld [vmem:[%s266 + $0x4a] sm:$0xff]
      %v1016 = vld [vmem:[%s266 + $0x52] sm:$0xff]
      %v1017 = vld [vmem:[%s266 + $0x62] sm:$0xff]
      %v1018 = vld [vmem:[%s266 + $0x6a] sm:$0xff]
      %v1019 = vld [vmem:[%s266 + $0x7a] sm:$0xff]
      %v1020 = vld [vmem:[%s266 + $0x82] sm:$0xff]
      %v1021 = vld [vmem:[%s266 + $0x92] sm:$0xff]
      %v1022 = vld [vmem:[%s266 + $0x9a] sm:$0xff]
      %v1023 = vld [vmem:[%s266 + $0xaa] sm:$0xff]
      %v1024 = vld [vmem:[%s266 + $0xb2] sm:$0xff]
      %v1025 = vld [vmem:[%s266 + $0xc2] sm:$0xff]
      %v1026 = vld [vmem:[%s266 + $0xca] sm:$0xff]
      %v1027 = vld [vmem:[%s266 + $0xda] sm:$0xff]
      %v1028 = vld [vmem:[%s266 + $0xe2] sm:$0xff]
      %v1029 = vld [vmem:[%s266 + $0xf2] sm:$0xff]
      %v1030 = vld [vmem:[%s266 + $0xfa] sm:$0xff]
      %v1031 = vld [vmem:[%s266 + $0x10a] sm:$0xff]
      %v1032 = vld [vmem:[%s266 + $0x112] sm:$0xff]
      %v1033 = vld [vmem:[%s266 + $0x122] sm:$0xff]
      %v1034 = vld [vmem:[%s266 + $0x12a] sm:$0xff]
      %v1035 = vld [vmem:[%s266 + $0x13a] sm:$0xff]
      %v1036 = vld [vmem:[%s266 + $0x142] sm:$0xff]
      %v1037 = vld [vmem:[%s266 + $0x152] sm:$0xff]
      %v1038 = vld [vmem:[%s266 + $0x15a] sm:$0xff]
      %v1039 = vld [vmem:[%s266 + $0x16a] sm:$0xff]
      %v1040 = vld [vmem:[%s266 + $0x172] sm:$0xff]
      %s1041 = scalar_lea.vmem %s3, 8
      %v1042 = vld [vmem:[%s1041] sm:$0xf]
      %v1044 = vsel %vm359, %v1009, 0
      %v1047 = vsel %vm359, %v1010, 0
      %v1050 = vsel %vm359, %v1011, 0
      %v1053 = vsel %vm359, %v1012, 0
      %v1056 = vsel %vm359, %v1013, 0
      %v1059 = vsel %vm359, %v1014, 0
      %v1062 = vsel %vm359, %v1015, 0
      %v1065 = vsel %vm359, %v1016, 0
      %v1068 = vsel %vm359, %v1017, 0
      %v1071 = vsel %vm359, %v1018, 0
      %v1074 = vsel %vm359, %v1019, 0
      %v1077 = vsel %vm359, %v1020, 0
      %v1080 = vsel %vm359, %v1021, 0
      %v1083 = vsel %vm359, %v1022, 0
      %v1086 = vsel %vm359, %v1023, 0
      %v1089 = vsel %vm359, %v1024, 0
      %v1092 = vsel %vm359, %v1025, 0
      %v1095 = vsel %vm359, %v1026, 0
      %v1098 = vsel %vm359, %v1027, 0
      %v1101 = vsel %vm359, %v1028, 0
      %v1104 = vsel %vm359, %v1029, 0
      %v1107 = vsel %vm359, %v1030, 0
      %v1110 = vsel %vm359, %v1031, 0
      %v1113 = vsel %vm359, %v1032, 0
      %v1116 = vsel %vm359, %v1033, 0
      %v1119 = vsel %vm359, %v1034, 0
      %v1122 = vsel %vm359, %v1035, 0
      %v1125 = vsel %vm359, %v1036, 0
      %v1128 = vsel %vm359, %v1037, 0
      %v1131 = vsel %vm359, %v1038, 0
      %v1134 = vsel %vm359, %v1039, 0
      %v1137 = vsel %vm359, %v1040, 0
      %v1140 = vsel %vm456, %v1042, 0
      %1142 = vmatprep.subr.mxu0 0.0
      %1143 = vmatpush1.msra.mxu0 %v1140
      %1144 = vmatprep.subr.mxu0 0.0
      %1145 = vmatpush1.msra.mxu0 0.0
      %1146 = vmatprep.subr.mxu0 0.0
      %1147 = vmatpush1.msra.mxu0 0.0
      %1148 = vmatprep.subr.mxu0 0.0
      %1149 = vmatpush1.msra.mxu0 0.0
      %1150 = vmatprep.subr.mxu0 0.0
      %1151 = vmatpush1.msra.mxu0 0.0
      %1152 = vmatprep.subr.mxu0 0.0
      %1153 = vmatpush1.msra.mxu0 0.0
      %1154 = vmatprep.subr.mxu0 0.0
      %1155 = vmatpush1.msra.mxu0 0.0
      %1156 = vmatprep.subr.mxu0 0.0
      %1157 = vmatpush1.msra.mxu0 0.0
      %1158 = vmatprep.subr.mxu0 0.0
      %1159 = vmatpush1.msra.mxu0 0.0
      %1160 = vmatprep.subr.mxu0 0.0
      %1161 = vmatpush1.msra.mxu0 0.0
      %1162 = vmatprep.subr.mxu0 0.0
      %1163 = vmatpush1.msra.mxu0 0.0
      %1164 = vmatprep.subr.mxu0 0.0
      %1165 = vmatpush1.msra.mxu0 0.0
      %1166 = vmatprep.subr.mxu0 0.0
      %1167 = vmatpush1.msra.mxu0 0.0
      %1168 = vmatprep.subr.mxu0 0.0
      %1169 = vmatpush1.msra.mxu0 0.0
      %1170 = vmatprep.subr.mxu0 0.0
      %1171 = vmatpush1.msra.mxu0 0.0
      %1172 = vmatprep.subr.mxu0 0.0
      %1173 = vmatpush1.msra.mxu0 0.0
      %1174 = vmatprep.subr.mxu0 0.0
      %1175 = vmatpush1.msra.mxu0 0.0
      %1176 = vmatprep.subr.mxu0 0.0
      %1177 = vmatpush1.msra.mxu0 0.0
      %1178 = vmatprep.subr.mxu0 0.0
      %1179 = vmatpush1.msra.mxu0 0.0
      %1180 = vmatprep.subr.mxu0 0.0
      %1181 = vmatpush1.msra.mxu0 0.0
      %1182 = vmatprep.subr.mxu0 0.0
      %1183 = vmatpush1.msra.mxu0 0.0
      %1184 = vmatprep.subr.mxu0 0.0
      %1185 = vmatpush1.msra.mxu0 0.0
      %1186 = vmatprep.subr.mxu0 0.0
      %1187 = vmatpush1.msra.mxu0 0.0
      %1188 = vmatprep.subr.mxu0 0.0
      %1189 = vmatpush1.msra.mxu0 0.0
      %1190 = vmatprep.subr.mxu0 0.0
      %1191 = vmatpush1.msra.mxu0 0.0
      %1192 = vmatprep.subr.mxu0 0.0
      %1193 = vmatpush1.msra.mxu0 0.0
      %1194 = vmatprep.subr.mxu0 0.0
      %1195 = vmatpush1.msra.mxu0 0.0
      %1196 = vmatprep.subr.mxu0 0.0
      %1197 = vmatpush1.msra.mxu0 0.0
      %1198 = vmatprep.subr.mxu0 0.0
      %1199 = vmatpush1.msra.mxu0 0.0
      %1200 = vmatprep.subr.mxu0 0.0
      %1201 = vmatpush1.msra.mxu0 0.0
      %1202 = vmatprep.subr.mxu0 0.0
      %1203 = vmatpush1.msra.mxu0 0.0
      %1204 = vmatprep.subr.mxu0 0.0
      %1205 = vmatpush1.msra.mxu0 0.0
      %1206 = vmatprep.mubr.f32.mxu0 0.0
      %1207 = vmatmul.mubr.f32.gmra.mrb[0].mxu0 %v1044
      %v1208 = vpop.f32.mrb[0].mxu0
      %v1209 = vadd.f32 0.0, %v1208
      %v1210 = vpop.f32.mrb[0].mxu0
      %1211 = vmatprep.mubr.f32.mxu0 0.0
      %1212 = vmatmul.mubr.f32.gmra.mrb[0].mxu0 %v1047
      %v1213 = vpop.f32.mrb[0].mxu0
      %v1214 = vadd.f32 0.0, %v1213
      %v1215 = vpop.f32.mrb[0].mxu0
      %1216 = vmatprep.mubr.f32.mxu0 0.0
      %1217 = vmatmul.mubr.f32.gmra.mrb[0].mxu0 %v1050
      %v1218 = vpop.f32.mrb[0].mxu0
      %v1219 = vadd.f32 0.0, %v1218
      %v1220 = vpop.f32.mrb[0].mxu0
      %1221 = vmatprep.mubr.f32.mxu0 0.0
      %1222 = vmatmul.mubr.f32.gmra.mrb[0].mxu0 %v1053
      %v1223 = vpop.f32.mrb[0].mxu0
      %v1224 = vadd.f32 0.0, %v1223
      %v1225 = vpop.f32.mrb[0].mxu0
      %1226 = vmatprep.mubr.f32.mxu0 0.0
      %1227 = vmatmul.mubr.f32.gmra.mrb[0].mxu0 %v1056
      %v1228 = vpop.f32.mrb[0].mxu0
      %v1229 = vadd.f32 0.0, %v1228
      %v1230 = vpop.f32.mrb[0].mxu0
      %1231 = vmatprep.mubr.f32.mxu0 0.0
      %1232 = vmatmul.mubr.f32.gmra.mrb[0].mxu0 %v1059
      %v1233 = vpop.f32.mrb[0].mxu0
      %v1234 = vadd.f32 0.0, %v1233
      %v1235 = vpop.f32.mrb[0].mxu0
      %1236 = vmatprep.mubr.f32.mxu0 0.0
      %1237 = vmatmul.mubr.f32.gmra.mrb[0].mxu0 %v1062
      %v1238 = vpop.f32.mrb[0].mxu0
      %v1239 = vadd.f32 0.0, %v1238
      %v1240 = vpop.f32.mrb[0].mxu0
      %1241 = vmatprep.mubr.f32.mxu0 0.0
      %1242 = vmatmul.mubr.f32.gmra.mrb[0].mxu0 %v1065
      %v1243 = vpop.f32.mrb[0].mxu0
      %v1244 = vadd.f32 0.0, %v1243
      %v1245 = vpop.f32.mrb[0].mxu0
      %1246 = vmatprep.mubr.f32.mxu0 0.0
      %1247 = vmatmul.mubr.f32.gmra.mrb[0].mxu0 %v1068
      %v1248 = vpop.f32.mrb[0].mxu0
      %v1249 = vadd.f32 0.0, %v1248
      %v1250 = vpop.f32.mrb[0].mxu0
      %1251 = vmatprep.mubr.f32.mxu0 0.0
      %1252 = vmatmul.mubr.f32.gmra.mrb[0].mxu0 %v1071
      %v1253 = vpop.f32.mrb[0].mxu0
      %v1254 = vadd.f32 0.0, %v1253
      %v1255 = vpop.f32.mrb[0].mxu0
      %1256 = vmatprep.mubr.f32.mxu0 0.0
      %1257 = vmatmul.mubr.f32.gmra.mrb[0].mxu0 %v1074
      %v1258 = vpop.f32.mrb[0].mxu0
      %v1259 = vadd.f32 0.0, %v1258
      %v1260 = vpop.f32.mrb[0].mxu0
      %1261 = vmatprep.mubr.f32.mxu0 0.0
      %1262 = vmatmul.mubr.f32.gmra.mrb[0].mxu0 %v1077
      %v1263 = vpop.f32.mrb[0].mxu0
      %v1264 = vadd.f32 0.0, %v1263
      %v1265 = vpop.f32.mrb[0].mxu0
      %1266 = vmatprep.mubr.f32.mxu0 0.0
      %1267 = vmatmul.mubr.f32.gmra.mrb[0].mxu0 %v1080
      %v1268 = vpop.f32.mrb[0].mxu0
      %v1269 = vadd.f32 0.0, %v1268
      %v1270 = vpop.f32.mrb[0].mxu0
      %1271 = vmatprep.mubr.f32.mxu0 0.0
      %1272 = vmatmul.mubr.f32.gmra.mrb[0].mxu0 %v1083
      %v1273 = vpop.f32.mrb[0].mxu0
      %v1274 = vadd.f32 0.0, %v1273
      %v1275 = vpop.f32.mrb[0].mxu0
      %1276 = vmatprep.mubr.f32.mxu0 0.0
      %1277 = vmatmul.mubr.f32.gmra.mrb[0].mxu0 %v1086
      %v1278 = vpop.f32.mrb[0].mxu0
      %v1279 = vadd.f32 0.0, %v1278
      %v1280 = vpop.f32.mrb[0].mxu0
      %1281 = vmatprep.mubr.f32.mxu0 0.0
      %1282 = vmatmul.mubr.f32.gmra.mrb[0].mxu0 %v1089
      %v1283 = vpop.f32.mrb[0].mxu0
      %v1284 = vadd.f32 0.0, %v1283
      %v1285 = vpop.f32.mrb[0].mxu0
      %1286 = vmatprep.mubr.f32.mxu0 0.0
      %1287 = vmatmul.mubr.f32.gmra.mrb[0].mxu0 %v1092
      %v1288 = vpop.f32.mrb[0].mxu0
      %v1289 = vadd.f32 0.0, %v1288
      %v1290 = vpop.f32.mrb[0].mxu0
      %1291 = vmatprep.mubr.f32.mxu0 0.0
      %1292 = vmatmul.mubr.f32.gmra.mrb[0].mxu0 %v1095
      %v1293 = vpop.f32.mrb[0].mxu0
      %v1294 = vadd.f32 0.0, %v1293
      %v1295 = vpop.f32.mrb[0].mxu0
      %1296 = vmatprep.mubr.f32.mxu0 0.0
      %1297 = vmatmul.mubr.f32.gmra.mrb[0].mxu0 %v1098
      %v1298 = vpop.f32.mrb[0].mxu0
      %v1299 = vadd.f32 0.0, %v1298
      %v1300 = vpop.f32.mrb[0].mxu0
      %1301 = vmatprep.mubr.f32.mxu0 0.0
      %1302 = vmatmul.mubr.f32.gmra.mrb[0].mxu0 %v1101
      %v1303 = vpop.f32.mrb[0].mxu0
      %v1304 = vadd.f32 0.0, %v1303
      %v1305 = vpop.f32.mrb[0].mxu0
      %1306 = vmatprep.mubr.f32.mxu0 0.0
      %1307 = vmatmul.mubr.f32.gmra.mrb[0].mxu0 %v1104
      %v1308 = vpop.f32.mrb[0].mxu0
      %v1309 = vadd.f32 0.0, %v1308
      %v1310 = vpop.f32.mrb[0].mxu0
      %1311 = vmatprep.mubr.f32.mxu0 0.0
      %1312 = vmatmul.mubr.f32.gmra.mrb[0].mxu0 %v1107
      %v1313 = vpop.f32.mrb[0].mxu0
      %v1314 = vadd.f32 0.0, %v1313
      %v1315 = vpop.f32.mrb[0].mxu0
      %1316 = vmatprep.mubr.f32.mxu0 0.0
      %1317 = vmatmul.mubr.f32.gmra.mrb[0].mxu0 %v1110
      %v1318 = vpop.f32.mrb[0].mxu0
      %v1319 = vadd.f32 0.0, %v1318
      %v1320 = vpop.f32.mrb[0].mxu0
      %1321 = vmatprep.mubr.f32.mxu0 0.0
      %1322 = vmatmul.mubr.f32.gmra.mrb[0].mxu0 %v1113
      %v1323 = vpop.f32.mrb[0].mxu0
      %v1324 = vadd.f32 0.0, %v1323
      %v1325 = vpop.f32.mrb[0].mxu0
      %1326 = vmatprep.mubr.f32.mxu0 0.0
      %1327 = vmatmul.mubr.f32.gmra.mrb[0].mxu0 %v1116
      %v1328 = vpop.f32.mrb[0].mxu0
      %v1329 = vadd.f32 0.0, %v1328
      %v1330 = vpop.f32.mrb[0].mxu0
      %1331 = vmatprep.mubr.f32.mxu0 0.0
      %1332 = vmatmul.mubr.f32.gmra.mrb[0].mxu0 %v1119
      %v1333 = vpop.f32.mrb[0].mxu0
      %v1334 = vadd.f32 0.0, %v1333
      %v1335 = vpop.f32.mrb[0].mxu0
      %1336 = vmatprep.mubr.f32.mxu0 0.0
      %1337 = vmatmul.mubr.f32.gmra.mrb[0].mxu0 %v1122
      %v1338 = vpop.f32.mrb[0].mxu0
      %v1339 = vadd.f32 0.0, %v1338
      %v1340 = vpop.f32.mrb[0].mxu0
      %1341 = vmatprep.mubr.f32.mxu0 0.0
      %1342 = vmatmul.mubr.f32.gmra.mrb[0].mxu0 %v1125
      %v1343 = vpop.f32.mrb[0].mxu0
      %v1344 = vadd.f32 0.0, %v1343
      %v1345 = vpop.f32.mrb[0].mxu0
      %1346 = vmatprep.mubr.f32.mxu0 0.0
      %1347 = vmatmul.mubr.f32.gmra.mrb[0].mxu0 %v1128
      %v1348 = vpop.f32.mrb[0].mxu0
      %v1349 = vadd.f32 0.0, %v1348
      %v1350 = vpop.f32.mrb[0].mxu0
      %1351 = vmatprep.mubr.f32.mxu0 0.0
      %1352 = vmatmul.mubr.f32.gmra.mrb[0].mxu0 %v1131
      %v1353 = vpop.f32.mrb[0].mxu0
      %v1354 = vadd.f32 0.0, %v1353
      %v1355 = vpop.f32.mrb[0].mxu0
      %1356 = vmatprep.mubr.f32.mxu0 0.0
      %1357 = vmatmul.mubr.f32.gmra.mrb[0].mxu0 %v1134
      %v1358 = vpop.f32.mrb[0].mxu0
      %v1359 = vadd.f32 0.0, %v1358
      %v1360 = vpop.f32.mrb[0].mxu0
      %1361 = vmatprep.mubr.f32.mxu0 0.0
      %1362 = vmatmul.mubr.f32.gmra.mrb[0].mxu0 %v1137
      %v1363 = vpop.f32.mrb[0].mxu0
      %v1364 = vadd.f32 0.0, %v1363
      %v1365 = vpop.f32.mrb[0].mxu0
      %1366 = vdwg.mxu0
      %v1367 = vadd.f32 %v851, %v1209
      %v1368 = vadd.f32 %v856, %v1214
      %v1369 = vadd.f32 %v861, %v1219
      %v1370 = vadd.f32 %v866, %v1224
      %v1371 = vadd.f32 %v871, %v1229
      %v1372 = vadd.f32 %v876, %v1234
      %v1373 = vadd.f32 %v881, %v1239
      %v1374 = vadd.f32 %v886, %v1244
      %v1375 = vadd.f32 %v891, %v1249
      %v1376 = vadd.f32 %v896, %v1254
      %v1377 = vadd.f32 %v901, %v1259
      %v1378 = vadd.f32 %v906, %v1264
      %v1379 = vadd.f32 %v911, %v1269
      %v1380 = vadd.f32 %v916, %v1274
      %v1381 = vadd.f32 %v921, %v1279
      %v1382 = vadd.f32 %v926, %v1284
      %v1383 = vadd.f32 %v931, %v1289
      %v1384 = vadd.f32 %v936, %v1294
      %v1385 = vadd.f32 %v941, %v1299
      %v1386 = vadd.f32 %v946, %v1304
      %v1387 = vadd.f32 %v951, %v1309
      %v1388 = vadd.f32 %v956, %v1314
      %v1389 = vadd.f32 %v961, %v1319
      %v1390 = vadd.f32 %v966, %v1324
      %v1391 = vadd.f32 %v971, %v1329
      %v1392 = vadd.f32 %v976, %v1334
      %v1393 = vadd.f32 %v981, %v1339
      %v1394 = vadd.f32 %v986, %v1344
      %v1395 = vadd.f32 %v991, %v1349
      %v1396 = vadd.f32 %v996, %v1354
      %v1397 = vadd.f32 %v1001, %v1359
      %v1398 = vadd.f32 %v1006, %v1364
      %v1399 = vld [vmem:[%s273] sm:$0xff]
      %v1400 = vld [vmem:[%s273 + $0x8] sm:$0xff]
      %v1401 = vld [vmem:[%s273 + $0x18] sm:$0xff]
      %v1402 = vld [vmem:[%s273 + $0x20] sm:$0xff]
      %v1403 = vld [vmem:[%s273 + $0x30] sm:$0xff]
      %v1404 = vld [vmem:[%s273 + $0x38] sm:$0xff]
      %v1405 = vld [vmem:[%s273 + $0x48] sm:$0xff]
      %v1406 = vld [vmem:[%s273 + $0x50] sm:$0xff]
      %v1407 = vld [vmem:[%s273 + $0x60] sm:$0xff]
      %v1408 = vld [vmem:[%s273 + $0x68] sm:$0xff]
      %v1409 = vld [vmem:[%s273 + $0x78] sm:$0xff]
      %v1410 = vld [vmem:[%s273 + $0x80] sm:$0xff]
      %v1411 = vld [vmem:[%s273 + $0x90] sm:$0xff]
      %v1412 = vld [vmem:[%s273 + $0x98] sm:$0xff]
      %v1413 = vld [vmem:[%s273 + $0xa8] sm:$0xff]
      %v1414 = vld [vmem:[%s273 + $0xb0] sm:$0xff]
      %v1415 = vld [vmem:[%s273 + $0xc0] sm:$0xff]
      %v1416 = vld [vmem:[%s273 + $0xc8] sm:$0xff]
      %v1417 = vld [vmem:[%s273 + $0xd8] sm:$0xff]
      %v1418 = vld [vmem:[%s273 + $0xe0] sm:$0xff]
      %v1419 = vld [vmem:[%s273 + $0xf0] sm:$0xff]
      %v1420 = vld [vmem:[%s273 + $0xf8] sm:$0xff]
      %v1421 = vld [vmem:[%s273 + $0x108] sm:$0xff]
      %v1422 = vld [vmem:[%s273 + $0x110] sm:$0xff]
      %v1423 = vld [vmem:[%s273 + $0x120] sm:$0xff]
      %v1424 = vld [vmem:[%s273 + $0x128] sm:$0xff]
      %v1425 = vld [vmem:[%s273 + $0x138] sm:$0xff]
      %v1426 = vld [vmem:[%s273 + $0x140] sm:$0xff]
      %v1427 = vld [vmem:[%s273 + $0x150] sm:$0xff]
      %v1428 = vld [vmem:[%s273 + $0x158] sm:$0xff]
      %v1429 = vld [vmem:[%s273 + $0x168] sm:$0xff]
      %v1430 = vld [vmem:[%s273 + $0x170] sm:$0xff]
      %s1431 = scalar_lea.vmem %s3, 12
      %v1432 = vld [vmem:[%s1431] sm:$0xf]
      %v1434 = vsel %vm359, %v1399, 0
      %v1437 = vsel %vm359, %v1400, 0
      %v1440 = vsel %vm359, %v1401, 0
      %v1443 = vsel %vm359, %v1402, 0
      %v1446 = vsel %vm359, %v1403, 0
      %v1449 = vsel %vm359, %v1404, 0
      %v1452 = vsel %vm359, %v1405, 0
      %v1455 = vsel %vm359, %v1406, 0
      %v1458 = vsel %vm359, %v1407, 0
      %v1461 = vsel %vm359, %v1408, 0
      %v1464 = vsel %vm359, %v1409, 0
      %v1467 = vsel %vm359, %v1410, 0
      %v1470 = vsel %vm359, %v1411, 0
      %v1473 = vsel %vm359, %v1412, 0
      %v1476 = vsel %vm359, %v1413, 0
      %v1479 = vsel %vm359, %v1414, 0
      %v1482 = vsel %vm359, %v1415, 0
      %v1485 = vsel %vm359, %v1416, 0
      %v1488 = vsel %vm359, %v1417, 0
      %v1491 = vsel %vm359, %v1418, 0
      %v1494 = vsel %vm359, %v1419, 0
      %v1497 = vsel %vm359, %v1420, 0
      %v1500 = vsel %vm359, %v1421, 0
      %v1503 = vsel %vm359, %v1422, 0
      %v1506 = vsel %vm359, %v1423, 0
      %v1509 = vsel %vm359, %v1424, 0
      %v1512 = vsel %vm359, %v1425, 0
      %v1515 = vsel %vm359, %v1426, 0
      %v1518 = vsel %vm359, %v1427, 0
      %v1521 = vsel %vm359, %v1428, 0
      %v1524 = vsel %vm359, %v1429, 0
      %v1527 = vsel %vm359, %v1430, 0
      %v1530 = vsel %vm456, %v1432, 0
      %1532 = vmatprep.subr.mxu0 0.0
      %1533 = vmatpush1.msra.mxu0 %v1530
      %1534 = vmatprep.subr.mxu0 0.0
      %1535 = vmatpush1.msra.mxu0 0.0
      %1536 = vmatprep.subr.mxu0 0.0
      %1537 = vmatpush1.msra.mxu0 0.0
      %1538 = vmatprep.subr.mxu0 0.0
      %1539 = vmatpush1.msra.mxu0 0.0
      %1540 = vmatprep.subr.mxu0 0.0
      %1541 = vmatpush1.msra.mxu0 0.0
      %1542 = vmatprep.subr.mxu0 0.0
      %1543 = vmatpush1.msra.mxu0 0.0
      %1544 = vmatprep.subr.mxu0 0.0
      %1545 = vmatpush1.msra.mxu0 0.0
      %1546 = vmatprep.subr.mxu0 0.0
      %1547 = vmatpush1.msra.mxu0 0.0
      %1548 = vmatprep.subr.mxu0 0.0
      %1549 = vmatpush1.msra.mxu0 0.0
      %1550 = vmatprep.subr.mxu0 0.0
      %1551 = vmatpush1.msra.mxu0 0.0
      %1552 = vmatprep.subr.mxu0 0.0
      %1553 = vmatpush1.msra.mxu0 0.0
      %1554 = vmatprep.subr.mxu0 0.0
      %1555 = vmatpush1.msra.mxu0 0.0
      %1556 = vmatprep.subr.mxu0 0.0
      %1557 = vmatpush1.msra.mxu0 0.0
      %1558 = vmatprep.subr.mxu0 0.0
      %1559 = vmatpush1.msra.mxu0 0.0
      %1560 = vmatprep.subr.mxu0 0.0
      %1561 = vmatpush1.msra.mxu0 0.0
      %1562 = vmatprep.subr.mxu0 0.0
      %1563 = vmatpush1.msra.mxu0 0.0
      %1564 = vmatprep.subr.mxu0 0.0
      %1565 = vmatpush1.msra.mxu0 0.0
      %1566 = vmatprep.subr.mxu0 0.0
      %1567 = vmatpush1.msra.mxu0 0.0
      %1568 = vmatprep.subr.mxu0 0.0
      %1569 = vmatpush1.msra.mxu0 0.0
      %1570 = vmatprep.subr.mxu0 0.0
      %1571 = vmatpush1.msra.mxu0 0.0
      %1572 = vmatprep.subr.mxu0 0.0
      %1573 = vmatpush1.msra.mxu0 0.0
      %1574 = vmatprep.subr.mxu0 0.0
      %1575 = vmatpush1.msra.mxu0 0.0
      %1576 = vmatprep.subr.mxu0 0.0
      %1577 = vmatpush1.msra.mxu0 0.0
      %1578 = vmatprep.subr.mxu0 0.0
      %1579 = vmatpush1.msra.mxu0 0.0
      %1580 = vmatprep.subr.mxu0 0.0
      %1581 = vmatpush1.msra.mxu0 0.0
      %1582 = vmatprep.subr.mxu0 0.0
      %1583 = vmatpush1.msra.mxu0 0.0
      %1584 = vmatprep.subr.mxu0 0.0
      %1585 = vmatpush1.msra.mxu0 0.0
      %1586 = vmatprep.subr.mxu0 0.0
      %1587 = vmatpush1.msra.mxu0 0.0
      %1588 = vmatprep.subr.mxu0 0.0
      %1589 = vmatpush1.msra.mxu0 0.0
      %1590 = vmatprep.subr.mxu0 0.0
      %1591 = vmatpush1.msra.mxu0 0.0
      %1592 = vmatprep.subr.mxu0 0.0
      %1593 = vmatpush1.msra.mxu0 0.0
      %1594 = vmatprep.subr.mxu0 0.0
      %1595 = vmatpush1.msra.mxu0 0.0
      %1596 = vmatprep.mubr.f32.mxu0 0.0
      %1597 = vmatmul.mubr.f32.gmra.mrb[0].mxu0 %v1434
      %v1598 = vpop.f32.mrb[0].mxu0
      %v1599 = vadd.f32 0.0, %v1598
      %v1600 = vpop.f32.mrb[0].mxu0
      %1601 = vmatprep.mubr.f32.mxu0 0.0
      %1602 = vmatmul.mubr.f32.gmra.mrb[0].mxu0 %v1437
      %v1603 = vpop.f32.mrb[0].mxu0
      %v1604 = vadd.f32 0.0, %v1603
      %v1605 = vpop.f32.mrb[0].mxu0
      %1606 = vmatprep.mubr.f32.mxu0 0.0
      %1607 = vmatmul.mubr.f32.gmra.mrb[0].mxu0 %v1440
      %v1608 = vpop.f32.mrb[0].mxu0
      %v1609 = vadd.f32 0.0, %v1608
      %v1610 = vpop.f32.mrb[0].mxu0
      %1611 = vmatprep.mubr.f32.mxu0 0.0
      %1612 = vmatmul.mubr.f32.gmra.mrb[0].mxu0 %v1443
      %v1613 = vpop.f32.mrb[0].mxu0
      %v1614 = vadd.f32 0.0, %v1613
      %v1615 = vpop.f32.mrb[0].mxu0
      %1616 = vmatprep.mubr.f32.mxu0 0.0
      %1617 = vmatmul.mubr.f32.gmra.mrb[0].mxu0 %v1446
      %v1618 = vpop.f32.mrb[0].mxu0
      %v1619 = vadd.f32 0.0, %v1618
      %v1620 = vpop.f32.mrb[0].mxu0
      %1621 = vmatprep.mubr.f32.mxu0 0.0
      %1622 = vmatmul.mubr.f32.gmra.mrb[0].mxu0 %v1449
      %v1623 = vpop.f32.mrb[0].mxu0
      %v1624 = vadd.f32 0.0, %v1623
      %v1625 = vpop.f32.mrb[0].mxu0
      %1626 = vmatprep.mubr.f32.mxu0 0.0
      %1627 = vmatmul.mubr.f32.gmra.mrb[0].mxu0 %v1452
      %v1628 = vpop.f32.mrb[0].mxu0
      %v1629 = vadd.f32 0.0, %v1628
      %v1630 = vpop.f32.mrb[0].mxu0
      %1631 = vmatprep.mubr.f32.mxu0 0.0
      %1632 = vmatmul.mubr.f32.gmra.mrb[0].mxu0 %v1455
      %v1633 = vpop.f32.mrb[0].mxu0
      %v1634 = vadd.f32 0.0, %v1633
      %v1635 = vpop.f32.mrb[0].mxu0
      %1636 = vmatprep.mubr.f32.mxu0 0.0
      %1637 = vmatmul.mubr.f32.gmra.mrb[0].mxu0 %v1458
      %v1638 = vpop.f32.mrb[0].mxu0
      %v1639 = vadd.f32 0.0, %v1638
      %v1640 = vpop.f32.mrb[0].mxu0
      %1641 = vmatprep.mubr.f32.mxu0 0.0
      %1642 = vmatmul.mubr.f32.gmra.mrb[0].mxu0 %v1461
      %v1643 = vpop.f32.mrb[0].mxu0
      %v1644 = vadd.f32 0.0, %v1643
      %v1645 = vpop.f32.mrb[0].mxu0
      %1646 = vmatprep.mubr.f32.mxu0 0.0
      %1647 = vmatmul.mubr.f32.gmra.mrb[0].mxu0 %v1464
      %v1648 = vpop.f32.mrb[0].mxu0
      %v1649 = vadd.f32 0.0, %v1648
      %v1650 = vpop.f32.mrb[0].mxu0
      %1651 = vmatprep.mubr.f32.mxu0 0.0
      %1652 = vmatmul.mubr.f32.gmra.mrb[0].mxu0 %v1467
      %v1653 = vpop.f32.mrb[0].mxu0
      %v1654 = vadd.f32 0.0, %v1653
      %v1655 = vpop.f32.mrb[0].mxu0
      %1656 = vmatprep.mubr.f32.mxu0 0.0
      %1657 = vmatmul.mubr.f32.gmra.mrb[0].mxu0 %v1470
      %v1658 = vpop.f32.mrb[0].mxu0
      %v1659 = vadd.f32 0.0, %v1658
      %v1660 = vpop.f32.mrb[0].mxu0
      %1661 = vmatprep.mubr.f32.mxu0 0.0
      %1662 = vmatmul.mubr.f32.gmra.mrb[0].mxu0 %v1473
      %v1663 = vpop.f32.mrb[0].mxu0
      %v1664 = vadd.f32 0.0, %v1663
      %v1665 = vpop.f32.mrb[0].mxu0
      %1666 = vmatprep.mubr.f32.mxu0 0.0
      %1667 = vmatmul.mubr.f32.gmra.mrb[0].mxu0 %v1476
      %v1668 = vpop.f32.mrb[0].mxu0
      %v1669 = vadd.f32 0.0, %v1668
      %v1670 = vpop.f32.mrb[0].mxu0
      %1671 = vmatprep.mubr.f32.mxu0 0.0
      %1672 = vmatmul.mubr.f32.gmra.mrb[0].mxu0 %v1479
      %v1673 = vpop.f32.mrb[0].mxu0
      %v1674 = vadd.f32 0.0, %v1673
      %v1675 = vpop.f32.mrb[0].mxu0
      %1676 = vmatprep.mubr.f32.mxu0 0.0
      %1677 = vmatmul.mubr.f32.gmra.mrb[0].mxu0 %v1482
      %v1678 = vpop.f32.mrb[0].mxu0
      %v1679 = vadd.f32 0.0, %v1678
      %v1680 = vpop.f32.mrb[0].mxu0
      %1681 = vmatprep.mubr.f32.mxu0 0.0
      %1682 = vmatmul.mubr.f32.gmra.mrb[0].mxu0 %v1485
      %v1683 = vpop.f32.mrb[0].mxu0
      %v1684 = vadd.f32 0.0, %v1683
      %v1685 = vpop.f32.mrb[0].mxu0
      %1686 = vmatprep.mubr.f32.mxu0 0.0
      %1687 = vmatmul.mubr.f32.gmra.mrb[0].mxu0 %v1488
      %v1688 = vpop.f32.mrb[0].mxu0
      %v1689 = vadd.f32 0.0, %v1688
      %v1690 = vpop.f32.mrb[0].mxu0
      %1691 = vmatprep.mubr.f32.mxu0 0.0
      %1692 = vmatmul.mubr.f32.gmra.mrb[0].mxu0 %v1491
      %v1693 = vpop.f32.mrb[0].mxu0
      %v1694 = vadd.f32 0.0, %v1693
      %v1695 = vpop.f32.mrb[0].mxu0
      %1696 = vmatprep.mubr.f32.mxu0 0.0
      %1697 = vmatmul.mubr.f32.gmra.mrb[0].mxu0 %v1494
      %v1698 = vpop.f32.mrb[0].mxu0
      %v1699 = vadd.f32 0.0, %v1698
      %v1700 = vpop.f32.mrb[0].mxu0
      %1701 = vmatprep.mubr.f32.mxu0 0.0
      %1702 = vmatmul.mubr.f32.gmra.mrb[0].mxu0 %v1497
      %v1703 = vpop.f32.mrb[0].mxu0
      %v1704 = vadd.f32 0.0, %v1703
      %v1705 = vpop.f32.mrb[0].mxu0
      %1706 = vmatprep.mubr.f32.mxu0 0.0
      %1707 = vmatmul.mubr.f32.gmra.mrb[0].mxu0 %v1500
      %v1708 = vpop.f32.mrb[0].mxu0
      %v1709 = vadd.f32 0.0, %v1708
      %v1710 = vpop.f32.mrb[0].mxu0
      %1711 = vmatprep.mubr.f32.mxu0 0.0
      %1712 = vmatmul.mubr.f32.gmra.mrb[0].mxu0 %v1503
      %v1713 = vpop.f32.mrb[0].mxu0
      %v1714 = vadd.f32 0.0, %v1713
      %v1715 = vpop.f32.mrb[0].mxu0
      %1716 = vmatprep.mubr.f32.mxu0 0.0
      %1717 = vmatmul.mubr.f32.gmra.mrb[0].mxu0 %v1506
      %v1718 = vpop.f32.mrb[0].mxu0
      %v1719 = vadd.f32 0.0, %v1718
      %v1720 = vpop.f32.mrb[0].mxu0
      %1721 = vmatprep.mubr.f32.mxu0 0.0
      %1722 = vmatmul.mubr.f32.gmra.mrb[0].mxu0 %v1509
      %v1723 = vpop.f32.mrb[0].mxu0
      %v1724 = vadd.f32 0.0, %v1723
      %v1725 = vpop.f32.mrb[0].mxu0
      %1726 = vmatprep.mubr.f32.mxu0 0.0
      %1727 = vmatmul.mubr.f32.gmra.mrb[0].mxu0 %v1512
      %v1728 = vpop.f32.mrb[0].mxu0
      %v1729 = vadd.f32 0.0, %v1728
      %v1730 = vpop.f32.mrb[0].mxu0
      %1731 = vmatprep.mubr.f32.mxu0 0.0
      %1732 = vmatmul.mubr.f32.gmra.mrb[0].mxu0 %v1515
      %v1733 = vpop.f32.mrb[0].mxu0
      %v1734 = vadd.f32 0.0, %v1733
      %v1735 = vpop.f32.mrb[0].mxu0
      %1736 = vmatprep.mubr.f32.mxu0 0.0
      %1737 = vmatmul.mubr.f32.gmra.mrb[0].mxu0 %v1518
      %v1738 = vpop.f32.mrb[0].mxu0
      %v1739 = vadd.f32 0.0, %v1738
      %v1740 = vpop.f32.mrb[0].mxu0
      %1741 = vmatprep.mubr.f32.mxu0 0.0
      %1742 = vmatmul.mubr.f32.gmra.mrb[0].mxu0 %v1521
      %v1743 = vpop.f32.mrb[0].mxu0
      %v1744 = vadd.f32 0.0, %v1743
      %v1745 = vpop.f32.mrb[0].mxu0
      %1746 = vmatprep.mubr.f32.mxu0 0.0
      %1747 = vmatmul.mubr.f32.gmra.mrb[0].mxu0 %v1524
      %v1748 = vpop.f32.mrb[0].mxu0
      %v1749 = vadd.f32 0.0, %v1748
      %v1750 = vpop.f32.mrb[0].mxu0
      %1751 = vmatprep.mubr.f32.mxu0 0.0
      %1752 = vmatmul.mubr.f32.gmra.mrb[0].mxu0 %v1527
      %v1753 = vpop.f32.mrb[0].mxu0
      %v1754 = vadd.f32 0.0, %v1753
      %v1755 = vpop.f32.mrb[0].mxu0
      %1756 = vdwg.mxu0
      %v1757 = vadd.f32 %v1367, %v1599
      %v1758 = vadd.f32 %v1368, %v1604
      %v1759 = vadd.f32 %v1369, %v1609
      %v1760 = vadd.f32 %v1370, %v1614
      %v1761 = vadd.f32 %v1371, %v1619
      %v1762 = vadd.f32 %v1372, %v1624
      %v1763 = vadd.f32 %v1373, %v1629
      %v1764 = vadd.f32 %v1374, %v1634
      %v1765 = vadd.f32 %v1375, %v1639
      %v1766 = vadd.f32 %v1376, %v1644
      %v1767 = vadd.f32 %v1377, %v1649
      %v1768 = vadd.f32 %v1378, %v1654
      %v1769 = vadd.f32 %v1379, %v1659
      %v1770 = vadd.f32 %v1380, %v1664
      %v1771 = vadd.f32 %v1381, %v1669
      %v1772 = vadd.f32 %v1382, %v1674
      %v1773 = vadd.f32 %v1383, %v1679
      %v1774 = vadd.f32 %v1384, %v1684
      %v1775 = vadd.f32 %v1385, %v1689
      %v1776 = vadd.f32 %v1386, %v1694
      %v1777 = vadd.f32 %v1387, %v1699
      %v1778 = vadd.f32 %v1388, %v1704
      %v1779 = vadd.f32 %v1389, %v1709
      %v1780 = vadd.f32 %v1390, %v1714
      %v1781 = vadd.f32 %v1391, %v1719
      %v1782 = vadd.f32 %v1392, %v1724
      %v1783 = vadd.f32 %v1393, %v1729
      %v1784 = vadd.f32 %v1394, %v1734
      %v1785 = vadd.f32 %v1395, %v1739
      %v1786 = vadd.f32 %v1396, %v1744
      %v1787 = vadd.f32 %v1397, %v1749
      %v1788 = vadd.f32 %v1398, %v1754
      %v1789 = vld [vmem:[%s273 + $0x1] sm:$0xff]
      %v1790 = vld [vmem:[%s273 + $0x9] sm:$0xff]
      %v1791 = vld [vmem:[%s273 + $0x19] sm:$0xff]
      %v1792 = vld [vmem:[%s273 + $0x21] sm:$0xff]
      %v1793 = vld [vmem:[%s273 + $0x31] sm:$0xff]
      %v1794 = vld [vmem:[%s273 + $0x39] sm:$0xff]
      %v1795 = vld [vmem:[%s273 + $0x49] sm:$0xff]
      %v1796 = vld [vmem:[%s273 + $0x51] sm:$0xff]
      %v1797 = vld [vmem:[%s273 + $0x61] sm:$0xff]
      %v1798 = vld [vmem:[%s273 + $0x69] sm:$0xff]
      %v1799 = vld [vmem:[%s273 + $0x79] sm:$0xff]
      %v1800 = vld [vmem:[%s273 + $0x81] sm:$0xff]
      %v1801 = vld [vmem:[%s273 + $0x91] sm:$0xff]
      %v1802 = vld [vmem:[%s273 + $0x99] sm:$0xff]
      %v1803 = vld [vmem:[%s273 + $0xa9] sm:$0xff]
      %v1804 = vld [vmem:[%s273 + $0xb1] sm:$0xff]
      %v1805 = vld [vmem:[%s273 + $0xc1] sm:$0xff]
      %v1806 = vld [vmem:[%s273 + $0xc9] sm:$0xff]
      %v1807 = vld [vmem:[%s273 + $0xd9] sm:$0xff]
      %v1808 = vld [vmem:[%s273 + $0xe1] sm:$0xff]
      %v1809 = vld [vmem:[%s273 + $0xf1] sm:$0xff]
      %v1810 = vld [vmem:[%s273 + $0xf9] sm:$0xff]
      %v1811 = vld [vmem:[%s273 + $0x109] sm:$0xff]
      %v1812 = vld [vmem:[%s273 + $0x111] sm:$0xff]
      %v1813 = vld [vmem:[%s273 + $0x121] sm:$0xff]
      %v1814 = vld [vmem:[%s273 + $0x129] sm:$0xff]
      %v1815 = vld [vmem:[%s273 + $0x139] sm:$0xff]
      %v1816 = vld [vmem:[%s273 + $0x141] sm:$0xff]
      %v1817 = vld [vmem:[%s273 + $0x151] sm:$0xff]
      %v1818 = vld [vmem:[%s273 + $0x159] sm:$0xff]
      %v1819 = vld [vmem:[%s273 + $0x169] sm:$0xff]
      %v1820 = vld [vmem:[%s273 + $0x171] sm:$0xff]
      %s1821 = scalar_lea.vmem %s3, 16
      %v1822 = vld [vmem:[%s1821] sm:$0xf]
      %v1824 = vsel %vm359, %v1789, 0
      %v1827 = vsel %vm359, %v1790, 0
      %v1830 = vsel %vm359, %v1791, 0
      %v1833 = vsel %vm359, %v1792, 0
      %v1836 = vsel %vm359, %v1793, 0
      %v1839 = vsel %vm359, %v1794, 0
      %v1842 = vsel %vm359, %v1795, 0
      %v1845 = vsel %vm359, %v1796, 0
      %v1848 = vsel %vm359, %v1797, 0
      %v1851 = vsel %vm359, %v1798, 0
      %v1854 = vsel %vm359, %v1799, 0
      %v1857 = vsel %vm359, %v1800, 0
      %v1860 = vsel %vm359, %v1801, 0
      %v1863 = vsel %vm359, %v1802, 0
      %v1866 = vsel %vm359, %v1803, 0
      %v1869 = vsel %vm359, %v1804, 0
      %v1872 = vsel %vm359, %v1805, 0
      %v1875 = vsel %vm359, %v1806, 0
      %v1878 = vsel %vm359, %v1807, 0
      %v1881 = vsel %vm359, %v1808, 0
      %v1884 = vsel %vm359, %v1809, 0
      %v1887 = vsel %vm359, %v1810, 0
      %v1890 = vsel %vm359, %v1811, 0
      %v1893 = vsel %vm359, %v1812, 0
      %v1896 = vsel %vm359, %v1813, 0
      %v1899 = vsel %vm359, %v1814, 0
      %v1902 = vsel %vm359, %v1815, 0
      %v1905 = vsel %vm359, %v1816, 0
      %v1908 = vsel %vm359, %v1817, 0
      %v1911 = vsel %vm359, %v1818, 0
      %v1914 = vsel %vm359, %v1819, 0
      %v1917 = vsel %vm359, %v1820, 0
      %v1920 = vsel %vm456, %v1822, 0
      %1922 = vmatprep.subr.mxu0 0.0
      %1923 = vmatpush1.msra.mxu0 %v1920
      %1924 = vmatprep.subr.mxu0 0.0
      %1925 = vmatpush1.msra.mxu0 0.0
      %1926 = vmatprep.subr.mxu0 0.0
      %1927 = vmatpush1.msra.mxu0 0.0
      %1928 = vmatprep.subr.mxu0 0.0
      %1929 = vmatpush1.msra.mxu0 0.0
      %1930 = vmatprep.subr.mxu0 0.0
      %1931 = vmatpush1.msra.mxu0 0.0
      %1932 = vmatprep.subr.mxu0 0.0
      %1933 = vmatpush1.msra.mxu0 0.0
      %1934 = vmatprep.subr.mxu0 0.0
      %1935 = vmatpush1.msra.mxu0 0.0
      %1936 = vmatprep.subr.mxu0 0.0
      %1937 = vmatpush1.msra.mxu0 0.0
      %1938 = vmatprep.subr.mxu0 0.0
      %1939 = vmatpush1.msra.mxu0 0.0
      %1940 = vmatprep.subr.mxu0 0.0
      %1941 = vmatpush1.msra.mxu0 0.0
      %1942 = vmatprep.subr.mxu0 0.0
      %1943 = vmatpush1.msra.mxu0 0.0
      %1944 = vmatprep.subr.mxu0 0.0
      %1945 = vmatpush1.msra.mxu0 0.0
      %1946 = vmatprep.subr.mxu0 0.0
      %1947 = vmatpush1.msra.mxu0 0.0
      %1948 = vmatprep.subr.mxu0 0.0
      %1949 = vmatpush1.msra.mxu0 0.0
      %1950 = vmatprep.subr.mxu0 0.0
      %1951 = vmatpush1.msra.mxu0 0.0
      %1952 = vmatprep.subr.mxu0 0.0
      %1953 = vmatpush1.msra.mxu0 0.0
      %1954 = vmatprep.subr.mxu0 0.0
      %1955 = vmatpush1.msra.mxu0 0.0
      %1956 = vmatprep.subr.mxu0 0.0
      %1957 = vmatpush1.msra.mxu0 0.0
      %1958 = vmatprep.subr.mxu0 0.0
      %1959 = vmatpush1.msra.mxu0 0.0
      %1960 = vmatprep.subr.mxu0 0.0
      %1961 = vmatpush1.msra.mxu0 0.0
      %1962 = vmatprep.subr.mxu0 0.0
      %1963 = vmatpush1.msra.mxu0 0.0
      %1964 = vmatprep.subr.mxu0 0.0
      %1965 = vmatpush1.msra.mxu0 0.0
      %1966 = vmatprep.subr.mxu0 0.0
      %1967 = vmatpush1.msra.mxu0 0.0
      %1968 = vmatprep.subr.mxu0 0.0
      %1969 = vmatpush1.msra.mxu0 0.0
      %1970 = vmatprep.subr.mxu0 0.0
      %1971 = vmatpush1.msra.mxu0 0.0
      %1972 = vmatprep.subr.mxu0 0.0
      %1973 = vmatpush1.msra.mxu0 0.0
      %1974 = vmatprep.subr.mxu0 0.0
      %1975 = vmatpush1.msra.mxu0 0.0
      %1976 = vmatprep.subr.mxu0 0.0
      %1977 = vmatpush1.msra.mxu0 0.0
      %1978 = vmatprep.subr.mxu0 0.0
      %1979 = vmatpush1.msra.mxu0 0.0
      %1980 = vmatprep.subr.mxu0 0.0
      %1981 = vmatpush1.msra.mxu0 0.0
      %1982 = vmatprep.subr.mxu0 0.0
      %1983 = vmatpush1.msra.mxu0 0.0
      %1984 = vmatprep.subr.mxu0 0.0
      %1985 = vmatpush1.msra.mxu0 0.0
      %1986 = vmatprep.mubr.f32.mxu0 0.0
      %1987 = vmatmul.mubr.f32.gmra.mrb[0].mxu0 %v1824
      %v1988 = vpop.f32.mrb[0].mxu0
      %v1989 = vadd.f32 0.0, %v1988
      %v1990 = vpop.f32.mrb[0].mxu0
      %1991 = vmatprep.mubr.f32.mxu0 0.0
      %1992 = vmatmul.mubr.f32.gmra.mrb[0].mxu0 %v1827
      %v1993 = vpop.f32.mrb[0].mxu0
      %v1994 = vadd.f32 0.0, %v1993
      %v1995 = vpop.f32.mrb[0].mxu0
      %1996 = vmatprep.mubr.f32.mxu0 0.0
      %1997 = vmatmul.mubr.f32.gmra.mrb[0].mxu0 %v1830
      %v1998 = vpop.f32.mrb[0].mxu0
      %v1999 = vadd.f32 0.0, %v1998
      %v2000 = vpop.f32.mrb[0].mxu0
      %2001 = vmatprep.mubr.f32.mxu0 0.0
      %2002 = vmatmul.mubr.f32.gmra.mrb[0].mxu0 %v1833
      %v2003 = vpop.f32.mrb[0].mxu0
      %v2004 = vadd.f32 0.0, %v2003
      %v2005 = vpop.f32.mrb[0].mxu0
      %2006 = vmatprep.mubr.f32.mxu0 0.0
      %2007 = vmatmul.mubr.f32.gmra.mrb[0].mxu0 %v1836
      %v2008 = vpop.f32.mrb[0].mxu0
      %v2009 = vadd.f32 0.0, %v2008
      %v2010 = vpop.f32.mrb[0].mxu0
      %2011 = vmatprep.mubr.f32.mxu0 0.0
      %2012 = vmatmul.mubr.f32.gmra.mrb[0].mxu0 %v1839
      %v2013 = vpop.f32.mrb[0].mxu0
      %v2014 = vadd.f32 0.0, %v2013
      %v2015 = vpop.f32.mrb[0].mxu0
      %2016 = vmatprep.mubr.f32.mxu0 0.0
      %2017 = vmatmul.mubr.f32.gmra.mrb[0].mxu0 %v1842
      %v2018 = vpop.f32.mrb[0].mxu0
      %v2019 = vadd.f32 0.0, %v2018
      %v2020 = vpop.f32.mrb[0].mxu0
      %2021 = vmatprep.mubr.f32.mxu0 0.0
      %2022 = vmatmul.mubr.f32.gmra.mrb[0].mxu0 %v1845
      %v2023 = vpop.f32.mrb[0].mxu0
      %v2024 = vadd.f32 0.0, %v2023
      %v2025 = vpop.f32.mrb[0].mxu0
      %2026 = vmatprep.mubr.f32.mxu0 0.0
      %2027 = vmatmul.mubr.f32.gmra.mrb[0].mxu0 %v1848
      %v2028 = vpop.f32.mrb[0].mxu0
      %v2029 = vadd.f32 0.0, %v2028
      %v2030 = vpop.f32.mrb[0].mxu0
      %2031 = vmatprep.mubr.f32.mxu0 0.0
      %2032 = vmatmul.mubr.f32.gmra.mrb[0].mxu0 %v1851
      %v2033 = vpop.f32.mrb[0].mxu0
      %v2034 = vadd.f32 0.0, %v2033
      %v2035 = vpop.f32.mrb[0].mxu0
      %2036 = vmatprep.mubr.f32.mxu0 0.0
      %2037 = vmatmul.mubr.f32.gmra.mrb[0].mxu0 %v1854
      %v2038 = vpop.f32.mrb[0].mxu0
      %v2039 = vadd.f32 0.0, %v2038
      %v2040 = vpop.f32.mrb[0].mxu0
      %2041 = vmatprep.mubr.f32.mxu0 0.0
      %2042 = vmatmul.mubr.f32.gmra.mrb[0].mxu0 %v1857
      %v2043 = vpop.f32.mrb[0].mxu0
      %v2044 = vadd.f32 0.0, %v2043
      %v2045 = vpop.f32.mrb[0].mxu0
      %2046 = vmatprep.mubr.f32.mxu0 0.0
      %2047 = vmatmul.mubr.f32.gmra.mrb[0].mxu0 %v1860
      %v2048 = vpop.f32.mrb[0].mxu0
      %v2049 = vadd.f32 0.0, %v2048
      %v2050 = vpop.f32.mrb[0].mxu0
      %2051 = vmatprep.mubr.f32.mxu0 0.0
      %2052 = vmatmul.mubr.f32.gmra.mrb[0].mxu0 %v1863
      %v2053 = vpop.f32.mrb[0].mxu0
      %v2054 = vadd.f32 0.0, %v2053
      %v2055 = vpop.f32.mrb[0].mxu0
      %2056 = vmatprep.mubr.f32.mxu0 0.0
      %2057 = vmatmul.mubr.f32.gmra.mrb[0].mxu0 %v1866
      %v2058 = vpop.f32.mrb[0].mxu0
      %v2059 = vadd.f32 0.0, %v2058
      %v2060 = vpop.f32.mrb[0].mxu0
      %2061 = vmatprep.mubr.f32.mxu0 0.0
      %2062 = vmatmul.mubr.f32.gmra.mrb[0].mxu0 %v1869
      %v2063 = vpop.f32.mrb[0].mxu0
      %v2064 = vadd.f32 0.0, %v2063
      %v2065 = vpop.f32.mrb[0].mxu0
      %2066 = vmatprep.mubr.f32.mxu0 0.0
      %2067 = vmatmul.mubr.f32.gmra.mrb[0].mxu0 %v1872
      %v2068 = vpop.f32.mrb[0].mxu0
      %v2069 = vadd.f32 0.0, %v2068
      %v2070 = vpop.f32.mrb[0].mxu0
      %2071 = vmatprep.mubr.f32.mxu0 0.0
      %2072 = vmatmul.mubr.f32.gmra.mrb[0].mxu0 %v1875
      %v2073 = vpop.f32.mrb[0].mxu0
      %v2074 = vadd.f32 0.0, %v2073
      %v2075 = vpop.f32.mrb[0].mxu0
      %2076 = vmatprep.mubr.f32.mxu0 0.0
      %2077 = vmatmul.mubr.f32.gmra.mrb[0].mxu0 %v1878
      %v2078 = vpop.f32.mrb[0].mxu0
      %v2079 = vadd.f32 0.0, %v2078
      %v2080 = vpop.f32.mrb[0].mxu0
      %2081 = vmatprep.mubr.f32.mxu0 0.0
      %2082 = vmatmul.mubr.f32.gmra.mrb[0].mxu0 %v1881
      %v2083 = vpop.f32.mrb[0].mxu0
      %v2084 = vadd.f32 0.0, %v2083
      %v2085 = vpop.f32.mrb[0].mxu0
      %2086 = vmatprep.mubr.f32.mxu0 0.0
      %2087 = vmatmul.mubr.f32.gmra.mrb[0].mxu0 %v1884
      %v2088 = vpop.f32.mrb[0].mxu0
      %v2089 = vadd.f32 0.0, %v2088
      %v2090 = vpop.f32.mrb[0].mxu0
      %2091 = vmatprep.mubr.f32.mxu0 0.0
      %2092 = vmatmul.mubr.f32.gmra.mrb[0].mxu0 %v1887
      %v2093 = vpop.f32.mrb[0].mxu0
      %v2094 = vadd.f32 0.0, %v2093
      %v2095 = vpop.f32.mrb[0].mxu0
      %2096 = vmatprep.mubr.f32.mxu0 0.0
      %2097 = vmatmul.mubr.f32.gmra.mrb[0].mxu0 %v1890
      %v2098 = vpop.f32.mrb[0].mxu0
      %v2099 = vadd.f32 0.0, %v2098
      %v2100 = vpop.f32.mrb[0].mxu0
      %2101 = vmatprep.mubr.f32.mxu0 0.0
      %2102 = vmatmul.mubr.f32.gmra.mrb[0].mxu0 %v1893
      %v2103 = vpop.f32.mrb[0].mxu0
      %v2104 = vadd.f32 0.0, %v2103
      %v2105 = vpop.f32.mrb[0].mxu0
      %2106 = vmatprep.mubr.f32.mxu0 0.0
      %2107 = vmatmul.mubr.f32.gmra.mrb[0].mxu0 %v1896
      %v2108 = vpop.f32.mrb[0].mxu0
      %v2109 = vadd.f32 0.0, %v2108
      %v2110 = vpop.f32.mrb[0].mxu0
      %2111 = vmatprep.mubr.f32.mxu0 0.0
      %2112 = vmatmul.mubr.f32.gmra.mrb[0].mxu0 %v1899
      %v2113 = vpop.f32.mrb[0].mxu0
      %v2114 = vadd.f32 0.0, %v2113
      %v2115 = vpop.f32.mrb[0].mxu0
      %2116 = vmatprep.mubr.f32.mxu0 0.0
      %2117 = vmatmul.mubr.f32.gmra.mrb[0].mxu0 %v1902
      %v2118 = vpop.f32.mrb[0].mxu0
      %v2119 = vadd.f32 0.0, %v2118
      %v2120 = vpop.f32.mrb[0].mxu0
      %2121 = vmatprep.mubr.f32.mxu0 0.0
      %2122 = vmatmul.mubr.f32.gmra.mrb[0].mxu0 %v1905
      %v2123 = vpop.f32.mrb[0].mxu0
      %v2124 = vadd.f32 0.0, %v2123
      %v2125 = vpop.f32.mrb[0].mxu0
      %2126 = vmatprep.mubr.f32.mxu0 0.0
      %2127 = vmatmul.mubr.f32.gmra.mrb[0].mxu0 %v1908
      %v2128 = vpop.f32.mrb[0].mxu0
      %v2129 = vadd.f32 0.0, %v2128
      %v2130 = vpop.f32.mrb[0].mxu0
      %2131 = vmatprep.mubr.f32.mxu0 0.0
      %2132 = vmatmul.mubr.f32.gmra.mrb[0].mxu0 %v1911
      %v2133 = vpop.f32.mrb[0].mxu0
      %v2134 = vadd.f32 0.0, %v2133
      %v2135 = vpop.f32.mrb[0].mxu0
      %2136 = vmatprep.mubr.f32.mxu0 0.0
      %2137 = vmatmul.mubr.f32.gmra.mrb[0].mxu0 %v1914
      %v2138 = vpop.f32.mrb[0].mxu0
      %v2139 = vadd.f32 0.0, %v2138
      %v2140 = vpop.f32.mrb[0].mxu0
      %2141 = vmatprep.mubr.f32.mxu0 0.0
      %2142 = vmatmul.mubr.f32.gmra.mrb[0].mxu0 %v1917
      %v2143 = vpop.f32.mrb[0].mxu0
      %v2144 = vadd.f32 0.0, %v2143
      %v2145 = vpop.f32.mrb[0].mxu0
      %2146 = vdwg.mxu0
      %v2147 = vadd.f32 %v1757, %v1989
      %v2148 = vadd.f32 %v1758, %v1994
      %v2149 = vadd.f32 %v1759, %v1999
      %v2150 = vadd.f32 %v1760, %v2004
      %v2151 = vadd.f32 %v1761, %v2009
      %v2152 = vadd.f32 %v1762, %v2014
      %v2153 = vadd.f32 %v1763, %v2019
      %v2154 = vadd.f32 %v1764, %v2024
      %v2155 = vadd.f32 %v1765, %v2029
      %v2156 = vadd.f32 %v1766, %v2034
      %v2157 = vadd.f32 %v1767, %v2039
      %v2158 = vadd.f32 %v1768, %v2044
      %v2159 = vadd.f32 %v1769, %v2049
      %v2160 = vadd.f32 %v1770, %v2054
      %v2161 = vadd.f32 %v1771, %v2059
      %v2162 = vadd.f32 %v1772, %v2064
      %v2163 = vadd.f32 %v1773, %v2069
      %v2164 = vadd.f32 %v1774, %v2074
      %v2165 = vadd.f32 %v1775, %v2079
      %v2166 = vadd.f32 %v1776, %v2084
      %v2167 = vadd.f32 %v1777, %v2089
      %v2168 = vadd.f32 %v1778, %v2094
      %v2169 = vadd.f32 %v1779, %v2099
      %v2170 = vadd.f32 %v1780, %v2104
      %v2171 = vadd.f32 %v1781, %v2109
      %v2172 = vadd.f32 %v1782, %v2114
      %v2173 = vadd.f32 %v1783, %v2119
      %v2174 = vadd.f32 %v1784, %v2124
      %v2175 = vadd.f32 %v1785, %v2129
      %v2176 = vadd.f32 %v1786, %v2134
      %v2177 = vadd.f32 %v1787, %v2139
      %v2178 = vadd.f32 %v1788, %v2144
      %v2179 = vld [vmem:[%s273 + $0x2] sm:$0xff]
      %v2180 = vld [vmem:[%s273 + $0xa] sm:$0xff]
      %v2181 = vld [vmem:[%s273 + $0x1a] sm:$0xff]
      %v2182 = vld [vmem:[%s273 + $0x22] sm:$0xff]
      %v2183 = vld [vmem:[%s273 + $0x32] sm:$0xff]
      %v2184 = vld [vmem:[%s273 + $0x3a] sm:$0xff]
      %v2185 = vld [vmem:[%s273 + $0x4a] sm:$0xff]
      %v2186 = vld [vmem:[%s273 + $0x52] sm:$0xff]
      %v2187 = vld [vmem:[%s273 + $0x62] sm:$0xff]
      %v2188 = vld [vmem:[%s273 + $0x6a] sm:$0xff]
      %v2189 = vld [vmem:[%s273 + $0x7a] sm:$0xff]
      %v2190 = vld [vmem:[%s273 + $0x82] sm:$0xff]
      %v2191 = vld [vmem:[%s273 + $0x92] sm:$0xff]
      %v2192 = vld [vmem:[%s273 + $0x9a] sm:$0xff]
      %v2193 = vld [vmem:[%s273 + $0xaa] sm:$0xff]
      %v2194 = vld [vmem:[%s273 + $0xb2] sm:$0xff]
      %v2195 = vld [vmem:[%s273 + $0xc2] sm:$0xff]
      %v2196 = vld [vmem:[%s273 + $0xca] sm:$0xff]
      %v2197 = vld [vmem:[%s273 + $0xda] sm:$0xff]
      %v2198 = vld [vmem:[%s273 + $0xe2] sm:$0xff]
      %v2199 = vld [vmem:[%s273 + $0xf2] sm:$0xff]
      %v2200 = vld [vmem:[%s273 + $0xfa] sm:$0xff]
      %v2201 = vld [vmem:[%s273 + $0x10a] sm:$0xff]
      %v2202 = vld [vmem:[%s273 + $0x112] sm:$0xff]
      %v2203 = vld [vmem:[%s273 + $0x122] sm:$0xff]
      %v2204 = vld [vmem:[%s273 + $0x12a] sm:$0xff]
      %v2205 = vld [vmem:[%s273 + $0x13a] sm:$0xff]
      %v2206 = vld [vmem:[%s273 + $0x142] sm:$0xff]
      %v2207 = vld [vmem:[%s273 + $0x152] sm:$0xff]
      %v2208 = vld [vmem:[%s273 + $0x15a] sm:$0xff]
      %v2209 = vld [vmem:[%s273 + $0x16a] sm:$0xff]
      %v2210 = vld [vmem:[%s273 + $0x172] sm:$0xff]
      %s2211 = scalar_lea.vmem %s3, 20
      %v2212 = vld [vmem:[%s2211] sm:$0xf]
      %v2214 = vsel %vm359, %v2179, 0
      %v2217 = vsel %vm359, %v2180, 0
      %v2220 = vsel %vm359, %v2181, 0
      %v2223 = vsel %vm359, %v2182, 0
      %v2226 = vsel %vm359, %v2183, 0
      %v2229 = vsel %vm359, %v2184, 0
      %v2232 = vsel %vm359, %v2185, 0
      %v2235 = vsel %vm359, %v2186, 0
      %v2238 = vsel %vm359, %v2187, 0
      %v2241 = vsel %vm359, %v2188, 0
      %v2244 = vsel %vm359, %v2189, 0
      %v2247 = vsel %vm359, %v2190, 0
      %v2250 = vsel %vm359, %v2191, 0
      %v2253 = vsel %vm359, %v2192, 0
      %v2256 = vsel %vm359, %v2193, 0
      %v2259 = vsel %vm359, %v2194, 0
      %v2262 = vsel %vm359, %v2195, 0
      %v2265 = vsel %vm359, %v2196, 0
      %v2268 = vsel %vm359, %v2197, 0
      %v2271 = vsel %vm359, %v2198, 0
      %v2274 = vsel %vm359, %v2199, 0
      %v2277 = vsel %vm359, %v2200, 0
      %v2280 = vsel %vm359, %v2201, 0
      %v2283 = vsel %vm359, %v2202, 0
      %v2286 = vsel %vm359, %v2203, 0
      %v2289 = vsel %vm359, %v2204, 0
      %v2292 = vsel %vm359, %v2205, 0
      %v2295 = vsel %vm359, %v2206, 0
      %v2298 = vsel %vm359, %v2207, 0
      %v2301 = vsel %vm359, %v2208, 0
      %v2304 = vsel %vm359, %v2209, 0
      %v2307 = vsel %vm359, %v2210, 0
      %v2310 = vsel %vm456, %v2212, 0
      %2312 = vmatprep.subr.mxu0 0.0
      %2313 = vmatpush1.msra.mxu0 %v2310
      %2314 = vmatprep.subr.mxu0 0.0
      %2315 = vmatpush1.msra.mxu0 0.0
      %2316 = vmatprep.subr.mxu0 0.0
      %2317 = vmatpush1.msra.mxu0 0.0
      %2318 = vmatprep.subr.mxu0 0.0
      %2319 = vmatpush1.msra.mxu0 0.0
      %2320 = vmatprep.subr.mxu0 0.0
      %2321 = vmatpush1.msra.mxu0 0.0
      %2322 = vmatprep.subr.mxu0 0.0
      %2323 = vmatpush1.msra.mxu0 0.0
      %2324 = vmatprep.subr.mxu0 0.0
      %2325 = vmatpush1.msra.mxu0 0.0
      %2326 = vmatprep.subr.mxu0 0.0
      %2327 = vmatpush1.msra.mxu0 0.0
      %2328 = vmatprep.subr.mxu0 0.0
      %2329 = vmatpush1.msra.mxu0 0.0
      %2330 = vmatprep.subr.mxu0 0.0
      %2331 = vmatpush1.msra.mxu0 0.0
      %2332 = vmatprep.subr.mxu0 0.0
      %2333 = vmatpush1.msra.mxu0 0.0
      %2334 = vmatprep.subr.mxu0 0.0
      %2335 = vmatpush1.msra.mxu0 0.0
      %2336 = vmatprep.subr.mxu0 0.0
      %2337 = vmatpush1.msra.mxu0 0.0
      %2338 = vmatprep.subr.mxu0 0.0
      %2339 = vmatpush1.msra.mxu0 0.0
      %2340 = vmatprep.subr.mxu0 0.0
      %2341 = vmatpush1.msra.mxu0 0.0
      %2342 = vmatprep.subr.mxu0 0.0
      %2343 = vmatpush1.msra.mxu0 0.0
      %2344 = vmatprep.subr.mxu0 0.0
      %2345 = vmatpush1.msra.mxu0 0.0
      %2346 = vmatprep.subr.mxu0 0.0
      %2347 = vmatpush1.msra.mxu0 0.0
      %2348 = vmatprep.subr.mxu0 0.0
      %2349 = vmatpush1.msra.mxu0 0.0
      %2350 = vmatprep.subr.mxu0 0.0
      %2351 = vmatpush1.msra.mxu0 0.0
      %2352 = vmatprep.subr.mxu0 0.0
      %2353 = vmatpush1.msra.mxu0 0.0
      %2354 = vmatprep.subr.mxu0 0.0
      %2355 = vmatpush1.msra.mxu0 0.0
      %2356 = vmatprep.subr.mxu0 0.0
      %2357 = vmatpush1.msra.mxu0 0.0
      %2358 = vmatprep.subr.mxu0 0.0
      %2359 = vmatpush1.msra.mxu0 0.0
      %2360 = vmatprep.subr.mxu0 0.0
      %2361 = vmatpush1.msra.mxu0 0.0
      %2362 = vmatprep.subr.mxu0 0.0
      %2363 = vmatpush1.msra.mxu0 0.0
      %2364 = vmatprep.subr.mxu0 0.0
      %2365 = vmatpush1.msra.mxu0 0.0
      %2366 = vmatprep.subr.mxu0 0.0
      %2367 = vmatpush1.msra.mxu0 0.0
      %2368 = vmatprep.subr.mxu0 0.0
      %2369 = vmatpush1.msra.mxu0 0.0
      %2370 = vmatprep.subr.mxu0 0.0
      %2371 = vmatpush1.msra.mxu0 0.0
      %2372 = vmatprep.subr.mxu0 0.0
      %2373 = vmatpush1.msra.mxu0 0.0
      %2374 = vmatprep.subr.mxu0 0.0
      %2375 = vmatpush1.msra.mxu0 0.0
      %2376 = vmatprep.mubr.f32.mxu0 0.0
      %2377 = vmatmul.mubr.f32.gmra.mrb[0].mxu0 %v2214
      %v2378 = vpop.f32.mrb[0].mxu0
      %v2379 = vadd.f32 0.0, %v2378
      %v2380 = vpop.f32.mrb[0].mxu0
      %2381 = vmatprep.mubr.f32.mxu0 0.0
      %2382 = vmatmul.mubr.f32.gmra.mrb[0].mxu0 %v2217
      %v2383 = vpop.f32.mrb[0].mxu0
      %v2384 = vadd.f32 0.0, %v2383
      %v2385 = vpop.f32.mrb[0].mxu0
      %2386 = vmatprep.mubr.f32.mxu0 0.0
      %2387 = vmatmul.mubr.f32.gmra.mrb[0].mxu0 %v2220
      %v2388 = vpop.f32.mrb[0].mxu0
      %v2389 = vadd.f32 0.0, %v2388
      %v2390 = vpop.f32.mrb[0].mxu0
      %2391 = vmatprep.mubr.f32.mxu0 0.0
      %2392 = vmatmul.mubr.f32.gmra.mrb[0].mxu0 %v2223
      %v2393 = vpop.f32.mrb[0].mxu0
      %v2394 = vadd.f32 0.0, %v2393
      %v2395 = vpop.f32.mrb[0].mxu0
      %2396 = vmatprep.mubr.f32.mxu0 0.0
      %2397 = vmatmul.mubr.f32.gmra.mrb[0].mxu0 %v2226
      %v2398 = vpop.f32.mrb[0].mxu0
      %v2399 = vadd.f32 0.0, %v2398
      %v2400 = vpop.f32.mrb[0].mxu0
      %2401 = vmatprep.mubr.f32.mxu0 0.0
      %2402 = vmatmul.mubr.f32.gmra.mrb[0].mxu0 %v2229
      %v2403 = vpop.f32.mrb[0].mxu0
      %v2404 = vadd.f32 0.0, %v2403
      %v2405 = vpop.f32.mrb[0].mxu0
      %2406 = vmatprep.mubr.f32.mxu0 0.0
      %2407 = vmatmul.mubr.f32.gmra.mrb[0].mxu0 %v2232
      %v2408 = vpop.f32.mrb[0].mxu0
      %v2409 = vadd.f32 0.0, %v2408
      %v2410 = vpop.f32.mrb[0].mxu0
      %2411 = vmatprep.mubr.f32.mxu0 0.0
      %2412 = vmatmul.mubr.f32.gmra.mrb[0].mxu0 %v2235
      %v2413 = vpop.f32.mrb[0].mxu0
      %v2414 = vadd.f32 0.0, %v2413
      %v2415 = vpop.f32.mrb[0].mxu0
      %2416 = vmatprep.mubr.f32.mxu0 0.0
      %2417 = vmatmul.mubr.f32.gmra.mrb[0].mxu0 %v2238
      %v2418 = vpop.f32.mrb[0].mxu0
      %v2419 = vadd.f32 0.0, %v2418
      %v2420 = vpop.f32.mrb[0].mxu0
      %2421 = vmatprep.mubr.f32.mxu0 0.0
      %2422 = vmatmul.mubr.f32.gmra.mrb[0].mxu0 %v2241
      %v2423 = vpop.f32.mrb[0].mxu0
      %v2424 = vadd.f32 0.0, %v2423
      %v2425 = vpop.f32.mrb[0].mxu0
      %2426 = vmatprep.mubr.f32.mxu0 0.0
      %2427 = vmatmul.mubr.f32.gmra.mrb[0].mxu0 %v2244
      %v2428 = vpop.f32.mrb[0].mxu0
      %v2429 = vadd.f32 0.0, %v2428
      %v2430 = vpop.f32.mrb[0].mxu0
      %2431 = vmatprep.mubr.f32.mxu0 0.0
      %2432 = vmatmul.mubr.f32.gmra.mrb[0].mxu0 %v2247
      %v2433 = vpop.f32.mrb[0].mxu0
      %v2434 = vadd.f32 0.0, %v2433
      %v2435 = vpop.f32.mrb[0].mxu0
      %2436 = vmatprep.mubr.f32.mxu0 0.0
      %2437 = vmatmul.mubr.f32.gmra.mrb[0].mxu0 %v2250
      %v2438 = vpop.f32.mrb[0].mxu0
      %v2439 = vadd.f32 0.0, %v2438
      %v2440 = vpop.f32.mrb[0].mxu0
      %2441 = vmatprep.mubr.f32.mxu0 0.0
      %2442 = vmatmul.mubr.f32.gmra.mrb[0].mxu0 %v2253
      %v2443 = vpop.f32.mrb[0].mxu0
      %v2444 = vadd.f32 0.0, %v2443
      %v2445 = vpop.f32.mrb[0].mxu0
      %2446 = vmatprep.mubr.f32.mxu0 0.0
      %2447 = vmatmul.mubr.f32.gmra.mrb[0].mxu0 %v2256
      %v2448 = vpop.f32.mrb[0].mxu0
      %v2449 = vadd.f32 0.0, %v2448
      %v2450 = vpop.f32.mrb[0].mxu0
      %2451 = vmatprep.mubr.f32.mxu0 0.0
      %2452 = vmatmul.mubr.f32.gmra.mrb[0].mxu0 %v2259
      %v2453 = vpop.f32.mrb[0].mxu0
      %v2454 = vadd.f32 0.0, %v2453
      %v2455 = vpop.f32.mrb[0].mxu0
      %2456 = vmatprep.mubr.f32.mxu0 0.0
      %2457 = vmatmul.mubr.f32.gmra.mrb[0].mxu0 %v2262
      %v2458 = vpop.f32.mrb[0].mxu0
      %v2459 = vadd.f32 0.0, %v2458
      %v2460 = vpop.f32.mrb[0].mxu0
      %2461 = vmatprep.mubr.f32.mxu0 0.0
      %2462 = vmatmul.mubr.f32.gmra.mrb[0].mxu0 %v2265
      %v2463 = vpop.f32.mrb[0].mxu0
      %v2464 = vadd.f32 0.0, %v2463
      %v2465 = vpop.f32.mrb[0].mxu0
      %2466 = vmatprep.mubr.f32.mxu0 0.0
      %2467 = vmatmul.mubr.f32.gmra.mrb[0].mxu0 %v2268
      %v2468 = vpop.f32.mrb[0].mxu0
      %v2469 = vadd.f32 0.0, %v2468
      %v2470 = vpop.f32.mrb[0].mxu0
      %2471 = vmatprep.mubr.f32.mxu0 0.0
      %2472 = vmatmul.mubr.f32.gmra.mrb[0].mxu0 %v2271
      %v2473 = vpop.f32.mrb[0].mxu0
      %v2474 = vadd.f32 0.0, %v2473
      %v2475 = vpop.f32.mrb[0].mxu0
      %2476 = vmatprep.mubr.f32.mxu0 0.0
      %2477 = vmatmul.mubr.f32.gmra.mrb[0].mxu0 %v2274
      %v2478 = vpop.f32.mrb[0].mxu0
      %v2479 = vadd.f32 0.0, %v2478
      %v2480 = vpop.f32.mrb[0].mxu0
      %2481 = vmatprep.mubr.f32.mxu0 0.0
      %2482 = vmatmul.mubr.f32.gmra.mrb[0].mxu0 %v2277
      %v2483 = vpop.f32.mrb[0].mxu0
      %v2484 = vadd.f32 0.0, %v2483
      %v2485 = vpop.f32.mrb[0].mxu0
      %2486 = vmatprep.mubr.f32.mxu0 0.0
      %2487 = vmatmul.mubr.f32.gmra.mrb[0].mxu0 %v2280
      %v2488 = vpop.f32.mrb[0].mxu0
      %v2489 = vadd.f32 0.0, %v2488
      %v2490 = vpop.f32.mrb[0].mxu0
      %2491 = vmatprep.mubr.f32.mxu0 0.0
      %2492 = vmatmul.mubr.f32.gmra.mrb[0].mxu0 %v2283
      %v2493 = vpop.f32.mrb[0].mxu0
      %v2494 = vadd.f32 0.0, %v2493
      %v2495 = vpop.f32.mrb[0].mxu0
      %2496 = vmatprep.mubr.f32.mxu0 0.0
      %2497 = vmatmul.mubr.f32.gmra.mrb[0].mxu0 %v2286
      %v2498 = vpop.f32.mrb[0].mxu0
      %v2499 = vadd.f32 0.0, %v2498
      %v2500 = vpop.f32.mrb[0].mxu0
      %2501 = vmatprep.mubr.f32.mxu0 0.0
      %2502 = vmatmul.mubr.f32.gmra.mrb[0].mxu0 %v2289
      %v2503 = vpop.f32.mrb[0].mxu0
      %v2504 = vadd.f32 0.0, %v2503
      %v2505 = vpop.f32.mrb[0].mxu0
      %2506 = vmatprep.mubr.f32.mxu0 0.0
      %2507 = vmatmul.mubr.f32.gmra.mrb[0].mxu0 %v2292
      %v2508 = vpop.f32.mrb[0].mxu0
      %v2509 = vadd.f32 0.0, %v2508
      %v2510 = vpop.f32.mrb[0].mxu0
      %2511 = vmatprep.mubr.f32.mxu0 0.0
      %2512 = vmatmul.mubr.f32.gmra.mrb[0].mxu0 %v2295
      %v2513 = vpop.f32.mrb[0].mxu0
      %v2514 = vadd.f32 0.0, %v2513
      %v2515 = vpop.f32.mrb[0].mxu0
      %2516 = vmatprep.mubr.f32.mxu0 0.0
      %2517 = vmatmul.mubr.f32.gmra.mrb[0].mxu0 %v2298
      %v2518 = vpop.f32.mrb[0].mxu0
      %v2519 = vadd.f32 0.0, %v2518
      %v2520 = vpop.f32.mrb[0].mxu0
      %2521 = vmatprep.mubr.f32.mxu0 0.0
      %2522 = vmatmul.mubr.f32.gmra.mrb[0].mxu0 %v2301
      %v2523 = vpop.f32.mrb[0].mxu0
      %v2524 = vadd.f32 0.0, %v2523
      %v2525 = vpop.f32.mrb[0].mxu0
      %2526 = vmatprep.mubr.f32.mxu0 0.0
      %2527 = vmatmul.mubr.f32.gmra.mrb[0].mxu0 %v2304
      %v2528 = vpop.f32.mrb[0].mxu0
      %v2529 = vadd.f32 0.0, %v2528
      %v2530 = vpop.f32.mrb[0].mxu0
      %2531 = vmatprep.mubr.f32.mxu0 0.0
      %2532 = vmatmul.mubr.f32.gmra.mrb[0].mxu0 %v2307
      %v2533 = vpop.f32.mrb[0].mxu0
      %v2534 = vadd.f32 0.0, %v2533
      %v2535 = vpop.f32.mrb[0].mxu0
      %2536 = vdwg.mxu0
      %v2537 = vadd.f32 %v2147, %v2379
      %v2538 = vadd.f32 %v2148, %v2384
      %v2539 = vadd.f32 %v2149, %v2389
      %v2540 = vadd.f32 %v2150, %v2394
      %v2541 = vadd.f32 %v2151, %v2399
      %v2542 = vadd.f32 %v2152, %v2404
      %v2543 = vadd.f32 %v2153, %v2409
      %v2544 = vadd.f32 %v2154, %v2414
      %v2545 = vadd.f32 %v2155, %v2419
      %v2546 = vadd.f32 %v2156, %v2424
      %v2547 = vadd.f32 %v2157, %v2429
      %v2548 = vadd.f32 %v2158, %v2434
      %v2549 = vadd.f32 %v2159, %v2439
      %v2550 = vadd.f32 %v2160, %v2444
      %v2551 = vadd.f32 %v2161, %v2449
      %v2552 = vadd.f32 %v2162, %v2454
      %v2553 = vadd.f32 %v2163, %v2459
      %v2554 = vadd.f32 %v2164, %v2464
      %v2555 = vadd.f32 %v2165, %v2469
      %v2556 = vadd.f32 %v2166, %v2474
      %v2557 = vadd.f32 %v2167, %v2479
      %v2558 = vadd.f32 %v2168, %v2484
      %v2559 = vadd.f32 %v2169, %v2489
      %v2560 = vadd.f32 %v2170, %v2494
      %v2561 = vadd.f32 %v2171, %v2499
      %v2562 = vadd.f32 %v2172, %v2504
      %v2563 = vadd.f32 %v2173, %v2509
      %v2564 = vadd.f32 %v2174, %v2514
      %v2565 = vadd.f32 %v2175, %v2519
      %v2566 = vadd.f32 %v2176, %v2524
      %v2567 = vadd.f32 %v2177, %v2529
      %v2568 = vadd.f32 %v2178, %v2534
      %v2569 = vld [vmem:[%s280] sm:$0xff]
      %v2570 = vld [vmem:[%s280 + $0x8] sm:$0xff]
      %v2571 = vld [vmem:[%s280 + $0x18] sm:$0xff]
      %v2572 = vld [vmem:[%s280 + $0x20] sm:$0xff]
      %v2573 = vld [vmem:[%s280 + $0x30] sm:$0xff]
      %v2574 = vld [vmem:[%s280 + $0x38] sm:$0xff]
      %v2575 = vld [vmem:[%s280 + $0x48] sm:$0xff]
      %v2576 = vld [vmem:[%s280 + $0x50] sm:$0xff]
      %v2577 = vld [vmem:[%s280 + $0x60] sm:$0xff]
      %v2578 = vld [vmem:[%s280 + $0x68] sm:$0xff]
      %v2579 = vld [vmem:[%s280 + $0x78] sm:$0xff]
      %v2580 = vld [vmem:[%s280 + $0x80] sm:$0xff]
      %v2581 = vld [vmem:[%s280 + $0x90] sm:$0xff]
      %v2582 = vld [vmem:[%s280 + $0x98] sm:$0xff]
      %v2583 = vld [vmem:[%s280 + $0xa8] sm:$0xff]
      %v2584 = vld [vmem:[%s280 + $0xb0] sm:$0xff]
      %v2585 = vld [vmem:[%s280 + $0xc0] sm:$0xff]
      %v2586 = vld [vmem:[%s280 + $0xc8] sm:$0xff]
      %v2587 = vld [vmem:[%s280 + $0xd8] sm:$0xff]
      %v2588 = vld [vmem:[%s280 + $0xe0] sm:$0xff]
      %v2589 = vld [vmem:[%s280 + $0xf0] sm:$0xff]
      %v2590 = vld [vmem:[%s280 + $0xf8] sm:$0xff]
      %v2591 = vld [vmem:[%s280 + $0x108] sm:$0xff]
      %v2592 = vld [vmem:[%s280 + $0x110] sm:$0xff]
      %v2593 = vld [vmem:[%s280 + $0x120] sm:$0xff]
      %v2594 = vld [vmem:[%s280 + $0x128] sm:$0xff]
      %v2595 = vld [vmem:[%s280 + $0x138] sm:$0xff]
      %v2596 = vld [vmem:[%s280 + $0x140] sm:$0xff]
      %v2597 = vld [vmem:[%s280 + $0x150] sm:$0xff]
      %v2598 = vld [vmem:[%s280 + $0x158] sm:$0xff]
      %v2599 = vld [vmem:[%s280 + $0x168] sm:$0xff]
      %v2600 = vld [vmem:[%s280 + $0x170] sm:$0xff]
      %s2601 = scalar_lea.vmem %s3, 24
      %v2602 = vld [vmem:[%s2601] sm:$0xf]
      %v2604 = vsel %vm359, %v2569, 0
      %v2607 = vsel %vm359, %v2570, 0
      %v2610 = vsel %vm359, %v2571, 0
      %v2613 = vsel %vm359, %v2572, 0
      %v2616 = vsel %vm359, %v2573, 0
      %v2619 = vsel %vm359, %v2574, 0
      %v2622 = vsel %vm359, %v2575, 0
      %v2625 = vsel %vm359, %v2576, 0
      %v2628 = vsel %vm359, %v2577, 0
      %v2631 = vsel %vm359, %v2578, 0
      %v2634 = vsel %vm359, %v2579, 0
      %v2637 = vsel %vm359, %v2580, 0
      %v2640 = vsel %vm359, %v2581, 0
      %v2643 = vsel %vm359, %v2582, 0
      %v2646 = vsel %vm359, %v2583, 0
      %v2649 = vsel %vm359, %v2584, 0
      %v2652 = vsel %vm359, %v2585, 0
      %v2655 = vsel %vm359, %v2586, 0
      %v2658 = vsel %vm359, %v2587, 0
      %v2661 = vsel %vm359, %v2588, 0
      %v2664 = vsel %vm359, %v2589, 0
      %v2667 = vsel %vm359, %v2590, 0
      %v2670 = vsel %vm359, %v2591, 0
      %v2673 = vsel %vm359, %v2592, 0
      %v2676 = vsel %vm359, %v2593, 0
      %v2679 = vsel %vm359, %v2594, 0
      %v2682 = vsel %vm359, %v2595, 0
      %v2685 = vsel %vm359, %v2596, 0
      %v2688 = vsel %vm359, %v2597, 0
      %v2691 = vsel %vm359, %v2598, 0
      %v2694 = vsel %vm359, %v2599, 0
      %v2697 = vsel %vm359, %v2600, 0
      %v2700 = vsel %vm456, %v2602, 0
      %2702 = vmatprep.subr.mxu0 0.0
      %2703 = vmatpush1.msra.mxu0 %v2700
      %2704 = vmatprep.subr.mxu0 0.0
      %2705 = vmatpush1.msra.mxu0 0.0
      %2706 = vmatprep.subr.mxu0 0.0
      %2707 = vmatpush1.msra.mxu0 0.0
      %2708 = vmatprep.subr.mxu0 0.0
      %2709 = vmatpush1.msra.mxu0 0.0
      %2710 = vmatprep.subr.mxu0 0.0
      %2711 = vmatpush1.msra.mxu0 0.0
      %2712 = vmatprep.subr.mxu0 0.0
      %2713 = vmatpush1.msra.mxu0 0.0
      %2714 = vmatprep.subr.mxu0 0.0
      %2715 = vmatpush1.msra.mxu0 0.0
      %2716 = vmatprep.subr.mxu0 0.0
      %2717 = vmatpush1.msra.mxu0 0.0
      %2718 = vmatprep.subr.mxu0 0.0
      %2719 = vmatpush1.msra.mxu0 0.0
      %2720 = vmatprep.subr.mxu0 0.0
      %2721 = vmatpush1.msra.mxu0 0.0
      %2722 = vmatprep.subr.mxu0 0.0
      %2723 = vmatpush1.msra.mxu0 0.0
      %2724 = vmatprep.subr.mxu0 0.0
      %2725 = vmatpush1.msra.mxu0 0.0
      %2726 = vmatprep.subr.mxu0 0.0
      %2727 = vmatpush1.msra.mxu0 0.0
      %2728 = vmatprep.subr.mxu0 0.0
      %2729 = vmatpush1.msra.mxu0 0.0
      %2730 = vmatprep.subr.mxu0 0.0
      %2731 = vmatpush1.msra.mxu0 0.0
      %2732 = vmatprep.subr.mxu0 0.0
      %2733 = vmatpush1.msra.mxu0 0.0
      %2734 = vmatprep.subr.mxu0 0.0
      %2735 = vmatpush1.msra.mxu0 0.0
      %2736 = vmatprep.subr.mxu0 0.0
      %2737 = vmatpush1.msra.mxu0 0.0
      %2738 = vmatprep.subr.mxu0 0.0
      %2739 = vmatpush1.msra.mxu0 0.0
      %2740 = vmatprep.subr.mxu0 0.0
      %2741 = vmatpush1.msra.mxu0 0.0
      %2742 = vmatprep.subr.mxu0 0.0
      %2743 = vmatpush1.msra.mxu0 0.0
      %2744 = vmatprep.subr.mxu0 0.0
      %2745 = vmatpush1.msra.mxu0 0.0
      %2746 = vmatprep.subr.mxu0 0.0
      %2747 = vmatpush1.msra.mxu0 0.0
      %2748 = vmatprep.subr.mxu0 0.0
      %2749 = vmatpush1.msra.mxu0 0.0
      %2750 = vmatprep.subr.mxu0 0.0
      %2751 = vmatpush1.msra.mxu0 0.0
      %2752 = vmatprep.subr.mxu0 0.0
      %2753 = vmatpush1.msra.mxu0 0.0
      %2754 = vmatprep.subr.mxu0 0.0
      %2755 = vmatpush1.msra.mxu0 0.0
      %2756 = vmatprep.subr.mxu0 0.0
      %2757 = vmatpush1.msra.mxu0 0.0
      %2758 = vmatprep.subr.mxu0 0.0
      %2759 = vmatpush1.msra.mxu0 0.0
      %2760 = vmatprep.subr.mxu0 0.0
      %2761 = vmatpush1.msra.mxu0 0.0
      %2762 = vmatprep.subr.mxu0 0.0
      %2763 = vmatpush1.msra.mxu0 0.0
      %2764 = vmatprep.subr.mxu0 0.0
      %2765 = vmatpush1.msra.mxu0 0.0
      %2766 = vmatprep.mubr.f32.mxu0 0.0
      %2767 = vmatmul.mubr.f32.gmra.mrb[0].mxu0 %v2604
      %v2768 = vpop.f32.mrb[0].mxu0
      %v2769 = vadd.f32 0.0, %v2768
      %v2770 = vpop.f32.mrb[0].mxu0
      %2771 = vmatprep.mubr.f32.mxu0 0.0
      %2772 = vmatmul.mubr.f32.gmra.mrb[0].mxu0 %v2607
      %v2773 = vpop.f32.mrb[0].mxu0
      %v2774 = vadd.f32 0.0, %v2773
      %v2775 = vpop.f32.mrb[0].mxu0
      %2776 = vmatprep.mubr.f32.mxu0 0.0
      %2777 = vmatmul.mubr.f32.gmra.mrb[0].mxu0 %v2610
      %v2778 = vpop.f32.mrb[0].mxu0
      %v2779 = vadd.f32 0.0, %v2778
      %v2780 = vpop.f32.mrb[0].mxu0
      %2781 = vmatprep.mubr.f32.mxu0 0.0
      %2782 = vmatmul.mubr.f32.gmra.mrb[0].mxu0 %v2613
      %v2783 = vpop.f32.mrb[0].mxu0
      %v2784 = vadd.f32 0.0, %v2783
      %v2785 = vpop.f32.mrb[0].mxu0
      %2786 = vmatprep.mubr.f32.mxu0 0.0
      %2787 = vmatmul.mubr.f32.gmra.mrb[0].mxu0 %v2616
      %v2788 = vpop.f32.mrb[0].mxu0
      %v2789 = vadd.f32 0.0, %v2788
      %v2790 = vpop.f32.mrb[0].mxu0
      %2791 = vmatprep.mubr.f32.mxu0 0.0
      %2792 = vmatmul.mubr.f32.gmra.mrb[0].mxu0 %v2619
      %v2793 = vpop.f32.mrb[0].mxu0
      %v2794 = vadd.f32 0.0, %v2793
      %v2795 = vpop.f32.mrb[0].mxu0
      %2796 = vmatprep.mubr.f32.mxu0 0.0
      %2797 = vmatmul.mubr.f32.gmra.mrb[0].mxu0 %v2622
      %v2798 = vpop.f32.mrb[0].mxu0
      %v2799 = vadd.f32 0.0, %v2798
      %v2800 = vpop.f32.mrb[0].mxu0
      %2801 = vmatprep.mubr.f32.mxu0 0.0
      %2802 = vmatmul.mubr.f32.gmra.mrb[0].mxu0 %v2625
      %v2803 = vpop.f32.mrb[0].mxu0
      %v2804 = vadd.f32 0.0, %v2803
      %v2805 = vpop.f32.mrb[0].mxu0
      %2806 = vmatprep.mubr.f32.mxu0 0.0
      %2807 = vmatmul.mubr.f32.gmra.mrb[0].mxu0 %v2628
      %v2808 = vpop.f32.mrb[0].mxu0
      %v2809 = vadd.f32 0.0, %v2808
      %v2810 = vpop.f32.mrb[0].mxu0
      %2811 = vmatprep.mubr.f32.mxu0 0.0
      %2812 = vmatmul.mubr.f32.gmra.mrb[0].mxu0 %v2631
      %v2813 = vpop.f32.mrb[0].mxu0
      %v2814 = vadd.f32 0.0, %v2813
      %v2815 = vpop.f32.mrb[0].mxu0
      %2816 = vmatprep.mubr.f32.mxu0 0.0
      %2817 = vmatmul.mubr.f32.gmra.mrb[0].mxu0 %v2634
      %v2818 = vpop.f32.mrb[0].mxu0
      %v2819 = vadd.f32 0.0, %v2818
      %v2820 = vpop.f32.mrb[0].mxu0
      %2821 = vmatprep.mubr.f32.mxu0 0.0
      %2822 = vmatmul.mubr.f32.gmra.mrb[0].mxu0 %v2637
      %v2823 = vpop.f32.mrb[0].mxu0
      %v2824 = vadd.f32 0.0, %v2823
      %v2825 = vpop.f32.mrb[0].mxu0
      %2826 = vmatprep.mubr.f32.mxu0 0.0
      %2827 = vmatmul.mubr.f32.gmra.mrb[0].mxu0 %v2640
      %v2828 = vpop.f32.mrb[0].mxu0
      %v2829 = vadd.f32 0.0, %v2828
      %v2830 = vpop.f32.mrb[0].mxu0
      %2831 = vmatprep.mubr.f32.mxu0 0.0
      %2832 = vmatmul.mubr.f32.gmra.mrb[0].mxu0 %v2643
      %v2833 = vpop.f32.mrb[0].mxu0
      %v2834 = vadd.f32 0.0, %v2833
      %v2835 = vpop.f32.mrb[0].mxu0
      %2836 = vmatprep.mubr.f32.mxu0 0.0
      %2837 = vmatmul.mubr.f32.gmra.mrb[0].mxu0 %v2646
      %v2838 = vpop.f32.mrb[0].mxu0
      %v2839 = vadd.f32 0.0, %v2838
      %v2840 = vpop.f32.mrb[0].mxu0
      %2841 = vmatprep.mubr.f32.mxu0 0.0
      %2842 = vmatmul.mubr.f32.gmra.mrb[0].mxu0 %v2649
      %v2843 = vpop.f32.mrb[0].mxu0
      %v2844 = vadd.f32 0.0, %v2843
      %v2845 = vpop.f32.mrb[0].mxu0
      %2846 = vmatprep.mubr.f32.mxu0 0.0
      %2847 = vmatmul.mubr.f32.gmra.mrb[0].mxu0 %v2652
      %v2848 = vpop.f32.mrb[0].mxu0
      %v2849 = vadd.f32 0.0, %v2848
      %v2850 = vpop.f32.mrb[0].mxu0
      %2851 = vmatprep.mubr.f32.mxu0 0.0
      %2852 = vmatmul.mubr.f32.gmra.mrb[0].mxu0 %v2655
      %v2853 = vpop.f32.mrb[0].mxu0
      %v2854 = vadd.f32 0.0, %v2853
      %v2855 = vpop.f32.mrb[0].mxu0
      %2856 = vmatprep.mubr.f32.mxu0 0.0
      %2857 = vmatmul.mubr.f32.gmra.mrb[0].mxu0 %v2658
      %v2858 = vpop.f32.mrb[0].mxu0
      %v2859 = vadd.f32 0.0, %v2858
      %v2860 = vpop.f32.mrb[0].mxu0
      %2861 = vmatprep.mubr.f32.mxu0 0.0
      %2862 = vmatmul.mubr.f32.gmra.mrb[0].mxu0 %v2661
      %v2863 = vpop.f32.mrb[0].mxu0
      %v2864 = vadd.f32 0.0, %v2863
      %v2865 = vpop.f32.mrb[0].mxu0
      %2866 = vmatprep.mubr.f32.mxu0 0.0
      %2867 = vmatmul.mubr.f32.gmra.mrb[0].mxu0 %v2664
      %v2868 = vpop.f32.mrb[0].mxu0
      %v2869 = vadd.f32 0.0, %v2868
      %v2870 = vpop.f32.mrb[0].mxu0
      %2871 = vmatprep.mubr.f32.mxu0 0.0
      %2872 = vmatmul.mubr.f32.gmra.mrb[0].mxu0 %v2667
      %v2873 = vpop.f32.mrb[0].mxu0
      %v2874 = vadd.f32 0.0, %v2873
      %v2875 = vpop.f32.mrb[0].mxu0
      %2876 = vmatprep.mubr.f32.mxu0 0.0
      %2877 = vmatmul.mubr.f32.gmra.mrb[0].mxu0 %v2670
      %v2878 = vpop.f32.mrb[0].mxu0
      %v2879 = vadd.f32 0.0, %v2878
      %v2880 = vpop.f32.mrb[0].mxu0
      %2881 = vmatprep.mubr.f32.mxu0 0.0
      %2882 = vmatmul.mubr.f32.gmra.mrb[0].mxu0 %v2673
      %v2883 = vpop.f32.mrb[0].mxu0
      %v2884 = vadd.f32 0.0, %v2883
      %v2885 = vpop.f32.mrb[0].mxu0
      %2886 = vmatprep.mubr.f32.mxu0 0.0
      %2887 = vmatmul.mubr.f32.gmra.mrb[0].mxu0 %v2676
      %v2888 = vpop.f32.mrb[0].mxu0
      %v2889 = vadd.f32 0.0, %v2888
      %v2890 = vpop.f32.mrb[0].mxu0
      %2891 = vmatprep.mubr.f32.mxu0 0.0
      %2892 = vmatmul.mubr.f32.gmra.mrb[0].mxu0 %v2679
      %v2893 = vpop.f32.mrb[0].mxu0
      %v2894 = vadd.f32 0.0, %v2893
      %v2895 = vpop.f32.mrb[0].mxu0
      %2896 = vmatprep.mubr.f32.mxu0 0.0
      %2897 = vmatmul.mubr.f32.gmra.mrb[0].mxu0 %v2682
      %v2898 = vpop.f32.mrb[0].mxu0
      %v2899 = vadd.f32 0.0, %v2898
      %v2900 = vpop.f32.mrb[0].mxu0
      %2901 = vmatprep.mubr.f32.mxu0 0.0
      %2902 = vmatmul.mubr.f32.gmra.mrb[0].mxu0 %v2685
      %v2903 = vpop.f32.mrb[0].mxu0
      %v2904 = vadd.f32 0.0, %v2903
      %v2905 = vpop.f32.mrb[0].mxu0
      %2906 = vmatprep.mubr.f32.mxu0 0.0
      %2907 = vmatmul.mubr.f32.gmra.mrb[0].mxu0 %v2688
      %v2908 = vpop.f32.mrb[0].mxu0
      %v2909 = vadd.f32 0.0, %v2908
      %v2910 = vpop.f32.mrb[0].mxu0
      %2911 = vmatprep.mubr.f32.mxu0 0.0
      %2912 = vmatmul.mubr.f32.gmra.mrb[0].mxu0 %v2691
      %v2913 = vpop.f32.mrb[0].mxu0
      %v2914 = vadd.f32 0.0, %v2913
      %v2915 = vpop.f32.mrb[0].mxu0
      %2916 = vmatprep.mubr.f32.mxu0 0.0
      %2917 = vmatmul.mubr.f32.gmra.mrb[0].mxu0 %v2694
      %v2918 = vpop.f32.mrb[0].mxu0
      %v2919 = vadd.f32 0.0, %v2918
      %v2920 = vpop.f32.mrb[0].mxu0
      %2921 = vmatprep.mubr.f32.mxu0 0.0
      %2922 = vmatmul.mubr.f32.gmra.mrb[0].mxu0 %v2697
      %v2923 = vpop.f32.mrb[0].mxu0
      %v2924 = vadd.f32 0.0, %v2923
      %v2925 = vpop.f32.mrb[0].mxu0
      %2926 = vdwg.mxu0
      %v2927 = vadd.f32 %v2537, %v2769
      %v2928 = vadd.f32 %v2538, %v2774
      %v2929 = vadd.f32 %v2539, %v2779
      %v2930 = vadd.f32 %v2540, %v2784
      %v2931 = vadd.f32 %v2541, %v2789
      %v2932 = vadd.f32 %v2542, %v2794
      %v2933 = vadd.f32 %v2543, %v2799
      %v2934 = vadd.f32 %v2544, %v2804
      %v2935 = vadd.f32 %v2545, %v2809
      %v2936 = vadd.f32 %v2546, %v2814
      %v2937 = vadd.f32 %v2547, %v2819
      %v2938 = vadd.f32 %v2548, %v2824
      %v2939 = vadd.f32 %v2549, %v2829
      %v2940 = vadd.f32 %v2550, %v2834
      %v2941 = vadd.f32 %v2551, %v2839
      %v2942 = vadd.f32 %v2552, %v2844
      %v2943 = vadd.f32 %v2553, %v2849
      %v2944 = vadd.f32 %v2554, %v2854
      %v2945 = vadd.f32 %v2555, %v2859
      %v2946 = vadd.f32 %v2556, %v2864
      %v2947 = vadd.f32 %v2557, %v2869
      %v2948 = vadd.f32 %v2558, %v2874
      %v2949 = vadd.f32 %v2559, %v2879
      %v2950 = vadd.f32 %v2560, %v2884
      %v2951 = vadd.f32 %v2561, %v2889
      %v2952 = vadd.f32 %v2562, %v2894
      %v2953 = vadd.f32 %v2563, %v2899
      %v2954 = vadd.f32 %v2564, %v2904
      %v2955 = vadd.f32 %v2565, %v2909
      %v2956 = vadd.f32 %v2566, %v2914
      %v2957 = vadd.f32 %v2567, %v2919
      %v2958 = vadd.f32 %v2568, %v2924
      %v2959 = vld [vmem:[%s280 + $0x1] sm:$0xff]
      %v2960 = vld [vmem:[%s280 + $0x9] sm:$0xff]
      %v2961 = vld [vmem:[%s280 + $0x19] sm:$0xff]
      %v2962 = vld [vmem:[%s280 + $0x21] sm:$0xff]
      %v2963 = vld [vmem:[%s280 + $0x31] sm:$0xff]
      %v2964 = vld [vmem:[%s280 + $0x39] sm:$0xff]
      %v2965 = vld [vmem:[%s280 + $0x49] sm:$0xff]
      %v2966 = vld [vmem:[%s280 + $0x51] sm:$0xff]
      %v2967 = vld [vmem:[%s280 + $0x61] sm:$0xff]
      %v2968 = vld [vmem:[%s280 + $0x69] sm:$0xff]
      %v2969 = vld [vmem:[%s280 + $0x79] sm:$0xff]
      %v2970 = vld [vmem:[%s280 + $0x81] sm:$0xff]
      %v2971 = vld [vmem:[%s280 + $0x91] sm:$0xff]
      %v2972 = vld [vmem:[%s280 + $0x99] sm:$0xff]
      %v2973 = vld [vmem:[%s280 + $0xa9] sm:$0xff]
      %v2974 = vld [vmem:[%s280 + $0xb1] sm:$0xff]
      %v2975 = vld [vmem:[%s280 + $0xc1] sm:$0xff]
      %v2976 = vld [vmem:[%s280 + $0xc9] sm:$0xff]
      %v2977 = vld [vmem:[%s280 + $0xd9] sm:$0xff]
      %v2978 = vld [vmem:[%s280 + $0xe1] sm:$0xff]
      %v2979 = vld [vmem:[%s280 + $0xf1] sm:$0xff]
      %v2980 = vld [vmem:[%s280 + $0xf9] sm:$0xff]
      %v2981 = vld [vmem:[%s280 + $0x109] sm:$0xff]
      %v2982 = vld [vmem:[%s280 + $0x111] sm:$0xff]
      %v2983 = vld [vmem:[%s280 + $0x121] sm:$0xff]
      %v2984 = vld [vmem:[%s280 + $0x129] sm:$0xff]
      %v2985 = vld [vmem:[%s280 + $0x139] sm:$0xff]
      %v2986 = vld [vmem:[%s280 + $0x141] sm:$0xff]
      %v2987 = vld [vmem:[%s280 + $0x151] sm:$0xff]
      %v2988 = vld [vmem:[%s280 + $0x159] sm:$0xff]
      %v2989 = vld [vmem:[%s280 + $0x169] sm:$0xff]
      %v2990 = vld [vmem:[%s280 + $0x171] sm:$0xff]
      %s2991 = scalar_lea.vmem %s3, 28
      %v2992 = vld [vmem:[%s2991] sm:$0xf]
      %v2994 = vsel %vm359, %v2959, 0
      %v2997 = vsel %vm359, %v2960, 0
      %v3000 = vsel %vm359, %v2961, 0
      %v3003 = vsel %vm359, %v2962, 0
      %v3006 = vsel %vm359, %v2963, 0
      %v3009 = vsel %vm359, %v2964, 0
      %v3012 = vsel %vm359, %v2965, 0
      %v3015 = vsel %vm359, %v2966, 0
      %v3018 = vsel %vm359, %v2967, 0
      %v3021 = vsel %vm359, %v2968, 0
      %v3024 = vsel %vm359, %v2969, 0
      %v3027 = vsel %vm359, %v2970, 0
      %v3030 = vsel %vm359, %v2971, 0
      %v3033 = vsel %vm359, %v2972, 0
      %v3036 = vsel %vm359, %v2973, 0
      %v3039 = vsel %vm359, %v2974, 0
      %v3042 = vsel %vm359, %v2975, 0
      %v3045 = vsel %vm359, %v2976, 0
      %v3048 = vsel %vm359, %v2977, 0
      %v3051 = vsel %vm359, %v2978, 0
      %v3054 = vsel %vm359, %v2979, 0
      %v3057 = vsel %vm359, %v2980, 0
      %v3060 = vsel %vm359, %v2981, 0
      %v3063 = vsel %vm359, %v2982, 0
      %v3066 = vsel %vm359, %v2983, 0
      %v3069 = vsel %vm359, %v2984, 0
      %v3072 = vsel %vm359, %v2985, 0
      %v3075 = vsel %vm359, %v2986, 0
      %v3078 = vsel %vm359, %v2987, 0
      %v3081 = vsel %vm359, %v2988, 0
      %v3084 = vsel %vm359, %v2989, 0
      %v3087 = vsel %vm359, %v2990, 0
      %v3090 = vsel %vm456, %v2992, 0
      %3092 = vmatprep.subr.mxu0 0.0
      %3093 = vmatpush1.msra.mxu0 %v3090
      %3094 = vmatprep.subr.mxu0 0.0
      %3095 = vmatpush1.msra.mxu0 0.0
      %3096 = vmatprep.subr.mxu0 0.0
      %3097 = vmatpush1.msra.mxu0 0.0
      %3098 = vmatprep.subr.mxu0 0.0
      %3099 = vmatpush1.msra.mxu0 0.0
      %3100 = vmatprep.subr.mxu0 0.0
      %3101 = vmatpush1.msra.mxu0 0.0
      %3102 = vmatprep.subr.mxu0 0.0
      %3103 = vmatpush1.msra.mxu0 0.0
      %3104 = vmatprep.subr.mxu0 0.0
      %3105 = vmatpush1.msra.mxu0 0.0
      %3106 = vmatprep.subr.mxu0 0.0
      %3107 = vmatpush1.msra.mxu0 0.0
      %3108 = vmatprep.subr.mxu0 0.0
      %3109 = vmatpush1.msra.mxu0 0.0
      %3110 = vmatprep.subr.mxu0 0.0
      %3111 = vmatpush1.msra.mxu0 0.0
      %3112 = vmatprep.subr.mxu0 0.0
      %3113 = vmatpush1.msra.mxu0 0.0
      %3114 = vmatprep.subr.mxu0 0.0
      %3115 = vmatpush1.msra.mxu0 0.0
      %3116 = vmatprep.subr.mxu0 0.0
      %3117 = vmatpush1.msra.mxu0 0.0
      %3118 = vmatprep.subr.mxu0 0.0
      %3119 = vmatpush1.msra.mxu0 0.0
      %3120 = vmatprep.subr.mxu0 0.0
      %3121 = vmatpush1.msra.mxu0 0.0
      %3122 = vmatprep.subr.mxu0 0.0
      %3123 = vmatpush1.msra.mxu0 0.0
      %3124 = vmatprep.subr.mxu0 0.0
      %3125 = vmatpush1.msra.mxu0 0.0
      %3126 = vmatprep.subr.mxu0 0.0
      %3127 = vmatpush1.msra.mxu0 0.0
      %3128 = vmatprep.subr.mxu0 0.0
      %3129 = vmatpush1.msra.mxu0 0.0
      %3130 = vmatprep.subr.mxu0 0.0
      %3131 = vmatpush1.msra.mxu0 0.0
      %3132 = vmatprep.subr.mxu0 0.0
      %3133 = vmatpush1.msra.mxu0 0.0
      %3134 = vmatprep.subr.mxu0 0.0
      %3135 = vmatpush1.msra.mxu0 0.0
      %3136 = vmatprep.subr.mxu0 0.0
      %3137 = vmatpush1.msra.mxu0 0.0
      %3138 = vmatprep.subr.mxu0 0.0
      %3139 = vmatpush1.msra.mxu0 0.0
      %3140 = vmatprep.subr.mxu0 0.0
      %3141 = vmatpush1.msra.mxu0 0.0
      %3142 = vmatprep.subr.mxu0 0.0
      %3143 = vmatpush1.msra.mxu0 0.0
      %3144 = vmatprep.subr.mxu0 0.0
      %3145 = vmatpush1.msra.mxu0 0.0
      %3146 = vmatprep.subr.mxu0 0.0
      %3147 = vmatpush1.msra.mxu0 0.0
      %3148 = vmatprep.subr.mxu0 0.0
      %3149 = vmatpush1.msra.mxu0 0.0
      %3150 = vmatprep.subr.mxu0 0.0
      %3151 = vmatpush1.msra.mxu0 0.0
      %3152 = vmatprep.subr.mxu0 0.0
      %3153 = vmatpush1.msra.mxu0 0.0
      %3154 = vmatprep.subr.mxu0 0.0
      %3155 = vmatpush1.msra.mxu0 0.0
      %3156 = vmatprep.mubr.f32.mxu0 0.0
      %3157 = vmatmul.mubr.f32.gmra.mrb[0].mxu0 %v2994
      %v3158 = vpop.f32.mrb[0].mxu0
      %v3159 = vadd.f32 0.0, %v3158
      %v3160 = vpop.f32.mrb[0].mxu0
      %3161 = vmatprep.mubr.f32.mxu0 0.0
      %3162 = vmatmul.mubr.f32.gmra.mrb[0].mxu0 %v2997
      %v3163 = vpop.f32.mrb[0].mxu0
      %v3164 = vadd.f32 0.0, %v3163
      %v3165 = vpop.f32.mrb[0].mxu0
      %3166 = vmatprep.mubr.f32.mxu0 0.0
      %3167 = vmatmul.mubr.f32.gmra.mrb[0].mxu0 %v3000
      %v3168 = vpop.f32.mrb[0].mxu0
      %v3169 = vadd.f32 0.0, %v3168
      %v3170 = vpop.f32.mrb[0].mxu0
      %3171 = vmatprep.mubr.f32.mxu0 0.0
      %3172 = vmatmul.mubr.f32.gmra.mrb[0].mxu0 %v3003
      %v3173 = vpop.f32.mrb[0].mxu0
      %v3174 = vadd.f32 0.0, %v3173
      %v3175 = vpop.f32.mrb[0].mxu0
      %3176 = vmatprep.mubr.f32.mxu0 0.0
      %3177 = vmatmul.mubr.f32.gmra.mrb[0].mxu0 %v3006
      %v3178 = vpop.f32.mrb[0].mxu0
      %v3179 = vadd.f32 0.0, %v3178
      %v3180 = vpop.f32.mrb[0].mxu0
      %3181 = vmatprep.mubr.f32.mxu0 0.0
      %3182 = vmatmul.mubr.f32.gmra.mrb[0].mxu0 %v3009
      %v3183 = vpop.f32.mrb[0].mxu0
      %v3184 = vadd.f32 0.0, %v3183
      %v3185 = vpop.f32.mrb[0].mxu0
      %3186 = vmatprep.mubr.f32.mxu0 0.0
      %3187 = vmatmul.mubr.f32.gmra.mrb[0].mxu0 %v3012
      %v3188 = vpop.f32.mrb[0].mxu0
      %v3189 = vadd.f32 0.0, %v3188
      %v3190 = vpop.f32.mrb[0].mxu0
      %3191 = vmatprep.mubr.f32.mxu0 0.0
      %3192 = vmatmul.mubr.f32.gmra.mrb[0].mxu0 %v3015
      %v3193 = vpop.f32.mrb[0].mxu0
      %v3194 = vadd.f32 0.0, %v3193
      %v3195 = vpop.f32.mrb[0].mxu0
      %3196 = vmatprep.mubr.f32.mxu0 0.0
      %3197 = vmatmul.mubr.f32.gmra.mrb[0].mxu0 %v3018
      %v3198 = vpop.f32.mrb[0].mxu0
      %v3199 = vadd.f32 0.0, %v3198
      %v3200 = vpop.f32.mrb[0].mxu0
      %3201 = vmatprep.mubr.f32.mxu0 0.0
      %3202 = vmatmul.mubr.f32.gmra.mrb[0].mxu0 %v3021
      %v3203 = vpop.f32.mrb[0].mxu0
      %v3204 = vadd.f32 0.0, %v3203
      %v3205 = vpop.f32.mrb[0].mxu0
      %3206 = vmatprep.mubr.f32.mxu0 0.0
      %3207 = vmatmul.mubr.f32.gmra.mrb[0].mxu0 %v3024
      %v3208 = vpop.f32.mrb[0].mxu0
      %v3209 = vadd.f32 0.0, %v3208
      %v3210 = vpop.f32.mrb[0].mxu0
      %3211 = vmatprep.mubr.f32.mxu0 0.0
      %3212 = vmatmul.mubr.f32.gmra.mrb[0].mxu0 %v3027
      %v3213 = vpop.f32.mrb[0].mxu0
      %v3214 = vadd.f32 0.0, %v3213
      %v3215 = vpop.f32.mrb[0].mxu0
      %3216 = vmatprep.mubr.f32.mxu0 0.0
      %3217 = vmatmul.mubr.f32.gmra.mrb[0].mxu0 %v3030
      %v3218 = vpop.f32.mrb[0].mxu0
      %v3219 = vadd.f32 0.0, %v3218
      %v3220 = vpop.f32.mrb[0].mxu0
      %3221 = vmatprep.mubr.f32.mxu0 0.0
      %3222 = vmatmul.mubr.f32.gmra.mrb[0].mxu0 %v3033
      %v3223 = vpop.f32.mrb[0].mxu0
      %v3224 = vadd.f32 0.0, %v3223
      %v3225 = vpop.f32.mrb[0].mxu0
      %3226 = vmatprep.mubr.f32.mxu0 0.0
      %3227 = vmatmul.mubr.f32.gmra.mrb[0].mxu0 %v3036
      %v3228 = vpop.f32.mrb[0].mxu0
      %v3229 = vadd.f32 0.0, %v3228
      %v3230 = vpop.f32.mrb[0].mxu0
      %3231 = vmatprep.mubr.f32.mxu0 0.0
      %3232 = vmatmul.mubr.f32.gmra.mrb[0].mxu0 %v3039
      %v3233 = vpop.f32.mrb[0].mxu0
      %v3234 = vadd.f32 0.0, %v3233
      %v3235 = vpop.f32.mrb[0].mxu0
      %3236 = vmatprep.mubr.f32.mxu0 0.0
      %3237 = vmatmul.mubr.f32.gmra.mrb[0].mxu0 %v3042
      %v3238 = vpop.f32.mrb[0].mxu0
      %v3239 = vadd.f32 0.0, %v3238
      %v3240 = vpop.f32.mrb[0].mxu0
      %3241 = vmatprep.mubr.f32.mxu0 0.0
      %3242 = vmatmul.mubr.f32.gmra.mrb[0].mxu0 %v3045
      %v3243 = vpop.f32.mrb[0].mxu0
      %v3244 = vadd.f32 0.0, %v3243
      %v3245 = vpop.f32.mrb[0].mxu0
      %3246 = vmatprep.mubr.f32.mxu0 0.0
      %3247 = vmatmul.mubr.f32.gmra.mrb[0].mxu0 %v3048
      %v3248 = vpop.f32.mrb[0].mxu0
      %v3249 = vadd.f32 0.0, %v3248
      %v3250 = vpop.f32.mrb[0].mxu0
      %3251 = vmatprep.mubr.f32.mxu0 0.0
      %3252 = vmatmul.mubr.f32.gmra.mrb[0].mxu0 %v3051
      %v3253 = vpop.f32.mrb[0].mxu0
      %v3254 = vadd.f32 0.0, %v3253
      %v3255 = vpop.f32.mrb[0].mxu0
      %3256 = vmatprep.mubr.f32.mxu0 0.0
      %3257 = vmatmul.mubr.f32.gmra.mrb[0].mxu0 %v3054
      %v3258 = vpop.f32.mrb[0].mxu0
      %v3259 = vadd.f32 0.0, %v3258
      %v3260 = vpop.f32.mrb[0].mxu0
      %3261 = vmatprep.mubr.f32.mxu0 0.0
      %3262 = vmatmul.mubr.f32.gmra.mrb[0].mxu0 %v3057
      %v3263 = vpop.f32.mrb[0].mxu0
      %v3264 = vadd.f32 0.0, %v3263
      %v3265 = vpop.f32.mrb[0].mxu0
      %3266 = vmatprep.mubr.f32.mxu0 0.0
      %3267 = vmatmul.mubr.f32.gmra.mrb[0].mxu0 %v3060
      %v3268 = vpop.f32.mrb[0].mxu0
      %v3269 = vadd.f32 0.0, %v3268
      %v3270 = vpop.f32.mrb[0].mxu0
      %3271 = vmatprep.mubr.f32.mxu0 0.0
      %3272 = vmatmul.mubr.f32.gmra.mrb[0].mxu0 %v3063
      %v3273 = vpop.f32.mrb[0].mxu0
      %v3274 = vadd.f32 0.0, %v3273
      %v3275 = vpop.f32.mrb[0].mxu0
      %3276 = vmatprep.mubr.f32.mxu0 0.0
      %3277 = vmatmul.mubr.f32.gmra.mrb[0].mxu0 %v3066
      %v3278 = vpop.f32.mrb[0].mxu0
      %v3279 = vadd.f32 0.0, %v3278
      %v3280 = vpop.f32.mrb[0].mxu0
      %3281 = vmatprep.mubr.f32.mxu0 0.0
      %3282 = vmatmul.mubr.f32.gmra.mrb[0].mxu0 %v3069
      %v3283 = vpop.f32.mrb[0].mxu0
      %v3284 = vadd.f32 0.0, %v3283
      %v3285 = vpop.f32.mrb[0].mxu0
      %3286 = vmatprep.mubr.f32.mxu0 0.0
      %3287 = vmatmul.mubr.f32.gmra.mrb[0].mxu0 %v3072
      %v3288 = vpop.f32.mrb[0].mxu0
      %v3289 = vadd.f32 0.0, %v3288
      %v3290 = vpop.f32.mrb[0].mxu0
      %3291 = vmatprep.mubr.f32.mxu0 0.0
      %3292 = vmatmul.mubr.f32.gmra.mrb[0].mxu0 %v3075
      %v3293 = vpop.f32.mrb[0].mxu0
      %v3294 = vadd.f32 0.0, %v3293
      %v3295 = vpop.f32.mrb[0].mxu0
      %3296 = vmatprep.mubr.f32.mxu0 0.0
      %3297 = vmatmul.mubr.f32.gmra.mrb[0].mxu0 %v3078
      %v3298 = vpop.f32.mrb[0].mxu0
      %v3299 = vadd.f32 0.0, %v3298
      %v3300 = vpop.f32.mrb[0].mxu0
      %3301 = vmatprep.mubr.f32.mxu0 0.0
      %3302 = vmatmul.mubr.f32.gmra.mrb[0].mxu0 %v3081
      %v3303 = vpop.f32.mrb[0].mxu0
      %v3304 = vadd.f32 0.0, %v3303
      %v3305 = vpop.f32.mrb[0].mxu0
      %3306 = vmatprep.mubr.f32.mxu0 0.0
      %3307 = vmatmul.mubr.f32.gmra.mrb[0].mxu0 %v3084
      %v3308 = vpop.f32.mrb[0].mxu0
      %v3309 = vadd.f32 0.0, %v3308
      %v3310 = vpop.f32.mrb[0].mxu0
      %3311 = vmatprep.mubr.f32.mxu0 0.0
      %3312 = vmatmul.mubr.f32.gmra.mrb[0].mxu0 %v3087
      %v3313 = vpop.f32.mrb[0].mxu0
      %v3314 = vadd.f32 0.0, %v3313
      %v3315 = vpop.f32.mrb[0].mxu0
      %3316 = vdwg.mxu0
      %v3317 = vadd.f32 %v2927, %v3159
      %v3318 = vadd.f32 %v2928, %v3164
      %v3319 = vadd.f32 %v2929, %v3169
      %v3320 = vadd.f32 %v2930, %v3174
      %v3321 = vadd.f32 %v2931, %v3179
      %v3322 = vadd.f32 %v2932, %v3184
      %v3323 = vadd.f32 %v2933, %v3189
      %v3324 = vadd.f32 %v2934, %v3194
      %v3325 = vadd.f32 %v2935, %v3199
      %v3326 = vadd.f32 %v2936, %v3204
      %v3327 = vadd.f32 %v2937, %v3209
      %v3328 = vadd.f32 %v2938, %v3214
      %v3329 = vadd.f32 %v2939, %v3219
      %v3330 = vadd.f32 %v2940, %v3224
      %v3331 = vadd.f32 %v2941, %v3229
      %v3332 = vadd.f32 %v2942, %v3234
      %v3333 = vadd.f32 %v2943, %v3239
      %v3334 = vadd.f32 %v2944, %v3244
      %v3335 = vadd.f32 %v2945, %v3249
      %v3336 = vadd.f32 %v2946, %v3254
      %v3337 = vadd.f32 %v2947, %v3259
      %v3338 = vadd.f32 %v2948, %v3264
      %v3339 = vadd.f32 %v2949, %v3269
      %v3340 = vadd.f32 %v2950, %v3274
      %v3341 = vadd.f32 %v2951, %v3279
      %v3342 = vadd.f32 %v2952, %v3284
      %v3343 = vadd.f32 %v2953, %v3289
      %v3344 = vadd.f32 %v2954, %v3294
      %v3345 = vadd.f32 %v2955, %v3299
      %v3346 = vadd.f32 %v2956, %v3304
      %v3347 = vadd.f32 %v2957, %v3309
      %v3348 = vadd.f32 %v2958, %v3314
      %v3349 = vld [vmem:[%s280 + $0x2] sm:$0xff]
      %v3350 = vld [vmem:[%s280 + $0xa] sm:$0xff]
      %v3351 = vld [vmem:[%s280 + $0x1a] sm:$0xff]
      %v3352 = vld [vmem:[%s280 + $0x22] sm:$0xff]
      %v3353 = vld [vmem:[%s280 + $0x32] sm:$0xff]
      %v3354 = vld [vmem:[%s280 + $0x3a] sm:$0xff]
      %v3355 = vld [vmem:[%s280 + $0x4a] sm:$0xff]
      %v3356 = vld [vmem:[%s280 + $0x52] sm:$0xff]
      %v3357 = vld [vmem:[%s280 + $0x62] sm:$0xff]
      %v3358 = vld [vmem:[%s280 + $0x6a] sm:$0xff]
      %v3359 = vld [vmem:[%s280 + $0x7a] sm:$0xff]
      %v3360 = vld [vmem:[%s280 + $0x82] sm:$0xff]
      %v3361 = vld [vmem:[%s280 + $0x92] sm:$0xff]
      %v3362 = vld [vmem:[%s280 + $0x9a] sm:$0xff]
      %v3363 = vld [vmem:[%s280 + $0xaa] sm:$0xff]
      %v3364 = vld [vmem:[%s280 + $0xb2] sm:$0xff]
      %v3365 = vld [vmem:[%s280 + $0xc2] sm:$0xff]
      %v3366 = vld [vmem:[%s280 + $0xca] sm:$0xff]
      %v3367 = vld [vmem:[%s280 + $0xda] sm:$0xff]
      %v3368 = vld [vmem:[%s280 + $0xe2] sm:$0xff]
      %v3369 = vld [vmem:[%s280 + $0xf2] sm:$0xff]
      %v3370 = vld [vmem:[%s280 + $0xfa] sm:$0xff]
      %v3371 = vld [vmem:[%s280 + $0x10a] sm:$0xff]
      %v3372 = vld [vmem:[%s280 + $0x112] sm:$0xff]
      %v3373 = vld [vmem:[%s280 + $0x122] sm:$0xff]
      %v3374 = vld [vmem:[%s280 + $0x12a] sm:$0xff]
      %v3375 = vld [vmem:[%s280 + $0x13a] sm:$0xff]
      %v3376 = vld [vmem:[%s280 + $0x142] sm:$0xff]
      %v3377 = vld [vmem:[%s280 + $0x152] sm:$0xff]
      %v3378 = vld [vmem:[%s280 + $0x15a] sm:$0xff]
      %v3379 = vld [vmem:[%s280 + $0x16a] sm:$0xff]
      %v3380 = vld [vmem:[%s280 + $0x172] sm:$0xff]
      %s3381 = scalar_lea.vmem %s3, 32
      %v3382 = vld [vmem:[%s3381] sm:$0xf]
      %v3384 = vsel %vm359, %v3349, 0
      %v3387 = vsel %vm359, %v3350, 0
      %v3390 = vsel %vm359, %v3351, 0
      %v3393 = vsel %vm359, %v3352, 0
      %v3396 = vsel %vm359, %v3353, 0
      %v3399 = vsel %vm359, %v3354, 0
      %v3402 = vsel %vm359, %v3355, 0
      %v3405 = vsel %vm359, %v3356, 0
      %v3408 = vsel %vm359, %v3357, 0
      %v3411 = vsel %vm359, %v3358, 0
      %v3414 = vsel %vm359, %v3359, 0
      %v3417 = vsel %vm359, %v3360, 0
      %v3420 = vsel %vm359, %v3361, 0
      %v3423 = vsel %vm359, %v3362, 0
      %v3426 = vsel %vm359, %v3363, 0
      %v3429 = vsel %vm359, %v3364, 0
      %v3432 = vsel %vm359, %v3365, 0
      %v3435 = vsel %vm359, %v3366, 0
      %v3438 = vsel %vm359, %v3367, 0
      %v3441 = vsel %vm359, %v3368, 0
      %v3444 = vsel %vm359, %v3369, 0
      %v3447 = vsel %vm359, %v3370, 0
      %v3450 = vsel %vm359, %v3371, 0
      %v3453 = vsel %vm359, %v3372, 0
      %v3456 = vsel %vm359, %v3373, 0
      %v3459 = vsel %vm359, %v3374, 0
      %v3462 = vsel %vm359, %v3375, 0
      %v3465 = vsel %vm359, %v3376, 0
      %v3468 = vsel %vm359, %v3377, 0
      %v3471 = vsel %vm359, %v3378, 0
      %v3474 = vsel %vm359, %v3379, 0
      %v3477 = vsel %vm359, %v3380, 0
      %v3480 = vsel %vm456, %v3382, 0
      %3482 = vmatprep.subr.mxu0 0.0
      %3483 = vmatpush1.msra.mxu0 %v3480
      %3484 = vmatprep.subr.mxu0 0.0
      %3485 = vmatpush1.msra.mxu0 0.0
      %3486 = vmatprep.subr.mxu0 0.0
      %3487 = vmatpush1.msra.mxu0 0.0
      %3488 = vmatprep.subr.mxu0 0.0
      %3489 = vmatpush1.msra.mxu0 0.0
      %3490 = vmatprep.subr.mxu0 0.0
      %3491 = vmatpush1.msra.mxu0 0.0
      %3492 = vmatprep.subr.mxu0 0.0
      %3493 = vmatpush1.msra.mxu0 0.0
      %3494 = vmatprep.subr.mxu0 0.0
      %3495 = vmatpush1.msra.mxu0 0.0
      %3496 = vmatprep.subr.mxu0 0.0
      %3497 = vmatpush1.msra.mxu0 0.0
      %3498 = vmatprep.subr.mxu0 0.0
      %3499 = vmatpush1.msra.mxu0 0.0
      %3500 = vmatprep.subr.mxu0 0.0
      %3501 = vmatpush1.msra.mxu0 0.0
      %3502 = vmatprep.subr.mxu0 0.0
      %3503 = vmatpush1.msra.mxu0 0.0
      %3504 = vmatprep.subr.mxu0 0.0
      %3505 = vmatpush1.msra.mxu0 0.0
      %3506 = vmatprep.subr.mxu0 0.0
      %3507 = vmatpush1.msra.mxu0 0.0
      %3508 = vmatprep.subr.mxu0 0.0
      %3509 = vmatpush1.msra.mxu0 0.0
      %3510 = vmatprep.subr.mxu0 0.0
      %3511 = vmatpush1.msra.mxu0 0.0
      %3512 = vmatprep.subr.mxu0 0.0
      %3513 = vmatpush1.msra.mxu0 0.0
      %3514 = vmatprep.subr.mxu0 0.0
      %3515 = vmatpush1.msra.mxu0 0.0
      %3516 = vmatprep.subr.mxu0 0.0
      %3517 = vmatpush1.msra.mxu0 0.0
      %3518 = vmatprep.subr.mxu0 0.0
      %3519 = vmatpush1.msra.mxu0 0.0
      %3520 = vmatprep.subr.mxu0 0.0
      %3521 = vmatpush1.msra.mxu0 0.0
      %3522 = vmatprep.subr.mxu0 0.0
      %3523 = vmatpush1.msra.mxu0 0.0
      %3524 = vmatprep.subr.mxu0 0.0
      %3525 = vmatpush1.msra.mxu0 0.0
      %3526 = vmatprep.subr.mxu0 0.0
      %3527 = vmatpush1.msra.mxu0 0.0
      %3528 = vmatprep.subr.mxu0 0.0
      %3529 = vmatpush1.msra.mxu0 0.0
      %3530 = vmatprep.subr.mxu0 0.0
      %3531 = vmatpush1.msra.mxu0 0.0
      %3532 = vmatprep.subr.mxu0 0.0
      %3533 = vmatpush1.msra.mxu0 0.0
      %3534 = vmatprep.subr.mxu0 0.0
      %3535 = vmatpush1.msra.mxu0 0.0
      %3536 = vmatprep.subr.mxu0 0.0
      %3537 = vmatpush1.msra.mxu0 0.0
      %3538 = vmatprep.subr.mxu0 0.0
      %3539 = vmatpush1.msra.mxu0 0.0
      %3540 = vmatprep.subr.mxu0 0.0
      %3541 = vmatpush1.msra.mxu0 0.0
      %3542 = vmatprep.subr.mxu0 0.0
      %3543 = vmatpush1.msra.mxu0 0.0
      %3544 = vmatprep.subr.mxu0 0.0
      %3545 = vmatpush1.msra.mxu0 0.0
      %3546 = vmatprep.mubr.f32.mxu0 0.0
      %3547 = vmatmul.mubr.f32.gmra.mrb[0].mxu0 %v3384
      %v3548 = vpop.f32.mrb[0].mxu0
      %v3549 = vadd.f32 0.0, %v3548
      %v3550 = vpop.f32.mrb[0].mxu0
      %3551 = vmatprep.mubr.f32.mxu0 0.0
      %3552 = vmatmul.mubr.f32.gmra.mrb[0].mxu0 %v3387
      %v3553 = vpop.f32.mrb[0].mxu0
      %v3554 = vadd.f32 0.0, %v3553
      %v3555 = vpop.f32.mrb[0].mxu0
      %3556 = vmatprep.mubr.f32.mxu0 0.0
      %3557 = vmatmul.mubr.f32.gmra.mrb[0].mxu0 %v3390
      %v3558 = vpop.f32.mrb[0].mxu0
      %v3559 = vadd.f32 0.0, %v3558
      %v3560 = vpop.f32.mrb[0].mxu0
      %3561 = vmatprep.mubr.f32.mxu0 0.0
      %3562 = vmatmul.mubr.f32.gmra.mrb[0].mxu0 %v3393
      %v3563 = vpop.f32.mrb[0].mxu0
      %v3564 = vadd.f32 0.0, %v3563
      %v3565 = vpop.f32.mrb[0].mxu0
      %3566 = vmatprep.mubr.f32.mxu0 0.0
      %3567 = vmatmul.mubr.f32.gmra.mrb[0].mxu0 %v3396
      %v3568 = vpop.f32.mrb[0].mxu0
      %v3569 = vadd.f32 0.0, %v3568
      %v3570 = vpop.f32.mrb[0].mxu0
      %3571 = vmatprep.mubr.f32.mxu0 0.0
      %3572 = vmatmul.mubr.f32.gmra.mrb[0].mxu0 %v3399
      %v3573 = vpop.f32.mrb[0].mxu0
      %v3574 = vadd.f32 0.0, %v3573
      %v3575 = vpop.f32.mrb[0].mxu0
      %3576 = vmatprep.mubr.f32.mxu0 0.0
      %3577 = vmatmul.mubr.f32.gmra.mrb[0].mxu0 %v3402
      %v3578 = vpop.f32.mrb[0].mxu0
      %v3579 = vadd.f32 0.0, %v3578
      %v3580 = vpop.f32.mrb[0].mxu0
      %3581 = vmatprep.mubr.f32.mxu0 0.0
      %3582 = vmatmul.mubr.f32.gmra.mrb[0].mxu0 %v3405
      %v3583 = vpop.f32.mrb[0].mxu0
      %v3584 = vadd.f32 0.0, %v3583
      %v3585 = vpop.f32.mrb[0].mxu0
      %3586 = vmatprep.mubr.f32.mxu0 0.0
      %3587 = vmatmul.mubr.f32.gmra.mrb[0].mxu0 %v3408
      %v3588 = vpop.f32.mrb[0].mxu0
      %v3589 = vadd.f32 0.0, %v3588
      %v3590 = vpop.f32.mrb[0].mxu0
      %3591 = vmatprep.mubr.f32.mxu0 0.0
      %3592 = vmatmul.mubr.f32.gmra.mrb[0].mxu0 %v3411
      %v3593 = vpop.f32.mrb[0].mxu0
      %v3594 = vadd.f32 0.0, %v3593
      %v3595 = vpop.f32.mrb[0].mxu0
      %3596 = vmatprep.mubr.f32.mxu0 0.0
      %3597 = vmatmul.mubr.f32.gmra.mrb[0].mxu0 %v3414
      %v3598 = vpop.f32.mrb[0].mxu0
      %v3599 = vadd.f32 0.0, %v3598
      %v3600 = vpop.f32.mrb[0].mxu0
      %3601 = vmatprep.mubr.f32.mxu0 0.0
      %3602 = vmatmul.mubr.f32.gmra.mrb[0].mxu0 %v3417
      %v3603 = vpop.f32.mrb[0].mxu0
      %v3604 = vadd.f32 0.0, %v3603
      %v3605 = vpop.f32.mrb[0].mxu0
      %3606 = vmatprep.mubr.f32.mxu0 0.0
      %3607 = vmatmul.mubr.f32.gmra.mrb[0].mxu0 %v3420
      %v3608 = vpop.f32.mrb[0].mxu0
      %v3609 = vadd.f32 0.0, %v3608
      %v3610 = vpop.f32.mrb[0].mxu0
      %3611 = vmatprep.mubr.f32.mxu0 0.0
      %3612 = vmatmul.mubr.f32.gmra.mrb[0].mxu0 %v3423
      %v3613 = vpop.f32.mrb[0].mxu0
      %v3614 = vadd.f32 0.0, %v3613
      %v3615 = vpop.f32.mrb[0].mxu0
      %3616 = vmatprep.mubr.f32.mxu0 0.0
      %3617 = vmatmul.mubr.f32.gmra.mrb[0].mxu0 %v3426
      %v3618 = vpop.f32.mrb[0].mxu0
      %v3619 = vadd.f32 0.0, %v3618
      %v3620 = vpop.f32.mrb[0].mxu0
      %3621 = vmatprep.mubr.f32.mxu0 0.0
      %3622 = vmatmul.mubr.f32.gmra.mrb[0].mxu0 %v3429
      %v3623 = vpop.f32.mrb[0].mxu0
      %v3624 = vadd.f32 0.0, %v3623
      %v3625 = vpop.f32.mrb[0].mxu0
      %3626 = vmatprep.mubr.f32.mxu0 0.0
      %3627 = vmatmul.mubr.f32.gmra.mrb[0].mxu0 %v3432
      %v3628 = vpop.f32.mrb[0].mxu0
      %v3629 = vadd.f32 0.0, %v3628
      %v3630 = vpop.f32.mrb[0].mxu0
      %3631 = vmatprep.mubr.f32.mxu0 0.0
      %3632 = vmatmul.mubr.f32.gmra.mrb[0].mxu0 %v3435
      %v3633 = vpop.f32.mrb[0].mxu0
      %v3634 = vadd.f32 0.0, %v3633
      %v3635 = vpop.f32.mrb[0].mxu0
      %3636 = vmatprep.mubr.f32.mxu0 0.0
      %3637 = vmatmul.mubr.f32.gmra.mrb[0].mxu0 %v3438
      %v3638 = vpop.f32.mrb[0].mxu0
      %v3639 = vadd.f32 0.0, %v3638
      %v3640 = vpop.f32.mrb[0].mxu0
      %3641 = vmatprep.mubr.f32.mxu0 0.0
      %3642 = vmatmul.mubr.f32.gmra.mrb[0].mxu0 %v3441
      %v3643 = vpop.f32.mrb[0].mxu0
      %v3644 = vadd.f32 0.0, %v3643
      %v3645 = vpop.f32.mrb[0].mxu0
      %3646 = vmatprep.mubr.f32.mxu0 0.0
      %3647 = vmatmul.mubr.f32.gmra.mrb[0].mxu0 %v3444
      %v3648 = vpop.f32.mrb[0].mxu0
      %v3649 = vadd.f32 0.0, %v3648
      %v3650 = vpop.f32.mrb[0].mxu0
      %3651 = vmatprep.mubr.f32.mxu0 0.0
      %3652 = vmatmul.mubr.f32.gmra.mrb[0].mxu0 %v3447
      %v3653 = vpop.f32.mrb[0].mxu0
      %v3654 = vadd.f32 0.0, %v3653
      %v3655 = vpop.f32.mrb[0].mxu0
      %3656 = vmatprep.mubr.f32.mxu0 0.0
      %3657 = vmatmul.mubr.f32.gmra.mrb[0].mxu0 %v3450
      %v3658 = vpop.f32.mrb[0].mxu0
      %v3659 = vadd.f32 0.0, %v3658
      %v3660 = vpop.f32.mrb[0].mxu0
      %3661 = vmatprep.mubr.f32.mxu0 0.0
      %3662 = vmatmul.mubr.f32.gmra.mrb[0].mxu0 %v3453
      %v3663 = vpop.f32.mrb[0].mxu0
      %v3664 = vadd.f32 0.0, %v3663
      %v3665 = vpop.f32.mrb[0].mxu0
      %3666 = vmatprep.mubr.f32.mxu0 0.0
      %3667 = vmatmul.mubr.f32.gmra.mrb[0].mxu0 %v3456
      %v3668 = vpop.f32.mrb[0].mxu0
      %v3669 = vadd.f32 0.0, %v3668
      %v3670 = vpop.f32.mrb[0].mxu0
      %3671 = vmatprep.mubr.f32.mxu0 0.0
      %3672 = vmatmul.mubr.f32.gmra.mrb[0].mxu0 %v3459
      %v3673 = vpop.f32.mrb[0].mxu0
      %v3674 = vadd.f32 0.0, %v3673
      %v3675 = vpop.f32.mrb[0].mxu0
      %3676 = vmatprep.mubr.f32.mxu0 0.0
      %3677 = vmatmul.mubr.f32.gmra.mrb[0].mxu0 %v3462
      %v3678 = vpop.f32.mrb[0].mxu0
      %v3679 = vadd.f32 0.0, %v3678
      %v3680 = vpop.f32.mrb[0].mxu0
      %3681 = vmatprep.mubr.f32.mxu0 0.0
      %3682 = vmatmul.mubr.f32.gmra.mrb[0].mxu0 %v3465
      %v3683 = vpop.f32.mrb[0].mxu0
      %v3684 = vadd.f32 0.0, %v3683
      %v3685 = vpop.f32.mrb[0].mxu0
      %3686 = vmatprep.mubr.f32.mxu0 0.0
      %3687 = vmatmul.mubr.f32.gmra.mrb[0].mxu0 %v3468
      %v3688 = vpop.f32.mrb[0].mxu0
      %v3689 = vadd.f32 0.0, %v3688
      %v3690 = vpop.f32.mrb[0].mxu0
      %3691 = vmatprep.mubr.f32.mxu0 0.0
      %3692 = vmatmul.mubr.f32.gmra.mrb[0].mxu0 %v3471
      %v3693 = vpop.f32.mrb[0].mxu0
      %v3694 = vadd.f32 0.0, %v3693
      %v3695 = vpop.f32.mrb[0].mxu0
      %3696 = vmatprep.mubr.f32.mxu0 0.0
      %3697 = vmatmul.mubr.f32.gmra.mrb[0].mxu0 %v3474
      %v3698 = vpop.f32.mrb[0].mxu0
      %v3699 = vadd.f32 0.0, %v3698
      %v3700 = vpop.f32.mrb[0].mxu0
      %3701 = vmatprep.mubr.f32.mxu0 0.0
      %3702 = vmatmul.mubr.f32.gmra.mrb[0].mxu0 %v3477
      %v3703 = vpop.f32.mrb[0].mxu0
      %v3704 = vadd.f32 0.0, %v3703
      %v3705 = vpop.f32.mrb[0].mxu0
      %3706 = vdwg.mxu0
      %v3707 = vadd.f32 %v3317, %v3549
      %v3708 = vadd.f32 %v3318, %v3554
      %v3709 = vadd.f32 %v3319, %v3559
      %v3710 = vadd.f32 %v3320, %v3564
      %v3711 = vadd.f32 %v3321, %v3569
      %v3712 = vadd.f32 %v3322, %v3574
      %v3713 = vadd.f32 %v3323, %v3579
      %v3714 = vadd.f32 %v3324, %v3584
      %v3715 = vadd.f32 %v3325, %v3589
      %v3716 = vadd.f32 %v3326, %v3594
      %v3717 = vadd.f32 %v3327, %v3599
      %v3718 = vadd.f32 %v3328, %v3604
      %v3719 = vadd.f32 %v3329, %v3609
      %v3720 = vadd.f32 %v3330, %v3614
      %v3721 = vadd.f32 %v3331, %v3619
      %v3722 = vadd.f32 %v3332, %v3624
      %v3723 = vadd.f32 %v3333, %v3629
      %v3724 = vadd.f32 %v3334, %v3634
      %v3725 = vadd.f32 %v3335, %v3639
      %v3726 = vadd.f32 %v3336, %v3644
      %v3727 = vadd.f32 %v3337, %v3649
      %v3728 = vadd.f32 %v3338, %v3654
      %v3729 = vadd.f32 %v3339, %v3659
      %v3730 = vadd.f32 %v3340, %v3664
      %v3731 = vadd.f32 %v3341, %v3669
      %v3732 = vadd.f32 %v3342, %v3674
      %v3733 = vadd.f32 %v3343, %v3679
      %v3734 = vadd.f32 %v3344, %v3684
      %v3735 = vadd.f32 %v3345, %v3689
      %v3736 = vadd.f32 %v3346, %v3694
      %v3737 = vadd.f32 %v3347, %v3699
      %v3738 = vadd.f32 %v3348, %v3704
      %3739 = vst [vmem:[%s286] sm:$0xff] %v3707
      %3740 = vst [vmem:[%s286 + $0x8] sm:$0xff] %v3708
      %3741 = vst [vmem:[%s286 + $0x10] sm:$0xff] %v3709
      %3742 = vst [vmem:[%s286 + $0x18] sm:$0xff] %v3710
      %3743 = vst [vmem:[%s286 + $0x20] sm:$0xff] %v3711
      %3744 = vst [vmem:[%s286 + $0x28] sm:$0xff] %v3712
      %3745 = vst [vmem:[%s286 + $0x30] sm:$0xff] %v3713
      %3746 = vst [vmem:[%s286 + $0x38] sm:$0xff] %v3714
      %3747 = vst [vmem:[%s286 + $0x40] sm:$0xff] %v3715
      %3748 = vst [vmem:[%s286 + $0x48] sm:$0xff] %v3716
      %3749 = vst [vmem:[%s286 + $0x50] sm:$0xff] %v3717
      %3750 = vst [vmem:[%s286 + $0x58] sm:$0xff] %v3718
      %3751 = vst [vmem:[%s286 + $0x60] sm:$0xff] %v3719
      %3752 = vst [vmem:[%s286 + $0x68] sm:$0xff] %v3720
      %3753 = vst [vmem:[%s286 + $0x70] sm:$0xff] %v3721
      %3754 = vst [vmem:[%s286 + $0x78] sm:$0xff] %v3722
      %3755 = vst [vmem:[%s286 + $0x80] sm:$0xff] %v3723
      %3756 = vst [vmem:[%s286 + $0x88] sm:$0xff] %v3724
      %3757 = vst [vmem:[%s286 + $0x90] sm:$0xff] %v3725
      %3758 = vst [vmem:[%s286 + $0x98] sm:$0xff] %v3726
      %3759 = vst [vmem:[%s286 + $0xa0] sm:$0xff] %v3727
      %3760 = vst [vmem:[%s286 + $0xa8] sm:$0xff] %v3728
      %3761 = vst [vmem:[%s286 + $0xb0] sm:$0xff] %v3729
      %3762 = vst [vmem:[%s286 + $0xb8] sm:$0xff] %v3730
      %3763 = vst [vmem:[%s286 + $0xc0] sm:$0xff] %v3731
      %3764 = vst [vmem:[%s286 + $0xc8] sm:$0xff] %v3732
      %3765 = vst [vmem:[%s286 + $0xd0] sm:$0xff] %v3733
      %3766 = vst [vmem:[%s286 + $0xd8] sm:$0xff] %v3734
      %3767 = vst [vmem:[%s286 + $0xe0] sm:$0xff] %v3735
      %3768 = vst [vmem:[%s286 + $0xe8] sm:$0xff] %v3736
      %3769 = vst [vmem:[%s286 + $0xf0] sm:$0xff] %v3737
      %3770 = vst [vmem:[%s286 + $0xf8] sm:$0xff] %v3738
      %v3771 = vadd.f32 %v3707, %v3708
      %v3772 = vadd.f32 %v3771, %v3709
      %v3773 = vadd.f32 %v3772, %v3710
      %v3774 = vadd.f32 %v3773, %v3711
      %v3775 = vadd.f32 %v3774, %v3712
      %v3776 = vadd.f32 %v3775, %v3713
      %v3777 = vadd.f32 %v3776, %v3714
      %v3778 = vadd.f32 %v3777, %v3715
      %v3779 = vadd.f32 %v3778, %v3716
      %v3780 = vadd.f32 %v3779, %v3717
      %v3781 = vadd.f32 %v3780, %v3718
      %v3782 = vadd.f32 %v3781, %v3719
      %v3783 = vadd.f32 %v3782, %v3720
      %v3784 = vadd.f32 %v3783, %v3721
      %v3785 = vadd.f32 %v3784, %v3722
      %v3786 = vadd.f32 %v3785, %v3723
      %v3787 = vadd.f32 %v3786, %v3724
      %v3788 = vadd.f32 %v3787, %v3725
      %v3789 = vadd.f32 %v3788, %v3726
      %v3790 = vadd.f32 %v3789, %v3727
      %v3791 = vadd.f32 %v3790, %v3728
      %v3792 = vadd.f32 %v3791, %v3729
      %v3793 = vadd.f32 %v3792, %v3730
      %v3794 = vadd.f32 %v3793, %v3731
      %v3795 = vadd.f32 %v3794, %v3732
      %v3796 = vadd.f32 %v3795, %v3733
      %v3797 = vadd.f32 %v3796, %v3734
      %v3798 = vadd.f32 %v3797, %v3735
      %v3799 = vadd.f32 %v3798, %v3736
      %v3800 = vadd.f32 %v3799, %v3737
      %v3801 = vadd.f32 %v3800, %v3738
      %v3802 = vrot.slane %v3801, 4
      %v3803 = vadd.f32 %v3801, %v3802
      %v3804 = vrot.slane %v3803, 2
      %v3805 = vadd.f32 %v3803, %v3804
      %v3806 = vrot.slane %v3805, 1
      %v3807 = vadd.f32 %v3805, %v3806
      %3808 = vst [vmem:[%s291] sm:$0x1] %v3807
      %v3809 = vmul.f32 %v3707, %v3707
      %v3810 = vmul.f32 %v3708, %v3708
      %v3811 = vmul.f32 %v3709, %v3709
      %v3812 = vmul.f32 %v3710, %v3710
      %v3813 = vmul.f32 %v3711, %v3711
      %v3814 = vmul.f32 %v3712, %v3712
      %v3815 = vmul.f32 %v3713, %v3713
      %v3816 = vmul.f32 %v3714, %v3714
      %v3817 = vmul.f32 %v3715, %v3715
      %v3818 = vmul.f32 %v3716, %v3716
      %v3819 = vmul.f32 %v3717, %v3717
      %v3820 = vmul.f32 %v3718, %v3718
      %v3821 = vmul.f32 %v3719, %v3719
      %v3822 = vmul.f32 %v3720, %v3720
      %v3823 = vmul.f32 %v3721, %v3721
      %v3824 = vmul.f32 %v3722, %v3722
      %v3825 = vmul.f32 %v3723, %v3723
      %v3826 = vmul.f32 %v3724, %v3724
      %v3827 = vmul.f32 %v3725, %v3725
      %v3828 = vmul.f32 %v3726, %v3726
      %v3829 = vmul.f32 %v3727, %v3727
      %v3830 = vmul.f32 %v3728, %v3728
      %v3831 = vmul.f32 %v3729, %v3729
      %v3832 = vmul.f32 %v3730, %v3730
      %v3833 = vmul.f32 %v3731, %v3731
      %v3834 = vmul.f32 %v3732, %v3732
      %v3835 = vmul.f32 %v3733, %v3733
      %v3836 = vmul.f32 %v3734, %v3734
      %v3837 = vmul.f32 %v3735, %v3735
      %v3838 = vmul.f32 %v3736, %v3736
      %v3839 = vmul.f32 %v3737, %v3737
      %v3840 = vmul.f32 %v3738, %v3738
      %v3841 = vadd.f32 %v3809, %v3810
      %v3842 = vadd.f32 %v3841, %v3811
      %v3843 = vadd.f32 %v3842, %v3812
      %v3844 = vadd.f32 %v3843, %v3813
      %v3845 = vadd.f32 %v3844, %v3814
      %v3846 = vadd.f32 %v3845, %v3815
      %v3847 = vadd.f32 %v3846, %v3816
      %v3848 = vadd.f32 %v3847, %v3817
      %v3849 = vadd.f32 %v3848, %v3818
      %v3850 = vadd.f32 %v3849, %v3819
      %v3851 = vadd.f32 %v3850, %v3820
      %v3852 = vadd.f32 %v3851, %v3821
      %v3853 = vadd.f32 %v3852, %v3822
      %v3854 = vadd.f32 %v3853, %v3823
      %v3855 = vadd.f32 %v3854, %v3824
      %v3856 = vadd.f32 %v3855, %v3825
      %v3857 = vadd.f32 %v3856, %v3826
      %v3858 = vadd.f32 %v3857, %v3827
      %v3859 = vadd.f32 %v3858, %v3828
      %v3860 = vadd.f32 %v3859, %v3829
      %v3861 = vadd.f32 %v3860, %v3830
      %v3862 = vadd.f32 %v3861, %v3831
      %v3863 = vadd.f32 %v3862, %v3832
      %v3864 = vadd.f32 %v3863, %v3833
      %v3865 = vadd.f32 %v3864, %v3834
      %v3866 = vadd.f32 %v3865, %v3835
      %v3867 = vadd.f32 %v3866, %v3836
      %v3868 = vadd.f32 %v3867, %v3837
      %v3869 = vadd.f32 %v3868, %v3838
      %v3870 = vadd.f32 %v3869, %v3839
      %v3871 = vadd.f32 %v3870, %v3840
      %v3872 = vrot.slane %v3871, 4
      %v3873 = vadd.f32 %v3871, %v3872
      %v3874 = vrot.slane %v3873, 2
      %v3875 = vadd.f32 %v3873, %v3874
      %v3876 = vrot.slane %v3875, 1
      %v3877 = vadd.f32 %v3875, %v3876
      %3878 = vst [vmem:[%s291 + $0x1] sm:$0x1] %v3877
      %s3879 = smul.u32 32, %s17
      %p3880 = scmp.lt.s32.totalorder %s3879, 63
      %s3881 = scalar_select %p3880, %s3879, 63
      %s3882 = smul.addr %s3881, 8
      %s3883 = scalar_lea.vmem %s4, %s3882
      %p3884 = scmp.lt.s32.totalorder %s17, 1
      %s3885 = scalar_select %p3884, %s17, 1
      %s3886 = smul.addr %s3885, 2
      %s3887 = scalar_lea.vmem %s5, %s3886
      // Predicated region
      $region37: #{double_conv.4} parent=35 // pred_check
        %p3888 = pneg %p134
      $region38: #{double_conv.4} parent=35 // pred_check_branch
        %3890 = sbr.rel (%p3888) target = $region40
      $region39: #{double_conv.4} parent=35 // pred_region
        %s3891 = smul.u32 32, %s17
      $region40: #{double_conv.4} parent=35 // pred_fallthru
        _
      // Predicated region
      $region41: #{double_conv.4} parent=35 // pred_check
        %p3892 = pneg %p160
      $region42: #{double_conv.4} parent=35 // pred_check_branch
        %3894 = sbr.rel (%p3892) target = $region44
      $region43: #{double_conv.4} parent=35 // pred_region
        _
      $region44: #{double_conv.4} parent=35 // pred_fallthru
        _
    $region36: #{double_conv.4} parent=5 // pred_fallthru
      _
    %p3895 = scmp.le.s32.totalorder 2, %s12
    // Predicated region
    $region45: #{double_conv.4} parent=5 // pred_check
      %p3896 = pneg %p3895
    $region46: #{double_conv.4} parent=5 // pred_check_branch
      %3898 = sbr.rel (%p3896) target = $region48
    $region47: #{double_conv.4} parent=5 // pred_region
      %s3899 = ssub.s32 %s12, 2
      // Predicated region
      $region49: #{double_conv.4} parent=47 // pred_check
        %p3900 = pneg %p140
      $region50: #{double_conv.4} parent=47 // pred_check_branch
        %3902 = sbr.rel (%p3900) target = $region52
      $region51: #{double_conv.4} parent=47 // pred_region
        %s3903 = smul.u32 32, %s18
        %p3904 = scmp.lt.s32.totalorder %s3903, 63
        %s3905 = scalar_select %p3904, %s3903, 63
        %s3906 = smul.addr %s3905, 8
        %s3907 = scalar_lea.vmem %s4, %s3906
      $region52: #{double_conv.4} parent=47 // pred_fallthru
        _
      // Predicated region
      $region53: #{double_conv.4} parent=47 // pred_check
        %p3908 = pneg %p166
      $region54: #{double_conv.4} parent=47 // pred_check_branch
        %3910 = sbr.rel (%p3908) target = $region56
      $region55: #{double_conv.4} parent=47 // pred_region
        %p3911 = scmp.lt.s32.totalorder %s18, 1
        %s3912 = scalar_select %p3911, %s18, 1
        %s3913 = smul.addr %s3912, 2
        %s3914 = scalar_lea.vmem %s5, %s3913
      $region56: #{double_conv.4} parent=47 // pred_fallthru
        _
    $region48: #{double_conv.4} parent=5 // pred_fallthru
      _
  $region6: #{double_conv.4} parent=0 // loop_footer
    %s16 = sadd.s32 1, %s12
  $region7: #{double_conv.4} parent=0 // loop_footer_branch
    %11 = sbr.rel target = $region3
  $region8: #{double_conv.4} parent=0 // loop_exit
    _

// kernel: double_conv.6
$region0: #{double_conv.6}
  #allocation0 [shape = 'u32[]', space=smem, size = 0x4, offset = 0x4, fixed_abs, tag = 'smem constant byte address 0x4 - core index']
  #allocation1 [shape = 'u32[144,128]{1,0:T(1,128)}', space=vmem, size = 0x12000, scoped, tag = 'internal scratch']
  %s0 = inlined_call_operand.vmem [shape: f32[32,18,8], index: 0, kind: input, shape index: {}]
  %s1 = inlined_call_operand.vmem [shape: f32[32,18,8], index: 1, kind: input, shape index: {}]
  %s2 = inlined_call_operand.vmem [shape: f32[32,18,8], index: 2, kind: input, shape index: {}]
  %s3 = inlined_call_operand.vmem [shape: f32[9,8,128], index: 3, kind: input, shape index: {}]
  %s4 = inlined_call_operand.vmem [shape: f32[512,128], index: 4, kind: output, shape index: {0}]
  %s5 = inlined_call_operand.vmem [shape: f32[2,2,128], index: 5, kind: output, shape index: {1}]
  %6 = xla_tuple %s4, %s5
  %s7 = sld [smem:[#allocation0]]
  $region57: #{double_conv.6} parent=0
    _
  %s9 = ssub.s32 1, %s7
  %s10 = scalar_select 0, %s9, %s7
  loop: start=0, step=1, limit=4
  $region2: #{double_conv.6} parent=0 // loop_pre_header
    _
  $region3: #{double_conv.6} parent=0 // loop_header
    %s12 = sphi 0, %s16
    %p13 = scmp.ge.s32.totalorder %s12, 4
    %s22 = sphi 0, %s24
    %s25 = sphi 0, %s22
    %s26 = sphi 0, %s25
    %s42 = sphi 0, %s26
    %s48 = sphi 0, %s50
    %s51 = sphi 0, %s48
    %s52 = sphi 0, %s51
    %s68 = sphi 0, %s52
    %s74 = sphi 0, %s76
    %s77 = sphi 0, %s74
    %s78 = sphi 0, %s77
    %s94 = sphi 0, %s78
    %s98 = sphi 0, %s98
    %s100 = sphi 0, %s98
    %s101 = sphi 0, %s100
    %s115 = sphi 0, %s101
    %s121 = sphi 0, %s123
    %s124 = sphi 0, %s121
    %s125 = sphi 0, %s124
    %s141 = sphi 0, %s125
    %s147 = sphi 0, %s149
    %s150 = sphi 0, %s147
    %s151 = sphi 0, %s150
    %s167 = sphi 0, %s151
  $region4: #{double_conv.6} parent=0 // loop_header_branch
    %15 = sbr.rel (%p13) target = $region8
  $region5: #{double_conv.6} parent=0 // loop_body
    %s17 = ssub.s32 %s12, 1
    %s18 = ssub.s32 %s12, 2
    %s19 = sadd.s32 %s12, 1
    %s20 = ssub.s32 %s12, %s19
    %p21 = scmp.eq.s32.totalorder %s20, 0
    %s23 = sadd.s32 %s22, 1
    %s24 = scalar_select %p21, %s22, %s23
    %p27 = pneg %p21
    %p28 = scmp.eq.s32.totalorder %s12, 1
    %p29 = por %p27, %p28
    %p30 = scmp.ne.s32.totalorder %s22, %s25
    %p31 = scmp.eq.s32.totalorder %s12, 0
    %p32 = por %p30, %p31
    %p33 = scmp.ne.s32.totalorder %s22, %s25
    %p34 = scmp.eq.s32.totalorder %s17, 1
    %p35 = por %p33, %p34
    %p36 = scmp.ne.s32.totalorder %s25, %s26
    %p37 = scmp.eq.s32.totalorder %s17, 0
    %p38 = por %p36, %p37
    %p39 = scmp.ne.s32.totalorder %s25, %s26
    %p40 = scmp.eq.s32.totalorder %s18, 1
    %p41 = por %p39, %p40
    %p43 = scmp.ne.s32.totalorder %s26, %s42
    %p44 = scmp.eq.s32.totalorder %s18, 0
    %p45 = por %p43, %p44
    %s46 = ssub.s32 %s12, %s19
    %p47 = scmp.eq.s32.totalorder %s46, 0
    %s49 = sadd.s32 %s48, 1
    %s50 = scalar_select %p47, %s48, %s49
    %p53 = pneg %p47
    %p54 = scmp.eq.s32.totalorder %s12, 1
    %p55 = por %p53, %p54
    %p56 = scmp.ne.s32.totalorder %s48, %s51
    %p57 = scmp.eq.s32.totalorder %s12, 0
    %p58 = por %p56, %p57
    %p59 = scmp.ne.s32.totalorder %s48, %s51
    %p60 = scmp.eq.s32.totalorder %s17, 1
    %p61 = por %p59, %p60
    %p62 = scmp.ne.s32.totalorder %s51, %s52
    %p63 = scmp.eq.s32.totalorder %s17, 0
    %p64 = por %p62, %p63
    %p65 = scmp.ne.s32.totalorder %s51, %s52
    %p66 = scmp.eq.s32.totalorder %s18, 1
    %p67 = por %p65, %p66
    %p69 = scmp.ne.s32.totalorder %s52, %s68
    %p70 = scmp.eq.s32.totalorder %s18, 0
    %p71 = por %p69, %p70
    %s72 = ssub.s32 %s12, %s19
    %p73 = scmp.eq.s32.totalorder %s72, 0
    %s75 = sadd.s32 %s74, 1
    %s76 = scalar_select %p73, %s74, %s75
    %p79 = pneg %p73
    %p80 = scmp.eq.s32.totalorder %s12, 1
    %p81 = por %p79, %p80
    %p82 = scmp.ne.s32.totalorder %s74, %s77
    %p83 = scmp.eq.s32.totalorder %s12, 0
    %p84 = por %p82, %p83
    %p85 = scmp.ne.s32.totalorder %s74, %s77
    %p86 = scmp.eq.s32.totalorder %s17, 1
    %p87 = por %p85, %p86
    %p88 = scmp.ne.s32.totalorder %s77, %s78
    %p89 = scmp.eq.s32.totalorder %s17, 0
    %p90 = por %p88, %p89
    %p91 = scmp.ne.s32.totalorder %s77, %s78
    %p92 = scmp.eq.s32.totalorder %s18, 1
    %p93 = por %p91, %p92
    %p95 = scmp.ne.s32.totalorder %s78, %s94
    %p96 = scmp.eq.s32.totalorder %s18, 0
    %p97 = por %p95, %p96
    %s99 = sadd.s32 %s98, 1
    %p102 = scmp.eq.s32.totalorder %s12, 1
    %p103 = scmp.ne.s32.totalorder %s98, %s100
    %p104 = scmp.eq.s32.totalorder %s12, 0
    %p105 = por %p103, %p104
    %p106 = scmp.ne.s32.totalorder %s98, %s100
    %p107 = scmp.eq.s32.totalorder %s17, 1
    %p108 = por %p106, %p107
    %p109 = scmp.ne.s32.totalorder %s100, %s101
    %p110 = scmp.eq.s32.totalorder %s17, 0
    %p111 = por %p109, %p110
    %p112 = scmp.ne.s32.totalorder %s100, %s101
    %p113 = scmp.eq.s32.totalorder %s18, 1
    %p114 = por %p112, %p113
    %p116 = scmp.ne.s32.totalorder %s101, %s115
    %p117 = scmp.eq.s32.totalorder %s18, 0
    %p118 = por %p116, %p117
    %s119 = ssub.s32 %s12, %s19
    %p120 = scmp.eq.s32.totalorder %s119, 0
    %s122 = sadd.s32 %s121, 1
    %s123 = scalar_select %p120, %s121, %s122
    %p126 = pneg %p120
    %p127 = scmp.eq.s32.totalorder %s12, 1
    %p128 = por %p126, %p127
    %p129 = scmp.ne.s32.totalorder %s121, %s124
    %p130 = scmp.eq.s32.totalorder %s12, 0
    %p131 = por %p129, %p130
    %p132 = scmp.ne.s32.totalorder %s121, %s124
    %p133 = scmp.eq.s32.totalorder %s17, 1
    %p134 = por %p132, %p133
    %p135 = scmp.ne.s32.totalorder %s124, %s125
    %p136 = scmp.eq.s32.totalorder %s17, 0
    %p137 = por %p135, %p136
    %p138 = scmp.ne.s32.totalorder %s124, %s125
    %p139 = scmp.eq.s32.totalorder %s18, 1
    %p140 = por %p138, %p139
    %p142 = scmp.ne.s32.totalorder %s125, %s141
    %p143 = scmp.eq.s32.totalorder %s18, 0
    %p144 = por %p142, %p143
    %s145 = ssub.s32 %s12, %s19
    %p146 = scmp.eq.s32.totalorder %s145, 0
    %s148 = sadd.s32 %s147, 1
    %s149 = scalar_select %p146, %s147, %s148
    %p152 = pneg %p146
    %p153 = scmp.eq.s32.totalorder %s12, 1
    %p154 = por %p152, %p153
    %p155 = scmp.ne.s32.totalorder %s147, %s150
    %p156 = scmp.eq.s32.totalorder %s12, 0
    %p157 = por %p155, %p156
    %p158 = scmp.ne.s32.totalorder %s147, %s150
    %p159 = scmp.eq.s32.totalorder %s17, 1
    %p160 = por %p158, %p159
    %p161 = scmp.ne.s32.totalorder %s150, %s151
    %p162 = scmp.eq.s32.totalorder %s17, 0
    %p163 = por %p161, %p162
    %p164 = scmp.ne.s32.totalorder %s150, %s151
    %p165 = scmp.eq.s32.totalorder %s18, 1
    %p166 = por %p164, %p165
    %p168 = scmp.ne.s32.totalorder %s151, %s167
    %p169 = scmp.eq.s32.totalorder %s18, 0
    %p170 = por %p168, %p169
    %p171 = scmp.le.s32.totalorder 1, %s12
    %p172 = scmp.lt.s32.totalorder %s12, 3
    %p173 = pnand %p171, %p172
    %p174 = pneg %p173
    // Predicated region
    $region9: #{double_conv.6} parent=5 // pred_check
      _
    $region10: #{double_conv.6} parent=5 // pred_check_branch
      %176 = sbr.rel (%p173) target = $region12
    $region11: #{double_conv.6} parent=5 // pred_region
      %s177 = ssub.s32 %s12, 1
      // Predicated region
      $region13: #{double_conv.6} parent=11 // pred_check
        %p178 = pneg %p111
      $region14: #{double_conv.6} parent=11 // pred_check_branch
        %180 = sbr.rel (%p178) target = $region16
      $region15: #{double_conv.6} parent=11 // pred_region
        _
      $region16: #{double_conv.6} parent=11 // pred_fallthru
        _
    $region12: #{double_conv.6} parent=5 // pred_fallthru
      _
    %p181 = scmp.lt.s32.totalorder %s12, 2
    // Predicated region
    $region17: #{double_conv.6} parent=5 // pred_check
      %p182 = pneg %p181
    $region18: #{double_conv.6} parent=5 // pred_check_branch
      %184 = sbr.rel (%p182) target = $region20
    $region19: #{double_conv.6} parent=5 // pred_region
      // Predicated region
      $region21: #{double_conv.6} parent=19 // pred_check
        %p185 = pneg %p32
      $region22: #{double_conv.6} parent=19 // pred_check_branch
        %187 = sbr.rel (%p185) target = $region24
      $region23: #{double_conv.6} parent=19 // pred_region
        %s188 = smul.u32 16, %s12
        %p189 = scmp.lt.s32.totalorder %s188, 31
        %s190 = scalar_select %p189, %s188, 31
        %s191 = smul.addr %s190, 3
        %s192 = smul.addr %s191, 8
        %s193 = scalar_lea.vmem %s0, %s192
        %s194 = smul.u32 16, %s12
      $region24: #{double_conv.6} parent=19 // pred_fallthru
        _
      // Predicated region
      $region25: #{double_conv.6} parent=19 // pred_check
        %p195 = pneg %p58
      $region26: #{double_conv.6} parent=19 // pred_check_branch
        %197 = sbr.rel (%p195) target = $region28
      $region27: #{double_conv.6} parent=19 // pred_region
        %s198 = smul.u32 16, %s12
        %p199 = scmp.lt.s32.totalorder %s198, 31
        %s200 = scalar_select %p199, %s198, 31
        %s201 = smul.addr %s200, 3
        %s202 = smul.addr %s201, 8
        %s203 = scalar_lea.vmem %s1, %s202
        %s204 = smul.u32 16, %s12
      $region28: #{double_conv.6} parent=19 // pred_fallthru
        _
      // Predicated region
      $region29: #{double_conv.6} parent=19 // pred_check
        %p205 = pneg %p84
      $region30: #{double_conv.6} parent=19 // pred_check_branch
        %207 = sbr.rel (%p205) target = $region32
      $region31: #{double_conv.6} parent=19 // pred_region
        %s208 = smul.u32 16, %s12
        %p209 = scmp.lt.s32.totalorder %s208, 31
        %s210 = scalar_select %p209, %s208, 31
        %s211 = smul.addr %s210, 3
        %s212 = smul.addr %s211, 8
        %s213 = scalar_lea.vmem %s2, %s212
        %s214 = smul.u32 16, %s12
      $region32: #{double_conv.6} parent=19 // pred_fallthru
        _
    $region20: #{double_conv.6} parent=5 // pred_fallthru
      _
    %p215 = scmp.le.s32.totalorder 1, %s12
    %p216 = scmp.lt.s32.totalorder %s12, 3
    %p217 = pnand %p215, %p216
    %p218 = pneg %p217
    // Predicated region
    $region33: #{double_conv.6} parent=5 // pred_check
      _
    $region34: #{double_conv.6} parent=5 // pred_check_branch
      %220 = sbr.rel (%p217) target = $region36
    $region35: #{double_conv.6} parent=5 // pred_region
      %s221 = ssub.s32 %s12, 1
      %s222 = smul.u32 16, %s17
      %p223 = scmp.lt.s32.totalorder %s222, 31
      %s224 = scalar_select %p223, %s222, 31
      %s225 = smul.addr %s224, 3
      %s226 = smul.addr %s225, 8
      %s227 = scalar_lea.vmem %s0, %s226
      %p228 = pneg %p38
      %p229 = pneg %p35
      %s230 = smul.u32 16, %s17
      %p231 = scmp.lt.s32.totalorder %s230, 31
      %s232 = scalar_select %p231, %s230, 31
      %s233 = smul.addr %s232, 3
      %s234 = smul.addr %s233, 8
      %s235 = scalar_lea.vmem %s1, %s234
      %p236 = pneg %p64
      %p237 = pneg %p61
      %s238 = smul.u32 16, %s17
      %p239 = scmp.lt.s32.totalorder %s238, 31
      %s240 = scalar_select %p239, %s238, 31
      %s241 = smul.addr %s240, 3
      %s242 = smul.addr %s241, 8
      %s243 = scalar_lea.vmem %s2, %s242
      %p244 = pneg %p90
      %p245 = pneg %p87
      %p246 = pneg %p111
      %p247 = pneg %p108
      %p248 = pneg %p137
      %p249 = pneg %p134
      %s250 = smul.u32 32, %s17
      %p251 = scmp.lt.s32.totalorder %s250, 63
      %s252 = scalar_select %p251, %s250, 63
      %s253 = smul.addr %s252, 8
      %s254 = scalar_lea.vmem %s4, %s253
      %p255 = pneg %p163
      %p256 = pneg %p160
      %p257 = scmp.lt.s32.totalorder %s17, 1
      %s258 = scalar_select %p257, %s17, 1
      %s259 = smul.addr %s258, 2
      %s260 = scalar_lea.vmem %s5, %s259
      %s261 = smul.u32 16, %s17
      %p262 = scmp.lt.s32.totalorder %s261, 31
      %s263 = scalar_select %p262, %s261, 31
      %s264 = smul.addr %s263, 3
      %s265 = smul.addr %s264, 8
      %s266 = scalar_lea.vmem %s0, %s265
      %s267 = smul.u32 16, %s17
      %s268 = smul.u32 16, %s17
      %p269 = scmp.lt.s32.totalorder %s268, 31
      %s270 = scalar_select %p269, %s268, 31
      %s271 = smul.addr %s270, 3
      %s272 = smul.addr %s271, 8
      %s273 = scalar_lea.vmem %s1, %s272
      %s274 = smul.u32 16, %s17
      %s275 = smul.u32 16, %s17
      %p276 = scmp.lt.s32.totalorder %s275, 31
      %s277 = scalar_select %p276, %s275, 31
      %s278 = smul.addr %s277, 3
      %s279 = smul.addr %s278, 8
      %s280 = scalar_lea.vmem %s2, %s279
      %s281 = smul.u32 16, %s17
      %s282 = smul.u32 32, %s17
      %p283 = scmp.lt.s32.totalorder %s282, 63
      %s284 = scalar_select %p283, %s282, 63
      %s285 = smul.addr %s284, 8
      %s286 = scalar_lea.vmem %s4, %s285
      %s287 = smul.u32 32, %s17
      %p288 = scmp.lt.s32.totalorder %s17, 1
      %s289 = scalar_select %p288, %s17, 1
      %s290 = smul.addr %s289, 2
      %s291 = scalar_lea.vmem %s5, %s290
      %v292 = vld [vmem:[%s266] sm:$0xff]
      %v293 = vld [vmem:[%s266 + $0x8] sm:$0xff]
      %v294 = vld [vmem:[%s266 + $0x18] sm:$0xff]
      %v295 = vld [vmem:[%s266 + $0x20] sm:$0xff]
      %v296 = vld [vmem:[%s266 + $0x30] sm:$0xff]
      %v297 = vld [vmem:[%s266 + $0x38] sm:$0xff]
      %v298 = vld [vmem:[%s266 + $0x48] sm:$0xff]
      %v299 = vld [vmem:[%s266 + $0x50] sm:$0xff]
      %v300 = vld [vmem:[%s266 + $0x60] sm:$0xff]
      %v301 = vld [vmem:[%s266 + $0x68] sm:$0xff]
      %v302 = vld [vmem:[%s266 + $0x78] sm:$0xff]
      %v303 = vld [vmem:[%s266 + $0x80] sm:$0xff]
      %v304 = vld [vmem:[%s266 + $0x90] sm:$0xff]
      %v305 = vld [vmem:[%s266 + $0x98] sm:$0xff]
      %v306 = vld [vmem:[%s266 + $0xa8] sm:$0xff]
      %v307 = vld [vmem:[%s266 + $0xb0] sm:$0xff]
      %v308 = vld [vmem:[%s266 + $0xc0] sm:$0xff]
      %v309 = vld [vmem:[%s266 + $0xc8] sm:$0xff]
      %v310 = vld [vmem:[%s266 + $0xd8] sm:$0xff]
      %v311 = vld [vmem:[%s266 + $0xe0] sm:$0xff]
      %v312 = vld [vmem:[%s266 + $0xf0] sm:$0xff]
      %v313 = vld [vmem:[%s266 + $0xf8] sm:$0xff]
      %v314 = vld [vmem:[%s266 + $0x108] sm:$0xff]
      %v315 = vld [vmem:[%s266 + $0x110] sm:$0xff]
      %v316 = vld [vmem:[%s266 + $0x120] sm:$0xff]
      %v317 = vld [vmem:[%s266 + $0x128] sm:$0xff]
      %v318 = vld [vmem:[%s266 + $0x138] sm:$0xff]
      %v319 = vld [vmem:[%s266 + $0x140] sm:$0xff]
      %v320 = vld [vmem:[%s266 + $0x150] sm:$0xff]
      %v321 = vld [vmem:[%s266 + $0x158] sm:$0xff]
      %v322 = vld [vmem:[%s266 + $0x168] sm:$0xff]
      %v323 = vld [vmem:[%s266 + $0x170] sm:$0xff]
      %v324 = vld [vmem:[%s3] sm:$0xff]
      %v325 = vld [vmem:[%s266 + $0x1] sm:$0xff]
      %v326 = vld [vmem:[%s266 + $0x9] sm:$0xff]
      %v327 = vld [vmem:[%s266 + $0x19] sm:$0xff]
      %v328 = vld [vmem:[%s266 + $0x21] sm:$0xff]
      %v329 = vld [vmem:[%s266 + $0x31] sm:$0xff]
      %v330 = vld [vmem:[%s266 + $0x39] sm:$0xff]
      %v331 = vld [vmem:[%s266 + $0x49] sm:$0xff]
      %v332 = vld [vmem:[%s266 + $0x51] sm:$0xff]
      %v333 = vld [vmem:[%s266 + $0x61] sm:$0xff]
      %v334 = vld [vmem:[%s266 + $0x69] sm:$0xff]
      %v335 = vld [vmem:[%s266 + $0x79] sm:$0xff]
      %v336 = vld [vmem:[%s266 + $0x81] sm:$0xff]
      %v337 = vld [vmem:[%s266 + $0x91] sm:$0xff]
      %v338 = vld [vmem:[%s266 + $0x99] sm:$0xff]
      %v339 = vld [vmem:[%s266 + $0xa9] sm:$0xff]
      %v340 = vld [vmem:[%s266 + $0xb1] sm:$0xff]
      %v341 = vld [vmem:[%s266 + $0xc1] sm:$0xff]
      %v342 = vld [vmem:[%s266 + $0xc9] sm:$0xff]
      %v343 = vld [vmem:[%s266 + $0xd9] sm:$0xff]
      %v344 = vld [vmem:[%s266 + $0xe1] sm:$0xff]
      %v345 = vld [vmem:[%s266 + $0xf1] sm:$0xff]
      %v346 = vld [vmem:[%s266 + $0xf9] sm:$0xff]
      %v347 = vld [vmem:[%s266 + $0x109] sm:$0xff]
      %v348 = vld [vmem:[%s266 + $0x111] sm:$0xff]
      %v349 = vld [vmem:[%s266 + $0x121] sm:$0xff]
      %v350 = vld [vmem:[%s266 + $0x129] sm:$0xff]
      %v351 = vld [vmem:[%s266 + $0x139] sm:$0xff]
      %v352 = vld [vmem:[%s266 + $0x141] sm:$0xff]
      %v353 = vld [vmem:[%s266 + $0x151] sm:$0xff]
      %v354 = vld [vmem:[%s266 + $0x159] sm:$0xff]
      %v355 = vld [vmem:[%s266 + $0x169] sm:$0xff]
      %v356 = vld [vmem:[%s266 + $0x171] sm:$0xff]
      %s357 = scalar_lea.vmem %s3, 8
      %v358 = vld [vmem:[%s357] sm:$0xff]
      %vm359 = vcmask 64512
      %v361 = vsel %vm359, %v325, 0
      %v364 = vsel %vm359, %v326, 0
      %v367 = vsel %vm359, %v327, 0
      %v370 = vsel %vm359, %v328, 0
      %v373 = vsel %vm359, %v329, 0
      %v376 = vsel %vm359, %v330, 0
      %v379 = vsel %vm359, %v331, 0
      %v382 = vsel %vm359, %v332, 0
      %v385 = vsel %vm359, %v333, 0
      %v388 = vsel %vm359, %v334, 0
      %v391 = vsel %vm359, %v335, 0
      %v394 = vsel %vm359, %v336, 0
      %v397 = vsel %vm359, %v337, 0
      %v400 = vsel %vm359, %v338, 0
      %v403 = vsel %vm359, %v339, 0
      %v406 = vsel %vm359, %v340, 0
      %v409 = vsel %vm359, %v341, 0
      %v412 = vsel %vm359, %v342, 0
      %v415 = vsel %vm359, %v343, 0
      %v418 = vsel %vm359, %v344, 0
      %v421 = vsel %vm359, %v345, 0
      %v424 = vsel %vm359, %v346, 0
      %v427 = vsel %vm359, %v347, 0
      %v430 = vsel %vm359, %v348, 0
      %v433 = vsel %vm359, %v349, 0
      %v436 = vsel %vm359, %v350, 0
      %v439 = vsel %vm359, %v351, 0
      %v442 = vsel %vm359, %v352, 0
      %v445 = vsel %vm359, %v353, 0
      %v448 = vsel %vm359, %v354, 0
      %v451 = vsel %vm359, %v355, 0
      %v454 = vsel %vm359, %v356, 0
      %456 = vmatprep.subr.mxu0 0.0
      %457 = vmatpush1.msra.mxu0 %v358
      %458 = vmatprep.subr.mxu0 0.0
      %459 = vmatpush1.msra.mxu0 0.0
      %460 = vmatprep.subr.mxu0 0.0
      %461 = vmatpush1.msra.mxu0 0.0
      %462 = vmatprep.subr.mxu0 0.0
      %463 = vmatpush1.msra.mxu0 0.0
      %464 = vmatprep.subr.mxu0 0.0
      %465 = vmatpush1.msra.mxu0 0.0
      %466 = vmatprep.subr.mxu0 0.0
      %467 = vmatpush1.msra.mxu0 0.0
      %468 = vmatprep.subr.mxu0 0.0
      %469 = vmatpush1.msra.mxu0 0.0
      %470 = vmatprep.subr.mxu0 0.0
      %471 = vmatpush1.msra.mxu0 0.0
      %472 = vmatprep.subr.mxu0 0.0
      %473 = vmatpush1.msra.mxu0 0.0
      %474 = vmatprep.subr.mxu0 0.0
      %475 = vmatpush1.msra.mxu0 0.0
      %476 = vmatprep.subr.mxu0 0.0
      %477 = vmatpush1.msra.mxu0 0.0
      %478 = vmatprep.subr.mxu0 0.0
      %479 = vmatpush1.msra.mxu0 0.0
      %480 = vmatprep.subr.mxu0 0.0
      %481 = vmatpush1.msra.mxu0 0.0
      %482 = vmatprep.subr.mxu0 0.0
      %483 = vmatpush1.msra.mxu0 0.0
      %484 = vmatprep.subr.mxu0 0.0
      %485 = vmatpush1.msra.mxu0 0.0
      %486 = vmatprep.subr.mxu0 0.0
      %487 = vmatpush1.msra.mxu0 0.0
      %488 = vmatprep.subr.mxu0 0.0
      %489 = vmatpush1.msra.mxu0 0.0
      %490 = vmatprep.subr.mxu0 0.0
      %491 = vmatpush1.msra.mxu0 0.0
      %492 = vmatprep.subr.mxu0 0.0
      %493 = vmatpush1.msra.mxu0 0.0
      %494 = vmatprep.subr.mxu0 0.0
      %495 = vmatpush1.msra.mxu0 0.0
      %496 = vmatprep.subr.mxu0 0.0
      %497 = vmatpush1.msra.mxu0 0.0
      %498 = vmatprep.subr.mxu0 0.0
      %499 = vmatpush1.msra.mxu0 0.0
      %500 = vmatprep.subr.mxu0 0.0
      %501 = vmatpush1.msra.mxu0 0.0
      %502 = vmatprep.subr.mxu0 0.0
      %503 = vmatpush1.msra.mxu0 0.0
      %504 = vmatprep.subr.mxu0 0.0
      %505 = vmatpush1.msra.mxu0 0.0
      %506 = vmatprep.subr.mxu0 0.0
      %507 = vmatpush1.msra.mxu0 0.0
      %508 = vmatprep.subr.mxu0 0.0
      %509 = vmatpush1.msra.mxu0 0.0
      %510 = vmatprep.subr.mxu0 0.0
      %511 = vmatpush1.msra.mxu0 0.0
      %512 = vmatprep.subr.mxu0 0.0
      %513 = vmatpush1.msra.mxu0 0.0
      %514 = vmatprep.subr.mxu0 0.0
      %515 = vmatpush1.msra.mxu0 0.0
      %516 = vmatprep.subr.mxu0 0.0
      %517 = vmatpush1.msra.mxu0 0.0
      %518 = vmatprep.subr.mxu0 0.0
      %519 = vmatpush1.msra.mxu0 0.0
      %520 = vmatprep.mubr.f32.mxu0 0.0
      %521 = vmatmul.mubr.f32.gmra.mrb[0].mxu0 %v361
      %v522 = vpop.f32.mrb[0].mxu0
      %v523 = vadd.f32 0.0, %v522
      %v524 = vpop.f32.mrb[0].mxu0
      %525 = vmatprep.mubr.f32.mxu0 0.0
      %526 = vmatmul.mubr.f32.gmra.mrb[0].mxu0 %v364
      %v527 = vpop.f32.mrb[0].mxu0
      %v528 = vadd.f32 0.0, %v527
      %v529 = vpop.f32.mrb[0].mxu0
      %530 = vmatprep.mubr.f32.mxu0 0.0
      %531 = vmatmul.mubr.f32.gmra.mrb[0].mxu0 %v367
      %v532 = vpop.f32.mrb[0].mxu0
      %v533 = vadd.f32 0.0, %v532
      %v534 = vpop.f32.mrb[0].mxu0
      %535 = vmatprep.mubr.f32.mxu0 0.0
      %536 = vmatmul.mubr.f32.gmra.mrb[0].mxu0 %v370
      %v537 = vpop.f32.mrb[0].mxu0
      %v538 = vadd.f32 0.0, %v537
      %v539 = vpop.f32.mrb[0].mxu0
      %540 = vmatprep.mubr.f32.mxu0 0.0
      %541 = vmatmul.mubr.f32.gmra.mrb[0].mxu0 %v373
      %v542 = vpop.f32.mrb[0].mxu0
      %v543 = vadd.f32 0.0, %v542
      %v544 = vpop.f32.mrb[0].mxu0
      %545 = vmatprep.mubr.f32.mxu0 0.0
      %546 = vmatmul.mubr.f32.gmra.mrb[0].mxu0 %v376
      %v547 = vpop.f32.mrb[0].mxu0
      %v548 = vadd.f32 0.0, %v547
      %v549 = vpop.f32.mrb[0].mxu0
      %550 = vmatprep.mubr.f32.mxu0 0.0
      %551 = vmatmul.mubr.f32.gmra.mrb[0].mxu0 %v379
      %v552 = vpop.f32.mrb[0].mxu0
      %v553 = vadd.f32 0.0, %v552
      %v554 = vpop.f32.mrb[0].mxu0
      %555 = vmatprep.mubr.f32.mxu0 0.0
      %556 = vmatmul.mubr.f32.gmra.mrb[0].mxu0 %v382
      %v557 = vpop.f32.mrb[0].mxu0
      %v558 = vadd.f32 0.0, %v557
      %v559 = vpop.f32.mrb[0].mxu0
      %560 = vmatprep.mubr.f32.mxu0 0.0
      %561 = vmatmul.mubr.f32.gmra.mrb[0].mxu0 %v385
      %v562 = vpop.f32.mrb[0].mxu0
      %v563 = vadd.f32 0.0, %v562
      %v564 = vpop.f32.mrb[0].mxu0
      %565 = vmatprep.mubr.f32.mxu0 0.0
      %566 = vmatmul.mubr.f32.gmra.mrb[0].mxu0 %v388
      %v567 = vpop.f32.mrb[0].mxu0
      %v568 = vadd.f32 0.0, %v567
      %v569 = vpop.f32.mrb[0].mxu0
      %570 = vmatprep.mubr.f32.mxu0 0.0
      %571 = vmatmul.mubr.f32.gmra.mrb[0].mxu0 %v391
      %v572 = vpop.f32.mrb[0].mxu0
      %v573 = vadd.f32 0.0, %v572
      %v574 = vpop.f32.mrb[0].mxu0
      %575 = vmatprep.mubr.f32.mxu0 0.0
      %576 = vmatmul.mubr.f32.gmra.mrb[0].mxu0 %v394
      %v577 = vpop.f32.mrb[0].mxu0
      %v578 = vadd.f32 0.0, %v577
      %v579 = vpop.f32.mrb[0].mxu0
      %580 = vmatprep.mubr.f32.mxu0 0.0
      %581 = vmatmul.mubr.f32.gmra.mrb[0].mxu0 %v397
      %v582 = vpop.f32.mrb[0].mxu0
      %v583 = vadd.f32 0.0, %v582
      %v584 = vpop.f32.mrb[0].mxu0
      %585 = vmatprep.mubr.f32.mxu0 0.0
      %586 = vmatmul.mubr.f32.gmra.mrb[0].mxu0 %v400
      %v587 = vpop.f32.mrb[0].mxu0
      %v588 = vadd.f32 0.0, %v587
      %v589 = vpop.f32.mrb[0].mxu0
      %590 = vmatprep.mubr.f32.mxu0 0.0
      %591 = vmatmul.mubr.f32.gmra.mrb[0].mxu0 %v403
      %v592 = vpop.f32.mrb[0].mxu0
      %v593 = vadd.f32 0.0, %v592
      %v594 = vpop.f32.mrb[0].mxu0
      %595 = vmatprep.mubr.f32.mxu0 0.0
      %596 = vmatmul.mubr.f32.gmra.mrb[0].mxu0 %v406
      %v597 = vpop.f32.mrb[0].mxu0
      %v598 = vadd.f32 0.0, %v597
      %v599 = vpop.f32.mrb[0].mxu0
      %600 = vmatprep.mubr.f32.mxu0 0.0
      %601 = vmatmul.mubr.f32.gmra.mrb[0].mxu0 %v409
      %v602 = vpop.f32.mrb[0].mxu0
      %v603 = vadd.f32 0.0, %v602
      %v604 = vpop.f32.mrb[0].mxu0
      %605 = vmatprep.mubr.f32.mxu0 0.0
      %606 = vmatmul.mubr.f32.gmra.mrb[0].mxu0 %v412
      %v607 = vpop.f32.mrb[0].mxu0
      %v608 = vadd.f32 0.0, %v607
      %v609 = vpop.f32.mrb[0].mxu0
      %610 = vmatprep.mubr.f32.mxu0 0.0
      %611 = vmatmul.mubr.f32.gmra.mrb[0].mxu0 %v415
      %v612 = vpop.f32.mrb[0].mxu0
      %v613 = vadd.f32 0.0, %v612
      %v614 = vpop.f32.mrb[0].mxu0
      %615 = vmatprep.mubr.f32.mxu0 0.0
      %616 = vmatmul.mubr.f32.gmra.mrb[0].mxu0 %v418
      %v617 = vpop.f32.mrb[0].mxu0
      %v618 = vadd.f32 0.0, %v617
      %v619 = vpop.f32.mrb[0].mxu0
      %620 = vmatprep.mubr.f32.mxu0 0.0
      %621 = vmatmul.mubr.f32.gmra.mrb[0].mxu0 %v421
      %v622 = vpop.f32.mrb[0].mxu0
      %v623 = vadd.f32 0.0, %v622
      %v624 = vpop.f32.mrb[0].mxu0
      %625 = vmatprep.mubr.f32.mxu0 0.0
      %626 = vmatmul.mubr.f32.gmra.mrb[0].mxu0 %v424
      %v627 = vpop.f32.mrb[0].mxu0
      %v628 = vadd.f32 0.0, %v627
      %v629 = vpop.f32.mrb[0].mxu0
      %630 = vmatprep.mubr.f32.mxu0 0.0
      %631 = vmatmul.mubr.f32.gmra.mrb[0].mxu0 %v427
      %v632 = vpop.f32.mrb[0].mxu0
      %v633 = vadd.f32 0.0, %v632
      %v634 = vpop.f32.mrb[0].mxu0
      %635 = vmatprep.mubr.f32.mxu0 0.0
      %636 = vmatmul.mubr.f32.gmra.mrb[0].mxu0 %v430
      %v637 = vpop.f32.mrb[0].mxu0
      %v638 = vadd.f32 0.0, %v637
      %v639 = vpop.f32.mrb[0].mxu0
      %640 = vmatprep.mubr.f32.mxu0 0.0
      %641 = vmatmul.mubr.f32.gmra.mrb[0].mxu0 %v433
      %v642 = vpop.f32.mrb[0].mxu0
      %v643 = vadd.f32 0.0, %v642
      %v644 = vpop.f32.mrb[0].mxu0
      %645 = vmatprep.mubr.f32.mxu0 0.0
      %646 = vmatmul.mubr.f32.gmra.mrb[0].mxu0 %v436
      %v647 = vpop.f32.mrb[0].mxu0
      %v648 = vadd.f32 0.0, %v647
      %v649 = vpop.f32.mrb[0].mxu0
      %650 = vmatprep.mubr.f32.mxu0 0.0
      %651 = vmatmul.mubr.f32.gmra.mrb[0].mxu0 %v439
      %v652 = vpop.f32.mrb[0].mxu0
      %v653 = vadd.f32 0.0, %v652
      %v654 = vpop.f32.mrb[0].mxu0
      %655 = vmatprep.mubr.f32.mxu0 0.0
      %656 = vmatmul.mubr.f32.gmra.mrb[0].mxu0 %v442
      %v657 = vpop.f32.mrb[0].mxu0
      %v658 = vadd.f32 0.0, %v657
      %v659 = vpop.f32.mrb[0].mxu0
      %660 = vmatprep.mubr.f32.mxu0 0.0
      %661 = vmatmul.mubr.f32.gmra.mrb[0].mxu0 %v445
      %v662 = vpop.f32.mrb[0].mxu0
      %v663 = vadd.f32 0.0, %v662
      %v664 = vpop.f32.mrb[0].mxu0
      %665 = vmatprep.mubr.f32.mxu0 0.0
      %666 = vmatmul.mubr.f32.gmra.mrb[0].mxu0 %v448
      %v667 = vpop.f32.mrb[0].mxu0
      %v668 = vadd.f32 0.0, %v667
      %v669 = vpop.f32.mrb[0].mxu0
      %670 = vmatprep.mubr.f32.mxu0 0.0
      %671 = vmatmul.mubr.f32.gmra.mrb[0].mxu0 %v451
      %v672 = vpop.f32.mrb[0].mxu0
      %v673 = vadd.f32 0.0, %v672
      %v674 = vpop.f32.mrb[0].mxu0
      %675 = vmatprep.mubr.f32.mxu0 0.0
      %676 = vmatmul.mubr.f32.gmra.mrb[0].mxu0 %v454
      %v677 = vpop.f32.mrb[0].mxu0
      %v678 = vadd.f32 0.0, %v677
      %v679 = vpop.f32.mrb[0].mxu0
      %680 = vdwg.mxu0
      %v682 = vsel %vm359, %v292, 0
      %v685 = vsel %vm359, %v293, 0
      %v688 = vsel %vm359, %v294, 0
      %v691 = vsel %vm359, %v295, 0
      %v694 = vsel %vm359, %v296, 0
      %v697 = vsel %vm359, %v297, 0
      %v700 = vsel %vm359, %v298, 0
      %v703 = vsel %vm359, %v299, 0
      %v706 = vsel %vm359, %v300, 0
      %v709 = vsel %vm359, %v301, 0
      %v712 = vsel %vm359, %v302, 0
      %v715 = vsel %vm359, %v303, 0
      %v718 = vsel %vm359, %v304, 0
      %v721 = vsel %vm359, %v305, 0
      %v724 = vsel %vm359, %v306, 0
      %v727 = vsel %vm359, %v307, 0
      %v730 = vsel %vm359, %v308, 0
      %v733 = vsel %vm359, %v309, 0
      %v736 = vsel %vm359, %v310, 0
      %v739 = vsel %vm359, %v311, 0
      %v742 = vsel %vm359, %v312, 0
      %v745 = vsel %vm359, %v313, 0
      %v748 = vsel %vm359, %v314, 0
      %v751 = vsel %vm359, %v315, 0
      %v754 = vsel %vm359, %v316, 0
      %v757 = vsel %vm359, %v317, 0
      %v760 = vsel %vm359, %v318, 0
      %v763 = vsel %vm359, %v319, 0
      %v766 = vsel %vm359, %v320, 0
      %v769 = vsel %vm359, %v321, 0
      %v772 = vsel %vm359, %v322, 0
      %v775 = vsel %vm359, %v323, 0
      %777 = vmatprep.subr.mxu0 0.0
      %778 = vmatpush1.msra.mxu0 %v324
      %779 = vmatprep.subr.mxu0 0.0
      %780 = vmatpush1.msra.mxu0 0.0
      %781 = vmatprep.subr.mxu0 0.0
      %782 = vmatpush1.msra.mxu0 0.0
      %783 = vmatprep.subr.mxu0 0.0
      %784 = vmatpush1.msra.mxu0 0.0
      %785 = vmatprep.subr.mxu0 0.0
      %786 = vmatpush1.msra.mxu0 0.0
      %787 = vmatprep.subr.mxu0 0.0
      %788 = vmatpush1.msra.mxu0 0.0
      %789 = vmatprep.subr.mxu0 0.0
      %790 = vmatpush1.msra.mxu0 0.0
      %791 = vmatprep.subr.mxu0 0.0
      %792 = vmatpush1.msra.mxu0 0.0
      %793 = vmatprep.subr.mxu0 0.0
      %794 = vmatpush1.msra.mxu0 0.0
      %795 = vmatprep.subr.mxu0 0.0
      %796 = vmatpush1.msra.mxu0 0.0
      %797 = vmatprep.subr.mxu0 0.0
      %798 = vmatpush1.msra.mxu0 0.0
      %799 = vmatprep.subr.mxu0 0.0
      %800 = vmatpush1.msra.mxu0 0.0
      %801 = vmatprep.subr.mxu0 0.0
      %802 = vmatpush1.msra.mxu0 0.0
      %803 = vmatprep.subr.mxu0 0.0
      %804 = vmatpush1.msra.mxu0 0.0
      %805 = vmatprep.subr.mxu0 0.0
      %806 = vmatpush1.msra.mxu0 0.0
      %807 = vmatprep.subr.mxu0 0.0
      %808 = vmatpush1.msra.mxu0 0.0
      %809 = vmatprep.subr.mxu0 0.0
      %810 = vmatpush1.msra.mxu0 0.0
      %811 = vmatprep.subr.mxu0 0.0
      %812 = vmatpush1.msra.mxu0 0.0
      %813 = vmatprep.subr.mxu0 0.0
      %814 = vmatpush1.msra.mxu0 0.0
      %815 = vmatprep.subr.mxu0 0.0
      %816 = vmatpush1.msra.mxu0 0.0
      %817 = vmatprep.subr.mxu0 0.0
      %818 = vmatpush1.msra.mxu0 0.0
      %819 = vmatprep.subr.mxu0 0.0
      %820 = vmatpush1.msra.mxu0 0.0
      %821 = vmatprep.subr.mxu0 0.0
      %822 = vmatpush1.msra.mxu0 0.0
      %823 = vmatprep.subr.mxu0 0.0
      %824 = vmatpush1.msra.mxu0 0.0
      %825 = vmatprep.subr.mxu0 0.0
      %826 = vmatpush1.msra.mxu0 0.0
      %827 = vmatprep.subr.mxu0 0.0
      %828 = vmatpush1.msra.mxu0 0.0
      %829 = vmatprep.subr.mxu0 0.0
      %830 = vmatpush1.msra.mxu0 0.0
      %831 = vmatprep.subr.mxu0 0.0
      %832 = vmatpush1.msra.mxu0 0.0
      %833 = vmatprep.subr.mxu0 0.0
      %834 = vmatpush1.msra.mxu0 0.0
      %835 = vmatprep.subr.mxu0 0.0
      %836 = vmatpush1.msra.mxu0 0.0
      %837 = vmatprep.subr.mxu0 0.0
      %838 = vmatpush1.msra.mxu0 0.0
      %839 = vmatprep.subr.mxu0 0.0
      %840 = vmatpush1.msra.mxu0 0.0
      %841 = vmatprep.mubr.f32.mxu0 0.0
      %842 = vmatmul.mubr.f32.gmra.mrb[0].mxu0 %v682
      %v843 = vpop.f32.mrb[0].mxu0
      %v844 = vadd.f32 %v523, %v843
      %v845 = vpop.f32.mrb[0].mxu0
      %846 = vmatprep.mubr.f32.mxu0 0.0
      %847 = vmatmul.mubr.f32.gmra.mrb[0].mxu0 %v685
      %v848 = vpop.f32.mrb[0].mxu0
      %v849 = vadd.f32 %v528, %v848
      %v850 = vpop.f32.mrb[0].mxu0
      %851 = vmatprep.mubr.f32.mxu0 0.0
      %852 = vmatmul.mubr.f32.gmra.mrb[0].mxu0 %v688
      %v853 = vpop.f32.mrb[0].mxu0
      %v854 = vadd.f32 %v533, %v853
      %v855 = vpop.f32.mrb[0].mxu0
      %856 = vmatprep.mubr.f32.mxu0 0.0
      %857 = vmatmul.mubr.f32.gmra.mrb[0].mxu0 %v691
      %v858 = vpop.f32.mrb[0].mxu0
      %v859 = vadd.f32 %v538, %v858
      %v860 = vpop.f32.mrb[0].mxu0
      %861 = vmatprep.mubr.f32.mxu0 0.0
      %862 = vmatmul.mubr.f32.gmra.mrb[0].mxu0 %v694
      %v863 = vpop.f32.mrb[0].mxu0
      %v864 = vadd.f32 %v543, %v863
      %v865 = vpop.f32.mrb[0].mxu0
      %866 = vmatprep.mubr.f32.mxu0 0.0
      %867 = vmatmul.mubr.f32.gmra.mrb[0].mxu0 %v697
      %v868 = vpop.f32.mrb[0].mxu0
      %v869 = vadd.f32 %v548, %v868
      %v870 = vpop.f32.mrb[0].mxu0
      %871 = vmatprep.mubr.f32.mxu0 0.0
      %872 = vmatmul.mubr.f32.gmra.mrb[0].mxu0 %v700
      %v873 = vpop.f32.mrb[0].mxu0
      %v874 = vadd.f32 %v553, %v873
      %v875 = vpop.f32.mrb[0].mxu0
      %876 = vmatprep.mubr.f32.mxu0 0.0
      %877 = vmatmul.mubr.f32.gmra.mrb[0].mxu0 %v703
      %v878 = vpop.f32.mrb[0].mxu0
      %v879 = vadd.f32 %v558, %v878
      %v880 = vpop.f32.mrb[0].mxu0
      %881 = vmatprep.mubr.f32.mxu0 0.0
      %882 = vmatmul.mubr.f32.gmra.mrb[0].mxu0 %v706
      %v883 = vpop.f32.mrb[0].mxu0
      %v884 = vadd.f32 %v563, %v883
      %v885 = vpop.f32.mrb[0].mxu0
      %886 = vmatprep.mubr.f32.mxu0 0.0
      %887 = vmatmul.mubr.f32.gmra.mrb[0].mxu0 %v709
      %v888 = vpop.f32.mrb[0].mxu0
      %v889 = vadd.f32 %v568, %v888
      %v890 = vpop.f32.mrb[0].mxu0
      %891 = vmatprep.mubr.f32.mxu0 0.0
      %892 = vmatmul.mubr.f32.gmra.mrb[0].mxu0 %v712
      %v893 = vpop.f32.mrb[0].mxu0
      %v894 = vadd.f32 %v573, %v893
      %v895 = vpop.f32.mrb[0].mxu0
      %896 = vmatprep.mubr.f32.mxu0 0.0
      %897 = vmatmul.mubr.f32.gmra.mrb[0].mxu0 %v715
      %v898 = vpop.f32.mrb[0].mxu0
      %v899 = vadd.f32 %v578, %v898
      %v900 = vpop.f32.mrb[0].mxu0
      %901 = vmatprep.mubr.f32.mxu0 0.0
      %902 = vmatmul.mubr.f32.gmra.mrb[0].mxu0 %v718
      %v903 = vpop.f32.mrb[0].mxu0
      %v904 = vadd.f32 %v583, %v903
      %v905 = vpop.f32.mrb[0].mxu0
      %906 = vmatprep.mubr.f32.mxu0 0.0
      %907 = vmatmul.mubr.f32.gmra.mrb[0].mxu0 %v721
      %v908 = vpop.f32.mrb[0].mxu0
      %v909 = vadd.f32 %v588, %v908
      %v910 = vpop.f32.mrb[0].mxu0
      %911 = vmatprep.mubr.f32.mxu0 0.0
      %912 = vmatmul.mubr.f32.gmra.mrb[0].mxu0 %v724
      %v913 = vpop.f32.mrb[0].mxu0
      %v914 = vadd.f32 %v593, %v913
      %v915 = vpop.f32.mrb[0].mxu0
      %916 = vmatprep.mubr.f32.mxu0 0.0
      %917 = vmatmul.mubr.f32.gmra.mrb[0].mxu0 %v727
      %v918 = vpop.f32.mrb[0].mxu0
      %v919 = vadd.f32 %v598, %v918
      %v920 = vpop.f32.mrb[0].mxu0
      %921 = vmatprep.mubr.f32.mxu0 0.0
      %922 = vmatmul.mubr.f32.gmra.mrb[0].mxu0 %v730
      %v923 = vpop.f32.mrb[0].mxu0
      %v924 = vadd.f32 %v603, %v923
      %v925 = vpop.f32.mrb[0].mxu0
      %926 = vmatprep.mubr.f32.mxu0 0.0
      %927 = vmatmul.mubr.f32.gmra.mrb[0].mxu0 %v733
      %v928 = vpop.f32.mrb[0].mxu0
      %v929 = vadd.f32 %v608, %v928
      %v930 = vpop.f32.mrb[0].mxu0
      %931 = vmatprep.mubr.f32.mxu0 0.0
      %932 = vmatmul.mubr.f32.gmra.mrb[0].mxu0 %v736
      %v933 = vpop.f32.mrb[0].mxu0
      %v934 = vadd.f32 %v613, %v933
      %v935 = vpop.f32.mrb[0].mxu0
      %936 = vmatprep.mubr.f32.mxu0 0.0
      %937 = vmatmul.mubr.f32.gmra.mrb[0].mxu0 %v739
      %v938 = vpop.f32.mrb[0].mxu0
      %v939 = vadd.f32 %v618, %v938
      %v940 = vpop.f32.mrb[0].mxu0
      %941 = vmatprep.mubr.f32.mxu0 0.0
      %942 = vmatmul.mubr.f32.gmra.mrb[0].mxu0 %v742
      %v943 = vpop.f32.mrb[0].mxu0
      %v944 = vadd.f32 %v623, %v943
      %v945 = vpop.f32.mrb[0].mxu0
      %946 = vmatprep.mubr.f32.mxu0 0.0
      %947 = vmatmul.mubr.f32.gmra.mrb[0].mxu0 %v745
      %v948 = vpop.f32.mrb[0].mxu0
      %v949 = vadd.f32 %v628, %v948
      %v950 = vpop.f32.mrb[0].mxu0
      %951 = vmatprep.mubr.f32.mxu0 0.0
      %952 = vmatmul.mubr.f32.gmra.mrb[0].mxu0 %v748
      %v953 = vpop.f32.mrb[0].mxu0
      %v954 = vadd.f32 %v633, %v953
      %v955 = vpop.f32.mrb[0].mxu0
      %956 = vmatprep.mubr.f32.mxu0 0.0
      %957 = vmatmul.mubr.f32.gmra.mrb[0].mxu0 %v751
      %v958 = vpop.f32.mrb[0].mxu0
      %v959 = vadd.f32 %v638, %v958
      %v960 = vpop.f32.mrb[0].mxu0
      %961 = vmatprep.mubr.f32.mxu0 0.0
      %962 = vmatmul.mubr.f32.gmra.mrb[0].mxu0 %v754
      %v963 = vpop.f32.mrb[0].mxu0
      %v964 = vadd.f32 %v643, %v963
      %v965 = vpop.f32.mrb[0].mxu0
      %966 = vmatprep.mubr.f32.mxu0 0.0
      %967 = vmatmul.mubr.f32.gmra.mrb[0].mxu0 %v757
      %v968 = vpop.f32.mrb[0].mxu0
      %v969 = vadd.f32 %v648, %v968
      %v970 = vpop.f32.mrb[0].mxu0
      %971 = vmatprep.mubr.f32.mxu0 0.0
      %972 = vmatmul.mubr.f32.gmra.mrb[0].mxu0 %v760
      %v973 = vpop.f32.mrb[0].mxu0
      %v974 = vadd.f32 %v653, %v973
      %v975 = vpop.f32.mrb[0].mxu0
      %976 = vmatprep.mubr.f32.mxu0 0.0
      %977 = vmatmul.mubr.f32.gmra.mrb[0].mxu0 %v763
      %v978 = vpop.f32.mrb[0].mxu0
      %v979 = vadd.f32 %v658, %v978
      %v980 = vpop.f32.mrb[0].mxu0
      %981 = vmatprep.mubr.f32.mxu0 0.0
      %982 = vmatmul.mubr.f32.gmra.mrb[0].mxu0 %v766
      %v983 = vpop.f32.mrb[0].mxu0
      %v984 = vadd.f32 %v663, %v983
      %v985 = vpop.f32.mrb[0].mxu0
      %986 = vmatprep.mubr.f32.mxu0 0.0
      %987 = vmatmul.mubr.f32.gmra.mrb[0].mxu0 %v769
      %v988 = vpop.f32.mrb[0].mxu0
      %v989 = vadd.f32 %v668, %v988
      %v990 = vpop.f32.mrb[0].mxu0
      %991 = vmatprep.mubr.f32.mxu0 0.0
      %992 = vmatmul.mubr.f32.gmra.mrb[0].mxu0 %v772
      %v993 = vpop.f32.mrb[0].mxu0
      %v994 = vadd.f32 %v673, %v993
      %v995 = vpop.f32.mrb[0].mxu0
      %996 = vmatprep.mubr.f32.mxu0 0.0
      %997 = vmatmul.mubr.f32.gmra.mrb[0].mxu0 %v775
      %v998 = vpop.f32.mrb[0].mxu0
      %v999 = vadd.f32 %v678, %v998
      %v1000 = vpop.f32.mrb[0].mxu0
      %1001 = vdwg.mxu0
      %v1002 = vld [vmem:[%s266 + $0x2] sm:$0xff]
      %v1003 = vld [vmem:[%s266 + $0xa] sm:$0xff]
      %v1004 = vld [vmem:[%s266 + $0x1a] sm:$0xff]
      %v1005 = vld [vmem:[%s266 + $0x22] sm:$0xff]
      %v1006 = vld [vmem:[%s266 + $0x32] sm:$0xff]
      %v1007 = vld [vmem:[%s266 + $0x3a] sm:$0xff]
      %v1008 = vld [vmem:[%s266 + $0x4a] sm:$0xff]
      %v1009 = vld [vmem:[%s266 + $0x52] sm:$0xff]
      %v1010 = vld [vmem:[%s266 + $0x62] sm:$0xff]
      %v1011 = vld [vmem:[%s266 + $0x6a] sm:$0xff]
      %v1012 = vld [vmem:[%s266 + $0x7a] sm:$0xff]
      %v1013 = vld [vmem:[%s266 + $0x82] sm:$0xff]
      %v1014 = vld [vmem:[%s266 + $0x92] sm:$0xff]
      %v1015 = vld [vmem:[%s266 + $0x9a] sm:$0xff]
      %v1016 = vld [vmem:[%s266 + $0xaa] sm:$0xff]
      %v1017 = vld [vmem:[%s266 + $0xb2] sm:$0xff]
      %v1018 = vld [vmem:[%s266 + $0xc2] sm:$0xff]
      %v1019 = vld [vmem:[%s266 + $0xca] sm:$0xff]
      %v1020 = vld [vmem:[%s266 + $0xda] sm:$0xff]
      %v1021 = vld [vmem:[%s266 + $0xe2] sm:$0xff]
      %v1022 = vld [vmem:[%s266 + $0xf2] sm:$0xff]
      %v1023 = vld [vmem:[%s266 + $0xfa] sm:$0xff]
      %v1024 = vld [vmem:[%s266 + $0x10a] sm:$0xff]
      %v1025 = vld [vmem:[%s266 + $0x112] sm:$0xff]
      %v1026 = vld [vmem:[%s266 + $0x122] sm:$0xff]
      %v1027 = vld [vmem:[%s266 + $0x12a] sm:$0xff]
      %v1028 = vld [vmem:[%s266 + $0x13a] sm:$0xff]
      %v1029 = vld [vmem:[%s266 + $0x142] sm:$0xff]
      %v1030 = vld [vmem:[%s266 + $0x152] sm:$0xff]
      %v1031 = vld [vmem:[%s266 + $0x15a] sm:$0xff]
      %v1032 = vld [vmem:[%s266 + $0x16a] sm:$0xff]
      %v1033 = vld [vmem:[%s266 + $0x172] sm:$0xff]
      %s1034 = scalar_lea.vmem %s3, 16
      %v1035 = vld [vmem:[%s1034] sm:$0xff]
      %v1037 = vsel %vm359, %v1002, 0
      %v1040 = vsel %vm359, %v1003, 0
      %v1043 = vsel %vm359, %v1004, 0
      %v1046 = vsel %vm359, %v1005, 0
      %v1049 = vsel %vm359, %v1006, 0
      %v1052 = vsel %vm359, %v1007, 0
      %v1055 = vsel %vm359, %v1008, 0
      %v1058 = vsel %vm359, %v1009, 0
      %v1061 = vsel %vm359, %v1010, 0
      %v1064 = vsel %vm359, %v1011, 0
      %v1067 = vsel %vm359, %v1012, 0
      %v1070 = vsel %vm359, %v1013, 0
      %v1073 = vsel %vm359, %v1014, 0
      %v1076 = vsel %vm359, %v1015, 0
      %v1079 = vsel %vm359, %v1016, 0
      %v1082 = vsel %vm359, %v1017, 0
      %v1085 = vsel %vm359, %v1018, 0
      %v1088 = vsel %vm359, %v1019, 0
      %v1091 = vsel %vm359, %v1020, 0
      %v1094 = vsel %vm359, %v1021, 0
      %v1097 = vsel %vm359, %v1022, 0
      %v1100 = vsel %vm359, %v1023, 0
      %v1103 = vsel %vm359, %v1024, 0
      %v1106 = vsel %vm359, %v1025, 0
      %v1109 = vsel %vm359, %v1026, 0
      %v1112 = vsel %vm359, %v1027, 0
      %v1115 = vsel %vm359, %v1028, 0
      %v1118 = vsel %vm359, %v1029, 0
      %v1121 = vsel %vm359, %v1030, 0
      %v1124 = vsel %vm359, %v1031, 0
      %v1127 = vsel %vm359, %v1032, 0
      %v1130 = vsel %vm359, %v1033, 0
      %1132 = vmatprep.subr.mxu0 0.0
      %1133 = vmatpush1.msra.mxu0 %v1035
      %1134 = vmatprep.subr.mxu0 0.0
      %1135 = vmatpush1.msra.mxu0 0.0
      %1136 = vmatprep.subr.mxu0 0.0
      %1137 = vmatpush1.msra.mxu0 0.0
      %1138 = vmatprep.subr.mxu0 0.0
      %1139 = vmatpush1.msra.mxu0 0.0
      %1140 = vmatprep.subr.mxu0 0.0
      %1141 = vmatpush1.msra.mxu0 0.0
      %1142 = vmatprep.subr.mxu0 0.0
      %1143 = vmatpush1.msra.mxu0 0.0
      %1144 = vmatprep.subr.mxu0 0.0
      %1145 = vmatpush1.msra.mxu0 0.0
      %1146 = vmatprep.subr.mxu0 0.0
      %1147 = vmatpush1.msra.mxu0 0.0
      %1148 = vmatprep.subr.mxu0 0.0
      %1149 = vmatpush1.msra.mxu0 0.0
      %1150 = vmatprep.subr.mxu0 0.0
      %1151 = vmatpush1.msra.mxu0 0.0
      %1152 = vmatprep.subr.mxu0 0.0
      %1153 = vmatpush1.msra.mxu0 0.0
      %1154 = vmatprep.subr.mxu0 0.0
      %1155 = vmatpush1.msra.mxu0 0.0
      %1156 = vmatprep.subr.mxu0 0.0
      %1157 = vmatpush1.msra.mxu0 0.0
      %1158 = vmatprep.subr.mxu0 0.0
      %1159 = vmatpush1.msra.mxu0 0.0
      %1160 = vmatprep.subr.mxu0 0.0
      %1161 = vmatpush1.msra.mxu0 0.0
      %1162 = vmatprep.subr.mxu0 0.0
      %1163 = vmatpush1.msra.mxu0 0.0
      %1164 = vmatprep.subr.mxu0 0.0
      %1165 = vmatpush1.msra.mxu0 0.0
      %1166 = vmatprep.subr.mxu0 0.0
      %1167 = vmatpush1.msra.mxu0 0.0
      %1168 = vmatprep.subr.mxu0 0.0
      %1169 = vmatpush1.msra.mxu0 0.0
      %1170 = vmatprep.subr.mxu0 0.0
      %1171 = vmatpush1.msra.mxu0 0.0
      %1172 = vmatprep.subr.mxu0 0.0
      %1173 = vmatpush1.msra.mxu0 0.0
      %1174 = vmatprep.subr.mxu0 0.0
      %1175 = vmatpush1.msra.mxu0 0.0
      %1176 = vmatprep.subr.mxu0 0.0
      %1177 = vmatpush1.msra.mxu0 0.0
      %1178 = vmatprep.subr.mxu0 0.0
      %1179 = vmatpush1.msra.mxu0 0.0
      %1180 = vmatprep.subr.mxu0 0.0
      %1181 = vmatpush1.msra.mxu0 0.0
      %1182 = vmatprep.subr.mxu0 0.0
      %1183 = vmatpush1.msra.mxu0 0.0
      %1184 = vmatprep.subr.mxu0 0.0
      %1185 = vmatpush1.msra.mxu0 0.0
      %1186 = vmatprep.subr.mxu0 0.0
      %1187 = vmatpush1.msra.mxu0 0.0
      %1188 = vmatprep.subr.mxu0 0.0
      %1189 = vmatpush1.msra.mxu0 0.0
      %1190 = vmatprep.subr.mxu0 0.0
      %1191 = vmatpush1.msra.mxu0 0.0
      %1192 = vmatprep.subr.mxu0 0.0
      %1193 = vmatpush1.msra.mxu0 0.0
      %1194 = vmatprep.subr.mxu0 0.0
      %1195 = vmatpush1.msra.mxu0 0.0
      %1196 = vmatprep.mubr.f32.mxu0 0.0
      %1197 = vmatmul.mubr.f32.gmra.mrb[0].mxu0 %v1037
      %v1198 = vpop.f32.mrb[0].mxu0
      %v1199 = vadd.f32 0.0, %v1198
      %v1200 = vpop.f32.mrb[0].mxu0
      %1201 = vmatprep.mubr.f32.mxu0 0.0
      %1202 = vmatmul.mubr.f32.gmra.mrb[0].mxu0 %v1040
      %v1203 = vpop.f32.mrb[0].mxu0
      %v1204 = vadd.f32 0.0, %v1203
      %v1205 = vpop.f32.mrb[0].mxu0
      %1206 = vmatprep.mubr.f32.mxu0 0.0
      %1207 = vmatmul.mubr.f32.gmra.mrb[0].mxu0 %v1043
      %v1208 = vpop.f32.mrb[0].mxu0
      %v1209 = vadd.f32 0.0, %v1208
      %v1210 = vpop.f32.mrb[0].mxu0
      %1211 = vmatprep.mubr.f32.mxu0 0.0
      %1212 = vmatmul.mubr.f32.gmra.mrb[0].mxu0 %v1046
      %v1213 = vpop.f32.mrb[0].mxu0
      %v1214 = vadd.f32 0.0, %v1213
      %v1215 = vpop.f32.mrb[0].mxu0
      %1216 = vmatprep.mubr.f32.mxu0 0.0
      %1217 = vmatmul.mubr.f32.gmra.mrb[0].mxu0 %v1049
      %v1218 = vpop.f32.mrb[0].mxu0
      %v1219 = vadd.f32 0.0, %v1218
      %v1220 = vpop.f32.mrb[0].mxu0
      %1221 = vmatprep.mubr.f32.mxu0 0.0
      %1222 = vmatmul.mubr.f32.gmra.mrb[0].mxu0 %v1052
      %v1223 = vpop.f32.mrb[0].mxu0
      %v1224 = vadd.f32 0.0, %v1223
      %v1225 = vpop.f32.mrb[0].mxu0
      %1226 = vmatprep.mubr.f32.mxu0 0.0
      %1227 = vmatmul.mubr.f32.gmra.mrb[0].mxu0 %v1055
      %v1228 = vpop.f32.mrb[0].mxu0
      %v1229 = vadd.f32 0.0, %v1228
      %v1230 = vpop.f32.mrb[0].mxu0
      %1231 = vmatprep.mubr.f32.mxu0 0.0
      %1232 = vmatmul.mubr.f32.gmra.mrb[0].mxu0 %v1058
      %v1233 = vpop.f32.mrb[0].mxu0
      %v1234 = vadd.f32 0.0, %v1233
      %v1235 = vpop.f32.mrb[0].mxu0
      %1236 = vmatprep.mubr.f32.mxu0 0.0
      %1237 = vmatmul.mubr.f32.gmra.mrb[0].mxu0 %v1061
      %v1238 = vpop.f32.mrb[0].mxu0
      %v1239 = vadd.f32 0.0, %v1238
      %v1240 = vpop.f32.mrb[0].mxu0
      %1241 = vmatprep.mubr.f32.mxu0 0.0
      %1242 = vmatmul.mubr.f32.gmra.mrb[0].mxu0 %v1064
      %v1243 = vpop.f32.mrb[0].mxu0
      %v1244 = vadd.f32 0.0, %v1243
      %v1245 = vpop.f32.mrb[0].mxu0
      %1246 = vmatprep.mubr.f32.mxu0 0.0
      %1247 = vmatmul.mubr.f32.gmra.mrb[0].mxu0 %v1067
      %v1248 = vpop.f32.mrb[0].mxu0
      %v1249 = vadd.f32 0.0, %v1248
      %v1250 = vpop.f32.mrb[0].mxu0
      %1251 = vmatprep.mubr.f32.mxu0 0.0
      %1252 = vmatmul.mubr.f32.gmra.mrb[0].mxu0 %v1070
      %v1253 = vpop.f32.mrb[0].mxu0
      %v1254 = vadd.f32 0.0, %v1253
      %v1255 = vpop.f32.mrb[0].mxu0
      %1256 = vmatprep.mubr.f32.mxu0 0.0
      %1257 = vmatmul.mubr.f32.gmra.mrb[0].mxu0 %v1073
      %v1258 = vpop.f32.mrb[0].mxu0
      %v1259 = vadd.f32 0.0, %v1258
      %v1260 = vpop.f32.mrb[0].mxu0
      %1261 = vmatprep.mubr.f32.mxu0 0.0
      %1262 = vmatmul.mubr.f32.gmra.mrb[0].mxu0 %v1076
      %v1263 = vpop.f32.mrb[0].mxu0
      %v1264 = vadd.f32 0.0, %v1263
      %v1265 = vpop.f32.mrb[0].mxu0
      %1266 = vmatprep.mubr.f32.mxu0 0.0
      %1267 = vmatmul.mubr.f32.gmra.mrb[0].mxu0 %v1079
      %v1268 = vpop.f32.mrb[0].mxu0
      %v1269 = vadd.f32 0.0, %v1268
      %v1270 = vpop.f32.mrb[0].mxu0
      %1271 = vmatprep.mubr.f32.mxu0 0.0
      %1272 = vmatmul.mubr.f32.gmra.mrb[0].mxu0 %v1082
      %v1273 = vpop.f32.mrb[0].mxu0
      %v1274 = vadd.f32 0.0, %v1273
      %v1275 = vpop.f32.mrb[0].mxu0
      %1276 = vmatprep.mubr.f32.mxu0 0.0
      %1277 = vmatmul.mubr.f32.gmra.mrb[0].mxu0 %v1085
      %v1278 = vpop.f32.mrb[0].mxu0
      %v1279 = vadd.f32 0.0, %v1278
      %v1280 = vpop.f32.mrb[0].mxu0
      %1281 = vmatprep.mubr.f32.mxu0 0.0
      %1282 = vmatmul.mubr.f32.gmra.mrb[0].mxu0 %v1088
      %v1283 = vpop.f32.mrb[0].mxu0
      %v1284 = vadd.f32 0.0, %v1283
      %v1285 = vpop.f32.mrb[0].mxu0
      %1286 = vmatprep.mubr.f32.mxu0 0.0
      %1287 = vmatmul.mubr.f32.gmra.mrb[0].mxu0 %v1091
      %v1288 = vpop.f32.mrb[0].mxu0
      %v1289 = vadd.f32 0.0, %v1288
      %v1290 = vpop.f32.mrb[0].mxu0
      %1291 = vmatprep.mubr.f32.mxu0 0.0
      %1292 = vmatmul.mubr.f32.gmra.mrb[0].mxu0 %v1094
      %v1293 = vpop.f32.mrb[0].mxu0
      %v1294 = vadd.f32 0.0, %v1293
      %v1295 = vpop.f32.mrb[0].mxu0
      %1296 = vmatprep.mubr.f32.mxu0 0.0
      %1297 = vmatmul.mubr.f32.gmra.mrb[0].mxu0 %v1097
      %v1298 = vpop.f32.mrb[0].mxu0
      %v1299 = vadd.f32 0.0, %v1298
      %v1300 = vpop.f32.mrb[0].mxu0
      %1301 = vmatprep.mubr.f32.mxu0 0.0
      %1302 = vmatmul.mubr.f32.gmra.mrb[0].mxu0 %v1100
      %v1303 = vpop.f32.mrb[0].mxu0
      %v1304 = vadd.f32 0.0, %v1303
      %v1305 = vpop.f32.mrb[0].mxu0
      %1306 = vmatprep.mubr.f32.mxu0 0.0
      %1307 = vmatmul.mubr.f32.gmra.mrb[0].mxu0 %v1103
      %v1308 = vpop.f32.mrb[0].mxu0
      %v1309 = vadd.f32 0.0, %v1308
      %v1310 = vpop.f32.mrb[0].mxu0
      %1311 = vmatprep.mubr.f32.mxu0 0.0
      %1312 = vmatmul.mubr.f32.gmra.mrb[0].mxu0 %v1106
      %v1313 = vpop.f32.mrb[0].mxu0
      %v1314 = vadd.f32 0.0, %v1313
      %v1315 = vpop.f32.mrb[0].mxu0
      %1316 = vmatprep.mubr.f32.mxu0 0.0
      %1317 = vmatmul.mubr.f32.gmra.mrb[0].mxu0 %v1109
      %v1318 = vpop.f32.mrb[0].mxu0
      %v1319 = vadd.f32 0.0, %v1318
      %v1320 = vpop.f32.mrb[0].mxu0
      %1321 = vmatprep.mubr.f32.mxu0 0.0
      %1322 = vmatmul.mubr.f32.gmra.mrb[0].mxu0 %v1112
      %v1323 = vpop.f32.mrb[0].mxu0
      %v1324 = vadd.f32 0.0, %v1323
      %v1325 = vpop.f32.mrb[0].mxu0
      %1326 = vmatprep.mubr.f32.mxu0 0.0
      %1327 = vmatmul.mubr.f32.gmra.mrb[0].mxu0 %v1115
      %v1328 = vpop.f32.mrb[0].mxu0
      %v1329 = vadd.f32 0.0, %v1328
      %v1330 = vpop.f32.mrb[0].mxu0
      %1331 = vmatprep.mubr.f32.mxu0 0.0
      %1332 = vmatmul.mubr.f32.gmra.mrb[0].mxu0 %v1118
      %v1333 = vpop.f32.mrb[0].mxu0
      %v1334 = vadd.f32 0.0, %v1333
      %v1335 = vpop.f32.mrb[0].mxu0
      %1336 = vmatprep.mubr.f32.mxu0 0.0
      %1337 = vmatmul.mubr.f32.gmra.mrb[0].mxu0 %v1121
      %v1338 = vpop.f32.mrb[0].mxu0
      %v1339 = vadd.f32 0.0, %v1338
      %v1340 = vpop.f32.mrb[0].mxu0
      %1341 = vmatprep.mubr.f32.mxu0 0.0
      %1342 = vmatmul.mubr.f32.gmra.mrb[0].mxu0 %v1124
      %v1343 = vpop.f32.mrb[0].mxu0
      %v1344 = vadd.f32 0.0, %v1343
      %v1345 = vpop.f32.mrb[0].mxu0
      %1346 = vmatprep.mubr.f32.mxu0 0.0
      %1347 = vmatmul.mubr.f32.gmra.mrb[0].mxu0 %v1127
      %v1348 = vpop.f32.mrb[0].mxu0
      %v1349 = vadd.f32 0.0, %v1348
      %v1350 = vpop.f32.mrb[0].mxu0
      %1351 = vmatprep.mubr.f32.mxu0 0.0
      %1352 = vmatmul.mubr.f32.gmra.mrb[0].mxu0 %v1130
      %v1353 = vpop.f32.mrb[0].mxu0
      %v1354 = vadd.f32 0.0, %v1353
      %v1355 = vpop.f32.mrb[0].mxu0
      %1356 = vdwg.mxu0
      %v1357 = vadd.f32 %v844, %v1199
      %v1358 = vadd.f32 %v849, %v1204
      %v1359 = vadd.f32 %v854, %v1209
      %v1360 = vadd.f32 %v859, %v1214
      %v1361 = vadd.f32 %v864, %v1219
      %v1362 = vadd.f32 %v869, %v1224
      %v1363 = vadd.f32 %v874, %v1229
      %v1364 = vadd.f32 %v879, %v1234
      %v1365 = vadd.f32 %v884, %v1239
      %v1366 = vadd.f32 %v889, %v1244
      %v1367 = vadd.f32 %v894, %v1249
      %v1368 = vadd.f32 %v899, %v1254
      %v1369 = vadd.f32 %v904, %v1259
      %v1370 = vadd.f32 %v909, %v1264
      %v1371 = vadd.f32 %v914, %v1269
      %v1372 = vadd.f32 %v919, %v1274
      %v1373 = vadd.f32 %v924, %v1279
      %v1374 = vadd.f32 %v929, %v1284
      %v1375 = vadd.f32 %v934, %v1289
      %v1376 = vadd.f32 %v939, %v1294
      %v1377 = vadd.f32 %v944, %v1299
      %v1378 = vadd.f32 %v949, %v1304
      %v1379 = vadd.f32 %v954, %v1309
      %v1380 = vadd.f32 %v959, %v1314
      %v1381 = vadd.f32 %v964, %v1319
      %v1382 = vadd.f32 %v969, %v1324
      %v1383 = vadd.f32 %v974, %v1329
      %v1384 = vadd.f32 %v979, %v1334
      %v1385 = vadd.f32 %v984, %v1339
      %v1386 = vadd.f32 %v989, %v1344
      %v1387 = vadd.f32 %v994, %v1349
      %v1388 = vadd.f32 %v999, %v1354
      %v1389 = vld [vmem:[%s273] sm:$0xff]
      %v1390 = vld [vmem:[%s273 + $0x8] sm:$0xff]
      %v1391 = vld [vmem:[%s273 + $0x18] sm:$0xff]
      %v1392 = vld [vmem:[%s273 + $0x20] sm:$0xff]
      %v1393 = vld [vmem:[%s273 + $0x30] sm:$0xff]
      %v1394 = vld [vmem:[%s273 + $0x38] sm:$0xff]
      %v1395 = vld [vmem:[%s273 + $0x48] sm:$0xff]
      %v1396 = vld [vmem:[%s273 + $0x50] sm:$0xff]
      %v1397 = vld [vmem:[%s273 + $0x60] sm:$0xff]
      %v1398 = vld [vmem:[%s273 + $0x68] sm:$0xff]
      %v1399 = vld [vmem:[%s273 + $0x78] sm:$0xff]
      %v1400 = vld [vmem:[%s273 + $0x80] sm:$0xff]
      %v1401 = vld [vmem:[%s273 + $0x90] sm:$0xff]
      %v1402 = vld [vmem:[%s273 + $0x98] sm:$0xff]
      %v1403 = vld [vmem:[%s273 + $0xa8] sm:$0xff]
      %v1404 = vld [vmem:[%s273 + $0xb0] sm:$0xff]
      %v1405 = vld [vmem:[%s273 + $0xc0] sm:$0xff]
      %v1406 = vld [vmem:[%s273 + $0xc8] sm:$0xff]
      %v1407 = vld [vmem:[%s273 + $0xd8] sm:$0xff]
      %v1408 = vld [vmem:[%s273 + $0xe0] sm:$0xff]
      %v1409 = vld [vmem:[%s273 + $0xf0] sm:$0xff]
      %v1410 = vld [vmem:[%s273 + $0xf8] sm:$0xff]
      %v1411 = vld [vmem:[%s273 + $0x108] sm:$0xff]
      %v1412 = vld [vmem:[%s273 + $0x110] sm:$0xff]
      %v1413 = vld [vmem:[%s273 + $0x120] sm:$0xff]
      %v1414 = vld [vmem:[%s273 + $0x128] sm:$0xff]
      %v1415 = vld [vmem:[%s273 + $0x138] sm:$0xff]
      %v1416 = vld [vmem:[%s273 + $0x140] sm:$0xff]
      %v1417 = vld [vmem:[%s273 + $0x150] sm:$0xff]
      %v1418 = vld [vmem:[%s273 + $0x158] sm:$0xff]
      %v1419 = vld [vmem:[%s273 + $0x168] sm:$0xff]
      %v1420 = vld [vmem:[%s273 + $0x170] sm:$0xff]
      %s1421 = scalar_lea.vmem %s3, 24
      %v1422 = vld [vmem:[%s1421] sm:$0xff]
      %v1424 = vsel %vm359, %v1389, 0
      %v1427 = vsel %vm359, %v1390, 0
      %v1430 = vsel %vm359, %v1391, 0
      %v1433 = vsel %vm359, %v1392, 0
      %v1436 = vsel %vm359, %v1393, 0
      %v1439 = vsel %vm359, %v1394, 0
      %v1442 = vsel %vm359, %v1395, 0
      %v1445 = vsel %vm359, %v1396, 0
      %v1448 = vsel %vm359, %v1397, 0
      %v1451 = vsel %vm359, %v1398, 0
      %v1454 = vsel %vm359, %v1399, 0
      %v1457 = vsel %vm359, %v1400, 0
      %v1460 = vsel %vm359, %v1401, 0
      %v1463 = vsel %vm359, %v1402, 0
      %v1466 = vsel %vm359, %v1403, 0
      %v1469 = vsel %vm359, %v1404, 0
      %v1472 = vsel %vm359, %v1405, 0
      %v1475 = vsel %vm359, %v1406, 0
      %v1478 = vsel %vm359, %v1407, 0
      %v1481 = vsel %vm359, %v1408, 0
      %v1484 = vsel %vm359, %v1409, 0
      %v1487 = vsel %vm359, %v1410, 0
      %v1490 = vsel %vm359, %v1411, 0
      %v1493 = vsel %vm359, %v1412, 0
      %v1496 = vsel %vm359, %v1413, 0
      %v1499 = vsel %vm359, %v1414, 0
      %v1502 = vsel %vm359, %v1415, 0
      %v1505 = vsel %vm359, %v1416, 0
      %v1508 = vsel %vm359, %v1417, 0
      %v1511 = vsel %vm359, %v1418, 0
      %v1514 = vsel %vm359, %v1419, 0
      %v1517 = vsel %vm359, %v1420, 0
      %1519 = vmatprep.subr.mxu0 0.0
      %1520 = vmatpush1.msra.mxu0 %v1422
      %1521 = vmatprep.subr.mxu0 0.0
      %1522 = vmatpush1.msra.mxu0 0.0
      %1523 = vmatprep.subr.mxu0 0.0
      %1524 = vmatpush1.msra.mxu0 0.0
      %1525 = vmatprep.subr.mxu0 0.0
      %1526 = vmatpush1.msra.mxu0 0.0
      %1527 = vmatprep.subr.mxu0 0.0
      %1528 = vmatpush1.msra.mxu0 0.0
      %1529 = vmatprep.subr.mxu0 0.0
      %1530 = vmatpush1.msra.mxu0 0.0
      %1531 = vmatprep.subr.mxu0 0.0
      %1532 = vmatpush1.msra.mxu0 0.0
      %1533 = vmatprep.subr.mxu0 0.0
      %1534 = vmatpush1.msra.mxu0 0.0
      %1535 = vmatprep.subr.mxu0 0.0
      %1536 = vmatpush1.msra.mxu0 0.0
      %1537 = vmatprep.subr.mxu0 0.0
      %1538 = vmatpush1.msra.mxu0 0.0
      %1539 = vmatprep.subr.mxu0 0.0
      %1540 = vmatpush1.msra.mxu0 0.0
      %1541 = vmatprep.subr.mxu0 0.0
      %1542 = vmatpush1.msra.mxu0 0.0
      %1543 = vmatprep.subr.mxu0 0.0
      %1544 = vmatpush1.msra.mxu0 0.0
      %1545 = vmatprep.subr.mxu0 0.0
      %1546 = vmatpush1.msra.mxu0 0.0
      %1547 = vmatprep.subr.mxu0 0.0
      %1548 = vmatpush1.msra.mxu0 0.0
      %1549 = vmatprep.subr.mxu0 0.0
      %1550 = vmatpush1.msra.mxu0 0.0
      %1551 = vmatprep.subr.mxu0 0.0
      %1552 = vmatpush1.msra.mxu0 0.0
      %1553 = vmatprep.subr.mxu0 0.0
      %1554 = vmatpush1.msra.mxu0 0.0
      %1555 = vmatprep.subr.mxu0 0.0
      %1556 = vmatpush1.msra.mxu0 0.0
      %1557 = vmatprep.subr.mxu0 0.0
      %1558 = vmatpush1.msra.mxu0 0.0
      %1559 = vmatprep.subr.mxu0 0.0
      %1560 = vmatpush1.msra.mxu0 0.0
      %1561 = vmatprep.subr.mxu0 0.0
      %1562 = vmatpush1.msra.mxu0 0.0
      %1563 = vmatprep.subr.mxu0 0.0
      %1564 = vmatpush1.msra.mxu0 0.0
      %1565 = vmatprep.subr.mxu0 0.0
      %1566 = vmatpush1.msra.mxu0 0.0
      %1567 = vmatprep.subr.mxu0 0.0
      %1568 = vmatpush1.msra.mxu0 0.0
      %1569 = vmatprep.subr.mxu0 0.0
      %1570 = vmatpush1.msra.mxu0 0.0
      %1571 = vmatprep.subr.mxu0 0.0
      %1572 = vmatpush1.msra.mxu0 0.0
      %1573 = vmatprep.subr.mxu0 0.0
      %1574 = vmatpush1.msra.mxu0 0.0
      %1575 = vmatprep.subr.mxu0 0.0
      %1576 = vmatpush1.msra.mxu0 0.0
      %1577 = vmatprep.subr.mxu0 0.0
      %1578 = vmatpush1.msra.mxu0 0.0
      %1579 = vmatprep.subr.mxu0 0.0
      %1580 = vmatpush1.msra.mxu0 0.0
      %1581 = vmatprep.subr.mxu0 0.0
      %1582 = vmatpush1.msra.mxu0 0.0
      %1583 = vmatprep.mubr.f32.mxu0 0.0
      %1584 = vmatmul.mubr.f32.gmra.mrb[0].mxu0 %v1424
      %v1585 = vpop.f32.mrb[0].mxu0
      %v1586 = vadd.f32 0.0, %v1585
      %v1587 = vpop.f32.mrb[0].mxu0
      %1588 = vmatprep.mubr.f32.mxu0 0.0
      %1589 = vmatmul.mubr.f32.gmra.mrb[0].mxu0 %v1427
      %v1590 = vpop.f32.mrb[0].mxu0
      %v1591 = vadd.f32 0.0, %v1590
      %v1592 = vpop.f32.mrb[0].mxu0
      %1593 = vmatprep.mubr.f32.mxu0 0.0
      %1594 = vmatmul.mubr.f32.gmra.mrb[0].mxu0 %v1430
      %v1595 = vpop.f32.mrb[0].mxu0
      %v1596 = vadd.f32 0.0, %v1595
      %v1597 = vpop.f32.mrb[0].mxu0
      %1598 = vmatprep.mubr.f32.mxu0 0.0
      %1599 = vmatmul.mubr.f32.gmra.mrb[0].mxu0 %v1433
      %v1600 = vpop.f32.mrb[0].mxu0
      %v1601 = vadd.f32 0.0, %v1600
      %v1602 = vpop.f32.mrb[0].mxu0
      %1603 = vmatprep.mubr.f32.mxu0 0.0
      %1604 = vmatmul.mubr.f32.gmra.mrb[0].mxu0 %v1436
      %v1605 = vpop.f32.mrb[0].mxu0
      %v1606 = vadd.f32 0.0, %v1605
      %v1607 = vpop.f32.mrb[0].mxu0
      %1608 = vmatprep.mubr.f32.mxu0 0.0
      %1609 = vmatmul.mubr.f32.gmra.mrb[0].mxu0 %v1439
      %v1610 = vpop.f32.mrb[0].mxu0
      %v1611 = vadd.f32 0.0, %v1610
      %v1612 = vpop.f32.mrb[0].mxu0
      %1613 = vmatprep.mubr.f32.mxu0 0.0
      %1614 = vmatmul.mubr.f32.gmra.mrb[0].mxu0 %v1442
      %v1615 = vpop.f32.mrb[0].mxu0
      %v1616 = vadd.f32 0.0, %v1615
      %v1617 = vpop.f32.mrb[0].mxu0
      %1618 = vmatprep.mubr.f32.mxu0 0.0
      %1619 = vmatmul.mubr.f32.gmra.mrb[0].mxu0 %v1445
      %v1620 = vpop.f32.mrb[0].mxu0
      %v1621 = vadd.f32 0.0, %v1620
      %v1622 = vpop.f32.mrb[0].mxu0
      %1623 = vmatprep.mubr.f32.mxu0 0.0
      %1624 = vmatmul.mubr.f32.gmra.mrb[0].mxu0 %v1448
      %v1625 = vpop.f32.mrb[0].mxu0
      %v1626 = vadd.f32 0.0, %v1625
      %v1627 = vpop.f32.mrb[0].mxu0
      %1628 = vmatprep.mubr.f32.mxu0 0.0
      %1629 = vmatmul.mubr.f32.gmra.mrb[0].mxu0 %v1451
      %v1630 = vpop.f32.mrb[0].mxu0
      %v1631 = vadd.f32 0.0, %v1630
      %v1632 = vpop.f32.mrb[0].mxu0
      %1633 = vmatprep.mubr.f32.mxu0 0.0
      %1634 = vmatmul.mubr.f32.gmra.mrb[0].mxu0 %v1454
      %v1635 = vpop.f32.mrb[0].mxu0
      %v1636 = vadd.f32 0.0, %v1635
      %v1637 = vpop.f32.mrb[0].mxu0
      %1638 = vmatprep.mubr.f32.mxu0 0.0
      %1639 = vmatmul.mubr.f32.gmra.mrb[0].mxu0 %v1457
      %v1640 = vpop.f32.mrb[0].mxu0
      %v1641 = vadd.f32 0.0, %v1640
      %v1642 = vpop.f32.mrb[0].mxu0
      %1643 = vmatprep.mubr.f32.mxu0 0.0
      %1644 = vmatmul.mubr.f32.gmra.mrb[0].mxu0 %v1460
      %v1645 = vpop.f32.mrb[0].mxu0
      %v1646 = vadd.f32 0.0, %v1645
      %v1647 = vpop.f32.mrb[0].mxu0
      %1648 = vmatprep.mubr.f32.mxu0 0.0
      %1649 = vmatmul.mubr.f32.gmra.mrb[0].mxu0 %v1463
      %v1650 = vpop.f32.mrb[0].mxu0
      %v1651 = vadd.f32 0.0, %v1650
      %v1652 = vpop.f32.mrb[0].mxu0
      %1653 = vmatprep.mubr.f32.mxu0 0.0
      %1654 = vmatmul.mubr.f32.gmra.mrb[0].mxu0 %v1466
      %v1655 = vpop.f32.mrb[0].mxu0
      %v1656 = vadd.f32 0.0, %v1655
      %v1657 = vpop.f32.mrb[0].mxu0
      %1658 = vmatprep.mubr.f32.mxu0 0.0
      %1659 = vmatmul.mubr.f32.gmra.mrb[0].mxu0 %v1469
      %v1660 = vpop.f32.mrb[0].mxu0
      %v1661 = vadd.f32 0.0, %v1660
      %v1662 = vpop.f32.mrb[0].mxu0
      %1663 = vmatprep.mubr.f32.mxu0 0.0
      %1664 = vmatmul.mubr.f32.gmra.mrb[0].mxu0 %v1472
      %v1665 = vpop.f32.mrb[0].mxu0
      %v1666 = vadd.f32 0.0, %v1665
      %v1667 = vpop.f32.mrb[0].mxu0
      %1668 = vmatprep.mubr.f32.mxu0 0.0
      %1669 = vmatmul.mubr.f32.gmra.mrb[0].mxu0 %v1475
      %v1670 = vpop.f32.mrb[0].mxu0
      %v1671 = vadd.f32 0.0, %v1670
      %v1672 = vpop.f32.mrb[0].mxu0
      %1673 = vmatprep.mubr.f32.mxu0 0.0
      %1674 = vmatmul.mubr.f32.gmra.mrb[0].mxu0 %v1478
      %v1675 = vpop.f32.mrb[0].mxu0
      %v1676 = vadd.f32 0.0, %v1675
      %v1677 = vpop.f32.mrb[0].mxu0
      %1678 = vmatprep.mubr.f32.mxu0 0.0
      %1679 = vmatmul.mubr.f32.gmra.mrb[0].mxu0 %v1481
      %v1680 = vpop.f32.mrb[0].mxu0
      %v1681 = vadd.f32 0.0, %v1680
      %v1682 = vpop.f32.mrb[0].mxu0
      %1683 = vmatprep.mubr.f32.mxu0 0.0
      %1684 = vmatmul.mubr.f32.gmra.mrb[0].mxu0 %v1484
      %v1685 = vpop.f32.mrb[0].mxu0
      %v1686 = vadd.f32 0.0, %v1685
      %v1687 = vpop.f32.mrb[0].mxu0
      %1688 = vmatprep.mubr.f32.mxu0 0.0
      %1689 = vmatmul.mubr.f32.gmra.mrb[0].mxu0 %v1487
      %v1690 = vpop.f32.mrb[0].mxu0
      %v1691 = vadd.f32 0.0, %v1690
      %v1692 = vpop.f32.mrb[0].mxu0
      %1693 = vmatprep.mubr.f32.mxu0 0.0
      %1694 = vmatmul.mubr.f32.gmra.mrb[0].mxu0 %v1490
      %v1695 = vpop.f32.mrb[0].mxu0
      %v1696 = vadd.f32 0.0, %v1695
      %v1697 = vpop.f32.mrb[0].mxu0
      %1698 = vmatprep.mubr.f32.mxu0 0.0
      %1699 = vmatmul.mubr.f32.gmra.mrb[0].mxu0 %v1493
      %v1700 = vpop.f32.mrb[0].mxu0
      %v1701 = vadd.f32 0.0, %v1700
      %v1702 = vpop.f32.mrb[0].mxu0
      %1703 = vmatprep.mubr.f32.mxu0 0.0
      %1704 = vmatmul.mubr.f32.gmra.mrb[0].mxu0 %v1496
      %v1705 = vpop.f32.mrb[0].mxu0
      %v1706 = vadd.f32 0.0, %v1705
      %v1707 = vpop.f32.mrb[0].mxu0
      %1708 = vmatprep.mubr.f32.mxu0 0.0
      %1709 = vmatmul.mubr.f32.gmra.mrb[0].mxu0 %v1499
      %v1710 = vpop.f32.mrb[0].mxu0
      %v1711 = vadd.f32 0.0, %v1710
      %v1712 = vpop.f32.mrb[0].mxu0
      %1713 = vmatprep.mubr.f32.mxu0 0.0
      %1714 = vmatmul.mubr.f32.gmra.mrb[0].mxu0 %v1502
      %v1715 = vpop.f32.mrb[0].mxu0
      %v1716 = vadd.f32 0.0, %v1715
      %v1717 = vpop.f32.mrb[0].mxu0
      %1718 = vmatprep.mubr.f32.mxu0 0.0
      %1719 = vmatmul.mubr.f32.gmra.mrb[0].mxu0 %v1505
      %v1720 = vpop.f32.mrb[0].mxu0
      %v1721 = vadd.f32 0.0, %v1720
      %v1722 = vpop.f32.mrb[0].mxu0
      %1723 = vmatprep.mubr.f32.mxu0 0.0
      %1724 = vmatmul.mubr.f32.gmra.mrb[0].mxu0 %v1508
      %v1725 = vpop.f32.mrb[0].mxu0
      %v1726 = vadd.f32 0.0, %v1725
      %v1727 = vpop.f32.mrb[0].mxu0
      %1728 = vmatprep.mubr.f32.mxu0 0.0
      %1729 = vmatmul.mubr.f32.gmra.mrb[0].mxu0 %v1511
      %v1730 = vpop.f32.mrb[0].mxu0
      %v1731 = vadd.f32 0.0, %v1730
      %v1732 = vpop.f32.mrb[0].mxu0
      %1733 = vmatprep.mubr.f32.mxu0 0.0
      %1734 = vmatmul.mubr.f32.gmra.mrb[0].mxu0 %v1514
      %v1735 = vpop.f32.mrb[0].mxu0
      %v1736 = vadd.f32 0.0, %v1735
      %v1737 = vpop.f32.mrb[0].mxu0
      %1738 = vmatprep.mubr.f32.mxu0 0.0
      %1739 = vmatmul.mubr.f32.gmra.mrb[0].mxu0 %v1517
      %v1740 = vpop.f32.mrb[0].mxu0
      %v1741 = vadd.f32 0.0, %v1740
      %v1742 = vpop.f32.mrb[0].mxu0
      %1743 = vdwg.mxu0
      %v1744 = vadd.f32 %v1357, %v1586
      %v1745 = vadd.f32 %v1358, %v1591
      %v1746 = vadd.f32 %v1359, %v1596
      %v1747 = vadd.f32 %v1360, %v1601
      %v1748 = vadd.f32 %v1361, %v1606
      %v1749 = vadd.f32 %v1362, %v1611
      %v1750 = vadd.f32 %v1363, %v1616
      %v1751 = vadd.f32 %v1364, %v1621
      %v1752 = vadd.f32 %v1365, %v1626
      %v1753 = vadd.f32 %v1366, %v1631
      %v1754 = vadd.f32 %v1367, %v1636
      %v1755 = vadd.f32 %v1368, %v1641
      %v1756 = vadd.f32 %v1369, %v1646
      %v1757 = vadd.f32 %v1370, %v1651
      %v1758 = vadd.f32 %v1371, %v1656
      %v1759 = vadd.f32 %v1372, %v1661
      %v1760 = vadd.f32 %v1373, %v1666
      %v1761 = vadd.f32 %v1374, %v1671
      %v1762 = vadd.f32 %v1375, %v1676
      %v1763 = vadd.f32 %v1376, %v1681
      %v1764 = vadd.f32 %v1377, %v1686
      %v1765 = vadd.f32 %v1378, %v1691
      %v1766 = vadd.f32 %v1379, %v1696
      %v1767 = vadd.f32 %v1380, %v1701
      %v1768 = vadd.f32 %v1381, %v1706
      %v1769 = vadd.f32 %v1382, %v1711
      %v1770 = vadd.f32 %v1383, %v1716
      %v1771 = vadd.f32 %v1384, %v1721
      %v1772 = vadd.f32 %v1385, %v1726
      %v1773 = vadd.f32 %v1386, %v1731
      %v1774 = vadd.f32 %v1387, %v1736
      %v1775 = vadd.f32 %v1388, %v1741
      %v1776 = vld [vmem:[%s273 + $0x1] sm:$0xff]
      %v1777 = vld [vmem:[%s273 + $0x9] sm:$0xff]
      %v1778 = vld [vmem:[%s273 + $0x19] sm:$0xff]
      %v1779 = vld [vmem:[%s273 + $0x21] sm:$0xff]
      %v1780 = vld [vmem:[%s273 + $0x31] sm:$0xff]
      %v1781 = vld [vmem:[%s273 + $0x39] sm:$0xff]
      %v1782 = vld [vmem:[%s273 + $0x49] sm:$0xff]
      %v1783 = vld [vmem:[%s273 + $0x51] sm:$0xff]
      %v1784 = vld [vmem:[%s273 + $0x61] sm:$0xff]
      %v1785 = vld [vmem:[%s273 + $0x69] sm:$0xff]
      %v1786 = vld [vmem:[%s273 + $0x79] sm:$0xff]
      %v1787 = vld [vmem:[%s273 + $0x81] sm:$0xff]
      %v1788 = vld [vmem:[%s273 + $0x91] sm:$0xff]
      %v1789 = vld [vmem:[%s273 + $0x99] sm:$0xff]
      %v1790 = vld [vmem:[%s273 + $0xa9] sm:$0xff]
      %v1791 = vld [vmem:[%s273 + $0xb1] sm:$0xff]
      %v1792 = vld [vmem:[%s273 + $0xc1] sm:$0xff]
      %v1793 = vld [vmem:[%s273 + $0xc9] sm:$0xff]
      %v1794 = vld [vmem:[%s273 + $0xd9] sm:$0xff]
      %v1795 = vld [vmem:[%s273 + $0xe1] sm:$0xff]
      %v1796 = vld [vmem:[%s273 + $0xf1] sm:$0xff]
      %v1797 = vld [vmem:[%s273 + $0xf9] sm:$0xff]
      %v1798 = vld [vmem:[%s273 + $0x109] sm:$0xff]
      %v1799 = vld [vmem:[%s273 + $0x111] sm:$0xff]
      %v1800 = vld [vmem:[%s273 + $0x121] sm:$0xff]
      %v1801 = vld [vmem:[%s273 + $0x129] sm:$0xff]
      %v1802 = vld [vmem:[%s273 + $0x139] sm:$0xff]
      %v1803 = vld [vmem:[%s273 + $0x141] sm:$0xff]
      %v1804 = vld [vmem:[%s273 + $0x151] sm:$0xff]
      %v1805 = vld [vmem:[%s273 + $0x159] sm:$0xff]
      %v1806 = vld [vmem:[%s273 + $0x169] sm:$0xff]
      %v1807 = vld [vmem:[%s273 + $0x171] sm:$0xff]
      %s1808 = scalar_lea.vmem %s3, 32
      %v1809 = vld [vmem:[%s1808] sm:$0xff]
      %v1811 = vsel %vm359, %v1776, 0
      %v1814 = vsel %vm359, %v1777, 0
      %v1817 = vsel %vm359, %v1778, 0
      %v1820 = vsel %vm359, %v1779, 0
      %v1823 = vsel %vm359, %v1780, 0
      %v1826 = vsel %vm359, %v1781, 0
      %v1829 = vsel %vm359, %v1782, 0
      %v1832 = vsel %vm359, %v1783, 0
      %v1835 = vsel %vm359, %v1784, 0
      %v1838 = vsel %vm359, %v1785, 0
      %v1841 = vsel %vm359, %v1786, 0
      %v1844 = vsel %vm359, %v1787, 0
      %v1847 = vsel %vm359, %v1788, 0
      %v1850 = vsel %vm359, %v1789, 0
      %v1853 = vsel %vm359, %v1790, 0
      %v1856 = vsel %vm359, %v1791, 0
      %v1859 = vsel %vm359, %v1792, 0
      %v1862 = vsel %vm359, %v1793, 0
      %v1865 = vsel %vm359, %v1794, 0
      %v1868 = vsel %vm359, %v1795, 0
      %v1871 = vsel %vm359, %v1796, 0
      %v1874 = vsel %vm359, %v1797, 0
      %v1877 = vsel %vm359, %v1798, 0
      %v1880 = vsel %vm359, %v1799, 0
      %v1883 = vsel %vm359, %v1800, 0
      %v1886 = vsel %vm359, %v1801, 0
      %v1889 = vsel %vm359, %v1802, 0
      %v1892 = vsel %vm359, %v1803, 0
      %v1895 = vsel %vm359, %v1804, 0
      %v1898 = vsel %vm359, %v1805, 0
      %v1901 = vsel %vm359, %v1806, 0
      %v1904 = vsel %vm359, %v1807, 0
      %1906 = vmatprep.subr.mxu0 0.0
      %1907 = vmatpush1.msra.mxu0 %v1809
      %1908 = vmatprep.subr.mxu0 0.0
      %1909 = vmatpush1.msra.mxu0 0.0
      %1910 = vmatprep.subr.mxu0 0.0
      %1911 = vmatpush1.msra.mxu0 0.0
      %1912 = vmatprep.subr.mxu0 0.0
      %1913 = vmatpush1.msra.mxu0 0.0
      %1914 = vmatprep.subr.mxu0 0.0
      %1915 = vmatpush1.msra.mxu0 0.0
      %1916 = vmatprep.subr.mxu0 0.0
      %1917 = vmatpush1.msra.mxu0 0.0
      %1918 = vmatprep.subr.mxu0 0.0
      %1919 = vmatpush1.msra.mxu0 0.0
      %1920 = vmatprep.subr.mxu0 0.0
      %1921 = vmatpush1.msra.mxu0 0.0
      %1922 = vmatprep.subr.mxu0 0.0
      %1923 = vmatpush1.msra.mxu0 0.0
      %1924 = vmatprep.subr.mxu0 0.0
      %1925 = vmatpush1.msra.mxu0 0.0
      %1926 = vmatprep.subr.mxu0 0.0
      %1927 = vmatpush1.msra.mxu0 0.0
      %1928 = vmatprep.subr.mxu0 0.0
      %1929 = vmatpush1.msra.mxu0 0.0
      %1930 = vmatprep.subr.mxu0 0.0
      %1931 = vmatpush1.msra.mxu0 0.0
      %1932 = vmatprep.subr.mxu0 0.0
      %1933 = vmatpush1.msra.mxu0 0.0
      %1934 = vmatprep.subr.mxu0 0.0
      %1935 = vmatpush1.msra.mxu0 0.0
      %1936 = vmatprep.subr.mxu0 0.0
      %1937 = vmatpush1.msra.mxu0 0.0
      %1938 = vmatprep.subr.mxu0 0.0
      %1939 = vmatpush1.msra.mxu0 0.0
      %1940 = vmatprep.subr.mxu0 0.0
      %1941 = vmatpush1.msra.mxu0 0.0
      %1942 = vmatprep.subr.mxu0 0.0
      %1943 = vmatpush1.msra.mxu0 0.0
      %1944 = vmatprep.subr.mxu0 0.0
      %1945 = vmatpush1.msra.mxu0 0.0
      %1946 = vmatprep.subr.mxu0 0.0
      %1947 = vmatpush1.msra.mxu0 0.0
      %1948 = vmatprep.subr.mxu0 0.0
      %1949 = vmatpush1.msra.mxu0 0.0
      %1950 = vmatprep.subr.mxu0 0.0
      %1951 = vmatpush1.msra.mxu0 0.0
      %1952 = vmatprep.subr.mxu0 0.0
      %1953 = vmatpush1.msra.mxu0 0.0
      %1954 = vmatprep.subr.mxu0 0.0
      %1955 = vmatpush1.msra.mxu0 0.0
      %1956 = vmatprep.subr.mxu0 0.0
      %1957 = vmatpush1.msra.mxu0 0.0
      %1958 = vmatprep.subr.mxu0 0.0
      %1959 = vmatpush1.msra.mxu0 0.0
      %1960 = vmatprep.subr.mxu0 0.0
      %1961 = vmatpush1.msra.mxu0 0.0
      %1962 = vmatprep.subr.mxu0 0.0
      %1963 = vmatpush1.msra.mxu0 0.0
      %1964 = vmatprep.subr.mxu0 0.0
      %1965 = vmatpush1.msra.mxu0 0.0
      %1966 = vmatprep.subr.mxu0 0.0
      %1967 = vmatpush1.msra.mxu0 0.0
      %1968 = vmatprep.subr.mxu0 0.0
      %1969 = vmatpush1.msra.mxu0 0.0
      %1970 = vmatprep.mubr.f32.mxu0 0.0
      %1971 = vmatmul.mubr.f32.gmra.mrb[0].mxu0 %v1811
      %v1972 = vpop.f32.mrb[0].mxu0
      %v1973 = vadd.f32 0.0, %v1972
      %v1974 = vpop.f32.mrb[0].mxu0
      %1975 = vmatprep.mubr.f32.mxu0 0.0
      %1976 = vmatmul.mubr.f32.gmra.mrb[0].mxu0 %v1814
      %v1977 = vpop.f32.mrb[0].mxu0
      %v1978 = vadd.f32 0.0, %v1977
      %v1979 = vpop.f32.mrb[0].mxu0
      %1980 = vmatprep.mubr.f32.mxu0 0.0
      %1981 = vmatmul.mubr.f32.gmra.mrb[0].mxu0 %v1817
      %v1982 = vpop.f32.mrb[0].mxu0
      %v1983 = vadd.f32 0.0, %v1982
      %v1984 = vpop.f32.mrb[0].mxu0
      %1985 = vmatprep.mubr.f32.mxu0 0.0
      %1986 = vmatmul.mubr.f32.gmra.mrb[0].mxu0 %v1820
      %v1987 = vpop.f32.mrb[0].mxu0
      %v1988 = vadd.f32 0.0, %v1987
      %v1989 = vpop.f32.mrb[0].mxu0
      %1990 = vmatprep.mubr.f32.mxu0 0.0
      %1991 = vmatmul.mubr.f32.gmra.mrb[0].mxu0 %v1823
      %v1992 = vpop.f32.mrb[0].mxu0
      %v1993 = vadd.f32 0.0, %v1992
      %v1994 = vpop.f32.mrb[0].mxu0
      %1995 = vmatprep.mubr.f32.mxu0 0.0
      %1996 = vmatmul.mubr.f32.gmra.mrb[0].mxu0 %v1826
      %v1997 = vpop.f32.mrb[0].mxu0
      %v1998 = vadd.f32 0.0, %v1997
      %v1999 = vpop.f32.mrb[0].mxu0
      %2000 = vmatprep.mubr.f32.mxu0 0.0
      %2001 = vmatmul.mubr.f32.gmra.mrb[0].mxu0 %v1829
      %v2002 = vpop.f32.mrb[0].mxu0
      %v2003 = vadd.f32 0.0, %v2002
      %v2004 = vpop.f32.mrb[0].mxu0
      %2005 = vmatprep.mubr.f32.mxu0 0.0
      %2006 = vmatmul.mubr.f32.gmra.mrb[0].mxu0 %v1832
      %v2007 = vpop.f32.mrb[0].mxu0
      %v2008 = vadd.f32 0.0, %v2007
      %v2009 = vpop.f32.mrb[0].mxu0
      %2010 = vmatprep.mubr.f32.mxu0 0.0
      %2011 = vmatmul.mubr.f32.gmra.mrb[0].mxu0 %v1835
      %v2012 = vpop.f32.mrb[0].mxu0
      %v2013 = vadd.f32 0.0, %v2012
      %v2014 = vpop.f32.mrb[0].mxu0
      %2015 = vmatprep.mubr.f32.mxu0 0.0
      %2016 = vmatmul.mubr.f32.gmra.mrb[0].mxu0 %v1838
      %v2017 = vpop.f32.mrb[0].mxu0
      %v2018 = vadd.f32 0.0, %v2017
      %v2019 = vpop.f32.mrb[0].mxu0
      %2020 = vmatprep.mubr.f32.mxu0 0.0
      %2021 = vmatmul.mubr.f32.gmra.mrb[0].mxu0 %v1841
      %v2022 = vpop.f32.mrb[0].mxu0
      %v2023 = vadd.f32 0.0, %v2022
      %v2024 = vpop.f32.mrb[0].mxu0
      %2025 = vmatprep.mubr.f32.mxu0 0.0
      %2026 = vmatmul.mubr.f32.gmra.mrb[0].mxu0 %v1844
      %v2027 = vpop.f32.mrb[0].mxu0
      %v2028 = vadd.f32 0.0, %v2027
      %v2029 = vpop.f32.mrb[0].mxu0
      %2030 = vmatprep.mubr.f32.mxu0 0.0
      %2031 = vmatmul.mubr.f32.gmra.mrb[0].mxu0 %v1847
      %v2032 = vpop.f32.mrb[0].mxu0
      %v2033 = vadd.f32 0.0, %v2032
      %v2034 = vpop.f32.mrb[0].mxu0
      %2035 = vmatprep.mubr.f32.mxu0 0.0
      %2036 = vmatmul.mubr.f32.gmra.mrb[0].mxu0 %v1850
      %v2037 = vpop.f32.mrb[0].mxu0
      %v2038 = vadd.f32 0.0, %v2037
      %v2039 = vpop.f32.mrb[0].mxu0
      %2040 = vmatprep.mubr.f32.mxu0 0.0
      %2041 = vmatmul.mubr.f32.gmra.mrb[0].mxu0 %v1853
      %v2042 = vpop.f32.mrb[0].mxu0
      %v2043 = vadd.f32 0.0, %v2042
      %v2044 = vpop.f32.mrb[0].mxu0
      %2045 = vmatprep.mubr.f32.mxu0 0.0
      %2046 = vmatmul.mubr.f32.gmra.mrb[0].mxu0 %v1856
      %v2047 = vpop.f32.mrb[0].mxu0
      %v2048 = vadd.f32 0.0, %v2047
      %v2049 = vpop.f32.mrb[0].mxu0
      %2050 = vmatprep.mubr.f32.mxu0 0.0
      %2051 = vmatmul.mubr.f32.gmra.mrb[0].mxu0 %v1859
      %v2052 = vpop.f32.mrb[0].mxu0
      %v2053 = vadd.f32 0.0, %v2052
      %v2054 = vpop.f32.mrb[0].mxu0
      %2055 = vmatprep.mubr.f32.mxu0 0.0
      %2056 = vmatmul.mubr.f32.gmra.mrb[0].mxu0 %v1862
      %v2057 = vpop.f32.mrb[0].mxu0
      %v2058 = vadd.f32 0.0, %v2057
      %v2059 = vpop.f32.mrb[0].mxu0
      %2060 = vmatprep.mubr.f32.mxu0 0.0
      %2061 = vmatmul.mubr.f32.gmra.mrb[0].mxu0 %v1865
      %v2062 = vpop.f32.mrb[0].mxu0
      %v2063 = vadd.f32 0.0, %v2062
      %v2064 = vpop.f32.mrb[0].mxu0
      %2065 = vmatprep.mubr.f32.mxu0 0.0
      %2066 = vmatmul.mubr.f32.gmra.mrb[0].mxu0 %v1868
      %v2067 = vpop.f32.mrb[0].mxu0
      %v2068 = vadd.f32 0.0, %v2067
      %v2069 = vpop.f32.mrb[0].mxu0
      %2070 = vmatprep.mubr.f32.mxu0 0.0
      %2071 = vmatmul.mubr.f32.gmra.mrb[0].mxu0 %v1871
      %v2072 = vpop.f32.mrb[0].mxu0
      %v2073 = vadd.f32 0.0, %v2072
      %v2074 = vpop.f32.mrb[0].mxu0
      %2075 = vmatprep.mubr.f32.mxu0 0.0
      %2076 = vmatmul.mubr.f32.gmra.mrb[0].mxu0 %v1874
      %v2077 = vpop.f32.mrb[0].mxu0
      %v2078 = vadd.f32 0.0, %v2077
      %v2079 = vpop.f32.mrb[0].mxu0
      %2080 = vmatprep.mubr.f32.mxu0 0.0
      %2081 = vmatmul.mubr.f32.gmra.mrb[0].mxu0 %v1877
      %v2082 = vpop.f32.mrb[0].mxu0
      %v2083 = vadd.f32 0.0, %v2082
      %v2084 = vpop.f32.mrb[0].mxu0
      %2085 = vmatprep.mubr.f32.mxu0 0.0
      %2086 = vmatmul.mubr.f32.gmra.mrb[0].mxu0 %v1880
      %v2087 = vpop.f32.mrb[0].mxu0
      %v2088 = vadd.f32 0.0, %v2087
      %v2089 = vpop.f32.mrb[0].mxu0
      %2090 = vmatprep.mubr.f32.mxu0 0.0
      %2091 = vmatmul.mubr.f32.gmra.mrb[0].mxu0 %v1883
      %v2092 = vpop.f32.mrb[0].mxu0
      %v2093 = vadd.f32 0.0, %v2092
      %v2094 = vpop.f32.mrb[0].mxu0
      %2095 = vmatprep.mubr.f32.mxu0 0.0
      %2096 = vmatmul.mubr.f32.gmra.mrb[0].mxu0 %v1886
      %v2097 = vpop.f32.mrb[0].mxu0
      %v2098 = vadd.f32 0.0, %v2097
      %v2099 = vpop.f32.mrb[0].mxu0
      %2100 = vmatprep.mubr.f32.mxu0 0.0
      %2101 = vmatmul.mubr.f32.gmra.mrb[0].mxu0 %v1889
      %v2102 = vpop.f32.mrb[0].mxu0
      %v2103 = vadd.f32 0.0, %v2102
      %v2104 = vpop.f32.mrb[0].mxu0
      %2105 = vmatprep.mubr.f32.mxu0 0.0
      %2106 = vmatmul.mubr.f32.gmra.mrb[0].mxu0 %v1892
      %v2107 = vpop.f32.mrb[0].mxu0
      %v2108 = vadd.f32 0.0, %v2107
      %v2109 = vpop.f32.mrb[0].mxu0
      %2110 = vmatprep.mubr.f32.mxu0 0.0
      %2111 = vmatmul.mubr.f32.gmra.mrb[0].mxu0 %v1895
      %v2112 = vpop.f32.mrb[0].mxu0
      %v2113 = vadd.f32 0.0, %v2112
      %v2114 = vpop.f32.mrb[0].mxu0
      %2115 = vmatprep.mubr.f32.mxu0 0.0
      %2116 = vmatmul.mubr.f32.gmra.mrb[0].mxu0 %v1898
      %v2117 = vpop.f32.mrb[0].mxu0
      %v2118 = vadd.f32 0.0, %v2117
      %v2119 = vpop.f32.mrb[0].mxu0
      %2120 = vmatprep.mubr.f32.mxu0 0.0
      %2121 = vmatmul.mubr.f32.gmra.mrb[0].mxu0 %v1901
      %v2122 = vpop.f32.mrb[0].mxu0
      %v2123 = vadd.f32 0.0, %v2122
      %v2124 = vpop.f32.mrb[0].mxu0
      %2125 = vmatprep.mubr.f32.mxu0 0.0
      %2126 = vmatmul.mubr.f32.gmra.mrb[0].mxu0 %v1904
      %v2127 = vpop.f32.mrb[0].mxu0
      %v2128 = vadd.f32 0.0, %v2127
      %v2129 = vpop.f32.mrb[0].mxu0
      %2130 = vdwg.mxu0
      %v2131 = vadd.f32 %v1744, %v1973
      %v2132 = vadd.f32 %v1745, %v1978
      %v2133 = vadd.f32 %v1746, %v1983
      %v2134 = vadd.f32 %v1747, %v1988
      %v2135 = vadd.f32 %v1748, %v1993
      %v2136 = vadd.f32 %v1749, %v1998
      %v2137 = vadd.f32 %v1750, %v2003
      %v2138 = vadd.f32 %v1751, %v2008
      %v2139 = vadd.f32 %v1752, %v2013
      %v2140 = vadd.f32 %v1753, %v2018
      %v2141 = vadd.f32 %v1754, %v2023
      %v2142 = vadd.f32 %v1755, %v2028
      %v2143 = vadd.f32 %v1756, %v2033
      %v2144 = vadd.f32 %v1757, %v2038
      %v2145 = vadd.f32 %v1758, %v2043
      %v2146 = vadd.f32 %v1759, %v2048
      %v2147 = vadd.f32 %v1760, %v2053
      %v2148 = vadd.f32 %v1761, %v2058
      %v2149 = vadd.f32 %v1762, %v2063
      %v2150 = vadd.f32 %v1763, %v2068
      %v2151 = vadd.f32 %v1764, %v2073
      %v2152 = vadd.f32 %v1765, %v2078
      %v2153 = vadd.f32 %v1766, %v2083
      %v2154 = vadd.f32 %v1767, %v2088
      %v2155 = vadd.f32 %v1768, %v2093
      %v2156 = vadd.f32 %v1769, %v2098
      %v2157 = vadd.f32 %v1770, %v2103
      %v2158 = vadd.f32 %v1771, %v2108
      %v2159 = vadd.f32 %v1772, %v2113
      %v2160 = vadd.f32 %v1773, %v2118
      %v2161 = vadd.f32 %v1774, %v2123
      %v2162 = vadd.f32 %v1775, %v2128
      %v2163 = vld [vmem:[%s273 + $0x2] sm:$0xff]
      %v2164 = vld [vmem:[%s273 + $0xa] sm:$0xff]
      %v2165 = vld [vmem:[%s273 + $0x1a] sm:$0xff]
      %v2166 = vld [vmem:[%s273 + $0x22] sm:$0xff]
      %v2167 = vld [vmem:[%s273 + $0x32] sm:$0xff]
      %v2168 = vld [vmem:[%s273 + $0x3a] sm:$0xff]
      %v2169 = vld [vmem:[%s273 + $0x4a] sm:$0xff]
      %v2170 = vld [vmem:[%s273 + $0x52] sm:$0xff]
      %v2171 = vld [vmem:[%s273 + $0x62] sm:$0xff]
      %v2172 = vld [vmem:[%s273 + $0x6a] sm:$0xff]
      %v2173 = vld [vmem:[%s273 + $0x7a] sm:$0xff]
      %v2174 = vld [vmem:[%s273 + $0x82] sm:$0xff]
      %v2175 = vld [vmem:[%s273 + $0x92] sm:$0xff]
      %v2176 = vld [vmem:[%s273 + $0x9a] sm:$0xff]
      %v2177 = vld [vmem:[%s273 + $0xaa] sm:$0xff]
      %v2178 = vld [vmem:[%s273 + $0xb2] sm:$0xff]
      %v2179 = vld [vmem:[%s273 + $0xc2] sm:$0xff]
      %v2180 = vld [vmem:[%s273 + $0xca] sm:$0xff]
      %v2181 = vld [vmem:[%s273 + $0xda] sm:$0xff]
      %v2182 = vld [vmem:[%s273 + $0xe2] sm:$0xff]
      %v2183 = vld [vmem:[%s273 + $0xf2] sm:$0xff]
      %v2184 = vld [vmem:[%s273 + $0xfa] sm:$0xff]
      %v2185 = vld [vmem:[%s273 + $0x10a] sm:$0xff]
      %v2186 = vld [vmem:[%s273 + $0x112] sm:$0xff]
      %v2187 = vld [vmem:[%s273 + $0x122] sm:$0xff]
      %v2188 = vld [vmem:[%s273 + $0x12a] sm:$0xff]
      %v2189 = vld [vmem:[%s273 + $0x13a] sm:$0xff]
      %v2190 = vld [vmem:[%s273 + $0x142] sm:$0xff]
      %v2191 = vld [vmem:[%s273 + $0x152] sm:$0xff]
      %v2192 = vld [vmem:[%s273 + $0x15a] sm:$0xff]
      %v2193 = vld [vmem:[%s273 + $0x16a] sm:$0xff]
      %v2194 = vld [vmem:[%s273 + $0x172] sm:$0xff]
      %s2195 = scalar_lea.vmem %s3, 40
      %v2196 = vld [vmem:[%s2195] sm:$0xff]
      %v2198 = vsel %vm359, %v2163, 0
      %v2201 = vsel %vm359, %v2164, 0
      %v2204 = vsel %vm359, %v2165, 0
      %v2207 = vsel %vm359, %v2166, 0
      %v2210 = vsel %vm359, %v2167, 0
      %v2213 = vsel %vm359, %v2168, 0
      %v2216 = vsel %vm359, %v2169, 0
      %v2219 = vsel %vm359, %v2170, 0
      %v2222 = vsel %vm359, %v2171, 0
      %v2225 = vsel %vm359, %v2172, 0
      %v2228 = vsel %vm359, %v2173, 0
      %v2231 = vsel %vm359, %v2174, 0
      %v2234 = vsel %vm359, %v2175, 0
      %v2237 = vsel %vm359, %v2176, 0
      %v2240 = vsel %vm359, %v2177, 0
      %v2243 = vsel %vm359, %v2178, 0
      %v2246 = vsel %vm359, %v2179, 0
      %v2249 = vsel %vm359, %v2180, 0
      %v2252 = vsel %vm359, %v2181, 0
      %v2255 = vsel %vm359, %v2182, 0
      %v2258 = vsel %vm359, %v2183, 0
      %v2261 = vsel %vm359, %v2184, 0
      %v2264 = vsel %vm359, %v2185, 0
      %v2267 = vsel %vm359, %v2186, 0
      %v2270 = vsel %vm359, %v2187, 0
      %v2273 = vsel %vm359, %v2188, 0
      %v2276 = vsel %vm359, %v2189, 0
      %v2279 = vsel %vm359, %v2190, 0
      %v2282 = vsel %vm359, %v2191, 0
      %v2285 = vsel %vm359, %v2192, 0
      %v2288 = vsel %vm359, %v2193, 0
      %v2291 = vsel %vm359, %v2194, 0
      %2293 = vmatprep.subr.mxu0 0.0
      %2294 = vmatpush1.msra.mxu0 %v2196
      %2295 = vmatprep.subr.mxu0 0.0
      %2296 = vmatpush1.msra.mxu0 0.0
      %2297 = vmatprep.subr.mxu0 0.0
      %2298 = vmatpush1.msra.mxu0 0.0
      %2299 = vmatprep.subr.mxu0 0.0
      %2300 = vmatpush1.msra.mxu0 0.0
      %2301 = vmatprep.subr.mxu0 0.0
      %2302 = vmatpush1.msra.mxu0 0.0
      %2303 = vmatprep.subr.mxu0 0.0
      %2304 = vmatpush1.msra.mxu0 0.0
      %2305 = vmatprep.subr.mxu0 0.0
      %2306 = vmatpush1.msra.mxu0 0.0
      %2307 = vmatprep.subr.mxu0 0.0
      %2308 = vmatpush1.msra.mxu0 0.0
      %2309 = vmatprep.subr.mxu0 0.0
      %2310 = vmatpush1.msra.mxu0 0.0
      %2311 = vmatprep.subr.mxu0 0.0
      %2312 = vmatpush1.msra.mxu0 0.0
      %2313 = vmatprep.subr.mxu0 0.0
      %2314 = vmatpush1.msra.mxu0 0.0
      %2315 = vmatprep.subr.mxu0 0.0
      %2316 = vmatpush1.msra.mxu0 0.0
      %2317 = vmatprep.subr.mxu0 0.0
      %2318 = vmatpush1.msra.mxu0 0.0
      %2319 = vmatprep.subr.mxu0 0.0
      %2320 = vmatpush1.msra.mxu0 0.0
      %2321 = vmatprep.subr.mxu0 0.0
      %2322 = vmatpush1.msra.mxu0 0.0
      %2323 = vmatprep.subr.mxu0 0.0
      %2324 = vmatpush1.msra.mxu0 0.0
      %2325 = vmatprep.subr.mxu0 0.0
      %2326 = vmatpush1.msra.mxu0 0.0
      %2327 = vmatprep.subr.mxu0 0.0
      %2328 = vmatpush1.msra.mxu0 0.0
      %2329 = vmatprep.subr.mxu0 0.0
      %2330 = vmatpush1.msra.mxu0 0.0
      %2331 = vmatprep.subr.mxu0 0.0
      %2332 = vmatpush1.msra.mxu0 0.0
      %2333 = vmatprep.subr.mxu0 0.0
      %2334 = vmatpush1.msra.mxu0 0.0
      %2335 = vmatprep.subr.mxu0 0.0
      %2336 = vmatpush1.msra.mxu0 0.0
      %2337 = vmatprep.subr.mxu0 0.0
      %2338 = vmatpush1.msra.mxu0 0.0
      %2339 = vmatprep.subr.mxu0 0.0
      %2340 = vmatpush1.msra.mxu0 0.0
      %2341 = vmatprep.subr.mxu0 0.0
      %2342 = vmatpush1.msra.mxu0 0.0
      %2343 = vmatprep.subr.mxu0 0.0
      %2344 = vmatpush1.msra.mxu0 0.0
      %2345 = vmatprep.subr.mxu0 0.0
      %2346 = vmatpush1.msra.mxu0 0.0
      %2347 = vmatprep.subr.mxu0 0.0
      %2348 = vmatpush1.msra.mxu0 0.0
      %2349 = vmatprep.subr.mxu0 0.0
      %2350 = vmatpush1.msra.mxu0 0.0
      %2351 = vmatprep.subr.mxu0 0.0
      %2352 = vmatpush1.msra.mxu0 0.0
      %2353 = vmatprep.subr.mxu0 0.0
      %2354 = vmatpush1.msra.mxu0 0.0
      %2355 = vmatprep.subr.mxu0 0.0
      %2356 = vmatpush1.msra.mxu0 0.0
      %2357 = vmatprep.mubr.f32.mxu0 0.0
      %2358 = vmatmul.mubr.f32.gmra.mrb[0].mxu0 %v2198
      %v2359 = vpop.f32.mrb[0].mxu0
      %v2360 = vadd.f32 0.0, %v2359
      %v2361 = vpop.f32.mrb[0].mxu0
      %2362 = vmatprep.mubr.f32.mxu0 0.0
      %2363 = vmatmul.mubr.f32.gmra.mrb[0].mxu0 %v2201
      %v2364 = vpop.f32.mrb[0].mxu0
      %v2365 = vadd.f32 0.0, %v2364
      %v2366 = vpop.f32.mrb[0].mxu0
      %2367 = vmatprep.mubr.f32.mxu0 0.0
      %2368 = vmatmul.mubr.f32.gmra.mrb[0].mxu0 %v2204
      %v2369 = vpop.f32.mrb[0].mxu0
      %v2370 = vadd.f32 0.0, %v2369
      %v2371 = vpop.f32.mrb[0].mxu0
      %2372 = vmatprep.mubr.f32.mxu0 0.0
      %2373 = vmatmul.mubr.f32.gmra.mrb[0].mxu0 %v2207
      %v2374 = vpop.f32.mrb[0].mxu0
      %v2375 = vadd.f32 0.0, %v2374
      %v2376 = vpop.f32.mrb[0].mxu0
      %2377 = vmatprep.mubr.f32.mxu0 0.0
      %2378 = vmatmul.mubr.f32.gmra.mrb[0].mxu0 %v2210
      %v2379 = vpop.f32.mrb[0].mxu0
      %v2380 = vadd.f32 0.0, %v2379
      %v2381 = vpop.f32.mrb[0].mxu0
      %2382 = vmatprep.mubr.f32.mxu0 0.0
      %2383 = vmatmul.mubr.f32.gmra.mrb[0].mxu0 %v2213
      %v2384 = vpop.f32.mrb[0].mxu0
      %v2385 = vadd.f32 0.0, %v2384
      %v2386 = vpop.f32.mrb[0].mxu0
      %2387 = vmatprep.mubr.f32.mxu0 0.0
      %2388 = vmatmul.mubr.f32.gmra.mrb[0].mxu0 %v2216
      %v2389 = vpop.f32.mrb[0].mxu0
      %v2390 = vadd.f32 0.0, %v2389
      %v2391 = vpop.f32.mrb[0].mxu0
      %2392 = vmatprep.mubr.f32.mxu0 0.0
      %2393 = vmatmul.mubr.f32.gmra.mrb[0].mxu0 %v2219
      %v2394 = vpop.f32.mrb[0].mxu0
      %v2395 = vadd.f32 0.0, %v2394
      %v2396 = vpop.f32.mrb[0].mxu0
      %2397 = vmatprep.mubr.f32.mxu0 0.0
      %2398 = vmatmul.mubr.f32.gmra.mrb[0].mxu0 %v2222
      %v2399 = vpop.f32.mrb[0].mxu0
      %v2400 = vadd.f32 0.0, %v2399
      %v2401 = vpop.f32.mrb[0].mxu0
      %2402 = vmatprep.mubr.f32.mxu0 0.0
      %2403 = vmatmul.mubr.f32.gmra.mrb[0].mxu0 %v2225
      %v2404 = vpop.f32.mrb[0].mxu0
      %v2405 = vadd.f32 0.0, %v2404
      %v2406 = vpop.f32.mrb[0].mxu0
      %2407 = vmatprep.mubr.f32.mxu0 0.0
      %2408 = vmatmul.mubr.f32.gmra.mrb[0].mxu0 %v2228
      %v2409 = vpop.f32.mrb[0].mxu0
      %v2410 = vadd.f32 0.0, %v2409
      %v2411 = vpop.f32.mrb[0].mxu0
      %2412 = vmatprep.mubr.f32.mxu0 0.0
      %2413 = vmatmul.mubr.f32.gmra.mrb[0].mxu0 %v2231
      %v2414 = vpop.f32.mrb[0].mxu0
      %v2415 = vadd.f32 0.0, %v2414
      %v2416 = vpop.f32.mrb[0].mxu0
      %2417 = vmatprep.mubr.f32.mxu0 0.0
      %2418 = vmatmul.mubr.f32.gmra.mrb[0].mxu0 %v2234
      %v2419 = vpop.f32.mrb[0].mxu0
      %v2420 = vadd.f32 0.0, %v2419
      %v2421 = vpop.f32.mrb[0].mxu0
      %2422 = vmatprep.mubr.f32.mxu0 0.0
      %2423 = vmatmul.mubr.f32.gmra.mrb[0].mxu0 %v2237
      %v2424 = vpop.f32.mrb[0].mxu0
      %v2425 = vadd.f32 0.0, %v2424
      %v2426 = vpop.f32.mrb[0].mxu0
      %2427 = vmatprep.mubr.f32.mxu0 0.0
      %2428 = vmatmul.mubr.f32.gmra.mrb[0].mxu0 %v2240
      %v2429 = vpop.f32.mrb[0].mxu0
      %v2430 = vadd.f32 0.0, %v2429
      %v2431 = vpop.f32.mrb[0].mxu0
      %2432 = vmatprep.mubr.f32.mxu0 0.0
      %2433 = vmatmul.mubr.f32.gmra.mrb[0].mxu0 %v2243
      %v2434 = vpop.f32.mrb[0].mxu0
      %v2435 = vadd.f32 0.0, %v2434
      %v2436 = vpop.f32.mrb[0].mxu0
      %2437 = vmatprep.mubr.f32.mxu0 0.0
      %2438 = vmatmul.mubr.f32.gmra.mrb[0].mxu0 %v2246
      %v2439 = vpop.f32.mrb[0].mxu0
      %v2440 = vadd.f32 0.0, %v2439
      %v2441 = vpop.f32.mrb[0].mxu0
      %2442 = vmatprep.mubr.f32.mxu0 0.0
      %2443 = vmatmul.mubr.f32.gmra.mrb[0].mxu0 %v2249
      %v2444 = vpop.f32.mrb[0].mxu0
      %v2445 = vadd.f32 0.0, %v2444
      %v2446 = vpop.f32.mrb[0].mxu0
      %2447 = vmatprep.mubr.f32.mxu0 0.0
      %2448 = vmatmul.mubr.f32.gmra.mrb[0].mxu0 %v2252
      %v2449 = vpop.f32.mrb[0].mxu0
      %v2450 = vadd.f32 0.0, %v2449
      %v2451 = vpop.f32.mrb[0].mxu0
      %2452 = vmatprep.mubr.f32.mxu0 0.0
      %2453 = vmatmul.mubr.f32.gmra.mrb[0].mxu0 %v2255
      %v2454 = vpop.f32.mrb[0].mxu0
      %v2455 = vadd.f32 0.0, %v2454
      %v2456 = vpop.f32.mrb[0].mxu0
      %2457 = vmatprep.mubr.f32.mxu0 0.0
      %2458 = vmatmul.mubr.f32.gmra.mrb[0].mxu0 %v2258
      %v2459 = vpop.f32.mrb[0].mxu0
      %v2460 = vadd.f32 0.0, %v2459
      %v2461 = vpop.f32.mrb[0].mxu0
      %2462 = vmatprep.mubr.f32.mxu0 0.0
      %2463 = vmatmul.mubr.f32.gmra.mrb[0].mxu0 %v2261
      %v2464 = vpop.f32.mrb[0].mxu0
      %v2465 = vadd.f32 0.0, %v2464
      %v2466 = vpop.f32.mrb[0].mxu0
      %2467 = vmatprep.mubr.f32.mxu0 0.0
      %2468 = vmatmul.mubr.f32.gmra.mrb[0].mxu0 %v2264
      %v2469 = vpop.f32.mrb[0].mxu0
      %v2470 = vadd.f32 0.0, %v2469
      %v2471 = vpop.f32.mrb[0].mxu0
      %2472 = vmatprep.mubr.f32.mxu0 0.0
      %2473 = vmatmul.mubr.f32.gmra.mrb[0].mxu0 %v2267
      %v2474 = vpop.f32.mrb[0].mxu0
      %v2475 = vadd.f32 0.0, %v2474
      %v2476 = vpop.f32.mrb[0].mxu0
      %2477 = vmatprep.mubr.f32.mxu0 0.0
      %2478 = vmatmul.mubr.f32.gmra.mrb[0].mxu0 %v2270
      %v2479 = vpop.f32.mrb[0].mxu0
      %v2480 = vadd.f32 0.0, %v2479
      %v2481 = vpop.f32.mrb[0].mxu0
      %2482 = vmatprep.mubr.f32.mxu0 0.0
      %2483 = vmatmul.mubr.f32.gmra.mrb[0].mxu0 %v2273
      %v2484 = vpop.f32.mrb[0].mxu0
      %v2485 = vadd.f32 0.0, %v2484
      %v2486 = vpop.f32.mrb[0].mxu0
      %2487 = vmatprep.mubr.f32.mxu0 0.0
      %2488 = vmatmul.mubr.f32.gmra.mrb[0].mxu0 %v2276
      %v2489 = vpop.f32.mrb[0].mxu0
      %v2490 = vadd.f32 0.0, %v2489
      %v2491 = vpop.f32.mrb[0].mxu0
      %2492 = vmatprep.mubr.f32.mxu0 0.0
      %2493 = vmatmul.mubr.f32.gmra.mrb[0].mxu0 %v2279
      %v2494 = vpop.f32.mrb[0].mxu0
      %v2495 = vadd.f32 0.0, %v2494
      %v2496 = vpop.f32.mrb[0].mxu0
      %2497 = vmatprep.mubr.f32.mxu0 0.0
      %2498 = vmatmul.mubr.f32.gmra.mrb[0].mxu0 %v2282
      %v2499 = vpop.f32.mrb[0].mxu0
      %v2500 = vadd.f32 0.0, %v2499
      %v2501 = vpop.f32.mrb[0].mxu0
      %2502 = vmatprep.mubr.f32.mxu0 0.0
      %2503 = vmatmul.mubr.f32.gmra.mrb[0].mxu0 %v2285
      %v2504 = vpop.f32.mrb[0].mxu0
      %v2505 = vadd.f32 0.0, %v2504
      %v2506 = vpop.f32.mrb[0].mxu0
      %2507 = vmatprep.mubr.f32.mxu0 0.0
      %2508 = vmatmul.mubr.f32.gmra.mrb[0].mxu0 %v2288
      %v2509 = vpop.f32.mrb[0].mxu0
      %v2510 = vadd.f32 0.0, %v2509
      %v2511 = vpop.f32.mrb[0].mxu0
      %2512 = vmatprep.mubr.f32.mxu0 0.0
      %2513 = vmatmul.mubr.f32.gmra.mrb[0].mxu0 %v2291
      %v2514 = vpop.f32.mrb[0].mxu0
      %v2515 = vadd.f32 0.0, %v2514
      %v2516 = vpop.f32.mrb[0].mxu0
      %2517 = vdwg.mxu0
      %v2518 = vadd.f32 %v2131, %v2360
      %v2519 = vadd.f32 %v2132, %v2365
      %v2520 = vadd.f32 %v2133, %v2370
      %v2521 = vadd.f32 %v2134, %v2375
      %v2522 = vadd.f32 %v2135, %v2380
      %v2523 = vadd.f32 %v2136, %v2385
      %v2524 = vadd.f32 %v2137, %v2390
      %v2525 = vadd.f32 %v2138, %v2395
      %v2526 = vadd.f32 %v2139, %v2400
      %v2527 = vadd.f32 %v2140, %v2405
      %v2528 = vadd.f32 %v2141, %v2410
      %v2529 = vadd.f32 %v2142, %v2415
      %v2530 = vadd.f32 %v2143, %v2420
      %v2531 = vadd.f32 %v2144, %v2425
      %v2532 = vadd.f32 %v2145, %v2430
      %v2533 = vadd.f32 %v2146, %v2435
      %v2534 = vadd.f32 %v2147, %v2440
      %v2535 = vadd.f32 %v2148, %v2445
      %v2536 = vadd.f32 %v2149, %v2450
      %v2537 = vadd.f32 %v2150, %v2455
      %v2538 = vadd.f32 %v2151, %v2460
      %v2539 = vadd.f32 %v2152, %v2465
      %v2540 = vadd.f32 %v2153, %v2470
      %v2541 = vadd.f32 %v2154, %v2475
      %v2542 = vadd.f32 %v2155, %v2480
      %v2543 = vadd.f32 %v2156, %v2485
      %v2544 = vadd.f32 %v2157, %v2490
      %v2545 = vadd.f32 %v2158, %v2495
      %v2546 = vadd.f32 %v2159, %v2500
      %v2547 = vadd.f32 %v2160, %v2505
      %v2548 = vadd.f32 %v2161, %v2510
      %v2549 = vadd.f32 %v2162, %v2515
      %v2550 = vld [vmem:[%s280] sm:$0xff]
      %v2551 = vld [vmem:[%s280 + $0x8] sm:$0xff]
      %v2552 = vld [vmem:[%s280 + $0x18] sm:$0xff]
      %v2553 = vld [vmem:[%s280 + $0x20] sm:$0xff]
      %v2554 = vld [vmem:[%s280 + $0x30] sm:$0xff]
      %v2555 = vld [vmem:[%s280 + $0x38] sm:$0xff]
      %v2556 = vld [vmem:[%s280 + $0x48] sm:$0xff]
      %v2557 = vld [vmem:[%s280 + $0x50] sm:$0xff]
      %v2558 = vld [vmem:[%s280 + $0x60] sm:$0xff]
      %v2559 = vld [vmem:[%s280 + $0x68] sm:$0xff]
      %v2560 = vld [vmem:[%s280 + $0x78] sm:$0xff]
      %v2561 = vld [vmem:[%s280 + $0x80] sm:$0xff]
      %v2562 = vld [vmem:[%s280 + $0x90] sm:$0xff]
      %v2563 = vld [vmem:[%s280 + $0x98] sm:$0xff]
      %v2564 = vld [vmem:[%s280 + $0xa8] sm:$0xff]
      %v2565 = vld [vmem:[%s280 + $0xb0] sm:$0xff]
      %v2566 = vld [vmem:[%s280 + $0xc0] sm:$0xff]
      %v2567 = vld [vmem:[%s280 + $0xc8] sm:$0xff]
      %v2568 = vld [vmem:[%s280 + $0xd8] sm:$0xff]
      %v2569 = vld [vmem:[%s280 + $0xe0] sm:$0xff]
      %v2570 = vld [vmem:[%s280 + $0xf0] sm:$0xff]
      %v2571 = vld [vmem:[%s280 + $0xf8] sm:$0xff]
      %v2572 = vld [vmem:[%s280 + $0x108] sm:$0xff]
      %v2573 = vld [vmem:[%s280 + $0x110] sm:$0xff]
      %v2574 = vld [vmem:[%s280 + $0x120] sm:$0xff]
      %v2575 = vld [vmem:[%s280 + $0x128] sm:$0xff]
      %v2576 = vld [vmem:[%s280 + $0x138] sm:$0xff]
      %v2577 = vld [vmem:[%s280 + $0x140] sm:$0xff]
      %v2578 = vld [vmem:[%s280 + $0x150] sm:$0xff]
      %v2579 = vld [vmem:[%s280 + $0x158] sm:$0xff]
      %v2580 = vld [vmem:[%s280 + $0x168] sm:$0xff]
      %v2581 = vld [vmem:[%s280 + $0x170] sm:$0xff]
      %s2582 = scalar_lea.vmem %s3, 48
      %v2583 = vld [vmem:[%s2582] sm:$0xff]
      %v2585 = vsel %vm359, %v2550, 0
      %v2588 = vsel %vm359, %v2551, 0
      %v2591 = vsel %vm359, %v2552, 0
      %v2594 = vsel %vm359, %v2553, 0
      %v2597 = vsel %vm359, %v2554, 0
      %v2600 = vsel %vm359, %v2555, 0
      %v2603 = vsel %vm359, %v2556, 0
      %v2606 = vsel %vm359, %v2557, 0
      %v2609 = vsel %vm359, %v2558, 0
      %v2612 = vsel %vm359, %v2559, 0
      %v2615 = vsel %vm359, %v2560, 0
      %v2618 = vsel %vm359, %v2561, 0
      %v2621 = vsel %vm359, %v2562, 0
      %v2624 = vsel %vm359, %v2563, 0
      %v2627 = vsel %vm359, %v2564, 0
      %v2630 = vsel %vm359, %v2565, 0
      %v2633 = vsel %vm359, %v2566, 0
      %v2636 = vsel %vm359, %v2567, 0
      %v2639 = vsel %vm359, %v2568, 0
      %v2642 = vsel %vm359, %v2569, 0
      %v2645 = vsel %vm359, %v2570, 0
      %v2648 = vsel %vm359, %v2571, 0
      %v2651 = vsel %vm359, %v2572, 0
      %v2654 = vsel %vm359, %v2573, 0
      %v2657 = vsel %vm359, %v2574, 0
      %v2660 = vsel %vm359, %v2575, 0
      %v2663 = vsel %vm359, %v2576, 0
      %v2666 = vsel %vm359, %v2577, 0
      %v2669 = vsel %vm359, %v2578, 0
      %v2672 = vsel %vm359, %v2579, 0
      %v2675 = vsel %vm359, %v2580, 0
      %v2678 = vsel %vm359, %v2581, 0
      %2680 = vmatprep.subr.mxu0 0.0
      %2681 = vmatpush1.msra.mxu0 %v2583
      %2682 = vmatprep.subr.mxu0 0.0
      %2683 = vmatpush1.msra.mxu0 0.0
      %2684 = vmatprep.subr.mxu0 0.0
      %2685 = vmatpush1.msra.mxu0 0.0
      %2686 = vmatprep.subr.mxu0 0.0
      %2687 = vmatpush1.msra.mxu0 0.0
      %2688 = vmatprep.subr.mxu0 0.0
      %2689 = vmatpush1.msra.mxu0 0.0
      %2690 = vmatprep.subr.mxu0 0.0
      %2691 = vmatpush1.msra.mxu0 0.0
      %2692 = vmatprep.subr.mxu0 0.0
      %2693 = vmatpush1.msra.mxu0 0.0
      %2694 = vmatprep.subr.mxu0 0.0
      %2695 = vmatpush1.msra.mxu0 0.0
      %2696 = vmatprep.subr.mxu0 0.0
      %2697 = vmatpush1.msra.mxu0 0.0
      %2698 = vmatprep.subr.mxu0 0.0
      %2699 = vmatpush1.msra.mxu0 0.0
      %2700 = vmatprep.subr.mxu0 0.0
      %2701 = vmatpush1.msra.mxu0 0.0
      %2702 = vmatprep.subr.mxu0 0.0
      %2703 = vmatpush1.msra.mxu0 0.0
      %2704 = vmatprep.subr.mxu0 0.0
      %2705 = vmatpush1.msra.mxu0 0.0
      %2706 = vmatprep.subr.mxu0 0.0
      %2707 = vmatpush1.msra.mxu0 0.0
      %2708 = vmatprep.subr.mxu0 0.0
      %2709 = vmatpush1.msra.mxu0 0.0
      %2710 = vmatprep.subr.mxu0 0.0
      %2711 = vmatpush1.msra.mxu0 0.0
      %2712 = vmatprep.subr.mxu0 0.0
      %2713 = vmatpush1.msra.mxu0 0.0
      %2714 = vmatprep.subr.mxu0 0.0
      %2715 = vmatpush1.msra.mxu0 0.0
      %2716 = vmatprep.subr.mxu0 0.0
      %2717 = vmatpush1.msra.mxu0 0.0
      %2718 = vmatprep.subr.mxu0 0.0
      %2719 = vmatpush1.msra.mxu0 0.0
      %2720 = vmatprep.subr.mxu0 0.0
      %2721 = vmatpush1.msra.mxu0 0.0
      %2722 = vmatprep.subr.mxu0 0.0
      %2723 = vmatpush1.msra.mxu0 0.0
      %2724 = vmatprep.subr.mxu0 0.0
      %2725 = vmatpush1.msra.mxu0 0.0
      %2726 = vmatprep.subr.mxu0 0.0
      %2727 = vmatpush1.msra.mxu0 0.0
      %2728 = vmatprep.subr.mxu0 0.0
      %2729 = vmatpush1.msra.mxu0 0.0
      %2730 = vmatprep.subr.mxu0 0.0
      %2731 = vmatpush1.msra.mxu0 0.0
      %2732 = vmatprep.subr.mxu0 0.0
      %2733 = vmatpush1.msra.mxu0 0.0
      %2734 = vmatprep.subr.mxu0 0.0
      %2735 = vmatpush1.msra.mxu0 0.0
      %2736 = vmatprep.subr.mxu0 0.0
      %2737 = vmatpush1.msra.mxu0 0.0
      %2738 = vmatprep.subr.mxu0 0.0
      %2739 = vmatpush1.msra.mxu0 0.0
      %2740 = vmatprep.subr.mxu0 0.0
      %2741 = vmatpush1.msra.mxu0 0.0
      %2742 = vmatprep.subr.mxu0 0.0
      %2743 = vmatpush1.msra.mxu0 0.0
      %2744 = vmatprep.mubr.f32.mxu0 0.0
      %2745 = vmatmul.mubr.f32.gmra.mrb[0].mxu0 %v2585
      %v2746 = vpop.f32.mrb[0].mxu0
      %v2747 = vadd.f32 0.0, %v2746
      %v2748 = vpop.f32.mrb[0].mxu0
      %2749 = vmatprep.mubr.f32.mxu0 0.0
      %2750 = vmatmul.mubr.f32.gmra.mrb[0].mxu0 %v2588
      %v2751 = vpop.f32.mrb[0].mxu0
      %v2752 = vadd.f32 0.0, %v2751
      %v2753 = vpop.f32.mrb[0].mxu0
      %2754 = vmatprep.mubr.f32.mxu0 0.0
      %2755 = vmatmul.mubr.f32.gmra.mrb[0].mxu0 %v2591
      %v2756 = vpop.f32.mrb[0].mxu0
      %v2757 = vadd.f32 0.0, %v2756
      %v2758 = vpop.f32.mrb[0].mxu0
      %2759 = vmatprep.mubr.f32.mxu0 0.0
      %2760 = vmatmul.mubr.f32.gmra.mrb[0].mxu0 %v2594
      %v2761 = vpop.f32.mrb[0].mxu0
      %v2762 = vadd.f32 0.0, %v2761
      %v2763 = vpop.f32.mrb[0].mxu0
      %2764 = vmatprep.mubr.f32.mxu0 0.0
      %2765 = vmatmul.mubr.f32.gmra.mrb[0].mxu0 %v2597
      %v2766 = vpop.f32.mrb[0].mxu0
      %v2767 = vadd.f32 0.0, %v2766
      %v2768 = vpop.f32.mrb[0].mxu0
      %2769 = vmatprep.mubr.f32.mxu0 0.0
      %2770 = vmatmul.mubr.f32.gmra.mrb[0].mxu0 %v2600
      %v2771 = vpop.f32.mrb[0].mxu0
      %v2772 = vadd.f32 0.0, %v2771
      %v2773 = vpop.f32.mrb[0].mxu0
      %2774 = vmatprep.mubr.f32.mxu0 0.0
      %2775 = vmatmul.mubr.f32.gmra.mrb[0].mxu0 %v2603
      %v2776 = vpop.f32.mrb[0].mxu0
      %v2777 = vadd.f32 0.0, %v2776
      %v2778 = vpop.f32.mrb[0].mxu0
      %2779 = vmatprep.mubr.f32.mxu0 0.0
      %2780 = vmatmul.mubr.f32.gmra.mrb[0].mxu0 %v2606
      %v2781 = vpop.f32.mrb[0].mxu0
      %v2782 = vadd.f32 0.0, %v2781
      %v2783 = vpop.f32.mrb[0].mxu0
      %2784 = vmatprep.mubr.f32.mxu0 0.0
      %2785 = vmatmul.mubr.f32.gmra.mrb[0].mxu0 %v2609
      %v2786 = vpop.f32.mrb[0].mxu0
      %v2787 = vadd.f32 0.0, %v2786
      %v2788 = vpop.f32.mrb[0].mxu0
      %2789 = vmatprep.mubr.f32.mxu0 0.0
      %2790 = vmatmul.mubr.f32.gmra.mrb[0].mxu0 %v2612
      %v2791 = vpop.f32.mrb[0].mxu0
      %v2792 = vadd.f32 0.0, %v2791
      %v2793 = vpop.f32.mrb[0].mxu0
      %2794 = vmatprep.mubr.f32.mxu0 0.0
      %2795 = vmatmul.mubr.f32.gmra.mrb[0].mxu0 %v2615
      %v2796 = vpop.f32.mrb[0].mxu0
      %v2797 = vadd.f32 0.0, %v2796
      %v2798 = vpop.f32.mrb[0].mxu0
      %2799 = vmatprep.mubr.f32.mxu0 0.0
      %2800 = vmatmul.mubr.f32.gmra.mrb[0].mxu0 %v2618
      %v2801 = vpop.f32.mrb[0].mxu0
      %v2802 = vadd.f32 0.0, %v2801
      %v2803 = vpop.f32.mrb[0].mxu0
      %2804 = vmatprep.mubr.f32.mxu0 0.0
      %2805 = vmatmul.mubr.f32.gmra.mrb[0].mxu0 %v2621
      %v2806 = vpop.f32.mrb[0].mxu0
      %v2807 = vadd.f32 0.0, %v2806
      %v2808 = vpop.f32.mrb[0].mxu0
      %2809 = vmatprep.mubr.f32.mxu0 0.0
      %2810 = vmatmul.mubr.f32.gmra.mrb[0].mxu0 %v2624
      %v2811 = vpop.f32.mrb[0].mxu0
      %v2812 = vadd.f32 0.0, %v2811
      %v2813 = vpop.f32.mrb[0].mxu0
      %2814 = vmatprep.mubr.f32.mxu0 0.0
      %2815 = vmatmul.mubr.f32.gmra.mrb[0].mxu0 %v2627
      %v2816 = vpop.f32.mrb[0].mxu0
      %v2817 = vadd.f32 0.0, %v2816
      %v2818 = vpop.f32.mrb[0].mxu0
      %2819 = vmatprep.mubr.f32.mxu0 0.0
      %2820 = vmatmul.mubr.f32.gmra.mrb[0].mxu0 %v2630
      %v2821 = vpop.f32.mrb[0].mxu0
      %v2822 = vadd.f32 0.0, %v2821
      %v2823 = vpop.f32.mrb[0].mxu0
      %2824 = vmatprep.mubr.f32.mxu0 0.0
      %2825 = vmatmul.mubr.f32.gmra.mrb[0].mxu0 %v2633
      %v2826 = vpop.f32.mrb[0].mxu0
      %v2827 = vadd.f32 0.0, %v2826
      %v2828 = vpop.f32.mrb[0].mxu0
      %2829 = vmatprep.mubr.f32.mxu0 0.0
      %2830 = vmatmul.mubr.f32.gmra.mrb[0].mxu0 %v2636
      %v2831 = vpop.f32.mrb[0].mxu0
      %v2832 = vadd.f32 0.0, %v2831
      %v2833 = vpop.f32.mrb[0].mxu0
      %2834 = vmatprep.mubr.f32.mxu0 0.0
      %2835 = vmatmul.mubr.f32.gmra.mrb[0].mxu0 %v2639
      %v2836 = vpop.f32.mrb[0].mxu0
      %v2837 = vadd.f32 0.0, %v2836
      %v2838 = vpop.f32.mrb[0].mxu0
      %2839 = vmatprep.mubr.f32.mxu0 0.0
      %2840 = vmatmul.mubr.f32.gmra.mrb[0].mxu0 %v2642
      %v2841 = vpop.f32.mrb[0].mxu0
      %v2842 = vadd.f32 0.0, %v2841
      %v2843 = vpop.f32.mrb[0].mxu0
      %2844 = vmatprep.mubr.f32.mxu0 0.0
      %2845 = vmatmul.mubr.f32.gmra.mrb[0].mxu0 %v2645
      %v2846 = vpop.f32.mrb[0].mxu0
      %v2847 = vadd.f32 0.0, %v2846
      %v2848 = vpop.f32.mrb[0].mxu0
      %2849 = vmatprep.mubr.f32.mxu0 0.0
      %2850 = vmatmul.mubr.f32.gmra.mrb[0].mxu0 %v2648
      %v2851 = vpop.f32.mrb[0].mxu0
      %v2852 = vadd.f32 0.0, %v2851
      %v2853 = vpop.f32.mrb[0].mxu0
      %2854 = vmatprep.mubr.f32.mxu0 0.0
      %2855 = vmatmul.mubr.f32.gmra.mrb[0].mxu0 %v2651
      %v2856 = vpop.f32.mrb[0].mxu0
      %v2857 = vadd.f32 0.0, %v2856
      %v2858 = vpop.f32.mrb[0].mxu0
      %2859 = vmatprep.mubr.f32.mxu0 0.0
      %2860 = vmatmul.mubr.f32.gmra.mrb[0].mxu0 %v2654
      %v2861 = vpop.f32.mrb[0].mxu0
      %v2862 = vadd.f32 0.0, %v2861
      %v2863 = vpop.f32.mrb[0].mxu0
      %2864 = vmatprep.mubr.f32.mxu0 0.0
      %2865 = vmatmul.mubr.f32.gmra.mrb[0].mxu0 %v2657
      %v2866 = vpop.f32.mrb[0].mxu0
      %v2867 = vadd.f32 0.0, %v2866
      %v2868 = vpop.f32.mrb[0].mxu0
      %2869 = vmatprep.mubr.f32.mxu0 0.0
      %2870 = vmatmul.mubr.f32.gmra.mrb[0].mxu0 %v2660
      %v2871 = vpop.f32.mrb[0].mxu0
      %v2872 = vadd.f32 0.0, %v2871
      %v2873 = vpop.f32.mrb[0].mxu0
      %2874 = vmatprep.mubr.f32.mxu0 0.0
      %2875 = vmatmul.mubr.f32.gmra.mrb[0].mxu0 %v2663
      %v2876 = vpop.f32.mrb[0].mxu0
      %v2877 = vadd.f32 0.0, %v2876
      %v2878 = vpop.f32.mrb[0].mxu0
      %2879 = vmatprep.mubr.f32.mxu0 0.0
      %2880 = vmatmul.mubr.f32.gmra.mrb[0].mxu0 %v2666
      %v2881 = vpop.f32.mrb[0].mxu0
      %v2882 = vadd.f32 0.0, %v2881
      %v2883 = vpop.f32.mrb[0].mxu0
      %2884 = vmatprep.mubr.f32.mxu0 0.0
      %2885 = vmatmul.mubr.f32.gmra.mrb[0].mxu0 %v2669
      %v2886 = vpop.f32.mrb[0].mxu0
      %v2887 = vadd.f32 0.0, %v2886
      %v2888 = vpop.f32.mrb[0].mxu0
      %2889 = vmatprep.mubr.f32.mxu0 0.0
      %2890 = vmatmul.mubr.f32.gmra.mrb[0].mxu0 %v2672
      %v2891 = vpop.f32.mrb[0].mxu0
      %v2892 = vadd.f32 0.0, %v2891
      %v2893 = vpop.f32.mrb[0].mxu0
      %2894 = vmatprep.mubr.f32.mxu0 0.0
      %2895 = vmatmul.mubr.f32.gmra.mrb[0].mxu0 %v2675
      %v2896 = vpop.f32.mrb[0].mxu0
      %v2897 = vadd.f32 0.0, %v2896
      %v2898 = vpop.f32.mrb[0].mxu0
      %2899 = vmatprep.mubr.f32.mxu0 0.0
      %2900 = vmatmul.mubr.f32.gmra.mrb[0].mxu0 %v2678
      %v2901 = vpop.f32.mrb[0].mxu0
      %v2902 = vadd.f32 0.0, %v2901
      %v2903 = vpop.f32.mrb[0].mxu0
      %2904 = vdwg.mxu0
      %v2905 = vadd.f32 %v2518, %v2747
      %v2906 = vadd.f32 %v2519, %v2752
      %v2907 = vadd.f32 %v2520, %v2757
      %v2908 = vadd.f32 %v2521, %v2762
      %v2909 = vadd.f32 %v2522, %v2767
      %v2910 = vadd.f32 %v2523, %v2772
      %v2911 = vadd.f32 %v2524, %v2777
      %v2912 = vadd.f32 %v2525, %v2782
      %v2913 = vadd.f32 %v2526, %v2787
      %v2914 = vadd.f32 %v2527, %v2792
      %v2915 = vadd.f32 %v2528, %v2797
      %v2916 = vadd.f32 %v2529, %v2802
      %v2917 = vadd.f32 %v2530, %v2807
      %v2918 = vadd.f32 %v2531, %v2812
      %v2919 = vadd.f32 %v2532, %v2817
      %v2920 = vadd.f32 %v2533, %v2822
      %v2921 = vadd.f32 %v2534, %v2827
      %v2922 = vadd.f32 %v2535, %v2832
      %v2923 = vadd.f32 %v2536, %v2837
      %v2924 = vadd.f32 %v2537, %v2842
      %v2925 = vadd.f32 %v2538, %v2847
      %v2926 = vadd.f32 %v2539, %v2852
      %v2927 = vadd.f32 %v2540, %v2857
      %v2928 = vadd.f32 %v2541, %v2862
      %v2929 = vadd.f32 %v2542, %v2867
      %v2930 = vadd.f32 %v2543, %v2872
      %v2931 = vadd.f32 %v2544, %v2877
      %v2932 = vadd.f32 %v2545, %v2882
      %v2933 = vadd.f32 %v2546, %v2887
      %v2934 = vadd.f32 %v2547, %v2892
      %v2935 = vadd.f32 %v2548, %v2897
      %v2936 = vadd.f32 %v2549, %v2902
      %v2937 = vld [vmem:[%s280 + $0x1] sm:$0xff]
      %v2938 = vld [vmem:[%s280 + $0x9] sm:$0xff]
      %v2939 = vld [vmem:[%s280 + $0x19] sm:$0xff]
      %v2940 = vld [vmem:[%s280 + $0x21] sm:$0xff]
      %v2941 = vld [vmem:[%s280 + $0x31] sm:$0xff]
      %v2942 = vld [vmem:[%s280 + $0x39] sm:$0xff]
      %v2943 = vld [vmem:[%s280 + $0x49] sm:$0xff]
      %v2944 = vld [vmem:[%s280 + $0x51] sm:$0xff]
      %v2945 = vld [vmem:[%s280 + $0x61] sm:$0xff]
      %v2946 = vld [vmem:[%s280 + $0x69] sm:$0xff]
      %v2947 = vld [vmem:[%s280 + $0x79] sm:$0xff]
      %v2948 = vld [vmem:[%s280 + $0x81] sm:$0xff]
      %v2949 = vld [vmem:[%s280 + $0x91] sm:$0xff]
      %v2950 = vld [vmem:[%s280 + $0x99] sm:$0xff]
      %v2951 = vld [vmem:[%s280 + $0xa9] sm:$0xff]
      %v2952 = vld [vmem:[%s280 + $0xb1] sm:$0xff]
      %v2953 = vld [vmem:[%s280 + $0xc1] sm:$0xff]
      %v2954 = vld [vmem:[%s280 + $0xc9] sm:$0xff]
      %v2955 = vld [vmem:[%s280 + $0xd9] sm:$0xff]
      %v2956 = vld [vmem:[%s280 + $0xe1] sm:$0xff]
      %v2957 = vld [vmem:[%s280 + $0xf1] sm:$0xff]
      %v2958 = vld [vmem:[%s280 + $0xf9] sm:$0xff]
      %v2959 = vld [vmem:[%s280 + $0x109] sm:$0xff]
      %v2960 = vld [vmem:[%s280 + $0x111] sm:$0xff]
      %v2961 = vld [vmem:[%s280 + $0x121] sm:$0xff]
      %v2962 = vld [vmem:[%s280 + $0x129] sm:$0xff]
      %v2963 = vld [vmem:[%s280 + $0x139] sm:$0xff]
      %v2964 = vld [vmem:[%s280 + $0x141] sm:$0xff]
      %v2965 = vld [vmem:[%s280 + $0x151] sm:$0xff]
      %v2966 = vld [vmem:[%s280 + $0x159] sm:$0xff]
      %v2967 = vld [vmem:[%s280 + $0x169] sm:$0xff]
      %v2968 = vld [vmem:[%s280 + $0x171] sm:$0xff]
      %s2969 = scalar_lea.vmem %s3, 56
      %v2970 = vld [vmem:[%s2969] sm:$0xff]
      %v2972 = vsel %vm359, %v2937, 0
      %v2975 = vsel %vm359, %v2938, 0
      %v2978 = vsel %vm359, %v2939, 0
      %v2981 = vsel %vm359, %v2940, 0
      %v2984 = vsel %vm359, %v2941, 0
      %v2987 = vsel %vm359, %v2942, 0
      %v2990 = vsel %vm359, %v2943, 0
      %v2993 = vsel %vm359, %v2944, 0
      %v2996 = vsel %vm359, %v2945, 0
      %v2999 = vsel %vm359, %v2946, 0
      %v3002 = vsel %vm359, %v2947, 0
      %v3005 = vsel %vm359, %v2948, 0
      %v3008 = vsel %vm359, %v2949, 0
      %v3011 = vsel %vm359, %v2950, 0
      %v3014 = vsel %vm359, %v2951, 0
      %v3017 = vsel %vm359, %v2952, 0
      %v3020 = vsel %vm359, %v2953, 0
      %v3023 = vsel %vm359, %v2954, 0
      %v3026 = vsel %vm359, %v2955, 0
      %v3029 = vsel %vm359, %v2956, 0
      %v3032 = vsel %vm359, %v2957, 0
      %v3035 = vsel %vm359, %v2958, 0
      %v3038 = vsel %vm359, %v2959, 0
      %v3041 = vsel %vm359, %v2960, 0
      %v3044 = vsel %vm359, %v2961, 0
      %v3047 = vsel %vm359, %v2962, 0
      %v3050 = vsel %vm359, %v2963, 0
      %v3053 = vsel %vm359, %v2964, 0
      %v3056 = vsel %vm359, %v2965, 0
      %v3059 = vsel %vm359, %v2966, 0
      %v3062 = vsel %vm359, %v2967, 0
      %v3065 = vsel %vm359, %v2968, 0
      %3067 = vmatprep.subr.mxu0 0.0
      %3068 = vmatpush1.msra.mxu0 %v2970
      %3069 = vmatprep.subr.mxu0 0.0
      %3070 = vmatpush1.msra.mxu0 0.0
      %3071 = vmatprep.subr.mxu0 0.0
      %3072 = vmatpush1.msra.mxu0 0.0
      %3073 = vmatprep.subr.mxu0 0.0
      %3074 = vmatpush1.msra.mxu0 0.0
      %3075 = vmatprep.subr.mxu0 0.0
      %3076 = vmatpush1.msra.mxu0 0.0
      %3077 = vmatprep.subr.mxu0 0.0
      %3078 = vmatpush1.msra.mxu0 0.0
      %3079 = vmatprep.subr.mxu0 0.0
      %3080 = vmatpush1.msra.mxu0 0.0
      %3081 = vmatprep.subr.mxu0 0.0
      %3082 = vmatpush1.msra.mxu0 0.0
      %3083 = vmatprep.subr.mxu0 0.0
      %3084 = vmatpush1.msra.mxu0 0.0
      %3085 = vmatprep.subr.mxu0 0.0
      %3086 = vmatpush1.msra.mxu0 0.0
      %3087 = vmatprep.subr.mxu0 0.0
      %3088 = vmatpush1.msra.mxu0 0.0
      %3089 = vmatprep.subr.mxu0 0.0
      %3090 = vmatpush1.msra.mxu0 0.0
      %3091 = vmatprep.subr.mxu0 0.0
      %3092 = vmatpush1.msra.mxu0 0.0
      %3093 = vmatprep.subr.mxu0 0.0
      %3094 = vmatpush1.msra.mxu0 0.0
      %3095 = vmatprep.subr.mxu0 0.0
      %3096 = vmatpush1.msra.mxu0 0.0
      %3097 = vmatprep.subr.mxu0 0.0
      %3098 = vmatpush1.msra.mxu0 0.0
      %3099 = vmatprep.subr.mxu0 0.0
      %3100 = vmatpush1.msra.mxu0 0.0
      %3101 = vmatprep.subr.mxu0 0.0
      %3102 = vmatpush1.msra.mxu0 0.0
      %3103 = vmatprep.subr.mxu0 0.0
      %3104 = vmatpush1.msra.mxu0 0.0
      %3105 = vmatprep.subr.mxu0 0.0
      %3106 = vmatpush1.msra.mxu0 0.0
      %3107 = vmatprep.subr.mxu0 0.0
      %3108 = vmatpush1.msra.mxu0 0.0
      %3109 = vmatprep.subr.mxu0 0.0
      %3110 = vmatpush1.msra.mxu0 0.0
      %3111 = vmatprep.subr.mxu0 0.0
      %3112 = vmatpush1.msra.mxu0 0.0
      %3113 = vmatprep.subr.mxu0 0.0
      %3114 = vmatpush1.msra.mxu0 0.0
      %3115 = vmatprep.subr.mxu0 0.0
      %3116 = vmatpush1.msra.mxu0 0.0
      %3117 = vmatprep.subr.mxu0 0.0
      %3118 = vmatpush1.msra.mxu0 0.0
      %3119 = vmatprep.subr.mxu0 0.0
      %3120 = vmatpush1.msra.mxu0 0.0
      %3121 = vmatprep.subr.mxu0 0.0
      %3122 = vmatpush1.msra.mxu0 0.0
      %3123 = vmatprep.subr.mxu0 0.0
      %3124 = vmatpush1.msra.mxu0 0.0
      %3125 = vmatprep.subr.mxu0 0.0
      %3126 = vmatpush1.msra.mxu0 0.0
      %3127 = vmatprep.subr.mxu0 0.0
      %3128 = vmatpush1.msra.mxu0 0.0
      %3129 = vmatprep.subr.mxu0 0.0
      %3130 = vmatpush1.msra.mxu0 0.0
      %3131 = vmatprep.mubr.f32.mxu0 0.0
      %3132 = vmatmul.mubr.f32.gmra.mrb[0].mxu0 %v2972
      %v3133 = vpop.f32.mrb[0].mxu0
      %v3134 = vadd.f32 0.0, %v3133
      %v3135 = vpop.f32.mrb[0].mxu0
      %3136 = vmatprep.mubr.f32.mxu0 0.0
      %3137 = vmatmul.mubr.f32.gmra.mrb[0].mxu0 %v2975
      %v3138 = vpop.f32.mrb[0].mxu0
      %v3139 = vadd.f32 0.0, %v3138
      %v3140 = vpop.f32.mrb[0].mxu0
      %3141 = vmatprep.mubr.f32.mxu0 0.0
      %3142 = vmatmul.mubr.f32.gmra.mrb[0].mxu0 %v2978
      %v3143 = vpop.f32.mrb[0].mxu0
      %v3144 = vadd.f32 0.0, %v3143
      %v3145 = vpop.f32.mrb[0].mxu0
      %3146 = vmatprep.mubr.f32.mxu0 0.0
      %3147 = vmatmul.mubr.f32.gmra.mrb[0].mxu0 %v2981
      %v3148 = vpop.f32.mrb[0].mxu0
      %v3149 = vadd.f32 0.0, %v3148
      %v3150 = vpop.f32.mrb[0].mxu0
      %3151 = vmatprep.mubr.f32.mxu0 0.0
      %3152 = vmatmul.mubr.f32.gmra.mrb[0].mxu0 %v2984
      %v3153 = vpop.f32.mrb[0].mxu0
      %v3154 = vadd.f32 0.0, %v3153
      %v3155 = vpop.f32.mrb[0].mxu0
      %3156 = vmatprep.mubr.f32.mxu0 0.0
      %3157 = vmatmul.mubr.f32.gmra.mrb[0].mxu0 %v2987
      %v3158 = vpop.f32.mrb[0].mxu0
      %v3159 = vadd.f32 0.0, %v3158
      %v3160 = vpop.f32.mrb[0].mxu0
      %3161 = vmatprep.mubr.f32.mxu0 0.0
      %3162 = vmatmul.mubr.f32.gmra.mrb[0].mxu0 %v2990
      %v3163 = vpop.f32.mrb[0].mxu0
      %v3164 = vadd.f32 0.0, %v3163
      %v3165 = vpop.f32.mrb[0].mxu0
      %3166 = vmatprep.mubr.f32.mxu0 0.0
      %3167 = vmatmul.mubr.f32.gmra.mrb[0].mxu0 %v2993
      %v3168 = vpop.f32.mrb[0].mxu0
      %v3169 = vadd.f32 0.0, %v3168
      %v3170 = vpop.f32.mrb[0].mxu0
      %3171 = vmatprep.mubr.f32.mxu0 0.0
      %3172 = vmatmul.mubr.f32.gmra.mrb[0].mxu0 %v2996
      %v3173 = vpop.f32.mrb[0].mxu0
      %v3174 = vadd.f32 0.0, %v3173
      %v3175 = vpop.f32.mrb[0].mxu0
      %3176 = vmatprep.mubr.f32.mxu0 0.0
      %3177 = vmatmul.mubr.f32.gmra.mrb[0].mxu0 %v2999
      %v3178 = vpop.f32.mrb[0].mxu0
      %v3179 = vadd.f32 0.0, %v3178
      %v3180 = vpop.f32.mrb[0].mxu0
      %3181 = vmatprep.mubr.f32.mxu0 0.0
      %3182 = vmatmul.mubr.f32.gmra.mrb[0].mxu0 %v3002
      %v3183 = vpop.f32.mrb[0].mxu0
      %v3184 = vadd.f32 0.0, %v3183
      %v3185 = vpop.f32.mrb[0].mxu0
      %3186 = vmatprep.mubr.f32.mxu0 0.0
      %3187 = vmatmul.mubr.f32.gmra.mrb[0].mxu0 %v3005
      %v3188 = vpop.f32.mrb[0].mxu0
      %v3189 = vadd.f32 0.0, %v3188
      %v3190 = vpop.f32.mrb[0].mxu0
      %3191 = vmatprep.mubr.f32.mxu0 0.0
      %3192 = vmatmul.mubr.f32.gmra.mrb[0].mxu0 %v3008
      %v3193 = vpop.f32.mrb[0].mxu0
      %v3194 = vadd.f32 0.0, %v3193
      %v3195 = vpop.f32.mrb[0].mxu0
      %3196 = vmatprep.mubr.f32.mxu0 0.0
      %3197 = vmatmul.mubr.f32.gmra.mrb[0].mxu0 %v3011
      %v3198 = vpop.f32.mrb[0].mxu0
      %v3199 = vadd.f32 0.0, %v3198
      %v3200 = vpop.f32.mrb[0].mxu0
      %3201 = vmatprep.mubr.f32.mxu0 0.0
      %3202 = vmatmul.mubr.f32.gmra.mrb[0].mxu0 %v3014
      %v3203 = vpop.f32.mrb[0].mxu0
      %v3204 = vadd.f32 0.0, %v3203
      %v3205 = vpop.f32.mrb[0].mxu0
      %3206 = vmatprep.mubr.f32.mxu0 0.0
      %3207 = vmatmul.mubr.f32.gmra.mrb[0].mxu0 %v3017
      %v3208 = vpop.f32.mrb[0].mxu0
      %v3209 = vadd.f32 0.0, %v3208
      %v3210 = vpop.f32.mrb[0].mxu0
      %3211 = vmatprep.mubr.f32.mxu0 0.0
      %3212 = vmatmul.mubr.f32.gmra.mrb[0].mxu0 %v3020
      %v3213 = vpop.f32.mrb[0].mxu0
      %v3214 = vadd.f32 0.0, %v3213
      %v3215 = vpop.f32.mrb[0].mxu0
      %3216 = vmatprep.mubr.f32.mxu0 0.0
      %3217 = vmatmul.mubr.f32.gmra.mrb[0].mxu0 %v3023
      %v3218 = vpop.f32.mrb[0].mxu0
      %v3219 = vadd.f32 0.0, %v3218
      %v3220 = vpop.f32.mrb[0].mxu0
      %3221 = vmatprep.mubr.f32.mxu0 0.0
      %3222 = vmatmul.mubr.f32.gmra.mrb[0].mxu0 %v3026
      %v3223 = vpop.f32.mrb[0].mxu0
      %v3224 = vadd.f32 0.0, %v3223
      %v3225 = vpop.f32.mrb[0].mxu0
      %3226 = vmatprep.mubr.f32.mxu0 0.0
      %3227 = vmatmul.mubr.f32.gmra.mrb[0].mxu0 %v3029
      %v3228 = vpop.f32.mrb[0].mxu0
      %v3229 = vadd.f32 0.0, %v3228
      %v3230 = vpop.f32.mrb[0].mxu0
      %3231 = vmatprep.mubr.f32.mxu0 0.0
      %3232 = vmatmul.mubr.f32.gmra.mrb[0].mxu0 %v3032
      %v3233 = vpop.f32.mrb[0].mxu0
      %v3234 = vadd.f32 0.0, %v3233
      %v3235 = vpop.f32.mrb[0].mxu0
      %3236 = vmatprep.mubr.f32.mxu0 0.0
      %3237 = vmatmul.mubr.f32.gmra.mrb[0].mxu0 %v3035
      %v3238 = vpop.f32.mrb[0].mxu0
      %v3239 = vadd.f32 0.0, %v3238
      %v3240 = vpop.f32.mrb[0].mxu0
      %3241 = vmatprep.mubr.f32.mxu0 0.0
      %3242 = vmatmul.mubr.f32.gmra.mrb[0].mxu0 %v3038
      %v3243 = vpop.f32.mrb[0].mxu0
      %v3244 = vadd.f32 0.0, %v3243
      %v3245 = vpop.f32.mrb[0].mxu0
      %3246 = vmatprep.mubr.f32.mxu0 0.0
      %3247 = vmatmul.mubr.f32.gmra.mrb[0].mxu0 %v3041
      %v3248 = vpop.f32.mrb[0].mxu0
      %v3249 = vadd.f32 0.0, %v3248
      %v3250 = vpop.f32.mrb[0].mxu0
      %3251 = vmatprep.mubr.f32.mxu0 0.0
      %3252 = vmatmul.mubr.f32.gmra.mrb[0].mxu0 %v3044
      %v3253 = vpop.f32.mrb[0].mxu0
      %v3254 = vadd.f32 0.0, %v3253
      %v3255 = vpop.f32.mrb[0].mxu0
      %3256 = vmatprep.mubr.f32.mxu0 0.0
      %3257 = vmatmul.mubr.f32.gmra.mrb[0].mxu0 %v3047
      %v3258 = vpop.f32.mrb[0].mxu0
      %v3259 = vadd.f32 0.0, %v3258
      %v3260 = vpop.f32.mrb[0].mxu0
      %3261 = vmatprep.mubr.f32.mxu0 0.0
      %3262 = vmatmul.mubr.f32.gmra.mrb[0].mxu0 %v3050
      %v3263 = vpop.f32.mrb[0].mxu0
      %v3264 = vadd.f32 0.0, %v3263
      %v3265 = vpop.f32.mrb[0].mxu0
      %3266 = vmatprep.mubr.f32.mxu0 0.0
      %3267 = vmatmul.mubr.f32.gmra.mrb[0].mxu0 %v3053
      %v3268 = vpop.f32.mrb[0].mxu0
      %v3269 = vadd.f32 0.0, %v3268
      %v3270 = vpop.f32.mrb[0].mxu0
      %3271 = vmatprep.mubr.f32.mxu0 0.0
      %3272 = vmatmul.mubr.f32.gmra.mrb[0].mxu0 %v3056
      %v3273 = vpop.f32.mrb[0].mxu0
      %v3274 = vadd.f32 0.0, %v3273
      %v3275 = vpop.f32.mrb[0].mxu0
      %3276 = vmatprep.mubr.f32.mxu0 0.0
      %3277 = vmatmul.mubr.f32.gmra.mrb[0].mxu0 %v3059
      %v3278 = vpop.f32.mrb[0].mxu0
      %v3279 = vadd.f32 0.0, %v3278
      %v3280 = vpop.f32.mrb[0].mxu0
      %3281 = vmatprep.mubr.f32.mxu0 0.0
      %3282 = vmatmul.mubr.f32.gmra.mrb[0].mxu0 %v3062
      %v3283 = vpop.f32.mrb[0].mxu0
      %v3284 = vadd.f32 0.0, %v3283
      %v3285 = vpop.f32.mrb[0].mxu0
      %3286 = vmatprep.mubr.f32.mxu0 0.0
      %3287 = vmatmul.mubr.f32.gmra.mrb[0].mxu0 %v3065
      %v3288 = vpop.f32.mrb[0].mxu0
      %v3289 = vadd.f32 0.0, %v3288
      %v3290 = vpop.f32.mrb[0].mxu0
      %3291 = vdwg.mxu0
      %v3292 = vadd.f32 %v2905, %v3134
      %v3293 = vadd.f32 %v2906, %v3139
      %v3294 = vadd.f32 %v2907, %v3144
      %v3295 = vadd.f32 %v2908, %v3149
      %v3296 = vadd.f32 %v2909, %v3154
      %v3297 = vadd.f32 %v2910, %v3159
      %v3298 = vadd.f32 %v2911, %v3164
      %v3299 = vadd.f32 %v2912, %v3169
      %v3300 = vadd.f32 %v2913, %v3174
      %v3301 = vadd.f32 %v2914, %v3179
      %v3302 = vadd.f32 %v2915, %v3184
      %v3303 = vadd.f32 %v2916, %v3189
      %v3304 = vadd.f32 %v2917, %v3194
      %v3305 = vadd.f32 %v2918, %v3199
      %v3306 = vadd.f32 %v2919, %v3204
      %v3307 = vadd.f32 %v2920, %v3209
      %v3308 = vadd.f32 %v2921, %v3214
      %v3309 = vadd.f32 %v2922, %v3219
      %v3310 = vadd.f32 %v2923, %v3224
      %v3311 = vadd.f32 %v2924, %v3229
      %v3312 = vadd.f32 %v2925, %v3234
      %v3313 = vadd.f32 %v2926, %v3239
      %v3314 = vadd.f32 %v2927, %v3244
      %v3315 = vadd.f32 %v2928, %v3249
      %v3316 = vadd.f32 %v2929, %v3254
      %v3317 = vadd.f32 %v2930, %v3259
      %v3318 = vadd.f32 %v2931, %v3264
      %v3319 = vadd.f32 %v2932, %v3269
      %v3320 = vadd.f32 %v2933, %v3274
      %v3321 = vadd.f32 %v2934, %v3279
      %v3322 = vadd.f32 %v2935, %v3284
      %v3323 = vadd.f32 %v2936, %v3289
      %v3324 = vld [vmem:[%s280 + $0x2] sm:$0xff]
      %v3325 = vld [vmem:[%s280 + $0xa] sm:$0xff]
      %v3326 = vld [vmem:[%s280 + $0x1a] sm:$0xff]
      %v3327 = vld [vmem:[%s280 + $0x22] sm:$0xff]
      %v3328 = vld [vmem:[%s280 + $0x32] sm:$0xff]
      %v3329 = vld [vmem:[%s280 + $0x3a] sm:$0xff]
      %v3330 = vld [vmem:[%s280 + $0x4a] sm:$0xff]
      %v3331 = vld [vmem:[%s280 + $0x52] sm:$0xff]
      %v3332 = vld [vmem:[%s280 + $0x62] sm:$0xff]
      %v3333 = vld [vmem:[%s280 + $0x6a] sm:$0xff]
      %v3334 = vld [vmem:[%s280 + $0x7a] sm:$0xff]
      %v3335 = vld [vmem:[%s280 + $0x82] sm:$0xff]
      %v3336 = vld [vmem:[%s280 + $0x92] sm:$0xff]
      %v3337 = vld [vmem:[%s280 + $0x9a] sm:$0xff]
      %v3338 = vld [vmem:[%s280 + $0xaa] sm:$0xff]
      %v3339 = vld [vmem:[%s280 + $0xb2] sm:$0xff]
      %v3340 = vld [vmem:[%s280 + $0xc2] sm:$0xff]
      %v3341 = vld [vmem:[%s280 + $0xca] sm:$0xff]
      %v3342 = vld [vmem:[%s280 + $0xda] sm:$0xff]
      %v3343 = vld [vmem:[%s280 + $0xe2] sm:$0xff]
      %v3344 = vld [vmem:[%s280 + $0xf2] sm:$0xff]
      %v3345 = vld [vmem:[%s280 + $0xfa] sm:$0xff]
      %v3346 = vld [vmem:[%s280 + $0x10a] sm:$0xff]
      %v3347 = vld [vmem:[%s280 + $0x112] sm:$0xff]
      %v3348 = vld [vmem:[%s280 + $0x122] sm:$0xff]
      %v3349 = vld [vmem:[%s280 + $0x12a] sm:$0xff]
      %v3350 = vld [vmem:[%s280 + $0x13a] sm:$0xff]
      %v3351 = vld [vmem:[%s280 + $0x142] sm:$0xff]
      %v3352 = vld [vmem:[%s280 + $0x152] sm:$0xff]
      %v3353 = vld [vmem:[%s280 + $0x15a] sm:$0xff]
      %v3354 = vld [vmem:[%s280 + $0x16a] sm:$0xff]
      %v3355 = vld [vmem:[%s280 + $0x172] sm:$0xff]
      %s3356 = scalar_lea.vmem %s3, 64
      %v3357 = vld [vmem:[%s3356] sm:$0xff]
      %v3359 = vsel %vm359, %v3324, 0
      %v3362 = vsel %vm359, %v3325, 0
      %v3365 = vsel %vm359, %v3326, 0
      %v3368 = vsel %vm359, %v3327, 0
      %v3371 = vsel %vm359, %v3328, 0
      %v3374 = vsel %vm359, %v3329, 0
      %v3377 = vsel %vm359, %v3330, 0
      %v3380 = vsel %vm359, %v3331, 0
      %v3383 = vsel %vm359, %v3332, 0
      %v3386 = vsel %vm359, %v3333, 0
      %v3389 = vsel %vm359, %v3334, 0
      %v3392 = vsel %vm359, %v3335, 0
      %v3395 = vsel %vm359, %v3336, 0
      %v3398 = vsel %vm359, %v3337, 0
      %v3401 = vsel %vm359, %v3338, 0
      %v3404 = vsel %vm359, %v3339, 0
      %v3407 = vsel %vm359, %v3340, 0
      %v3410 = vsel %vm359, %v3341, 0
      %v3413 = vsel %vm359, %v3342, 0
      %v3416 = vsel %vm359, %v3343, 0
      %v3419 = vsel %vm359, %v3344, 0
      %v3422 = vsel %vm359, %v3345, 0
      %v3425 = vsel %vm359, %v3346, 0
      %v3428 = vsel %vm359, %v3347, 0
      %v3431 = vsel %vm359, %v3348, 0
      %v3434 = vsel %vm359, %v3349, 0
      %v3437 = vsel %vm359, %v3350, 0
      %v3440 = vsel %vm359, %v3351, 0
      %v3443 = vsel %vm359, %v3352, 0
      %v3446 = vsel %vm359, %v3353, 0
      %v3449 = vsel %vm359, %v3354, 0
      %v3452 = vsel %vm359, %v3355, 0
      %3454 = vmatprep.subr.mxu0 0.0
      %3455 = vmatpush1.msra.mxu0 %v3357
      %3456 = vmatprep.subr.mxu0 0.0
      %3457 = vmatpush1.msra.mxu0 0.0
      %3458 = vmatprep.subr.mxu0 0.0
      %3459 = vmatpush1.msra.mxu0 0.0
      %3460 = vmatprep.subr.mxu0 0.0
      %3461 = vmatpush1.msra.mxu0 0.0
      %3462 = vmatprep.subr.mxu0 0.0
      %3463 = vmatpush1.msra.mxu0 0.0
      %3464 = vmatprep.subr.mxu0 0.0
      %3465 = vmatpush1.msra.mxu0 0.0
      %3466 = vmatprep.subr.mxu0 0.0
      %3467 = vmatpush1.msra.mxu0 0.0
      %3468 = vmatprep.subr.mxu0 0.0
      %3469 = vmatpush1.msra.mxu0 0.0
      %3470 = vmatprep.subr.mxu0 0.0
      %3471 = vmatpush1.msra.mxu0 0.0
      %3472 = vmatprep.subr.mxu0 0.0
      %3473 = vmatpush1.msra.mxu0 0.0
      %3474 = vmatprep.subr.mxu0 0.0
      %3475 = vmatpush1.msra.mxu0 0.0
      %3476 = vmatprep.subr.mxu0 0.0
      %3477 = vmatpush1.msra.mxu0 0.0
      %3478 = vmatprep.subr.mxu0 0.0
      %3479 = vmatpush1.msra.mxu0 0.0
      %3480 = vmatprep.subr.mxu0 0.0
      %3481 = vmatpush1.msra.mxu0 0.0
      %3482 = vmatprep.subr.mxu0 0.0
      %3483 = vmatpush1.msra.mxu0 0.0
      %3484 = vmatprep.subr.mxu0 0.0
      %3485 = vmatpush1.msra.mxu0 0.0
      %3486 = vmatprep.subr.mxu0 0.0
      %3487 = vmatpush1.msra.mxu0 0.0
      %3488 = vmatprep.subr.mxu0 0.0
      %3489 = vmatpush1.msra.mxu0 0.0
      %3490 = vmatprep.subr.mxu0 0.0
      %3491 = vmatpush1.msra.mxu0 0.0
      %3492 = vmatprep.subr.mxu0 0.0
      %3493 = vmatpush1.msra.mxu0 0.0
      %3494 = vmatprep.subr.mxu0 0.0
      %3495 = vmatpush1.msra.mxu0 0.0
      %3496 = vmatprep.subr.mxu0 0.0
      %3497 = vmatpush1.msra.mxu0 0.0
      %3498 = vmatprep.subr.mxu0 0.0
      %3499 = vmatpush1.msra.mxu0 0.0
      %3500 = vmatprep.subr.mxu0 0.0
      %3501 = vmatpush1.msra.mxu0 0.0
      %3502 = vmatprep.subr.mxu0 0.0
      %3503 = vmatpush1.msra.mxu0 0.0
      %3504 = vmatprep.subr.mxu0 0.0
      %3505 = vmatpush1.msra.mxu0 0.0
      %3506 = vmatprep.subr.mxu0 0.0
      %3507 = vmatpush1.msra.mxu0 0.0
      %3508 = vmatprep.subr.mxu0 0.0
      %3509 = vmatpush1.msra.mxu0 0.0
      %3510 = vmatprep.subr.mxu0 0.0
      %3511 = vmatpush1.msra.mxu0 0.0
      %3512 = vmatprep.subr.mxu0 0.0
      %3513 = vmatpush1.msra.mxu0 0.0
      %3514 = vmatprep.subr.mxu0 0.0
      %3515 = vmatpush1.msra.mxu0 0.0
      %3516 = vmatprep.subr.mxu0 0.0
      %3517 = vmatpush1.msra.mxu0 0.0
      %3518 = vmatprep.mubr.f32.mxu0 0.0
      %3519 = vmatmul.mubr.f32.gmra.mrb[0].mxu0 %v3359
      %v3520 = vpop.f32.mrb[0].mxu0
      %v3521 = vadd.f32 0.0, %v3520
      %v3522 = vpop.f32.mrb[0].mxu0
      %3523 = vmatprep.mubr.f32.mxu0 0.0
      %3524 = vmatmul.mubr.f32.gmra.mrb[0].mxu0 %v3362
      %v3525 = vpop.f32.mrb[0].mxu0
      %v3526 = vadd.f32 0.0, %v3525
      %v3527 = vpop.f32.mrb[0].mxu0
      %3528 = vmatprep.mubr.f32.mxu0 0.0
      %3529 = vmatmul.mubr.f32.gmra.mrb[0].mxu0 %v3365
      %v3530 = vpop.f32.mrb[0].mxu0
      %v3531 = vadd.f32 0.0, %v3530
      %v3532 = vpop.f32.mrb[0].mxu0
      %3533 = vmatprep.mubr.f32.mxu0 0.0
      %3534 = vmatmul.mubr.f32.gmra.mrb[0].mxu0 %v3368
      %v3535 = vpop.f32.mrb[0].mxu0
      %v3536 = vadd.f32 0.0, %v3535
      %v3537 = vpop.f32.mrb[0].mxu0
      %3538 = vmatprep.mubr.f32.mxu0 0.0
      %3539 = vmatmul.mubr.f32.gmra.mrb[0].mxu0 %v3371
      %v3540 = vpop.f32.mrb[0].mxu0
      %v3541 = vadd.f32 0.0, %v3540
      %v3542 = vpop.f32.mrb[0].mxu0
      %3543 = vmatprep.mubr.f32.mxu0 0.0
      %3544 = vmatmul.mubr.f32.gmra.mrb[0].mxu0 %v3374
      %v3545 = vpop.f32.mrb[0].mxu0
      %v3546 = vadd.f32 0.0, %v3545
      %v3547 = vpop.f32.mrb[0].mxu0
      %3548 = vmatprep.mubr.f32.mxu0 0.0
      %3549 = vmatmul.mubr.f32.gmra.mrb[0].mxu0 %v3377
      %v3550 = vpop.f32.mrb[0].mxu0
      %v3551 = vadd.f32 0.0, %v3550
      %v3552 = vpop.f32.mrb[0].mxu0
      %3553 = vmatprep.mubr.f32.mxu0 0.0
      %3554 = vmatmul.mubr.f32.gmra.mrb[0].mxu0 %v3380
      %v3555 = vpop.f32.mrb[0].mxu0
      %v3556 = vadd.f32 0.0, %v3555
      %v3557 = vpop.f32.mrb[0].mxu0
      %3558 = vmatprep.mubr.f32.mxu0 0.0
      %3559 = vmatmul.mubr.f32.gmra.mrb[0].mxu0 %v3383
      %v3560 = vpop.f32.mrb[0].mxu0
      %v3561 = vadd.f32 0.0, %v3560
      %v3562 = vpop.f32.mrb[0].mxu0
      %3563 = vmatprep.mubr.f32.mxu0 0.0
      %3564 = vmatmul.mubr.f32.gmra.mrb[0].mxu0 %v3386
      %v3565 = vpop.f32.mrb[0].mxu0
      %v3566 = vadd.f32 0.0, %v3565
      %v3567 = vpop.f32.mrb[0].mxu0
      %3568 = vmatprep.mubr.f32.mxu0 0.0
      %3569 = vmatmul.mubr.f32.gmra.mrb[0].mxu0 %v3389
      %v3570 = vpop.f32.mrb[0].mxu0
      %v3571 = vadd.f32 0.0, %v3570
      %v3572 = vpop.f32.mrb[0].mxu0
      %3573 = vmatprep.mubr.f32.mxu0 0.0
      %3574 = vmatmul.mubr.f32.gmra.mrb[0].mxu0 %v3392
      %v3575 = vpop.f32.mrb[0].mxu0
      %v3576 = vadd.f32 0.0, %v3575
      %v3577 = vpop.f32.mrb[0].mxu0
      %3578 = vmatprep.mubr.f32.mxu0 0.0
      %3579 = vmatmul.mubr.f32.gmra.mrb[0].mxu0 %v3395
      %v3580 = vpop.f32.mrb[0].mxu0
      %v3581 = vadd.f32 0.0, %v3580
      %v3582 = vpop.f32.mrb[0].mxu0
      %3583 = vmatprep.mubr.f32.mxu0 0.0
      %3584 = vmatmul.mubr.f32.gmra.mrb[0].mxu0 %v3398
      %v3585 = vpop.f32.mrb[0].mxu0
      %v3586 = vadd.f32 0.0, %v3585
      %v3587 = vpop.f32.mrb[0].mxu0
      %3588 = vmatprep.mubr.f32.mxu0 0.0
      %3589 = vmatmul.mubr.f32.gmra.mrb[0].mxu0 %v3401
      %v3590 = vpop.f32.mrb[0].mxu0
      %v3591 = vadd.f32 0.0, %v3590
      %v3592 = vpop.f32.mrb[0].mxu0
      %3593 = vmatprep.mubr.f32.mxu0 0.0
      %3594 = vmatmul.mubr.f32.gmra.mrb[0].mxu0 %v3404
      %v3595 = vpop.f32.mrb[0].mxu0
      %v3596 = vadd.f32 0.0, %v3595
      %v3597 = vpop.f32.mrb[0].mxu0
      %3598 = vmatprep.mubr.f32.mxu0 0.0
      %3599 = vmatmul.mubr.f32.gmra.mrb[0].mxu0 %v3407
      %v3600 = vpop.f32.mrb[0].mxu0
      %v3601 = vadd.f32 0.0, %v3600
      %v3602 = vpop.f32.mrb[0].mxu0
      %3603 = vmatprep.mubr.f32.mxu0 0.0
      %3604 = vmatmul.mubr.f32.gmra.mrb[0].mxu0 %v3410
      %v3605 = vpop.f32.mrb[0].mxu0
      %v3606 = vadd.f32 0.0, %v3605
      %v3607 = vpop.f32.mrb[0].mxu0
      %3608 = vmatprep.mubr.f32.mxu0 0.0
      %3609 = vmatmul.mubr.f32.gmra.mrb[0].mxu0 %v3413
      %v3610 = vpop.f32.mrb[0].mxu0
      %v3611 = vadd.f32 0.0, %v3610
      %v3612 = vpop.f32.mrb[0].mxu0
      %3613 = vmatprep.mubr.f32.mxu0 0.0
      %3614 = vmatmul.mubr.f32.gmra.mrb[0].mxu0 %v3416
      %v3615 = vpop.f32.mrb[0].mxu0
      %v3616 = vadd.f32 0.0, %v3615
      %v3617 = vpop.f32.mrb[0].mxu0
      %3618 = vmatprep.mubr.f32.mxu0 0.0
      %3619 = vmatmul.mubr.f32.gmra.mrb[0].mxu0 %v3419
      %v3620 = vpop.f32.mrb[0].mxu0
      %v3621 = vadd.f32 0.0, %v3620
      %v3622 = vpop.f32.mrb[0].mxu0
      %3623 = vmatprep.mubr.f32.mxu0 0.0
      %3624 = vmatmul.mubr.f32.gmra.mrb[0].mxu0 %v3422
      %v3625 = vpop.f32.mrb[0].mxu0
      %v3626 = vadd.f32 0.0, %v3625
      %v3627 = vpop.f32.mrb[0].mxu0
      %3628 = vmatprep.mubr.f32.mxu0 0.0
      %3629 = vmatmul.mubr.f32.gmra.mrb[0].mxu0 %v3425
      %v3630 = vpop.f32.mrb[0].mxu0
      %v3631 = vadd.f32 0.0, %v3630
      %v3632 = vpop.f32.mrb[0].mxu0
      %3633 = vmatprep.mubr.f32.mxu0 0.0
      %3634 = vmatmul.mubr.f32.gmra.mrb[0].mxu0 %v3428
      %v3635 = vpop.f32.mrb[0].mxu0
      %v3636 = vadd.f32 0.0, %v3635
      %v3637 = vpop.f32.mrb[0].mxu0
      %3638 = vmatprep.mubr.f32.mxu0 0.0
      %3639 = vmatmul.mubr.f32.gmra.mrb[0].mxu0 %v3431
      %v3640 = vpop.f32.mrb[0].mxu0
      %v3641 = vadd.f32 0.0, %v3640
      %v3642 = vpop.f32.mrb[0].mxu0
      %3643 = vmatprep.mubr.f32.mxu0 0.0
      %3644 = vmatmul.mubr.f32.gmra.mrb[0].mxu0 %v3434
      %v3645 = vpop.f32.mrb[0].mxu0
      %v3646 = vadd.f32 0.0, %v3645
      %v3647 = vpop.f32.mrb[0].mxu0
      %3648 = vmatprep.mubr.f32.mxu0 0.0
      %3649 = vmatmul.mubr.f32.gmra.mrb[0].mxu0 %v3437
      %v3650 = vpop.f32.mrb[0].mxu0
      %v3651 = vadd.f32 0.0, %v3650
      %v3652 = vpop.f32.mrb[0].mxu0
      %3653 = vmatprep.mubr.f32.mxu0 0.0
      %3654 = vmatmul.mubr.f32.gmra.mrb[0].mxu0 %v3440
      %v3655 = vpop.f32.mrb[0].mxu0
      %v3656 = vadd.f32 0.0, %v3655
      %v3657 = vpop.f32.mrb[0].mxu0
      %3658 = vmatprep.mubr.f32.mxu0 0.0
      %3659 = vmatmul.mubr.f32.gmra.mrb[0].mxu0 %v3443
      %v3660 = vpop.f32.mrb[0].mxu0
      %v3661 = vadd.f32 0.0, %v3660
      %v3662 = vpop.f32.mrb[0].mxu0
      %3663 = vmatprep.mubr.f32.mxu0 0.0
      %3664 = vmatmul.mubr.f32.gmra.mrb[0].mxu0 %v3446
      %v3665 = vpop.f32.mrb[0].mxu0
      %v3666 = vadd.f32 0.0, %v3665
      %v3667 = vpop.f32.mrb[0].mxu0
      %3668 = vmatprep.mubr.f32.mxu0 0.0
      %3669 = vmatmul.mubr.f32.gmra.mrb[0].mxu0 %v3449
      %v3670 = vpop.f32.mrb[0].mxu0
      %v3671 = vadd.f32 0.0, %v3670
      %v3672 = vpop.f32.mrb[0].mxu0
      %3673 = vmatprep.mubr.f32.mxu0 0.0
      %3674 = vmatmul.mubr.f32.gmra.mrb[0].mxu0 %v3452
      %v3675 = vpop.f32.mrb[0].mxu0
      %v3676 = vadd.f32 0.0, %v3675
      %v3677 = vpop.f32.mrb[0].mxu0
      %3678 = vdwg.mxu0
      %v3679 = vadd.f32 %v3292, %v3521
      %v3680 = vadd.f32 %v3293, %v3526
      %v3681 = vadd.f32 %v3294, %v3531
      %v3682 = vadd.f32 %v3295, %v3536
      %v3683 = vadd.f32 %v3296, %v3541
      %v3684 = vadd.f32 %v3297, %v3546
      %v3685 = vadd.f32 %v3298, %v3551
      %v3686 = vadd.f32 %v3299, %v3556
      %v3687 = vadd.f32 %v3300, %v3561
      %v3688 = vadd.f32 %v3301, %v3566
      %v3689 = vadd.f32 %v3302, %v3571
      %v3690 = vadd.f32 %v3303, %v3576
      %v3691 = vadd.f32 %v3304, %v3581
      %v3692 = vadd.f32 %v3305, %v3586
      %v3693 = vadd.f32 %v3306, %v3591
      %v3694 = vadd.f32 %v3307, %v3596
      %v3695 = vadd.f32 %v3308, %v3601
      %v3696 = vadd.f32 %v3309, %v3606
      %v3697 = vadd.f32 %v3310, %v3611
      %v3698 = vadd.f32 %v3311, %v3616
      %v3699 = vadd.f32 %v3312, %v3621
      %v3700 = vadd.f32 %v3313, %v3626
      %v3701 = vadd.f32 %v3314, %v3631
      %v3702 = vadd.f32 %v3315, %v3636
      %v3703 = vadd.f32 %v3316, %v3641
      %v3704 = vadd.f32 %v3317, %v3646
      %v3705 = vadd.f32 %v3318, %v3651
      %v3706 = vadd.f32 %v3319, %v3656
      %v3707 = vadd.f32 %v3320, %v3661
      %v3708 = vadd.f32 %v3321, %v3666
      %v3709 = vadd.f32 %v3322, %v3671
      %v3710 = vadd.f32 %v3323, %v3676
      %3711 = vst [vmem:[%s286] sm:$0xff] %v3679
      %3712 = vst [vmem:[%s286 + $0x8] sm:$0xff] %v3680
      %3713 = vst [vmem:[%s286 + $0x10] sm:$0xff] %v3681
      %3714 = vst [vmem:[%s286 + $0x18] sm:$0xff] %v3682
      %3715 = vst [vmem:[%s286 + $0x20] sm:$0xff] %v3683
      %3716 = vst [vmem:[%s286 + $0x28] sm:$0xff] %v3684
      %3717 = vst [vmem:[%s286 + $0x30] sm:$0xff] %v3685
      %3718 = vst [vmem:[%s286 + $0x38] sm:$0xff] %v3686
      %3719 = vst [vmem:[%s286 + $0x40] sm:$0xff] %v3687
      %3720 = vst [vmem:[%s286 + $0x48] sm:$0xff] %v3688
      %3721 = vst [vmem:[%s286 + $0x50] sm:$0xff] %v3689
      %3722 = vst [vmem:[%s286 + $0x58] sm:$0xff] %v3690
      %3723 = vst [vmem:[%s286 + $0x60] sm:$0xff] %v3691
      %3724 = vst [vmem:[%s286 + $0x68] sm:$0xff] %v3692
      %3725 = vst [vmem:[%s286 + $0x70] sm:$0xff] %v3693
      %3726 = vst [vmem:[%s286 + $0x78] sm:$0xff] %v3694
      %3727 = vst [vmem:[%s286 + $0x80] sm:$0xff] %v3695
      %3728 = vst [vmem:[%s286 + $0x88] sm:$0xff] %v3696
      %3729 = vst [vmem:[%s286 + $0x90] sm:$0xff] %v3697
      %3730 = vst [vmem:[%s286 + $0x98] sm:$0xff] %v3698
      %3731 = vst [vmem:[%s286 + $0xa0] sm:$0xff] %v3699
      %3732 = vst [vmem:[%s286 + $0xa8] sm:$0xff] %v3700
      %3733 = vst [vmem:[%s286 + $0xb0] sm:$0xff] %v3701
      %3734 = vst [vmem:[%s286 + $0xb8] sm:$0xff] %v3702
      %3735 = vst [vmem:[%s286 + $0xc0] sm:$0xff] %v3703
      %3736 = vst [vmem:[%s286 + $0xc8] sm:$0xff] %v3704
      %3737 = vst [vmem:[%s286 + $0xd0] sm:$0xff] %v3705
      %3738 = vst [vmem:[%s286 + $0xd8] sm:$0xff] %v3706
      %3739 = vst [vmem:[%s286 + $0xe0] sm:$0xff] %v3707
      %3740 = vst [vmem:[%s286 + $0xe8] sm:$0xff] %v3708
      %3741 = vst [vmem:[%s286 + $0xf0] sm:$0xff] %v3709
      %3742 = vst [vmem:[%s286 + $0xf8] sm:$0xff] %v3710
      %v3743 = vadd.f32 %v3679, %v3680
      %v3744 = vadd.f32 %v3743, %v3681
      %v3745 = vadd.f32 %v3744, %v3682
      %v3746 = vadd.f32 %v3745, %v3683
      %v3747 = vadd.f32 %v3746, %v3684
      %v3748 = vadd.f32 %v3747, %v3685
      %v3749 = vadd.f32 %v3748, %v3686
      %v3750 = vadd.f32 %v3749, %v3687
      %v3751 = vadd.f32 %v3750, %v3688
      %v3752 = vadd.f32 %v3751, %v3689
      %v3753 = vadd.f32 %v3752, %v3690
      %v3754 = vadd.f32 %v3753, %v3691
      %v3755 = vadd.f32 %v3754, %v3692
      %v3756 = vadd.f32 %v3755, %v3693
      %v3757 = vadd.f32 %v3756, %v3694
      %v3758 = vadd.f32 %v3757, %v3695
      %v3759 = vadd.f32 %v3758, %v3696
      %v3760 = vadd.f32 %v3759, %v3697
      %v3761 = vadd.f32 %v3760, %v3698
      %v3762 = vadd.f32 %v3761, %v3699
      %v3763 = vadd.f32 %v3762, %v3700
      %v3764 = vadd.f32 %v3763, %v3701
      %v3765 = vadd.f32 %v3764, %v3702
      %v3766 = vadd.f32 %v3765, %v3703
      %v3767 = vadd.f32 %v3766, %v3704
      %v3768 = vadd.f32 %v3767, %v3705
      %v3769 = vadd.f32 %v3768, %v3706
      %v3770 = vadd.f32 %v3769, %v3707
      %v3771 = vadd.f32 %v3770, %v3708
      %v3772 = vadd.f32 %v3771, %v3709
      %v3773 = vadd.f32 %v3772, %v3710
      %v3774 = vrot.slane %v3773, 4
      %v3775 = vadd.f32 %v3773, %v3774
      %v3776 = vrot.slane %v3775, 2
      %v3777 = vadd.f32 %v3775, %v3776
      %v3778 = vrot.slane %v3777, 1
      %v3779 = vadd.f32 %v3777, %v3778
      %3780 = vst [vmem:[%s291] sm:$0x1] %v3779
      %v3781 = vmul.f32 %v3679, %v3679
      %v3782 = vmul.f32 %v3680, %v3680
      %v3783 = vmul.f32 %v3681, %v3681
      %v3784 = vmul.f32 %v3682, %v3682
      %v3785 = vmul.f32 %v3683, %v3683
      %v3786 = vmul.f32 %v3684, %v3684
      %v3787 = vmul.f32 %v3685, %v3685
      %v3788 = vmul.f32 %v3686, %v3686
      %v3789 = vmul.f32 %v3687, %v3687
      %v3790 = vmul.f32 %v3688, %v3688
      %v3791 = vmul.f32 %v3689, %v3689
      %v3792 = vmul.f32 %v3690, %v3690
      %v3793 = vmul.f32 %v3691, %v3691
      %v3794 = vmul.f32 %v3692, %v3692
      %v3795 = vmul.f32 %v3693, %v3693
      %v3796 = vmul.f32 %v3694, %v3694
      %v3797 = vmul.f32 %v3695, %v3695
      %v3798 = vmul.f32 %v3696, %v3696
      %v3799 = vmul.f32 %v3697, %v3697
      %v3800 = vmul.f32 %v3698, %v3698
      %v3801 = vmul.f32 %v3699, %v3699
      %v3802 = vmul.f32 %v3700, %v3700
      %v3803 = vmul.f32 %v3701, %v3701
      %v3804 = vmul.f32 %v3702, %v3702
      %v3805 = vmul.f32 %v3703, %v3703
      %v3806 = vmul.f32 %v3704, %v3704
      %v3807 = vmul.f32 %v3705, %v3705
      %v3808 = vmul.f32 %v3706, %v3706
      %v3809 = vmul.f32 %v3707, %v3707
      %v3810 = vmul.f32 %v3708, %v3708
      %v3811 = vmul.f32 %v3709, %v3709
      %v3812 = vmul.f32 %v3710, %v3710
      %v3813 = vadd.f32 %v3781, %v3782
      %v3814 = vadd.f32 %v3813, %v3783
      %v3815 = vadd.f32 %v3814, %v3784
      %v3816 = vadd.f32 %v3815, %v3785
      %v3817 = vadd.f32 %v3816, %v3786
      %v3818 = vadd.f32 %v3817, %v3787
      %v3819 = vadd.f32 %v3818, %v3788
      %v3820 = vadd.f32 %v3819, %v3789
      %v3821 = vadd.f32 %v3820, %v3790
      %v3822 = vadd.f32 %v3821, %v3791
      %v3823 = vadd.f32 %v3822, %v3792
      %v3824 = vadd.f32 %v3823, %v3793
      %v3825 = vadd.f32 %v3824, %v3794
      %v3826 = vadd.f32 %v3825, %v3795
      %v3827 = vadd.f32 %v3826, %v3796
      %v3828 = vadd.f32 %v3827, %v3797
      %v3829 = vadd.f32 %v3828, %v3798
      %v3830 = vadd.f32 %v3829, %v3799
      %v3831 = vadd.f32 %v3830, %v3800
      %v3832 = vadd.f32 %v3831, %v3801
      %v3833 = vadd.f32 %v3832, %v3802
      %v3834 = vadd.f32 %v3833, %v3803
      %v3835 = vadd.f32 %v3834, %v3804
      %v3836 = vadd.f32 %v3835, %v3805
      %v3837 = vadd.f32 %v3836, %v3806
      %v3838 = vadd.f32 %v3837, %v3807
      %v3839 = vadd.f32 %v3838, %v3808
      %v3840 = vadd.f32 %v3839, %v3809
      %v3841 = vadd.f32 %v3840, %v3810
      %v3842 = vadd.f32 %v3841, %v3811
      %v3843 = vadd.f32 %v3842, %v3812
      %v3844 = vrot.slane %v3843, 4
      %v3845 = vadd.f32 %v3843, %v3844
      %v3846 = vrot.slane %v3845, 2
      %v3847 = vadd.f32 %v3845, %v3846
      %v3848 = vrot.slane %v3847, 1
      %v3849 = vadd.f32 %v3847, %v3848
      %3850 = vst [vmem:[%s291 + $0x1] sm:$0x1] %v3849
      %s3851 = smul.u32 32, %s17
      %p3852 = scmp.lt.s32.totalorder %s3851, 63
      %s3853 = scalar_select %p3852, %s3851, 63
      %s3854 = smul.addr %s3853, 8
      %s3855 = scalar_lea.vmem %s4, %s3854
      %p3856 = scmp.lt.s32.totalorder %s17, 1
      %s3857 = scalar_select %p3856, %s17, 1
      %s3858 = smul.addr %s3857, 2
      %s3859 = scalar_lea.vmem %s5, %s3858
      // Predicated region
      $region37: #{double_conv.6} parent=35 // pred_check
        %p3860 = pneg %p134
      $region38: #{double_conv.6} parent=35 // pred_check_branch
        %3862 = sbr.rel (%p3860) target = $region40
      $region39: #{double_conv.6} parent=35 // pred_region
        %s3863 = smul.u32 32, %s17
      $region40: #{double_conv.6} parent=35 // pred_fallthru
        _
      // Predicated region
      $region41: #{double_conv.6} parent=35 // pred_check
        %p3864 = pneg %p160
      $region42: #{double_conv.6} parent=35 // pred_check_branch
        %3866 = sbr.rel (%p3864) target = $region44
      $region43: #{double_conv.6} parent=35 // pred_region
        _
      $region44: #{double_conv.6} parent=35 // pred_fallthru
        _
    $region36: #{double_conv.6} parent=5 // pred_fallthru
      _
    %p3867 = scmp.le.s32.totalorder 2, %s12
    // Predicated region
    $region45: #{double_conv.6} parent=5 // pred_check
      %p3868 = pneg %p3867
    $region46: #{double_conv.6} parent=5 // pred_check_branch
      %3870 = sbr.rel (%p3868) target = $region48
    $region47: #{double_conv.6} parent=5 // pred_region
      %s3871 = ssub.s32 %s12, 2
      // Predicated region
      $region49: #{double_conv.6} parent=47 // pred_check
        %p3872 = pneg %p140
      $region50: #{double_conv.6} parent=47 // pred_check_branch
        %3874 = sbr.rel (%p3872) target = $region52
      $region51: #{double_conv.6} parent=47 // pred_region
        %s3875 = smul.u32 32, %s18
        %p3876 = scmp.lt.s32.totalorder %s3875, 63
        %s3877 = scalar_select %p3876, %s3875, 63
        %s3878 = smul.addr %s3877, 8
        %s3879 = scalar_lea.vmem %s4, %s3878
      $region52: #{double_conv.6} parent=47 // pred_fallthru
        _
      // Predicated region
      $region53: #{double_conv.6} parent=47 // pred_check
        %p3880 = pneg %p166
      $region54: #{double_conv.6} parent=47 // pred_check_branch
        %3882 = sbr.rel (%p3880) target = $region56
      $region55: #{double_conv.6} parent=47 // pred_region
        %p3883 = scmp.lt.s32.totalorder %s18, 1
        %s3884 = scalar_select %p3883, %s18, 1
        %s3885 = smul.addr %s3884, 2
        %s3886 = scalar_lea.vmem %s5, %s3885
      $region56: #{double_conv.6} parent=47 // pred_fallthru
        _
    $region48: #{double_conv.6} parent=5 // pred_fallthru
      _
  $region6: #{double_conv.6} parent=0 // loop_footer
    %s16 = sadd.s32 1, %s12
  $region7: #{double_conv.6} parent=0 // loop_footer_branch
    %11 = sbr.rel target = $region3
  $region8: #{double_conv.6} parent=0 // loop_exit
    _

</llo_original>
